<compile_context>
chip_gen: v7x
topology: tpu7x:2x2x1
jax: 0.10.0
libtpu: 0.0.40
codegen_flags: <defaults>
</compile_context>

<pallas_src>
import functools

import jax
import jax.numpy as jnp
from jax.experimental import pallas as pl
from jax.experimental.pallas import tpu as pltpu


# ----------------------------- in-kernel helpers -----------------------------

def _mish_f32(y):
    """Mish with a single transcendental: y * tanh(softplus(y)).

    tanh(softplus(y)) = u / (u + 2) with u = e^y * (e^y + 2).  The divide uses
    the EUP approx reciprocal; a large-y guard avoids exp overflow (tanh -> 1).
    """
    t = jnp.exp(y)
    u = t * (t + 2.0)
    soft_tanh = u * pl.reciprocal(u + 2.0, approx=True)
    return jnp.where(y > 20.0, y, y * soft_tanh)


def _conv3x3_acc(x_ref, w_ref, n, width, cout):
    """Accumulate the 9 shifted matmuls of a 3x3/s1/p1 conv over a flat row tile.

    x_ref: (1, (th+2)*width + 2, Cin) halo slab (1 pad elem at each flat end).
    w_ref: (9, Cin, Cout) tap-major weights (BN scale pre-folded).
    Returns (n, Cout) f32 accumulator (no bias / activation yet).
    """
    # Output-column index of every flattened output row; used to zero the
    # contributions of the left/right taps at the image borders (this IS the
    # width zero-padding, without materializing padded data).
    col = jax.lax.broadcasted_iota(jnp.int32, (n, 1), 0) % width
    not_first = col != 0            # mask for kj == 0  (dj = -1)
    not_last = col != (width - 1)   # mask for kj == 2  (dj = +1)

    acc = jnp.zeros((n, cout), jnp.float32)
    for ki in range(3):             # kernel row
        for kj in range(3):         # kernel col
            # flat offset of tap (ki, kj): ki*width + (kj - 1) + 1 leading pad
            off = ki * width + kj
            win = x_ref[0, off:off + n, :]                      # (n, Cin)
            contrib = jnp.dot(win, w_ref[3 * ki + kj],
                              preferred_element_type=jnp.float32)
            if kj == 0:
                contrib = jnp.where(not_first, contrib, 0.0)
            elif kj == 2:
                contrib = jnp.where(not_last, contrib, 0.0)
            acc = acc + contrib
    return acc


def _conv3x3_bn_mish_kernel(x_ref, w_ref, b_ref, o_ref, *, th, width):
    """Conv2d(3x3, s=1, p=1, bias=False) + folded BN + Mish on one row tile."""
    n = th * width
    cout = o_ref.shape[-1]
    acc = _conv3x3_acc(x_ref, w_ref, n, width, cout)
    o_ref[0] = _mish_f32(acc + b_ref[...]).astype(o_ref.dtype)


def _tail_kernel(x2_ref, rt_ref, w3_ref, b3_ref, wa_ref, wb_ref, b4_ref, o_ref,
                 *, th, width):
    """Fused tail of Resblock_body, one row tile:
        y3 = Mish(BN(conv3_3x3(x2)))            (stays in registers/VMEM)
        y4 = Mish(BN(conv4_1x1(cat([y3, route1]))))   (split weights -> no cat)
        out = cat([route, y4])                  (written directly, no cat)

    x2_ref: (1, (th+2)*width + 2, ch)  conv2-output halo slab; its center rows
            are route1, so route1 needs no separate HBM read.
    rt_ref: (1, th*width, c)           route (conv1 output) tile, passed through.
    w3_ref: (9, ch, ch); b3_ref: (1, ch)
    wa_ref: (ch, c)  conv4 weights for the conv3-out half (BN scale folded)
    wb_ref: (ch, c)  conv4 weights for the route1 half
    b4_ref: (1, c)
    o_ref : (1, th*width, 2c)          final block output tile.
    """
    n = th * width
    ch = w3_ref.shape[-1]

    acc = _conv3x3_acc(x2_ref, w3_ref, n, width, ch)
    y3 = _mish_f32(acc + b3_ref[...]).astype(x2_ref.dtype)      # (n, ch)
    r1 = x2_ref[0, width + 1:width + 1 + n, :]                  # route1 rows

    y4 = jnp.dot(y3, wa_ref[...], preferred_element_type=jnp.float32)
    y4 = y4 + jnp.dot(r1, wb_ref[...], preferred_element_type=jnp.float32)
    y4 = _mish_f32(y4 + b4_ref[...])

    o_ref[0] = jnp.concatenate(
        [rt_ref[0].astype(o_ref.dtype), y4.astype(o_ref.dtype)], axis=-1)


# ------------------------------- host wrappers -------------------------------

def _pick_row_tile(h, row_bytes_in, row_bytes_out, halo_bytes,
                   row_bytes_scratch=0, block_rows=None):
    """Largest row-tile dividing H whose double-buffered in/out tiles (+ f32
    scratch) fit a conservative VMEM budget (within default scoped VMEM on
    v5e/v6e/v7x)."""
    if block_rows is not None and h % block_rows == 0:
        return block_rows
    budget = 6 * 1024 * 1024
    best = 1
    for th in range(1, min(h, 512) + 1):
        if h % th:
            continue
        cost = (2 * (th * (row_bytes_in + row_bytes_out) + halo_bytes)
                + th * row_bytes_scratch)
        if cost <= budget:
            best = th
    return best


def _halo_slab(x, th, nT, cdt):
    """(B, H, W, C) -> (B*nT, (th+2)*W + 2, C) flattened row tiles with one halo
    row top/bottom and one zero pad element at each end of the flat axis."""
    B, H, W, C = x.shape
    xh = jnp.pad(x.astype(cdt), ((0, 0), (1, 1), (0, 0), (0, 0)))
    rows = jnp.arange(nT)[:, None] * th + jnp.arange(th + 2)[None, :]
    flat = xh[:, rows].reshape(B * nT, (th + 2) * W, C)
    return jnp.pad(flat, ((0, 0), (1, 1), (0, 0)))


def conv3x3_bn_mish(x, w, scale, bias, *, block_rows=None, compute_dtype=None):
    """BasicConv(k=3): Conv2d(3, s=1, p=1, bias=False) + BN(eval) + Mish."""
    B, H, W, Cin = x.shape
    Cout = w.shape[-1]
    cdt = jnp.dtype(compute_dtype) if compute_dtype is not None else x.dtype
    isz = cdt.itemsize
    th = _pick_row_tile(H, W * Cin * isz, W * Cout * isz, 2 * W * Cin * isz,
                        row_bytes_scratch=W * Cout * 4, block_rows=block_rows)
    nT = H // th
    L = (th + 2) * W + 2

    # Fold BN scale into the conv weights; kernel only adds the bias.
    w_f = (w * scale[None, None, None, :]).reshape(9, Cin, Cout).astype(cdt)
    b_f = bias.reshape(1, Cout).astype(jnp.float32)

    flat = _halo_slab(x, th, nT, cdt)                   # (B*nT, L, Cin)

    out = pl.pallas_call(
        functools.partial(_conv3x3_bn_mish_kernel, th=th, width=W),
        out_shape=jax.ShapeDtypeStruct((B * nT, th * W, Cout), cdt),
        grid_spec=pltpu.PrefetchScalarGridSpec(
            num_scalar_prefetch=0,
            grid=(B * nT,),
            in_specs=[
                pl.BlockSpec((1, L, Cin), lambda i: (i, 0, 0)),
                pl.BlockSpec((9, Cin, Cout), lambda i: (0, 0, 0)),
                pl.BlockSpec((1, Cout), lambda i: (0, 0)),
            ],
            out_specs=pl.BlockSpec((1, th * W, Cout), lambda i: (i, 0, 0)),
        ),
        compiler_params=pltpu.CompilerParams(
            dimension_semantics=("parallel",)),
    )(flat, w_f, b_f)
    # (B*nT, th*W, Cout) -> (B, H, W, Cout): contiguous, free metadata reshape.
    return out.reshape(B, H, W, Cout)


def conv3_conv4_tail(x2, route, p3, p4, *, block_rows=None, compute_dtype=None):
    """Fused conv3 (3x3) + conv4 (1x1) + both concats of Resblock_body."""
    B, H, W, ch = x2.shape
    c = route.shape[-1]
    w3, s3, b3 = p3
    w4, s4, b4 = p4
    assert c == 2 * ch and w3.shape == (3, 3, ch, ch) and w4.shape == (1, 1, c, c)
    cdt = jnp.dtype(compute_dtype) if compute_dtype is not None else x2.dtype
    isz = cdt.itemsize
    th = _pick_row_tile(H, W * (ch + c) * isz, W * 2 * c * isz,
                        2 * W * ch * isz,
                        row_bytes_scratch=W * (ch + c) * 4,
                        block_rows=block_rows)
    nT = H // th
    n = th * W
    L = (th + 2) * W + 2

    w3_f = (w3 * s3[None, None, None, :]).reshape(9, ch, ch).astype(cdt)
    b3_f = b3.reshape(1, ch).astype(jnp.float32)
    w4_f = (w4[0, 0] * s4[None, :]).astype(cdt)          # (c, c), BN scale folded
    wa, wb = w4_f[:ch], w4_f[ch:]                        # conv3-out | route1 halves
    b4_f = b4.reshape(1, c).astype(jnp.float32)

    slab = _halo_slab(x2, th, nT, cdt)                   # (B*nT, L, ch)
    rtf = route.astype(cdt).reshape(B * nT, n, c)        # free reshape

    out = pl.pallas_call(
        functools.partial(_tail_kernel, th=th, width=W),
        out_shape=jax.ShapeDtypeStruct((B * nT, n, 2 * c), cdt),
        grid_spec=pltpu.PrefetchScalarGridSpec(
            num_scalar_prefetch=0,
            grid=(B * nT,),
            in_specs=[
                pl.BlockSpec((1, L, ch), lambda i: (i, 0, 0)),
                pl.BlockSpec((1, n, c), lambda i: (i, 0, 0)),
                pl.BlockSpec((9, ch, ch), lambda i: (0, 0, 0)),
                pl.BlockSpec((1, ch), lambda i: (0, 0)),
                pl.BlockSpec((ch, c), lambda i: (0, 0)),
                pl.BlockSpec((ch, c), lambda i: (0, 0)),
                pl.BlockSpec((1, c), lambda i: (0, 0)),
            ],
            out_specs=pl.BlockSpec((1, n, 2 * c), lambda i: (i, 0, 0)),
        ),
        compiler_params=pltpu.CompilerParams(
            dimension_semantics=("parallel",)),
    )(slab, rtf, w3_f, b3_f, wa, wb, b4_f)
    return out.reshape(B, H, W, 2 * c)


def resblock_body(x, params, out_channels, *, block_rows=None,
                  compute_dtype=None):
    """Forward of Resblock_body.  x: (B, H, W, in_channels) NHWC."""
    c = out_channels
    x1 = conv3x3_bn_mish(x, *params["conv1"], block_rows=block_rows,
                         compute_dtype=compute_dtype)           # route
    # torch.split(x, c//2, dim=1)[1]: the channel-half read fuses into conv2's
    # halo-gather pass (no standalone HBM round trip for the slice).
    x2 = conv3x3_bn_mish(x1[..., c // 2:], *params["conv2"],
                         block_rows=block_rows, compute_dtype=compute_dtype)
    # conv3 + conv4 + cat([x3, route1]) + cat([route, x4]) in one fused kernel;
    # the conv3 output never touches HBM.
    return conv3_conv4_tail(x2, x1, params["conv3"], params["conv4"],
                            block_rows=block_rows, compute_dtype=compute_dtype)


# ---------------- deterministic parameter initialization ----------------

def init_basic_conv(key, cin, cout, k):
    kw_, kg, kb, km, kv = jax.random.split(key, 5)
    fan_in = cin * k * k
    w = jax.random.normal(kw_, (k, k, cin, cout), jnp.float32) * (fan_in ** -0.5)
    gamma = 1.0 + 0.1 * jax.random.normal(kg, (cout,), jnp.float32)
    beta = 0.1 * jax.random.normal(kb, (cout,), jnp.float32)
    running_mean = 0.1 * jax.random.normal(km, (cout,), jnp.float32)
    running_var = 0.5 + jax.random.uniform(kv, (cout,), jnp.float32)
    eps = 1e-5
    scale = gamma / jnp.sqrt(running_var + eps)   # fold BN (eval mode)
    bias = beta - running_mean * scale
    return w, scale, bias


def init_resblock(key, in_channels, out_channels):
    k1, k2, k3, k4 = jax.random.split(key, 4)
    c = out_channels
    return {
        "conv1": init_basic_conv(k1, in_channels, c, 3),
        "conv2": init_basic_conv(k2, c // 2, c // 2, 3),
        "conv3": init_basic_conv(k3, c // 2, c // 2, 3),
        "conv4": init_basic_conv(k4, c, c, 1),
    }


# ---------------- plain-JAX reference (for correctness check) ----------------

def _conv_bn_mish_ref(x, w, scale, bias):
    pad = w.shape[0] // 2
    y = jax.lax.conv_general_dilated(
        x, w, window_strides=(1, 1),
        padding=[(pad, pad), (pad, pad)],
        dimension_numbers=("NHWC", "HWIO", "NHWC"))
    y = y * scale + bias
    return y * jnp.tanh(jax.nn.softplus(y))


def _resblock_ref(x, params, out_channels):
    c = out_channels
    x = _conv_bn_mish_ref(x, *params["conv1"])
    route = x
    x = x[..., c // 2:]
    x = _conv_bn_mish_ref(x, *params["conv2"])
    route1 = x
    x = _conv_bn_mish_ref(x, *params["conv3"])
    x = jnp.concatenate([x, route1], axis=-1)
    x = _conv_bn_mish_ref(x, *params["conv4"])
    return jnp.concatenate([route, x], axis=-1)


if __name__ == "__main__":
    B, H, W = 2, 16, 16
    in_channels, out_channels = 4, 8

    key = jax.random.PRNGKey(0)
    kx, kp = jax.random.split(key)
    # NHWC input, equivalent to PyTorch NCHW (2, 4, 16, 16)
    x = jax.random.normal(kx, (B, H, W, in_channels), jnp.float32)
    params = init_resblock(kp, in_channels, out_channels)

    ref = _resblock_ref(x, params, out_channels)

    # f32 compute path; block_rows=8 -> 2 row tiles per image, exercising the
    # spatially tiled (parallel) grid.
    fwd32 = jax.jit(functools.partial(resblock_body, out_channels=out_channels,
                                      block_rows=8, compute_dtype=jnp.float32))
    out32 = jax.block_until_ready(fwd32(x, params))
    assert out32.shape == (B, H, W, 2 * out_channels), out32.shape
    err32 = float(jnp.max(jnp.abs(out32 - ref)))
    # slack for the approx-reciprocal single-exp Mish
    assert jnp.allclose(out32, ref, rtol=1e-2, atol=1e-2), err32

    # bf16 compute path (MXU-friendly inputs, f32 accumulation), loose check.
    fwd16 = jax.jit(functools.partial(resblock_body, out_channels=out_channels,
                                      block_rows=8, compute_dtype=jnp.bfloat16))
    out16 = jax.block_until_ready(fwd16(x, params)).astype(jnp.float32)
    assert out16.shape == (B, H, W, 2 * out_channels), out16.shape
    err16 = float(jnp.max(jnp.abs(out16 - ref)))
    assert jnp.allclose(out16, ref, rtol=5e-2, atol=5e-2), err16

    print("KERNEL_OK")
</pallas_src>

<mosaic_0001>
module attributes {stable_mosaic.version = 11 : i64} {
  func.func @_conv3x3_bn_mish_kernel(%arg0: i32, %arg1: memref<1x162x4xf32, #tpu.memory_space<vmem>>, %arg2: memref<9x4x8xf32, #tpu.memory_space<vmem>>, %arg3: memref<1x8xf32, #tpu.memory_space<vmem>>, %arg4: memref<1x128x8xf32, #tpu.memory_space<vmem>>) attributes {dimension_semantics = [#tpu.dimension_semantics<parallel>], iteration_bounds = array<i64: 4>, scalar_prefetch = 0 : i64, scratch_operands = 0 : i64, tpu.core_type = #tpu.core_type<tc>, window_params = [{transform_indices = @transform_0, window_bounds = array<i64: 1, 162, 4>}, {pipeline_mode = #tpu.pipeline_mode<synchronous>, transform_indices = @transform_1, window_bounds = array<i64: 9, 4, 8>}, {pipeline_mode = #tpu.pipeline_mode<synchronous>, transform_indices = @transform_2, window_bounds = array<i64: 1, 8>}, {transform_indices = @transform_3, window_bounds = array<i64: 1, 128, 8>}]} {
    %0 = tpu.iota {dimensions = array<i32: 0>} : vector<128x1xi32>
    %c16_i32 = arith.constant 16 : i32
    %c0_i32 = arith.constant 0 : i32
    %1 = arith.cmpi eq, %c16_i32, %c0_i32 : i32
    %c1_i32 = arith.constant 1 : i32
    %2 = arith.select %1, %c1_i32, %c16_i32 : i32
    %3 = vector.broadcast %2 : i32 to vector<128x1xi32>
    %4 = arith.remsi %0, %3 : vector<128x1xi32>
    %c0_i32_0 = arith.constant 0 : i32
    %5 = vector.broadcast %c0_i32_0 : i32 to vector<128x1xi32>
    %6 = arith.cmpi ne, %4, %5 : vector<128x1xi32>
    %c0_i32_1 = arith.constant 0 : i32
    %7 = vector.broadcast %c0_i32_1 : i32 to vector<128x1xi32>
    %8 = arith.cmpi slt, %4, %7 : vector<128x1xi32>
    %c0_i32_2 = arith.constant 0 : i32
    %9 = arith.cmpi slt, %2, %c0_i32_2 : i32
    %10 = vector.broadcast %9 : i1 to vector<128x1xi1>
    %11 = vector.broadcast %10 : vector<128x1xi1> to vector<128x1xi1>
    %12 = arith.xori %8, %11 : vector<128x1xi1>
    %13 = arith.andi %12, %6 : vector<128x1xi1>
    %14 = vector.broadcast %2 : i32 to vector<128x1xi32>
    %15 = arith.addi %4, %14 : vector<128x1xi32>
    %16 = arith.select %13, %15, %4 : vector<128x1xi1>, vector<128x1xi32>
    %c0_i32_3 = arith.constant 0 : i32
    %17 = vector.broadcast %c0_i32_3 : i32 to vector<128x1xi32>
    %18 = arith.cmpi ne, %16, %17 : vector<128x1xi32>
    %c15_i32 = arith.constant 15 : i32
    %19 = vector.broadcast %c15_i32 : i32 to vector<128x1xi32>
    %20 = arith.cmpi ne, %16, %19 : vector<128x1xi32>
    %cst = arith.constant 0.000000e+00 : f32
    %21 = vector.broadcast %cst : f32 to vector<128x8xf32>
    %c0 = arith.constant 0 : index
    %c0_4 = arith.constant 0 : index
    %c0_5 = arith.constant 0 : index
    %22 = vector.load %arg1[%c0, %c0_4, %c0_5] : memref<1x162x4xf32, #tpu.memory_space<vmem>>, vector<1x128x4xf32>
    %23 = vector.shape_cast %22 : vector<1x128x4xf32> to vector<128x4xf32>
    %c0_6 = arith.constant 0 : index
    %c0_7 = arith.constant 0 : index
    %c0_8 = arith.constant 0 : index
    %24 = vector.load %arg2[%c0_6, %c0_7, %c0_8] : memref<9x4x8xf32, #tpu.memory_space<vmem>>, vector<1x4x8xf32>
    %25 = vector.shape_cast %24 : vector<1x4x8xf32> to vector<4x8xf32>
    %cst_9 = arith.constant dense<0.000000e+00> : vector<128x8xf32>
    %26 = tpu.matmul %23, %25, %cst_9 {dimension_numbers = #tpu.dot_dimension_numbers<[1], [0], [0], [1], [0, 0, 1, 1], [], []>} : vector<128x4xf32>, vector<4x8xf32>, vector<128x8xf32> -> vector<128x8xf32>
    %cst_10 = arith.constant 0.000000e+00 : f32
    %27 = vector.shape_cast %18 : vector<128x1xi1> to vector<128x1xi1>
    %28 = vector.broadcast %27 : vector<128x1xi1> to vector<128x8xi1>
    %29 = vector.broadcast %cst_10 : f32 to vector<128x8xf32>
    %30 = arith.select %28, %26, %29 : vector<128x8xi1>, vector<128x8xf32>
    %31 = arith.addf %21, %30 : vector<128x8xf32>
    %c0_11 = arith.constant 0 : index
    %c1 = arith.constant 1 : index
    %c0_12 = arith.constant 0 : index
    %32 = vector.load %arg1[%c0_11, %c1, %c0_12] : memref<1x162x4xf32, #tpu.memory_space<vmem>>, vector<1x128x4xf32>
    %33 = vector.shape_cast %32 : vector<1x128x4xf32> to vector<128x4xf32>
    %c1_13 = arith.constant 1 : index
    %c0_14 = arith.constant 0 : index
    %c0_15 = arith.constant 0 : index
    %34 = vector.load %arg2[%c1_13, %c0_14, %c0_15] : memref<9x4x8xf32, #tpu.memory_space<vmem>>, vector<1x4x8xf32>
    %35 = vector.shape_cast %34 : vector<1x4x8xf32> to vector<4x8xf32>
    %cst_16 = arith.constant dense<0.000000e+00> : vector<128x8xf32>
    %36 = tpu.matmul %33, %35, %cst_16 {dimension_numbers = #tpu.dot_dimension_numbers<[1], [0], [0], [1], [0, 0, 1, 1], [], []>} : vector<128x4xf32>, vector<4x8xf32>, vector<128x8xf32> -> vector<128x8xf32>
    %37 = arith.addf %31, %36 : vector<128x8xf32>
    %c0_17 = arith.constant 0 : index
    %c2 = arith.constant 2 : index
    %c0_18 = arith.constant 0 : index
    %38 = vector.load %arg1[%c0_17, %c2, %c0_18] : memref<1x162x4xf32, #tpu.memory_space<vmem>>, vector<1x128x4xf32>
    %39 = vector.shape_cast %38 : vector<1x128x4xf32> to vector<128x4xf32>
    %c2_19 = arith.constant 2 : index
    %c0_20 = arith.constant 0 : index
    %c0_21 = arith.constant 0 : index
    %40 = vector.load %arg2[%c2_19, %c0_20, %c0_21] : memref<9x4x8xf32, #tpu.memory_space<vmem>>, vector<1x4x8xf32>
    %41 = vector.shape_cast %40 : vector<1x4x8xf32> to vector<4x8xf32>
    %cst_22 = arith.constant dense<0.000000e+00> : vector<128x8xf32>
    %42 = tpu.matmul %39, %41, %cst_22 {dimension_numbers = #tpu.dot_dimension_numbers<[1], [0], [0], [1], [0, 0, 1, 1], [], []>} : vector<128x4xf32>, vector<4x8xf32>, vector<128x8xf32> -> vector<128x8xf32>
    %cst_23 = arith.constant 0.000000e+00 : f32
    %43 = vector.shape_cast %20 : vector<128x1xi1> to vector<128x1xi1>
    %44 = vector.broadcast %43 : vector<128x1xi1> to vector<128x8xi1>
    %45 = vector.broadcast %cst_23 : f32 to vector<128x8xf32>
    %46 = arith.select %44, %42, %45 : vector<128x8xi1>, vector<128x8xf32>
    %47 = arith.addf %37, %46 : vector<128x8xf32>
    %c0_24 = arith.constant 0 : index
    %c16 = arith.constant 16 : index
    %c0_25 = arith.constant 0 : index
    %48 = vector.load %arg1[%c0_24, %c16, %c0_25] : memref<1x162x4xf32, #tpu.memory_space<vmem>>, vector<1x128x4xf32>
    %49 = vector.shape_cast %48 : vector<1x128x4xf32> to vector<128x4xf32>
    %c3 = arith.constant 3 : index
    %c0_26 = arith.constant 0 : index
    %c0_27 = arith.constant 0 : index
    %50 = vector.load %arg2[%c3, %c0_26, %c0_27] : memref<9x4x8xf32, #tpu.memory_space<vmem>>, vector<1x4x8xf32>
    %51 = vector.shape_cast %50 : vector<1x4x8xf32> to vector<4x8xf32>
    %cst_28 = arith.constant dense<0.000000e+00> : vector<128x8xf32>
    %52 = tpu.matmul %49, %51, %cst_28 {dimension_numbers = #tpu.dot_dimension_numbers<[1], [0], [0], [1], [0, 0, 1, 1], [], []>} : vector<128x4xf32>, vector<4x8xf32>, vector<128x8xf32> -> vector<128x8xf32>
    %cst_29 = arith.constant 0.000000e+00 : f32
    %53 = vector.shape_cast %18 : vector<128x1xi1> to vector<128x1xi1>
    %54 = vector.broadcast %53 : vector<128x1xi1> to vector<128x8xi1>
    %55 = vector.broadcast %cst_29 : f32 to vector<128x8xf32>
    %56 = arith.select %54, %52, %55 : vector<128x8xi1>, vector<128x8xf32>
    %57 = arith.addf %47, %56 : vector<128x8xf32>
    %c0_30 = arith.constant 0 : index
    %c17 = arith.constant 17 : index
    %c0_31 = arith.constant 0 : index
    %58 = vector.load %arg1[%c0_30, %c17, %c0_31] : memref<1x162x4xf32, #tpu.memory_space<vmem>>, vector<1x128x4xf32>
    %59 = vector.shape_cast %58 : vector<1x128x4xf32> to vector<128x4xf32>
    %c4 = arith.constant 4 : index
    %c0_32 = arith.constant 0 : index
    %c0_33 = arith.constant 0 : index
    %60 = vector.load %arg2[%c4, %c0_32, %c0_33] : memref<9x4x8xf32, #tpu.memory_space<vmem>>, vector<1x4x8xf32>
    %61 = vector.shape_cast %60 : vector<1x4x8xf32> to vector<4x8xf32>
    %cst_34 = arith.constant dense<0.000000e+00> : vector<128x8xf32>
    %62 = tpu.matmul %59, %61, %cst_34 {dimension_numbers = #tpu.dot_dimension_numbers<[1], [0], [0], [1], [0, 0, 1, 1], [], []>} : vector<128x4xf32>, vector<4x8xf32>, vector<128x8xf32> -> vector<128x8xf32>
    %63 = arith.addf %57, %62 : vector<128x8xf32>
    %c0_35 = arith.constant 0 : index
    %c18 = arith.constant 18 : index
    %c0_36 = arith.constant 0 : index
    %64 = vector.load %arg1[%c0_35, %c18, %c0_36] : memref<1x162x4xf32, #tpu.memory_space<vmem>>, vector<1x128x4xf32>
    %65 = vector.shape_cast %64 : vector<1x128x4xf32> to vector<128x4xf32>
    %c5 = arith.constant 5 : index
    %c0_37 = arith.constant 0 : index
    %c0_38 = arith.constant 0 : index
    %66 = vector.load %arg2[%c5, %c0_37, %c0_38] : memref<9x4x8xf32, #tpu.memory_space<vmem>>, vector<1x4x8xf32>
    %67 = vector.shape_cast %66 : vector<1x4x8xf32> to vector<4x8xf32>
    %cst_39 = arith.constant dense<0.000000e+00> : vector<128x8xf32>
    %68 = tpu.matmul %65, %67, %cst_39 {dimension_numbers = #tpu.dot_dimension_numbers<[1], [0], [0], [1], [0, 0, 1, 1], [], []>} : vector<128x4xf32>, vector<4x8xf32>, vector<128x8xf32> -> vector<128x8xf32>
    %cst_40 = arith.constant 0.000000e+00 : f32
    %69 = vector.shape_cast %20 : vector<128x1xi1> to vector<128x1xi1>
    %70 = vector.broadcast %69 : vector<128x1xi1> to vector<128x8xi1>
    %71 = vector.broadcast %cst_40 : f32 to vector<128x8xf32>
    %72 = arith.select %70, %68, %71 : vector<128x8xi1>, vector<128x8xf32>
    %73 = arith.addf %63, %72 : vector<128x8xf32>
    %c0_41 = arith.constant 0 : index
    %c32 = arith.constant 32 : index
    %c0_42 = arith.constant 0 : index
    %74 = vector.load %arg1[%c0_41, %c32, %c0_42] : memref<1x162x4xf32, #tpu.memory_space<vmem>>, vector<1x128x4xf32>
    %75 = vector.shape_cast %74 : vector<1x128x4xf32> to vector<128x4xf32>
    %c6 = arith.constant 6 : index
    %c0_43 = arith.constant 0 : index
    %c0_44 = arith.constant 0 : index
    %76 = vector.load %arg2[%c6, %c0_43, %c0_44] : memref<9x4x8xf32, #tpu.memory_space<vmem>>, vector<1x4x8xf32>
    %77 = vector.shape_cast %76 : vector<1x4x8xf32> to vector<4x8xf32>
    %cst_45 = arith.constant dense<0.000000e+00> : vector<128x8xf32>
    %78 = tpu.matmul %75, %77, %cst_45 {dimension_numbers = #tpu.dot_dimension_numbers<[1], [0], [0], [1], [0, 0, 1, 1], [], []>} : vector<128x4xf32>, vector<4x8xf32>, vector<128x8xf32> -> vector<128x8xf32>
    %cst_46 = arith.constant 0.000000e+00 : f32
    %79 = vector.shape_cast %18 : vector<128x1xi1> to vector<128x1xi1>
    %80 = vector.broadcast %79 : vector<128x1xi1> to vector<128x8xi1>
    %81 = vector.broadcast %cst_46 : f32 to vector<128x8xf32>
    %82 = arith.select %80, %78, %81 : vector<128x8xi1>, vector<128x8xf32>
    %83 = arith.addf %73, %82 : vector<128x8xf32>
    %c0_47 = arith.constant 0 : index
    %c33 = arith.constant 33 : index
    %c0_48 = arith.constant 0 : index
    %84 = vector.load %arg1[%c0_47, %c33, %c0_48] : memref<1x162x4xf32, #tpu.memory_space<vmem>>, vector<1x128x4xf32>
    %85 = vector.shape_cast %84 : vector<1x128x4xf32> to vector<128x4xf32>
    %c7 = arith.constant 7 : index
    %c0_49 = arith.constant 0 : index
    %c0_50 = arith.constant 0 : index
    %86 = vector.load %arg2[%c7, %c0_49, %c0_50] : memref<9x4x8xf32, #tpu.memory_space<vmem>>, vector<1x4x8xf32>
    %87 = vector.shape_cast %86 : vector<1x4x8xf32> to vector<4x8xf32>
    %cst_51 = arith.constant dense<0.000000e+00> : vector<128x8xf32>
    %88 = tpu.matmul %85, %87, %cst_51 {dimension_numbers = #tpu.dot_dimension_numbers<[1], [0], [0], [1], [0, 0, 1, 1], [], []>} : vector<128x4xf32>, vector<4x8xf32>, vector<128x8xf32> -> vector<128x8xf32>
    %89 = arith.addf %83, %88 : vector<128x8xf32>
    %c0_52 = arith.constant 0 : index
    %c34 = arith.constant 34 : index
    %c0_53 = arith.constant 0 : index
    %90 = vector.load %arg1[%c0_52, %c34, %c0_53] : memref<1x162x4xf32, #tpu.memory_space<vmem>>, vector<1x128x4xf32>
    %91 = vector.shape_cast %90 : vector<1x128x4xf32> to vector<128x4xf32>
    %c8 = arith.constant 8 : index
    %c0_54 = arith.constant 0 : index
    %c0_55 = arith.constant 0 : index
    %92 = vector.load %arg2[%c8, %c0_54, %c0_55] : memref<9x4x8xf32, #tpu.memory_space<vmem>>, vector<1x4x8xf32>
    %93 = vector.shape_cast %92 : vector<1x4x8xf32> to vector<4x8xf32>
    %cst_56 = arith.constant dense<0.000000e+00> : vector<128x8xf32>
    %94 = tpu.matmul %91, %93, %cst_56 {dimension_numbers = #tpu.dot_dimension_numbers<[1], [0], [0], [1], [0, 0, 1, 1], [], []>} : vector<128x4xf32>, vector<4x8xf32>, vector<128x8xf32> -> vector<128x8xf32>
    %cst_57 = arith.constant 0.000000e+00 : f32
    %95 = vector.shape_cast %20 : vector<128x1xi1> to vector<128x1xi1>
    %96 = vector.broadcast %95 : vector<128x1xi1> to vector<128x8xi1>
    %97 = vector.broadcast %cst_57 : f32 to vector<128x8xf32>
    %98 = arith.select %96, %94, %97 : vector<128x8xi1>, vector<128x8xf32>
    %99 = arith.addf %89, %98 : vector<128x8xf32>
    %c0_58 = arith.constant 0 : index
    %c0_59 = arith.constant 0 : index
    %100 = vector.load %arg3[%c0_58, %c0_59] : memref<1x8xf32, #tpu.memory_space<vmem>>, vector<1x8xf32>
    %101 = vector.broadcast %100 : vector<1x8xf32> to vector<128x8xf32>
    %102 = arith.addf %99, %101 : vector<128x8xf32>
    %103 = math.exp %102 : vector<128x8xf32>
    %cst_60 = arith.constant 2.000000e+00 : f32
    %104 = vector.broadcast %cst_60 : f32 to vector<128x8xf32>
    %105 = arith.addf %103, %104 : vector<128x8xf32>
    %106 = arith.mulf %103, %105 : vector<128x8xf32>
    %cst_61 = arith.constant 2.000000e+00 : f32
    %107 = vector.broadcast %cst_61 : f32 to vector<128x8xf32>
    %108 = arith.addf %106, %107 : vector<128x8xf32>
    %109 = tpu.reciprocal %108 {approx = true} : vector<128x8xf32> -> vector<128x8xf32>
    %110 = arith.mulf %106, %109 : vector<128x8xf32>
    %cst_62 = arith.constant 2.000000e+01 : f32
    %111 = vector.broadcast %cst_62 : f32 to vector<128x8xf32>
    %112 = arith.cmpf ogt, %102, %111 : vector<128x8xf32>
    %113 = arith.mulf %102, %110 : vector<128x8xf32>
    %114 = arith.select %112, %102, %113 : vector<128x8xi1>, vector<128x8xf32>
    %c0_63 = arith.constant 0 : index
    %c0_64 = arith.constant 0 : index
    %c0_65 = arith.constant 0 : index
    %115 = vector.load %arg4[%c0_63, %c0_64, %c0_65] : memref<1x128x8xf32, #tpu.memory_space<vmem>>, vector<1x128x8xf32>
    %116 = vector.shape_cast %115 : vector<1x128x8xf32> to vector<128x8xf32>
    %117 = vector.shape_cast %114 : vector<128x8xf32> to vector<1x128x8xf32>
    tpu.vector_store %arg4[%c0_63, %c0_64, %c0_65], %117 {strides = array<i32>} : memref<1x128x8xf32, #tpu.memory_space<vmem>>, vector<1x128x8xf32>,
    return
  }
  func.func @transform_0(%arg0: i32) -> (i32, i32, i32) {
    %c0_i32 = arith.constant 0 : i32
    %c0_i32_0 = arith.constant 0 : i32
    %c0_i32_1 = arith.constant 0 : i32
    return %arg0, %c0_i32, %c0_i32_0 : i32, i32, i32
  }
  func.func @transform_1(%arg0: i32) -> (i32, i32, i32) {
    %c0_i32 = arith.constant 0 : i32
    %c0_i32_0 = arith.constant 0 : i32
    %c0_i32_1 = arith.constant 0 : i32
    %c0_i32_2 = arith.constant 0 : i32
    return %c0_i32, %c0_i32_0, %c0_i32_1 : i32, i32, i32
  }
  func.func @transform_2(%arg0: i32) -> (i32, i32) {
    %c0_i32 = arith.constant 0 : i32
    %c0_i32_0 = arith.constant 0 : i32
    %c0_i32_1 = arith.constant 0 : i32
    return %c0_i32, %c0_i32_0 : i32, i32
  }
  func.func @transform_3(%arg0: i32) -> (i32, i32, i32) {
    %c0_i32 = arith.constant 0 : i32
    %c0_i32_0 = arith.constant 0 : i32
    %c0_i32_1 = arith.constant 0 : i32
    return %arg0, %c0_i32, %c0_i32_0 : i32, i32, i32
  }
}

module attributes {stable_mosaic.version = 11 : i64} {
  func.func @_conv3x3_bn_mish_kernel(%arg0: i32, %arg1: memref<1x162x4xf32, #tpu.memory_space<vmem>>, %arg2: memref<9x4x4xf32, #tpu.memory_space<vmem>>, %arg3: memref<1x4xf32, #tpu.memory_space<vmem>>, %arg4: memref<1x128x4xf32, #tpu.memory_space<vmem>>) attributes {dimension_semantics = [#tpu.dimension_semantics<parallel>], iteration_bounds = array<i64: 4>, scalar_prefetch = 0 : i64, scratch_operands = 0 : i64, tpu.core_type = #tpu.core_type<tc>, window_params = [{transform_indices = @transform_0, window_bounds = array<i64: 1, 162, 4>}, {pipeline_mode = #tpu.pipeline_mode<synchronous>, transform_indices = @transform_1, window_bounds = array<i64: 9, 4, 4>}, {pipeline_mode = #tpu.pipeline_mode<synchronous>, transform_indices = @transform_2, window_bounds = array<i64: 1, 4>}, {transform_indices = @transform_3, window_bounds = array<i64: 1, 128, 4>}]} {
    %0 = tpu.iota {dimensions = array<i32: 0>} : vector<128x1xi32>
    %c16_i32 = arith.constant 16 : i32
    %c0_i32 = arith.constant 0 : i32
    %1 = arith.cmpi eq, %c16_i32, %c0_i32 : i32
    %c1_i32 = arith.constant 1 : i32
    %2 = arith.select %1, %c1_i32, %c16_i32 : i32
    %3 = vector.broadcast %2 : i32 to vector<128x1xi32>
    %4 = arith.remsi %0, %3 : vector<128x1xi32>
    %c0_i32_0 = arith.constant 0 : i32
    %5 = vector.broadcast %c0_i32_0 : i32 to vector<128x1xi32>
    %6 = arith.cmpi ne, %4, %5 : vector<128x1xi32>
    %c0_i32_1 = arith.constant 0 : i32
    %7 = vector.broadcast %c0_i32_1 : i32 to vector<128x1xi32>
    %8 = arith.cmpi slt, %4, %7 : vector<128x1xi32>
    %c0_i32_2 = arith.constant 0 : i32
    %9 = arith.cmpi slt, %2, %c0_i32_2 : i32
    %10 = vector.broadcast %9 : i1 to vector<128x1xi1>
    %11 = vector.broadcast %10 : vector<128x1xi1> to vector<128x1xi1>
    %12 = arith.xori %8, %11 : vector<128x1xi1>
    %13 = arith.andi %12, %6 : vector<128x1xi1>
    %14 = vector.broadcast %2 : i32 to vector<128x1xi32>
    %15 = arith.addi %4, %14 : vector<128x1xi32>
    %16 = arith.select %13, %15, %4 : vector<128x1xi1>, vector<128x1xi32>
    %c0_i32_3 = arith.constant 0 : i32
    %17 = vector.broadcast %c0_i32_3 : i32 to vector<128x1xi32>
    %18 = arith.cmpi ne, %16, %17 : vector<128x1xi32>
    %c15_i32 = arith.constant 15 : i32
    %19 = vector.broadcast %c15_i32 : i32 to vector<128x1xi32>
    %20 = arith.cmpi ne, %16, %19 : vector<128x1xi32>
    %cst = arith.constant 0.000000e+00 : f32
    %21 = vector.broadcast %cst : f32 to vector<128x4xf32>
    %c0 = arith.constant 0 : index
    %c0_4 = arith.constant 0 : index
    %c0_5 = arith.constant 0 : index
    %22 = vector.load %arg1[%c0, %c0_4, %c0_5] : memref<1x162x4xf32, #tpu.memory_space<vmem>>, vector<1x128x4xf32>
    %23 = vector.shape_cast %22 : vector<1x128x4xf32> to vector<128x4xf32>
    %c0_6 = arith.constant 0 : index
    %c0_7 = arith.constant 0 : index
    %c0_8 = arith.constant 0 : index
    %24 = vector.load %arg2[%c0_6, %c0_7, %c0_8] : memref<9x4x4xf32, #tpu.memory_space<vmem>>, vector<1x4x4xf32>
    %25 = vector.shape_cast %24 : vector<1x4x4xf32> to vector<4x4xf32>
    %cst_9 = arith.constant dense<0.000000e+00> : vector<128x4xf32>
    %26 = tpu.matmul %23, %25, %cst_9 {dimension_numbers = #tpu.dot_dimension_numbers<[1], [0], [0], [1], [0, 0, 1, 1], [], []>} : vector<128x4xf32>, vector<4x4xf32>, vector<128x4xf32> -> vector<128x4xf32>
    %cst_10 = arith.constant 0.000000e+00 : f32
    %27 = vector.shape_cast %18 : vector<128x1xi1> to vector<128x1xi1>
    %28 = vector.broadcast %27 : vector<128x1xi1> to vector<128x4xi1>
    %29 = vector.broadcast %cst_10 : f32 to vector<128x4xf32>
    %30 = arith.select %28, %26, %29 : vector<128x4xi1>, vector<128x4xf32>
    %31 = arith.addf %21, %30 : vector<128x4xf32>
    %c0_11 = arith.constant 0 : index
    %c1 = arith.constant 1 : index
    %c0_12 = arith.constant 0 : index
    %32 = vector.load %arg1[%c0_11, %c1, %c0_12] : memref<1x162x4xf32, #tpu.memory_space<vmem>>, vector<1x128x4xf32>
    %33 = vector.shape_cast %32 : vector<1x128x4xf32> to vector<128x4xf32>
    %c1_13 = arith.constant 1 : index
    %c0_14 = arith.constant 0 : index
    %c0_15 = arith.constant 0 : index
    %34 = vector.load %arg2[%c1_13, %c0_14, %c0_15] : memref<9x4x4xf32, #tpu.memory_space<vmem>>, vector<1x4x4xf32>
    %35 = vector.shape_cast %34 : vector<1x4x4xf32> to vector<4x4xf32>
    %cst_16 = arith.constant dense<0.000000e+00> : vector<128x4xf32>
    %36 = tpu.matmul %33, %35, %cst_16 {dimension_numbers = #tpu.dot_dimension_numbers<[1], [0], [0], [1], [0, 0, 1, 1], [], []>} : vector<128x4xf32>, vector<4x4xf32>, vector<128x4xf32> -> vector<128x4xf32>
    %37 = arith.addf %31, %36 : vector<128x4xf32>
    %c0_17 = arith.constant 0 : index
    %c2 = arith.constant 2 : index
    %c0_18 = arith.constant 0 : index
    %38 = vector.load %arg1[%c0_17, %c2, %c0_18] : memref<1x162x4xf32, #tpu.memory_space<vmem>>, vector<1x128x4xf32>
    %39 = vector.shape_cast %38 : vector<1x128x4xf32> to vector<128x4xf32>
    %c2_19 = arith.constant 2 : index
    %c0_20 = arith.constant 0 : index
    %c0_21 = arith.constant 0 : index
    %40 = vector.load %arg2[%c2_19, %c0_20, %c0_21] : memref<9x4x4xf32, #tpu.memory_space<vmem>>, vector<1x4x4xf32>
    %41 = vector.shape_cast %40 : vector<1x4x4xf32> to vector<4x4xf32>
    %cst_22 = arith.constant dense<0.000000e+00> : vector<128x4xf32>
    %42 = tpu.matmul %39, %41, %cst_22 {dimension_numbers = #tpu.dot_dimension_numbers<[1], [0], [0], [1], [0, 0, 1, 1], [], []>} : vector<128x4xf32>, vector<4x4xf32>, vector<128x4xf32> -> vector<128x4xf32>
    %cst_23 = arith.constant 0.000000e+00 : f32
    %43 = vector.shape_cast %20 : vector<128x1xi1> to vector<128x1xi1>
    %44 = vector.broadcast %43 : vector<128x1xi1> to vector<128x4xi1>
    %45 = vector.broadcast %cst_23 : f32 to vector<128x4xf32>
    %46 = arith.select %44, %42, %45 : vector<128x4xi1>, vector<128x4xf32>
    %47 = arith.addf %37, %46 : vector<128x4xf32>
    %c0_24 = arith.constant 0 : index
    %c16 = arith.constant 16 : index
    %c0_25 = arith.constant 0 : index
    %48 = vector.load %arg1[%c0_24, %c16, %c0_25] : memref<1x162x4xf32, #tpu.memory_space<vmem>>, vector<1x128x4xf32>
    %49 = vector.shape_cast %48 : vector<1x128x4xf32> to vector<128x4xf32>
    %c3 = arith.constant 3 : index
    %c0_26 = arith.constant 0 : index
    %c0_27 = arith.constant 0 : index
    %50 = vector.load %arg2[%c3, %c0_26, %c0_27] : memref<9x4x4xf32, #tpu.memory_space<vmem>>, vector<1x4x4xf32>
    %51 = vector.shape_cast %50 : vector<1x4x4xf32> to vector<4x4xf32>
    %cst_28 = arith.constant dense<0.000000e+00> : vector<128x4xf32>
    %52 = tpu.matmul %49, %51, %cst_28 {dimension_numbers = #tpu.dot_dimension_numbers<[1], [0], [0], [1], [0, 0, 1, 1], [], []>} : vector<128x4xf32>, vector<4x4xf32>, vector<128x4xf32> -> vector<128x4xf32>
    %cst_29 = arith.constant 0.000000e+00 : f32
    %53 = vector.shape_cast %18 : vector<128x1xi1> to vector<128x1xi1>
    %54 = vector.broadcast %53 : vector<128x1xi1> to vector<128x4xi1>
    %55 = vector.broadcast %cst_29 : f32 to vector<128x4xf32>
    %56 = arith.select %54, %52, %55 : vector<128x4xi1>, vector<128x4xf32>
    %57 = arith.addf %47, %56 : vector<128x4xf32>
    %c0_30 = arith.constant 0 : index
    %c17 = arith.constant 17 : index
    %c0_31 = arith.constant 0 : index
    %58 = vector.load %arg1[%c0_30, %c17, %c0_31] : memref<1x162x4xf32, #tpu.memory_space<vmem>>, vector<1x128x4xf32>
    %59 = vector.shape_cast %58 : vector<1x128x4xf32> to vector<128x4xf32>
    %c4 = arith.constant 4 : index
    %c0_32 = arith.constant 0 : index
    %c0_33 = arith.constant 0 : index
    %60 = vector.load %arg2[%c4, %c0_32, %c0_33] : memref<9x4x4xf32, #tpu.memory_space<vmem>>, vector<1x4x4xf32>
    %61 = vector.shape_cast %60 : vector<1x4x4xf32> to vector<4x4xf32>
    %cst_34 = arith.constant dense<0.000000e+00> : vector<128x4xf32>
    %62 = tpu.matmul %59, %61, %cst_34 {dimension_numbers = #tpu.dot_dimension_numbers<[1], [0], [0], [1], [0, 0, 1, 1], [], []>} : vector<128x4xf32>, vector<4x4xf32>, vector<128x4xf32> -> vector<128x4xf32>
    %63 = arith.addf %57, %62 : vector<128x4xf32>
    %c0_35 = arith.constant 0 : index
    %c18 = arith.constant 18 : index
    %c0_36 = arith.constant 0 : index
    %64 = vector.load %arg1[%c0_35, %c18, %c0_36] : memref<1x162x4xf32, #tpu.memory_space<vmem>>, vector<1x128x4xf32>
    %65 = vector.shape_cast %64 : vector<1x128x4xf32> to vector<128x4xf32>
    %c5 = arith.constant 5 : index
    %c0_37 = arith.constant 0 : index
    %c0_38 = arith.constant 0 : index
    %66 = vector.load %arg2[%c5, %c0_37, %c0_38] : memref<9x4x4xf32, #tpu.memory_space<vmem>>, vector<1x4x4xf32>
    %67 = vector.shape_cast %66 : vector<1x4x4xf32> to vector<4x4xf32>
    %cst_39 = arith.constant dense<0.000000e+00> : vector<128x4xf32>
    %68 = tpu.matmul %65, %67, %cst_39 {dimension_numbers = #tpu.dot_dimension_numbers<[1], [0], [0], [1], [0, 0, 1, 1], [], []>} : vector<128x4xf32>, vector<4x4xf32>, vector<128x4xf32> -> vector<128x4xf32>
    %cst_40 = arith.constant 0.000000e+00 : f32
    %69 = vector.shape_cast %20 : vector<128x1xi1> to vector<128x1xi1>
    %70 = vector.broadcast %69 : vector<128x1xi1> to vector<128x4xi1>
    %71 = vector.broadcast %cst_40 : f32 to vector<128x4xf32>
    %72 = arith.select %70, %68, %71 : vector<128x4xi1>, vector<128x4xf32>
    %73 = arith.addf %63, %72 : vector<128x4xf32>
    %c0_41 = arith.constant 0 : index
    %c32 = arith.constant 32 : index
    %c0_42 = arith.constant 0 : index
    %74 = vector.load %arg1[%c0_41, %c32, %c0_42] : memref<1x162x4xf32, #tpu.memory_space<vmem>>, vector<1x128x4xf32>
    %75 = vector.shape_cast %74 : vector<1x128x4xf32> to vector<128x4xf32>
    %c6 = arith.constant 6 : index
    %c0_43 = arith.constant 0 : index
    %c0_44 = arith.constant 0 : index
    %76 = vector.load %arg2[%c6, %c0_43, %c0_44] : memref<9x4x4xf32, #tpu.memory_space<vmem>>, vector<1x4x4xf32>
    %77 = vector.shape_cast %76 : vector<1x4x4xf32> to vector<4x4xf32>
    %cst_45 = arith.constant dense<0.000000e+00> : vector<128x4xf32>
    %78 = tpu.matmul %75, %77, %cst_45 {dimension_numbers = #tpu.dot_dimension_numbers<[1], [0], [0], [1], [0, 0, 1, 1], [], []>} : vector<128x4xf32>, vector<4x4xf32>, vector<128x4xf32> -> vector<128x4xf32>
    %cst_46 = arith.constant 0.000000e+00 : f32
    %79 = vector.shape_cast %18 : vector<128x1xi1> to vector<128x1xi1>
    %80 = vector.broadcast %79 : vector<128x1xi1> to vector<128x4xi1>
    %81 = vector.broadcast %cst_46 : f32 to vector<128x4xf32>
    %82 = arith.select %80, %78, %81 : vector<128x4xi1>, vector<128x4xf32>
    %83 = arith.addf %73, %82 : vector<128x4xf32>
    %c0_47 = arith.constant 0 : index
    %c33 = arith.constant 33 : index
    %c0_48 = arith.constant 0 : index
    %84 = vector.load %arg1[%c0_47, %c33, %c0_48] : memref<1x162x4xf32, #tpu.memory_space<vmem>>, vector<1x128x4xf32>
    %85 = vector.shape_cast %84 : vector<1x128x4xf32> to vector<128x4xf32>
    %c7 = arith.constant 7 : index
    %c0_49 = arith.constant 0 : index
    %c0_50 = arith.constant 0 : index
    %86 = vector.load %arg2[%c7, %c0_49, %c0_50] : memref<9x4x4xf32, #tpu.memory_space<vmem>>, vector<1x4x4xf32>
    %87 = vector.shape_cast %86 : vector<1x4x4xf32> to vector<4x4xf32>
    %cst_51 = arith.constant dense<0.000000e+00> : vector<128x4xf32>
    %88 = tpu.matmul %85, %87, %cst_51 {dimension_numbers = #tpu.dot_dimension_numbers<[1], [0], [0], [1], [0, 0, 1, 1], [], []>} : vector<128x4xf32>, vector<4x4xf32>, vector<128x4xf32> -> vector<128x4xf32>
    %89 = arith.addf %83, %88 : vector<128x4xf32>
    %c0_52 = arith.constant 0 : index
    %c34 = arith.constant 34 : index
    %c0_53 = arith.constant 0 : index
    %90 = vector.load %arg1[%c0_52, %c34, %c0_53] : memref<1x162x4xf32, #tpu.memory_space<vmem>>, vector<1x128x4xf32>
    %91 = vector.shape_cast %90 : vector<1x128x4xf32> to vector<128x4xf32>
    %c8 = arith.constant 8 : index
    %c0_54 = arith.constant 0 : index
    %c0_55 = arith.constant 0 : index
    %92 = vector.load %arg2[%c8, %c0_54, %c0_55] : memref<9x4x4xf32, #tpu.memory_space<vmem>>, vector<1x4x4xf32>
    %93 = vector.shape_cast %92 : vector<1x4x4xf32> to vector<4x4xf32>
    %cst_56 = arith.constant dense<0.000000e+00> : vector<128x4xf32>
    %94 = tpu.matmul %91, %93, %cst_56 {dimension_numbers = #tpu.dot_dimension_numbers<[1], [0], [0], [1], [0, 0, 1, 1], [], []>} : vector<128x4xf32>, vector<4x4xf32>, vector<128x4xf32> -> vector<128x4xf32>
    %cst_57 = arith.constant 0.000000e+00 : f32
    %95 = vector.shape_cast %20 : vector<128x1xi1> to vector<128x1xi1>
    %96 = vector.broadcast %95 : vector<128x1xi1> to vector<128x4xi1>
    %97 = vector.broadcast %cst_57 : f32 to vector<128x4xf32>
    %98 = arith.select %96, %94, %97 : vector<128x4xi1>, vector<128x4xf32>
    %99 = arith.addf %89, %98 : vector<128x4xf32>
    %c0_58 = arith.constant 0 : index
    %c0_59 = arith.constant 0 : index
    %100 = vector.load %arg3[%c0_58, %c0_59] : memref<1x4xf32, #tpu.memory_space<vmem>>, vector<1x4xf32>
    %101 = vector.broadcast %100 : vector<1x4xf32> to vector<128x4xf32>
    %102 = arith.addf %99, %101 : vector<128x4xf32>
    %103 = math.exp %102 : vector<128x4xf32>
    %cst_60 = arith.constant 2.000000e+00 : f32
    %104 = vector.broadcast %cst_60 : f32 to vector<128x4xf32>
    %105 = arith.addf %103, %104 : vector<128x4xf32>
    %106 = arith.mulf %103, %105 : vector<128x4xf32>
    %cst_61 = arith.constant 2.000000e+00 : f32
    %107 = vector.broadcast %cst_61 : f32 to vector<128x4xf32>
    %108 = arith.addf %106, %107 : vector<128x4xf32>
    %109 = tpu.reciprocal %108 {approx = true} : vector<128x4xf32> -> vector<128x4xf32>
    %110 = arith.mulf %106, %109 : vector<128x4xf32>
    %cst_62 = arith.constant 2.000000e+01 : f32
    %111 = vector.broadcast %cst_62 : f32 to vector<128x4xf32>
    %112 = arith.cmpf ogt, %102, %111 : vector<128x4xf32>
    %113 = arith.mulf %102, %110 : vector<128x4xf32>
    %114 = arith.select %112, %102, %113 : vector<128x4xi1>, vector<128x4xf32>
    %c0_63 = arith.constant 0 : index
    %c0_64 = arith.constant 0 : index
    %c0_65 = arith.constant 0 : index
    %115 = vector.load %arg4[%c0_63, %c0_64, %c0_65] : memref<1x128x4xf32, #tpu.memory_space<vmem>>, vector<1x128x4xf32>
    %116 = vector.shape_cast %115 : vector<1x128x4xf32> to vector<128x4xf32>
    %117 = vector.shape_cast %114 : vector<128x4xf32> to vector<1x128x4xf32>
    tpu.vector_store %arg4[%c0_63, %c0_64, %c0_65], %117 {strides = array<i32>} : memref<1x128x4xf32, #tpu.memory_space<vmem>>, vector<1x128x4xf32>,
    return
  }
  func.func @transform_0(%arg0: i32) -> (i32, i32, i32) {
    %c0_i32 = arith.constant 0 : i32
    %c0_i32_0 = arith.constant 0 : i32
    %c0_i32_1 = arith.constant 0 : i32
    return %arg0, %c0_i32, %c0_i32_0 : i32, i32, i32
  }
  func.func @transform_1(%arg0: i32) -> (i32, i32, i32) {
    %c0_i32 = arith.constant 0 : i32
    %c0_i32_0 = arith.constant 0 : i32
    %c0_i32_1 = arith.constant 0 : i32
    %c0_i32_2 = arith.constant 0 : i32
    return %c0_i32, %c0_i32_0, %c0_i32_1 : i32, i32, i32
  }
  func.func @transform_2(%arg0: i32) -> (i32, i32) {
    %c0_i32 = arith.constant 0 : i32
    %c0_i32_0 = arith.constant 0 : i32
    %c0_i32_1 = arith.constant 0 : i32
    return %c0_i32, %c0_i32_0 : i32, i32
  }
  func.func @transform_3(%arg0: i32) -> (i32, i32, i32) {
    %c0_i32 = arith.constant 0 : i32
    %c0_i32_0 = arith.constant 0 : i32
    %c0_i32_1 = arith.constant 0 : i32
    return %arg0, %c0_i32, %c0_i32_0 : i32, i32, i32
  }
}

module attributes {stable_mosaic.version = 11 : i64} {
  func.func @_tail_kernel(%arg0: i32, %arg1: memref<1x162x4xf32, #tpu.memory_space<vmem>>, %arg2: memref<1x128x8xf32, #tpu.memory_space<vmem>>, %arg3: memref<9x4x4xf32, #tpu.memory_space<vmem>>, %arg4: memref<1x4xf32, #tpu.memory_space<vmem>>, %arg5: memref<4x8xf32, #tpu.memory_space<vmem>>, %arg6: memref<4x8xf32, #tpu.memory_space<vmem>>, %arg7: memref<1x8xf32, #tpu.memory_space<vmem>>, %arg8: memref<1x128x16xf32, #tpu.memory_space<vmem>>) attributes {dimension_semantics = [#tpu.dimension_semantics<parallel>], iteration_bounds = array<i64: 4>, scalar_prefetch = 0 : i64, scratch_operands = 0 : i64, tpu.core_type = #tpu.core_type<tc>, window_params = [{transform_indices = @transform_0, window_bounds = array<i64: 1, 162, 4>}, {transform_indices = @transform_1, window_bounds = array<i64: 1, 128, 8>}, {pipeline_mode = #tpu.pipeline_mode<synchronous>, transform_indices = @transform_2, window_bounds = array<i64: 9, 4, 4>}, {pipeline_mode = #tpu.pipeline_mode<synchronous>, transform_indices = @transform_3, window_bounds = array<i64: 1, 4>}, {pipeline_mode = #tpu.pipeline_mode<synchronous>, transform_indices = @transform_4, window_bounds = array<i64: 4, 8>}, {pipeline_mode = #tpu.pipeline_mode<synchronous>, transform_indices = @transform_5, window_bounds = array<i64: 4, 8>}, {pipeline_mode = #tpu.pipeline_mode<synchronous>, transform_indices = @transform_6, window_bounds = array<i64: 1, 8>}, {transform_indices = @transform_7, window_bounds = array<i64: 1, 128, 16>}]} {
    %0 = tpu.iota {dimensions = array<i32: 0>} : vector<128x1xi32>
    %c16_i32 = arith.constant 16 : i32
    %c0_i32 = arith.constant 0 : i32
    %1 = arith.cmpi eq, %c16_i32, %c0_i32 : i32
    %c1_i32 = arith.constant 1 : i32
    %2 = arith.select %1, %c1_i32, %c16_i32 : i32
    %3 = vector.broadcast %2 : i32 to vector<128x1xi32>
    %4 = arith.remsi %0, %3 : vector<128x1xi32>
    %c0_i32_0 = arith.constant 0 : i32
    %5 = vector.broadcast %c0_i32_0 : i32 to vector<128x1xi32>
    %6 = arith.cmpi ne, %4, %5 : vector<128x1xi32>
    %c0_i32_1 = arith.constant 0 : i32
    %7 = vector.broadcast %c0_i32_1 : i32 to vector<128x1xi32>
    %8 = arith.cmpi slt, %4, %7 : vector<128x1xi32>
    %c0_i32_2 = arith.constant 0 : i32
    %9 = arith.cmpi slt, %2, %c0_i32_2 : i32
    %10 = vector.broadcast %9 : i1 to vector<128x1xi1>
    %11 = vector.broadcast %10 : vector<128x1xi1> to vector<128x1xi1>
    %12 = arith.xori %8, %11 : vector<128x1xi1>
    %13 = arith.andi %12, %6 : vector<128x1xi1>
    %14 = vector.broadcast %2 : i32 to vector<128x1xi32>
    %15 = arith.addi %4, %14 : vector<128x1xi32>
    %16 = arith.select %13, %15, %4 : vector<128x1xi1>, vector<128x1xi32>
    %c0_i32_3 = arith.constant 0 : i32
    %17 = vector.broadcast %c0_i32_3 : i32 to vector<128x1xi32>
    %18 = arith.cmpi ne, %16, %17 : vector<128x1xi32>
    %c15_i32 = arith.constant 15 : i32
    %19 = vector.broadcast %c15_i32 : i32 to vector<128x1xi32>
    %20 = arith.cmpi ne, %16, %19 : vector<128x1xi32>
    %cst = arith.constant 0.000000e+00 : f32
    %21 = vector.broadcast %cst : f32 to vector<128x4xf32>
    %c0 = arith.constant 0 : index
    %c0_4 = arith.constant 0 : index
    %c0_5 = arith.constant 0 : index
    %22 = vector.load %arg1[%c0, %c0_4, %c0_5] : memref<1x162x4xf32, #tpu.memory_space<vmem>>, vector<1x128x4xf32>
    %23 = vector.shape_cast %22 : vector<1x128x4xf32> to vector<128x4xf32>
    %c0_6 = arith.constant 0 : index
    %c0_7 = arith.constant 0 : index
    %c0_8 = arith.constant 0 : index
    %24 = vector.load %arg3[%c0_6, %c0_7, %c0_8] : memref<9x4x4xf32, #tpu.memory_space<vmem>>, vector<1x4x4xf32>
    %25 = vector.shape_cast %24 : vector<1x4x4xf32> to vector<4x4xf32>
    %cst_9 = arith.constant dense<0.000000e+00> : vector<128x4xf32>
    %26 = tpu.matmul %23, %25, %cst_9 {dimension_numbers = #tpu.dot_dimension_numbers<[1], [0], [0], [1], [0, 0, 1, 1], [], []>} : vector<128x4xf32>, vector<4x4xf32>, vector<128x4xf32> -> vector<128x4xf32>
    %cst_10 = arith.constant 0.000000e+00 : f32
    %27 = vector.shape_cast %18 : vector<128x1xi1> to vector<128x1xi1>
    %28 = vector.broadcast %27 : vector<128x1xi1> to vector<128x4xi1>
    %29 = vector.broadcast %cst_10 : f32 to vector<128x4xf32>
    %30 = arith.select %28, %26, %29 : vector<128x4xi1>, vector<128x4xf32>
    %31 = arith.addf %21, %30 : vector<128x4xf32>
    %c0_11 = arith.constant 0 : index
    %c1 = arith.constant 1 : index
    %c0_12 = arith.constant 0 : index
    %32 = vector.load %arg1[%c0_11, %c1, %c0_12] : memref<1x162x4xf32, #tpu.memory_space<vmem>>, vector<1x128x4xf32>
    %33 = vector.shape_cast %32 : vector<1x128x4xf32> to vector<128x4xf32>
    %c1_13 = arith.constant 1 : index
    %c0_14 = arith.constant 0 : index
    %c0_15 = arith.constant 0 : index
    %34 = vector.load %arg3[%c1_13, %c0_14, %c0_15] : memref<9x4x4xf32, #tpu.memory_space<vmem>>, vector<1x4x4xf32>
    %35 = vector.shape_cast %34 : vector<1x4x4xf32> to vector<4x4xf32>
    %cst_16 = arith.constant dense<0.000000e+00> : vector<128x4xf32>
    %36 = tpu.matmul %33, %35, %cst_16 {dimension_numbers = #tpu.dot_dimension_numbers<[1], [0], [0], [1], [0, 0, 1, 1], [], []>} : vector<128x4xf32>, vector<4x4xf32>, vector<128x4xf32> -> vector<128x4xf32>
    %37 = arith.addf %31, %36 : vector<128x4xf32>
    %c0_17 = arith.constant 0 : index
    %c2 = arith.constant 2 : index
    %c0_18 = arith.constant 0 : index
    %38 = vector.load %arg1[%c0_17, %c2, %c0_18] : memref<1x162x4xf32, #tpu.memory_space<vmem>>, vector<1x128x4xf32>
    %39 = vector.shape_cast %38 : vector<1x128x4xf32> to vector<128x4xf32>
    %c2_19 = arith.constant 2 : index
    %c0_20 = arith.constant 0 : index
    %c0_21 = arith.constant 0 : index
    %40 = vector.load %arg3[%c2_19, %c0_20, %c0_21] : memref<9x4x4xf32, #tpu.memory_space<vmem>>, vector<1x4x4xf32>
    %41 = vector.shape_cast %40 : vector<1x4x4xf32> to vector<4x4xf32>
    %cst_22 = arith.constant dense<0.000000e+00> : vector<128x4xf32>
    %42 = tpu.matmul %39, %41, %cst_22 {dimension_numbers = #tpu.dot_dimension_numbers<[1], [0], [0], [1], [0, 0, 1, 1], [], []>} : vector<128x4xf32>, vector<4x4xf32>, vector<128x4xf32> -> vector<128x4xf32>
    %cst_23 = arith.constant 0.000000e+00 : f32
    %43 = vector.shape_cast %20 : vector<128x1xi1> to vector<128x1xi1>
    %44 = vector.broadcast %43 : vector<128x1xi1> to vector<128x4xi1>
    %45 = vector.broadcast %cst_23 : f32 to vector<128x4xf32>
    %46 = arith.select %44, %42, %45 : vector<128x4xi1>, vector<128x4xf32>
    %47 = arith.addf %37, %46 : vector<128x4xf32>
    %c0_24 = arith.constant 0 : index
    %c16 = arith.constant 16 : index
    %c0_25 = arith.constant 0 : index
    %48 = vector.load %arg1[%c0_24, %c16, %c0_25] : memref<1x162x4xf32, #tpu.memory_space<vmem>>, vector<1x128x4xf32>
    %49 = vector.shape_cast %48 : vector<1x128x4xf32> to vector<128x4xf32>
    %c3 = arith.constant 3 : index
    %c0_26 = arith.constant 0 : index
    %c0_27 = arith.constant 0 : index
    %50 = vector.load %arg3[%c3, %c0_26, %c0_27] : memref<9x4x4xf32, #tpu.memory_space<vmem>>, vector<1x4x4xf32>
    %51 = vector.shape_cast %50 : vector<1x4x4xf32> to vector<4x4xf32>
    %cst_28 = arith.constant dense<0.000000e+00> : vector<128x4xf32>
    %52 = tpu.matmul %49, %51, %cst_28 {dimension_numbers = #tpu.dot_dimension_numbers<[1], [0], [0], [1], [0, 0, 1, 1], [], []>} : vector<128x4xf32>, vector<4x4xf32>, vector<128x4xf32> -> vector<128x4xf32>
    %cst_29 = arith.constant 0.000000e+00 : f32
    %53 = vector.shape_cast %18 : vector<128x1xi1> to vector<128x1xi1>
    %54 = vector.broadcast %53 : vector<128x1xi1> to vector<128x4xi1>
    %55 = vector.broadcast %cst_29 : f32 to vector<128x4xf32>
    %56 = arith.select %54, %52, %55 : vector<128x4xi1>, vector<128x4xf32>
    %57 = arith.addf %47, %56 : vector<128x4xf32>
    %c0_30 = arith.constant 0 : index
    %c17 = arith.constant 17 : index
    %c0_31 = arith.constant 0 : index
    %58 = vector.load %arg1[%c0_30, %c17, %c0_31] : memref<1x162x4xf32, #tpu.memory_space<vmem>>, vector<1x128x4xf32>
    %59 = vector.shape_cast %58 : vector<1x128x4xf32> to vector<128x4xf32>
    %c4 = arith.constant 4 : index
    %c0_32 = arith.constant 0 : index
    %c0_33 = arith.constant 0 : index
    %60 = vector.load %arg3[%c4, %c0_32, %c0_33] : memref<9x4x4xf32, #tpu.memory_space<vmem>>, vector<1x4x4xf32>
    %61 = vector.shape_cast %60 : vector<1x4x4xf32> to vector<4x4xf32>
    %cst_34 = arith.constant dense<0.000000e+00> : vector<128x4xf32>
    %62 = tpu.matmul %59, %61, %cst_34 {dimension_numbers = #tpu.dot_dimension_numbers<[1], [0], [0], [1], [0, 0, 1, 1], [], []>} : vector<128x4xf32>, vector<4x4xf32>, vector<128x4xf32> -> vector<128x4xf32>
    %63 = arith.addf %57, %62 : vector<128x4xf32>
    %c0_35 = arith.constant 0 : index
    %c18 = arith.constant 18 : index
    %c0_36 = arith.constant 0 : index
    %64 = vector.load %arg1[%c0_35, %c18, %c0_36] : memref<1x162x4xf32, #tpu.memory_space<vmem>>, vector<1x128x4xf32>
    %65 = vector.shape_cast %64 : vector<1x128x4xf32> to vector<128x4xf32>
    %c5 = arith.constant 5 : index
    %c0_37 = arith.constant 0 : index
    %c0_38 = arith.constant 0 : index
    %66 = vector.load %arg3[%c5, %c0_37, %c0_38] : memref<9x4x4xf32, #tpu.memory_space<vmem>>, vector<1x4x4xf32>
    %67 = vector.shape_cast %66 : vector<1x4x4xf32> to vector<4x4xf32>
    %cst_39 = arith.constant dense<0.000000e+00> : vector<128x4xf32>
    %68 = tpu.matmul %65, %67, %cst_39 {dimension_numbers = #tpu.dot_dimension_numbers<[1], [0], [0], [1], [0, 0, 1, 1], [], []>} : vector<128x4xf32>, vector<4x4xf32>, vector<128x4xf32> -> vector<128x4xf32>
    %cst_40 = arith.constant 0.000000e+00 : f32
    %69 = vector.shape_cast %20 : vector<128x1xi1> to vector<128x1xi1>
    %70 = vector.broadcast %69 : vector<128x1xi1> to vector<128x4xi1>
    %71 = vector.broadcast %cst_40 : f32 to vector<128x4xf32>
    %72 = arith.select %70, %68, %71 : vector<128x4xi1>, vector<128x4xf32>
    %73 = arith.addf %63, %72 : vector<128x4xf32>
    %c0_41 = arith.constant 0 : index
    %c32 = arith.constant 32 : index
    %c0_42 = arith.constant 0 : index
    %74 = vector.load %arg1[%c0_41, %c32, %c0_42] : memref<1x162x4xf32, #tpu.memory_space<vmem>>, vector<1x128x4xf32>
    %75 = vector.shape_cast %74 : vector<1x128x4xf32> to vector<128x4xf32>
    %c6 = arith.constant 6 : index
    %c0_43 = arith.constant 0 : index
    %c0_44 = arith.constant 0 : index
    %76 = vector.load %arg3[%c6, %c0_43, %c0_44] : memref<9x4x4xf32, #tpu.memory_space<vmem>>, vector<1x4x4xf32>
    %77 = vector.shape_cast %76 : vector<1x4x4xf32> to vector<4x4xf32>
    %cst_45 = arith.constant dense<0.000000e+00> : vector<128x4xf32>
    %78 = tpu.matmul %75, %77, %cst_45 {dimension_numbers = #tpu.dot_dimension_numbers<[1], [0], [0], [1], [0, 0, 1, 1], [], []>} : vector<128x4xf32>, vector<4x4xf32>, vector<128x4xf32> -> vector<128x4xf32>
    %cst_46 = arith.constant 0.000000e+00 : f32
    %79 = vector.shape_cast %18 : vector<128x1xi1> to vector<128x1xi1>
    %80 = vector.broadcast %79 : vector<128x1xi1> to vector<128x4xi1>
    %81 = vector.broadcast %cst_46 : f32 to vector<128x4xf32>
    %82 = arith.select %80, %78, %81 : vector<128x4xi1>, vector<128x4xf32>
    %83 = arith.addf %73, %82 : vector<128x4xf32>
    %c0_47 = arith.constant 0 : index
    %c33 = arith.constant 33 : index
    %c0_48 = arith.constant 0 : index
    %84 = vector.load %arg1[%c0_47, %c33, %c0_48] : memref<1x162x4xf32, #tpu.memory_space<vmem>>, vector<1x128x4xf32>
    %85 = vector.shape_cast %84 : vector<1x128x4xf32> to vector<128x4xf32>
    %c7 = arith.constant 7 : index
    %c0_49 = arith.constant 0 : index
    %c0_50 = arith.constant 0 : index
    %86 = vector.load %arg3[%c7, %c0_49, %c0_50] : memref<9x4x4xf32, #tpu.memory_space<vmem>>, vector<1x4x4xf32>
    %87 = vector.shape_cast %86 : vector<1x4x4xf32> to vector<4x4xf32>
    %cst_51 = arith.constant dense<0.000000e+00> : vector<128x4xf32>
    %88 = tpu.matmul %85, %87, %cst_51 {dimension_numbers = #tpu.dot_dimension_numbers<[1], [0], [0], [1], [0, 0, 1, 1], [], []>} : vector<128x4xf32>, vector<4x4xf32>, vector<128x4xf32> -> vector<128x4xf32>
    %89 = arith.addf %83, %88 : vector<128x4xf32>
    %c0_52 = arith.constant 0 : index
    %c34 = arith.constant 34 : index
    %c0_53 = arith.constant 0 : index
    %90 = vector.load %arg1[%c0_52, %c34, %c0_53] : memref<1x162x4xf32, #tpu.memory_space<vmem>>, vector<1x128x4xf32>
    %91 = vector.shape_cast %90 : vector<1x128x4xf32> to vector<128x4xf32>
    %c8 = arith.constant 8 : index
    %c0_54 = arith.constant 0 : index
    %c0_55 = arith.constant 0 : index
    %92 = vector.load %arg3[%c8, %c0_54, %c0_55] : memref<9x4x4xf32, #tpu.memory_space<vmem>>, vector<1x4x4xf32>
    %93 = vector.shape_cast %92 : vector<1x4x4xf32> to vector<4x4xf32>
    %cst_56 = arith.constant dense<0.000000e+00> : vector<128x4xf32>
    %94 = tpu.matmul %91, %93, %cst_56 {dimension_numbers = #tpu.dot_dimension_numbers<[1], [0], [0], [1], [0, 0, 1, 1], [], []>} : vector<128x4xf32>, vector<4x4xf32>, vector<128x4xf32> -> vector<128x4xf32>
    %cst_57 = arith.constant 0.000000e+00 : f32
    %95 = vector.shape_cast %20 : vector<128x1xi1> to vector<128x1xi1>
    %96 = vector.broadcast %95 : vector<128x1xi1> to vector<128x4xi1>
    %97 = vector.broadcast %cst_57 : f32 to vector<128x4xf32>
    %98 = arith.select %96, %94, %97 : vector<128x4xi1>, vector<128x4xf32>
    %99 = arith.addf %89, %98 : vector<128x4xf32>
    %c0_58 = arith.constant 0 : index
    %c0_59 = arith.constant 0 : index
    %100 = vector.load %arg4[%c0_58, %c0_59] : memref<1x4xf32, #tpu.memory_space<vmem>>, vector<1x4xf32>
    %101 = vector.broadcast %100 : vector<1x4xf32> to vector<128x4xf32>
    %102 = arith.addf %99, %101 : vector<128x4xf32>
    %103 = math.exp %102 : vector<128x4xf32>
    %cst_60 = arith.constant 2.000000e+00 : f32
    %104 = vector.broadcast %cst_60 : f32 to vector<128x4xf32>
    %105 = arith.addf %103, %104 : vector<128x4xf32>
    %106 = arith.mulf %103, %105 : vector<128x4xf32>
    %cst_61 = arith.constant 2.000000e+00 : f32
    %107 = vector.broadcast %cst_61 : f32 to vector<128x4xf32>
    %108 = arith.addf %106, %107 : vector<128x4xf32>
    %109 = tpu.reciprocal %108 {approx = true} : vector<128x4xf32> -> vector<128x4xf32>
    %110 = arith.mulf %106, %109 : vector<128x4xf32>
    %cst_62 = arith.constant 2.000000e+01 : f32
    %111 = vector.broadcast %cst_62 : f32 to vector<128x4xf32>
    %112 = arith.cmpf ogt, %102, %111 : vector<128x4xf32>
    %113 = arith.mulf %102, %110 : vector<128x4xf32>
    %114 = arith.select %112, %102, %113 : vector<128x4xi1>, vector<128x4xf32>
    %c0_63 = arith.constant 0 : index
    %c17_64 = arith.constant 17 : index
    %c0_65 = arith.constant 0 : index
    %115 = vector.load %arg1[%c0_63, %c17_64, %c0_65] : memref<1x162x4xf32, #tpu.memory_space<vmem>>, vector<1x128x4xf32>
    %116 = vector.shape_cast %115 : vector<1x128x4xf32> to vector<128x4xf32>
    %c0_66 = arith.constant 0 : index
    %c0_67 = arith.constant 0 : index
    %117 = vector.load %arg5[%c0_66, %c0_67] : memref<4x8xf32, #tpu.memory_space<vmem>>, vector<4x8xf32>
    %cst_68 = arith.constant dense<0.000000e+00> : vector<128x8xf32>
    %118 = tpu.matmul %114, %117, %cst_68 {dimension_numbers = #tpu.dot_dimension_numbers<[1], [0], [0], [1], [0, 0, 1, 1], [], []>} : vector<128x4xf32>, vector<4x8xf32>, vector<128x8xf32> -> vector<128x8xf32>
    %c0_69 = arith.constant 0 : index
    %c0_70 = arith.constant 0 : index
    %119 = vector.load %arg6[%c0_69, %c0_70] : memref<4x8xf32, #tpu.memory_space<vmem>>, vector<4x8xf32>
    %cst_71 = arith.constant dense<0.000000e+00> : vector<128x8xf32>
    %120 = tpu.matmul %116, %119, %cst_71 {dimension_numbers = #tpu.dot_dimension_numbers<[1], [0], [0], [1], [0, 0, 1, 1], [], []>} : vector<128x4xf32>, vector<4x8xf32>, vector<128x8xf32> -> vector<128x8xf32>
    %121 = arith.addf %118, %120 : vector<128x8xf32>
    %c0_72 = arith.constant 0 : index
    %c0_73 = arith.constant 0 : index
    %122 = vector.load %arg7[%c0_72, %c0_73] : memref<1x8xf32, #tpu.memory_space<vmem>>, vector<1x8xf32>
    %123 = vector.broadcast %122 : vector<1x8xf32> to vector<128x8xf32>
    %124 = arith.addf %121, %123 : vector<128x8xf32>
    %125 = math.exp %124 : vector<128x8xf32>
    %cst_74 = arith.constant 2.000000e+00 : f32
    %126 = vector.broadcast %cst_74 : f32 to vector<128x8xf32>
    %127 = arith.addf %125, %126 : vector<128x8xf32>
    %128 = arith.mulf %125, %127 : vector<128x8xf32>
    %cst_75 = arith.constant 2.000000e+00 : f32
    %129 = vector.broadcast %cst_75 : f32 to vector<128x8xf32>
    %130 = arith.addf %128, %129 : vector<128x8xf32>
    %131 = tpu.reciprocal %130 {approx = true} : vector<128x8xf32> -> vector<128x8xf32>
    %132 = arith.mulf %128, %131 : vector<128x8xf32>
    %cst_76 = arith.constant 2.000000e+01 : f32
    %133 = vector.broadcast %cst_76 : f32 to vector<128x8xf32>
    %134 = arith.cmpf ogt, %124, %133 : vector<128x8xf32>
    %135 = arith.mulf %124, %132 : vector<128x8xf32>
    %136 = arith.select %134, %124, %135 : vector<128x8xi1>, vector<128x8xf32>
    %c0_77 = arith.constant 0 : index
    %c0_78 = arith.constant 0 : index
    %c0_79 = arith.constant 0 : index
    %137 = vector.load %arg2[%c0_77, %c0_78, %c0_79] : memref<1x128x8xf32, #tpu.memory_space<vmem>>, vector<1x128x8xf32>
    %138 = vector.shape_cast %137 : vector<1x128x8xf32> to vector<128x8xf32>
    %139 = tpu.concatenate %138, %136 in 1 : vector<128x8xf32>, vector<128x8xf32> -> vector<128x16xf32>
    %c0_80 = arith.constant 0 : index
    %c0_81 = arith.constant 0 : index
    %c0_82 = arith.constant 0 : index
    %140 = vector.load %arg8[%c0_80, %c0_81, %c0_82] : memref<1x128x16xf32, #tpu.memory_space<vmem>>, vector<1x128x16xf32>
    %141 = vector.shape_cast %140 : vector<1x128x16xf32> to vector<128x16xf32>
    %142 = vector.shape_cast %139 : vector<128x16xf32> to vector<1x128x16xf32>
    tpu.vector_store %arg8[%c0_80, %c0_81, %c0_82], %142 {strides = array<i32>} : memref<1x128x16xf32, #tpu.memory_space<vmem>>, vector<1x128x16xf32>,
    return
  }
  func.func @transform_0(%arg0: i32) -> (i32, i32, i32) {
    %c0_i32 = arith.constant 0 : i32
    %c0_i32_0 = arith.constant 0 : i32
    %c0_i32_1 = arith.constant 0 : i32
    return %arg0, %c0_i32, %c0_i32_0 : i32, i32, i32
  }
  func.func @transform_1(%arg0: i32) -> (i32, i32, i32) {
    %c0_i32 = arith.constant 0 : i32
    %c0_i32_0 = arith.constant 0 : i32
    %c0_i32_1 = arith.constant 0 : i32
    return %arg0, %c0_i32, %c0_i32_0 : i32, i32, i32
  }
  func.func @transform_2(%arg0: i32) -> (i32, i32, i32) {
    %c0_i32 = arith.constant 0 : i32
    %c0_i32_0 = arith.constant 0 : i32
    %c0_i32_1 = arith.constant 0 : i32
    %c0_i32_2 = arith.constant 0 : i32
    return %c0_i32, %c0_i32_0, %c0_i32_1 : i32, i32, i32
  }
  func.func @transform_3(%arg0: i32) -> (i32, i32) {
    %c0_i32 = arith.constant 0 : i32
    %c0_i32_0 = arith.constant 0 : i32
    %c0_i32_1 = arith.constant 0 : i32
    return %c0_i32, %c0_i32_0 : i32, i32
  }
  func.func @transform_4(%arg0: i32) -> (i32, i32) {
    %c0_i32 = arith.constant 0 : i32
    %c0_i32_0 = arith.constant 0 : i32
    %c0_i32_1 = arith.constant 0 : i32
    return %c0_i32, %c0_i32_0 : i32, i32
  }
  func.func @transform_5(%arg0: i32) -> (i32, i32) {
    %c0_i32 = arith.constant 0 : i32
    %c0_i32_0 = arith.constant 0 : i32
    %c0_i32_1 = arith.constant 0 : i32
    return %c0_i32, %c0_i32_0 : i32, i32
  }
  func.func @transform_6(%arg0: i32) -> (i32, i32) {
    %c0_i32 = arith.constant 0 : i32
    %c0_i32_0 = arith.constant 0 : i32
    %c0_i32_1 = arith.constant 0 : i32
    return %c0_i32, %c0_i32_0 : i32, i32
  }
  func.func @transform_7(%arg0: i32) -> (i32, i32, i32) {
    %c0_i32 = arith.constant 0 : i32
    %c0_i32_0 = arith.constant 0 : i32
    %c0_i32_1 = arith.constant 0 : i32
    return %arg0, %c0_i32, %c0_i32_0 : i32, i32, i32
  }
}

</mosaic_0001>

<llo_original>
// kernel: resblock_body.3
$region0: #{resblock_body.3}
  #allocation0 [shape = 'u32[]', space=smem, size = 0x4, offset = 0x4, fixed_abs, tag = 'smem constant byte address 0x4 - core index']
  #allocation1 [shape = 'u32[144,128]{1,0:T(1,128)}', space=vmem, size = 0x12000, scoped, tag = 'internal scratch']
  %s0 = inlined_call_operand.vmem [shape: f32[4,162,4], index: 0, kind: input, shape index: {}]
  %s1 = inlined_call_operand.vmem [shape: f32[9,4,8], index: 1, kind: input, shape index: {}]
  %s2 = inlined_call_operand.vmem [shape: f32[1,8], index: 2, kind: input, shape index: {}]
  %s3 = inlined_call_operand.vmem [shape: f32[4,128,8], index: 3, kind: output, shape index: {}]
  %s4 = sld [smem:[#allocation0]]
  $region45: #{resblock_body.3} parent=0
    _
  %s6 = ssub.s32 1, %s4
  %s7 = scalar_select 0, %s6, %s4
  loop: start=0, step=1, limit=6
  $region2: #{resblock_body.3} parent=0 // loop_pre_header
    _
  $region3: #{resblock_body.3} parent=0 // loop_header
    %s9 = sphi 0, %s13
    %p10 = scmp.ge.s32.totalorder %s9, 6
    %s19 = sphi 0, %s21
    %s22 = sphi 0, %s19
    %s23 = sphi 0, %s22
    %s39 = sphi 0, %s23
    %s43 = sphi 0, %s43
    %s45 = sphi 0, %s43
    %s46 = sphi 0, %s45
    %s60 = sphi 0, %s46
    %s64 = sphi 0, %s64
    %s66 = sphi 0, %s64
    %s67 = sphi 0, %s66
    %s81 = sphi 0, %s67
    %s87 = sphi 0, %s89
    %s90 = sphi 0, %s87
    %s91 = sphi 0, %s90
    %s107 = sphi 0, %s91
  $region4: #{resblock_body.3} parent=0 // loop_header_branch
    %12 = sbr.rel (%p10) target = $region8
  $region5: #{resblock_body.3} parent=0 // loop_body
    %s14 = ssub.s32 %s9, 1
    %s15 = ssub.s32 %s9, 2
    %s16 = sadd.s32 %s9, 1
    %s17 = ssub.s32 %s9, %s16
    %p18 = scmp.eq.s32.totalorder %s17, 0
    %s20 = sadd.s32 %s19, 1
    %s21 = scalar_select %p18, %s19, %s20
    %p24 = pneg %p18
    %p25 = scmp.eq.s32.totalorder %s9, 3
    %p26 = por %p24, %p25
    %p27 = scmp.ne.s32.totalorder %s19, %s22
    %p28 = scmp.eq.s32.totalorder %s9, 0
    %p29 = por %p27, %p28
    %p30 = scmp.ne.s32.totalorder %s19, %s22
    %p31 = scmp.eq.s32.totalorder %s14, 3
    %p32 = por %p30, %p31
    %p33 = scmp.ne.s32.totalorder %s22, %s23
    %p34 = scmp.eq.s32.totalorder %s14, 0
    %p35 = por %p33, %p34
    %p36 = scmp.ne.s32.totalorder %s22, %s23
    %p37 = scmp.eq.s32.totalorder %s15, 3
    %p38 = por %p36, %p37
    %p40 = scmp.ne.s32.totalorder %s23, %s39
    %p41 = scmp.eq.s32.totalorder %s15, 0
    %p42 = por %p40, %p41
    %s44 = sadd.s32 %s43, 1
    %p47 = scmp.eq.s32.totalorder %s9, 3
    %p48 = scmp.ne.s32.totalorder %s43, %s45
    %p49 = scmp.eq.s32.totalorder %s9, 0
    %p50 = por %p48, %p49
    %p51 = scmp.ne.s32.totalorder %s43, %s45
    %p52 = scmp.eq.s32.totalorder %s14, 3
    %p53 = por %p51, %p52
    %p54 = scmp.ne.s32.totalorder %s45, %s46
    %p55 = scmp.eq.s32.totalorder %s14, 0
    %p56 = por %p54, %p55
    %p57 = scmp.ne.s32.totalorder %s45, %s46
    %p58 = scmp.eq.s32.totalorder %s15, 3
    %p59 = por %p57, %p58
    %p61 = scmp.ne.s32.totalorder %s46, %s60
    %p62 = scmp.eq.s32.totalorder %s15, 0
    %p63 = por %p61, %p62
    %s65 = sadd.s32 %s64, 1
    %p68 = scmp.eq.s32.totalorder %s9, 3
    %p69 = scmp.ne.s32.totalorder %s64, %s66
    %p70 = scmp.eq.s32.totalorder %s9, 0
    %p71 = por %p69, %p70
    %p72 = scmp.ne.s32.totalorder %s64, %s66
    %p73 = scmp.eq.s32.totalorder %s14, 3
    %p74 = por %p72, %p73
    %p75 = scmp.ne.s32.totalorder %s66, %s67
    %p76 = scmp.eq.s32.totalorder %s14, 0
    %p77 = por %p75, %p76
    %p78 = scmp.ne.s32.totalorder %s66, %s67
    %p79 = scmp.eq.s32.totalorder %s15, 3
    %p80 = por %p78, %p79
    %p82 = scmp.ne.s32.totalorder %s67, %s81
    %p83 = scmp.eq.s32.totalorder %s15, 0
    %p84 = por %p82, %p83
    %s85 = ssub.s32 %s9, %s16
    %p86 = scmp.eq.s32.totalorder %s85, 0
    %s88 = sadd.s32 %s87, 1
    %s89 = scalar_select %p86, %s87, %s88
    %p92 = pneg %p86
    %p93 = scmp.eq.s32.totalorder %s9, 3
    %p94 = por %p92, %p93
    %p95 = scmp.ne.s32.totalorder %s87, %s90
    %p96 = scmp.eq.s32.totalorder %s9, 0
    %p97 = por %p95, %p96
    %p98 = scmp.ne.s32.totalorder %s87, %s90
    %p99 = scmp.eq.s32.totalorder %s14, 3
    %p100 = por %p98, %p99
    %p101 = scmp.ne.s32.totalorder %s90, %s91
    %p102 = scmp.eq.s32.totalorder %s14, 0
    %p103 = por %p101, %p102
    %p104 = scmp.ne.s32.totalorder %s90, %s91
    %p105 = scmp.eq.s32.totalorder %s15, 3
    %p106 = por %p104, %p105
    %p108 = scmp.ne.s32.totalorder %s91, %s107
    %p109 = scmp.eq.s32.totalorder %s15, 0
    %p110 = por %p108, %p109
    %p111 = scmp.le.s32.totalorder 1, %s9
    %p112 = scmp.lt.s32.totalorder %s9, 5
    %p113 = pnand %p111, %p112
    %p114 = pneg %p113
    // Predicated region
    $region9: #{resblock_body.3} parent=5 // pred_check
      _
    $region10: #{resblock_body.3} parent=5 // pred_check_branch
      %116 = sbr.rel (%p113) target = $region12
    $region11: #{resblock_body.3} parent=5 // pred_region
      %s117 = ssub.s32 %s9, 1
      // Predicated region
      $region13: #{resblock_body.3} parent=11 // pred_check
        %p118 = pneg %p56
      $region14: #{resblock_body.3} parent=11 // pred_check_branch
        %120 = sbr.rel (%p118) target = $region16
      $region15: #{resblock_body.3} parent=11 // pred_region
        _
      $region16: #{resblock_body.3} parent=11 // pred_fallthru
        _
      // Predicated region
      $region17: #{resblock_body.3} parent=11 // pred_check
        %p121 = pneg %p77
      $region18: #{resblock_body.3} parent=11 // pred_check_branch
        %123 = sbr.rel (%p121) target = $region20
      $region19: #{resblock_body.3} parent=11 // pred_region
        _
      $region20: #{resblock_body.3} parent=11 // pred_fallthru
        _
    $region12: #{resblock_body.3} parent=5 // pred_fallthru
      _
    %p124 = scmp.lt.s32.totalorder %s9, 4
    // Predicated region
    $region21: #{resblock_body.3} parent=5 // pred_check
      %p125 = pneg %p124
    $region22: #{resblock_body.3} parent=5 // pred_check_branch
      %127 = sbr.rel (%p125) target = $region24
    $region23: #{resblock_body.3} parent=5 // pred_region
      // Predicated region
      $region25: #{resblock_body.3} parent=23 // pred_check
        %p128 = pneg %p29
      $region26: #{resblock_body.3} parent=23 // pred_check_branch
        %130 = sbr.rel (%p128) target = $region28
      $region27: #{resblock_body.3} parent=23 // pred_region
        %p131 = scmp.lt.s32.totalorder %s9, 3
        %s132 = scalar_select %p131, %s9, 3
        %s133 = smul.addr %s132, 21
        %s134 = smul.addr %s133, 8
        %s135 = scalar_lea.vmem %s0, %s134
      $region28: #{resblock_body.3} parent=23 // pred_fallthru
        _
    $region24: #{resblock_body.3} parent=5 // pred_fallthru
      _
    %p136 = scmp.le.s32.totalorder 1, %s9
    %p137 = scmp.lt.s32.totalorder %s9, 5
    %p138 = pnand %p136, %p137
    %p139 = pneg %p138
    // Predicated region
    $region29: #{resblock_body.3} parent=5 // pred_check
      _
    $region30: #{resblock_body.3} parent=5 // pred_check_branch
      %141 = sbr.rel (%p138) target = $region32
    $region31: #{resblock_body.3} parent=5 // pred_region
      %s142 = ssub.s32 %s9, 1
      %p143 = scmp.lt.s32.totalorder %s14, 3
      %s144 = scalar_select %p143, %s14, 3
      %s145 = smul.addr %s144, 21
      %s146 = smul.addr %s145, 8
      %s147 = scalar_lea.vmem %s0, %s146
      %p148 = pneg %p35
      %p149 = pneg %p32
      %p150 = pneg %p56
      %p151 = pneg %p53
      %p152 = pneg %p77
      %p153 = pneg %p74
      %p154 = pneg %p103
      %p155 = pneg %p100
      %p156 = scmp.lt.s32.totalorder %s14, 3
      %s157 = scalar_select %p156, %s14, 3
      %s158 = smul.addr %s157, 16
      %s159 = smul.addr %s158, 8
      %s160 = scalar_lea.vmem %s3, %s159
      %p161 = scmp.lt.s32.totalorder %s14, 3
      %s162 = scalar_select %p161, %s14, 3
      %s163 = smul.addr %s162, 21
      %s164 = smul.addr %s163, 8
      %s165 = scalar_lea.vmem %s0, %s164
      %p166 = scmp.lt.s32.totalorder %s14, 3
      %s167 = scalar_select %p166, %s14, 3
      %s168 = smul.addr %s167, 16
      %s169 = smul.addr %s168, 8
      %s170 = scalar_lea.vmem %s3, %s169
      %v171 = vlaneseq
      %v172 = vshrl.u32 %v171, 7
      %v173 = vadd.s32 %v172, 8
      %v174 = vadd.s32 %v172, 16
      %v175 = vadd.s32 %v172, 24
      %v176 = vadd.s32 %v172, 32
      %v177 = vadd.s32 %v172, 40
      %v178 = vadd.s32 %v172, 48
      %v179 = vadd.s32 %v172, 56
      %v180 = vadd.s32 %v172, 64
      %v181 = vadd.s32 %v172, 72
      %v182 = vadd.s32 %v172, 80
      %v183 = vadd.s32 %v172, 88
      %v184 = vadd.s32 %v172, 96
      %v185 = vadd.s32 %v172, 104
      %v186 = vadd.s32 %v172, 112
      %v187 = vadd.s32 %v172, 120
      %vm188 = vcmp.lt.s32.totalorder %v172, 0
      %v189 = vsub.s32 0, %v172
      %v190 = vsel %vm188, %v189, %v172
      %v191 = vshrl.u32 %v190, 4
      %v192 = vand.u32 %v190, 15
      %v193 = vsub.s32 0, %v192
      %v194 = vsel %vm188, %v193, %v192
      %vm195 = vcmp.lt.s32.totalorder %v173, 0
      %v196 = vsub.s32 0, %v173
      %v197 = vsel %vm195, %v196, %v173
      %v198 = vshrl.u32 %v197, 4
      %v199 = vand.u32 %v197, 15
      %v200 = vsub.s32 0, %v199
      %v201 = vsel %vm195, %v200, %v199
      %vm202 = vcmp.lt.s32.totalorder %v174, 0
      %v203 = vsub.s32 0, %v174
      %v204 = vsel %vm202, %v203, %v174
      %v205 = vshrl.u32 %v204, 4
      %v206 = vand.u32 %v204, 15
      %v207 = vsub.s32 0, %v206
      %v208 = vsel %vm202, %v207, %v206
      %vm209 = vcmp.lt.s32.totalorder %v175, 0
      %v210 = vsub.s32 0, %v175
      %v211 = vsel %vm209, %v210, %v175
      %v212 = vshrl.u32 %v211, 4
      %v213 = vand.u32 %v211, 15
      %v214 = vsub.s32 0, %v213
      %v215 = vsel %vm209, %v214, %v213
      %vm216 = vcmp.lt.s32.totalorder %v176, 0
      %v217 = vsub.s32 0, %v176
      %v218 = vsel %vm216, %v217, %v176
      %v219 = vshrl.u32 %v218, 4
      %v220 = vand.u32 %v218, 15
      %v221 = vsub.s32 0, %v220
      %v222 = vsel %vm216, %v221, %v220
      %vm223 = vcmp.lt.s32.totalorder %v177, 0
      %v224 = vsub.s32 0, %v177
      %v225 = vsel %vm223, %v224, %v177
      %v226 = vshrl.u32 %v225, 4
      %v227 = vand.u32 %v225, 15
      %v228 = vsub.s32 0, %v227
      %v229 = vsel %vm223, %v228, %v227
      %vm230 = vcmp.lt.s32.totalorder %v178, 0
      %v231 = vsub.s32 0, %v178
      %v232 = vsel %vm230, %v231, %v178
      %v233 = vshrl.u32 %v232, 4
      %v234 = vand.u32 %v232, 15
      %v235 = vsub.s32 0, %v234
      %v236 = vsel %vm230, %v235, %v234
      %vm237 = vcmp.lt.s32.totalorder %v179, 0
      %v238 = vsub.s32 0, %v179
      %v239 = vsel %vm237, %v238, %v179
      %v240 = vshrl.u32 %v239, 4
      %v241 = vand.u32 %v239, 15
      %v242 = vsub.s32 0, %v241
      %v243 = vsel %vm237, %v242, %v241
      %vm244 = vcmp.lt.s32.totalorder %v180, 0
      %v245 = vsub.s32 0, %v180
      %v246 = vsel %vm244, %v245, %v180
      %v247 = vshrl.u32 %v246, 4
      %v248 = vand.u32 %v246, 15
      %v249 = vsub.s32 0, %v248
      %v250 = vsel %vm244, %v249, %v248
      %vm251 = vcmp.lt.s32.totalorder %v181, 0
      %v252 = vsub.s32 0, %v181
      %v253 = vsel %vm251, %v252, %v181
      %v254 = vshrl.u32 %v253, 4
      %v255 = vand.u32 %v253, 15
      %v256 = vsub.s32 0, %v255
      %v257 = vsel %vm251, %v256, %v255
      %vm258 = vcmp.lt.s32.totalorder %v182, 0
      %v259 = vsub.s32 0, %v182
      %v260 = vsel %vm258, %v259, %v182
      %v261 = vshrl.u32 %v260, 4
      %v262 = vand.u32 %v260, 15
      %v263 = vsub.s32 0, %v262
      %v264 = vsel %vm258, %v263, %v262
      %vm265 = vcmp.lt.s32.totalorder %v183, 0
      %v266 = vsub.s32 0, %v183
      %v267 = vsel %vm265, %v266, %v183
      %v268 = vshrl.u32 %v267, 4
      %v269 = vand.u32 %v267, 15
      %v270 = vsub.s32 0, %v269
      %v271 = vsel %vm265, %v270, %v269
      %vm272 = vcmp.lt.s32.totalorder %v184, 0
      %v273 = vsub.s32 0, %v184
      %v274 = vsel %vm272, %v273, %v184
      %v275 = vshrl.u32 %v274, 4
      %v276 = vand.u32 %v274, 15
      %v277 = vsub.s32 0, %v276
      %v278 = vsel %vm272, %v277, %v276
      %vm279 = vcmp.lt.s32.totalorder %v185, 0
      %v280 = vsub.s32 0, %v185
      %v281 = vsel %vm279, %v280, %v185
      %v282 = vshrl.u32 %v281, 4
      %v283 = vand.u32 %v281, 15
      %v284 = vsub.s32 0, %v283
      %v285 = vsel %vm279, %v284, %v283
      %vm286 = vcmp.lt.s32.totalorder %v186, 0
      %v287 = vsub.s32 0, %v186
      %v288 = vsel %vm286, %v287, %v186
      %v289 = vshrl.u32 %v288, 4
      %v290 = vand.u32 %v288, 15
      %v291 = vsub.s32 0, %v290
      %v292 = vsel %vm286, %v291, %v290
      %vm293 = vcmp.lt.s32.totalorder %v187, 0
      %v294 = vsub.s32 0, %v187
      %v295 = vsel %vm293, %v294, %v187
      %v296 = vshrl.u32 %v295, 4
      %v297 = vand.u32 %v295, 15
      %v298 = vsub.s32 0, %v297
      %v299 = vsel %vm293, %v298, %v297
      %vm300 = vcmp.ne.s32.totalorder %v194, 0
      %vm301 = vcmp.ne.s32.totalorder %v201, 0
      %vm302 = vcmp.ne.s32.totalorder %v208, 0
      %vm303 = vcmp.ne.s32.totalorder %v215, 0
      %vm304 = vcmp.ne.s32.totalorder %v222, 0
      %vm305 = vcmp.ne.s32.totalorder %v229, 0
      %vm306 = vcmp.ne.s32.totalorder %v236, 0
      %vm307 = vcmp.ne.s32.totalorder %v243, 0
      %vm308 = vcmp.ne.s32.totalorder %v250, 0
      %vm309 = vcmp.ne.s32.totalorder %v257, 0
      %vm310 = vcmp.ne.s32.totalorder %v264, 0
      %vm311 = vcmp.ne.s32.totalorder %v271, 0
      %vm312 = vcmp.ne.s32.totalorder %v278, 0
      %vm313 = vcmp.ne.s32.totalorder %v285, 0
      %vm314 = vcmp.ne.s32.totalorder %v292, 0
      %vm315 = vcmp.ne.s32.totalorder %v299, 0
      %vm316 = vcmp.lt.s32.totalorder %v194, 0
      %vm317 = vcmp.lt.s32.totalorder %v201, 0
      %vm318 = vcmp.lt.s32.totalorder %v208, 0
      %vm319 = vcmp.lt.s32.totalorder %v215, 0
      %vm320 = vcmp.lt.s32.totalorder %v222, 0
      %vm321 = vcmp.lt.s32.totalorder %v229, 0
      %vm322 = vcmp.lt.s32.totalorder %v236, 0
      %vm323 = vcmp.lt.s32.totalorder %v243, 0
      %vm324 = vcmp.lt.s32.totalorder %v250, 0
      %vm325 = vcmp.lt.s32.totalorder %v257, 0
      %vm326 = vcmp.lt.s32.totalorder %v264, 0
      %vm327 = vcmp.lt.s32.totalorder %v271, 0
      %vm328 = vcmp.lt.s32.totalorder %v278, 0
      %vm329 = vcmp.lt.s32.totalorder %v285, 0
      %vm330 = vcmp.lt.s32.totalorder %v292, 0
      %vm331 = vcmp.lt.s32.totalorder %v299, 0
      %vm332 = vmand %vm316, %vm300
      %vm333 = vmand %vm317, %vm301
      %vm334 = vmand %vm318, %vm302
      %vm335 = vmand %vm319, %vm303
      %vm336 = vmand %vm320, %vm304
      %vm337 = vmand %vm321, %vm305
      %vm338 = vmand %vm322, %vm306
      %vm339 = vmand %vm323, %vm307
      %vm340 = vmand %vm324, %vm308
      %vm341 = vmand %vm325, %vm309
      %vm342 = vmand %vm326, %vm310
      %vm343 = vmand %vm327, %vm311
      %vm344 = vmand %vm328, %vm312
      %vm345 = vmand %vm329, %vm313
      %vm346 = vmand %vm330, %vm314
      %vm347 = vmand %vm331, %vm315
      %v348 = vadd.s32 %v194, 16
      %v349 = vadd.s32 %v201, 16
      %v350 = vadd.s32 %v208, 16
      %v351 = vadd.s32 %v215, 16
      %v352 = vadd.s32 %v222, 16
      %v353 = vadd.s32 %v229, 16
      %v354 = vadd.s32 %v236, 16
      %v355 = vadd.s32 %v243, 16
      %v356 = vadd.s32 %v250, 16
      %v357 = vadd.s32 %v257, 16
      %v358 = vadd.s32 %v264, 16
      %v359 = vadd.s32 %v271, 16
      %v360 = vadd.s32 %v278, 16
      %v361 = vadd.s32 %v285, 16
      %v362 = vadd.s32 %v292, 16
      %v363 = vadd.s32 %v299, 16
      %v364 = vsel %vm332, %v348, %v194
      %v365 = vsel %vm333, %v349, %v201
      %v366 = vsel %vm334, %v350, %v208
      %v367 = vsel %vm335, %v351, %v215
      %v368 = vsel %vm336, %v352, %v222
      %v369 = vsel %vm337, %v353, %v229
      %v370 = vsel %vm338, %v354, %v236
      %v371 = vsel %vm339, %v355, %v243
      %v372 = vsel %vm340, %v356, %v250
      %v373 = vsel %vm341, %v357, %v257
      %v374 = vsel %vm342, %v358, %v264
      %v375 = vsel %vm343, %v359, %v271
      %v376 = vsel %vm344, %v360, %v278
      %v377 = vsel %vm345, %v361, %v285
      %v378 = vsel %vm346, %v362, %v292
      %v379 = vsel %vm347, %v363, %v299
      %vm380 = vcmp.ne.s32.totalorder %v364, 0
      %vm381 = vcmp.ne.s32.totalorder %v365, 0
      %vm382 = vcmp.ne.s32.totalorder %v366, 0
      %vm383 = vcmp.ne.s32.totalorder %v367, 0
      %vm384 = vcmp.ne.s32.totalorder %v368, 0
      %vm385 = vcmp.ne.s32.totalorder %v369, 0
      %vm386 = vcmp.ne.s32.totalorder %v370, 0
      %vm387 = vcmp.ne.s32.totalorder %v371, 0
      %vm388 = vcmp.ne.s32.totalorder %v372, 0
      %vm389 = vcmp.ne.s32.totalorder %v373, 0
      %vm390 = vcmp.ne.s32.totalorder %v374, 0
      %vm391 = vcmp.ne.s32.totalorder %v375, 0
      %vm392 = vcmp.ne.s32.totalorder %v376, 0
      %vm393 = vcmp.ne.s32.totalorder %v377, 0
      %vm394 = vcmp.ne.s32.totalorder %v378, 0
      %vm395 = vcmp.ne.s32.totalorder %v379, 0
      %vm396 = vcmp.ne.s32.totalorder %v364, 15
      %vm397 = vcmp.ne.s32.totalorder %v365, 15
      %vm398 = vcmp.ne.s32.totalorder %v366, 15
      %vm399 = vcmp.ne.s32.totalorder %v367, 15
      %vm400 = vcmp.ne.s32.totalorder %v368, 15
      %vm401 = vcmp.ne.s32.totalorder %v369, 15
      %vm402 = vcmp.ne.s32.totalorder %v370, 15
      %vm403 = vcmp.ne.s32.totalorder %v371, 15
      %vm404 = vcmp.ne.s32.totalorder %v372, 15
      %vm405 = vcmp.ne.s32.totalorder %v373, 15
      %vm406 = vcmp.ne.s32.totalorder %v374, 15
      %vm407 = vcmp.ne.s32.totalorder %v375, 15
      %vm408 = vcmp.ne.s32.totalorder %v376, 15
      %vm409 = vcmp.ne.s32.totalorder %v377, 15
      %vm410 = vcmp.ne.s32.totalorder %v378, 15
      %vm411 = vcmp.ne.s32.totalorder %v379, 15
      %v412 = vld [vmem:[%s165] sm:$0xff]
      %v413 = vld [vmem:[%s165 + $0x8] sm:$0xff]
      %v414 = vld [vmem:[%s165 + $0x10] sm:$0xff]
      %v415 = vld [vmem:[%s165 + $0x18] sm:$0xff]
      %v416 = vld [vmem:[%s165 + $0x20] sm:$0xff]
      %v417 = vld [vmem:[%s165 + $0x28] sm:$0xff]
      %v418 = vld [vmem:[%s165 + $0x30] sm:$0xff]
      %v419 = vld [vmem:[%s165 + $0x38] sm:$0xff]
      %v420 = vld [vmem:[%s165 + $0x40] sm:$0xff]
      %v421 = vld [vmem:[%s165 + $0x48] sm:$0xff]
      %v422 = vld [vmem:[%s165 + $0x50] sm:$0xff]
      %v423 = vld [vmem:[%s165 + $0x58] sm:$0xff]
      %v424 = vld [vmem:[%s165 + $0x60] sm:$0xff]
      %v425 = vld [vmem:[%s165 + $0x68] sm:$0xff]
      %v426 = vld [vmem:[%s165 + $0x70] sm:$0xff]
      %v427 = vld [vmem:[%s165 + $0x78] sm:$0xff]
      %v428 = vld [vmem:[%s1] sm:$0xf]
      %vm429 = vcmask 31744
      %v431 = vsel %vm429, %v412, 0
      %v434 = vsel %vm429, %v413, 0
      %v437 = vsel %vm429, %v414, 0
      %v440 = vsel %vm429, %v415, 0
      %v443 = vsel %vm429, %v416, 0
      %v446 = vsel %vm429, %v417, 0
      %v449 = vsel %vm429, %v418, 0
      %v452 = vsel %vm429, %v419, 0
      %v455 = vsel %vm429, %v420, 0
      %v458 = vsel %vm429, %v421, 0
      %v461 = vsel %vm429, %v422, 0
      %v464 = vsel %vm429, %v423, 0
      %v467 = vsel %vm429, %v424, 0
      %v470 = vsel %vm429, %v425, 0
      %v473 = vsel %vm429, %v426, 0
      %v476 = vsel %vm429, %v427, 0
      %vm478 = vcmask 1043456
      %v480 = vsel %vm478, %v428, 0
      %482 = vmatprep.subr.mxu0 0.0
      %483 = vmatpush1.msra.mxu0 %v480
      %484 = vmatprep.subr.mxu0 0.0
      %485 = vmatpush1.msra.mxu0 0.0
      %486 = vmatprep.subr.mxu0 0.0
      %487 = vmatpush1.msra.mxu0 0.0
      %488 = vmatprep.subr.mxu0 0.0
      %489 = vmatpush1.msra.mxu0 0.0
      %490 = vmatprep.subr.mxu0 0.0
      %491 = vmatpush1.msra.mxu0 0.0
      %492 = vmatprep.subr.mxu0 0.0
      %493 = vmatpush1.msra.mxu0 0.0
      %494 = vmatprep.subr.mxu0 0.0
      %495 = vmatpush1.msra.mxu0 0.0
      %496 = vmatprep.subr.mxu0 0.0
      %497 = vmatpush1.msra.mxu0 0.0
      %498 = vmatprep.subr.mxu0 0.0
      %499 = vmatpush1.msra.mxu0 0.0
      %500 = vmatprep.subr.mxu0 0.0
      %501 = vmatpush1.msra.mxu0 0.0
      %502 = vmatprep.subr.mxu0 0.0
      %503 = vmatpush1.msra.mxu0 0.0
      %504 = vmatprep.subr.mxu0 0.0
      %505 = vmatpush1.msra.mxu0 0.0
      %506 = vmatprep.subr.mxu0 0.0
      %507 = vmatpush1.msra.mxu0 0.0
      %508 = vmatprep.subr.mxu0 0.0
      %509 = vmatpush1.msra.mxu0 0.0
      %510 = vmatprep.subr.mxu0 0.0
      %511 = vmatpush1.msra.mxu0 0.0
      %512 = vmatprep.subr.mxu0 0.0
      %513 = vmatpush1.msra.mxu0 0.0
      %514 = vmatprep.subr.mxu0 0.0
      %515 = vmatpush1.msra.mxu0 0.0
      %516 = vmatprep.subr.mxu0 0.0
      %517 = vmatpush1.msra.mxu0 0.0
      %518 = vmatprep.subr.mxu0 0.0
      %519 = vmatpush1.msra.mxu0 0.0
      %520 = vmatprep.subr.mxu0 0.0
      %521 = vmatpush1.msra.mxu0 0.0
      %522 = vmatprep.subr.mxu0 0.0
      %523 = vmatpush1.msra.mxu0 0.0
      %524 = vmatprep.subr.mxu0 0.0
      %525 = vmatpush1.msra.mxu0 0.0
      %526 = vmatprep.subr.mxu0 0.0
      %527 = vmatpush1.msra.mxu0 0.0
      %528 = vmatprep.subr.mxu0 0.0
      %529 = vmatpush1.msra.mxu0 0.0
      %530 = vmatprep.subr.mxu0 0.0
      %531 = vmatpush1.msra.mxu0 0.0
      %532 = vmatprep.subr.mxu0 0.0
      %533 = vmatpush1.msra.mxu0 0.0
      %534 = vmatprep.subr.mxu0 0.0
      %535 = vmatpush1.msra.mxu0 0.0
      %536 = vmatprep.subr.mxu0 0.0
      %537 = vmatpush1.msra.mxu0 0.0
      %538 = vmatprep.subr.mxu0 0.0
      %539 = vmatpush1.msra.mxu0 0.0
      %540 = vmatprep.subr.mxu0 0.0
      %541 = vmatpush1.msra.mxu0 0.0
      %542 = vmatprep.subr.mxu0 0.0
      %543 = vmatpush1.msra.mxu0 0.0
      %544 = vmatprep.subr.mxu0 0.0
      %545 = vmatpush1.msra.mxu0 0.0
      %546 = vmatprep.mubr.f32.mxu0 0.0
      %547 = vmatmul.mubr.f32.gmra.mrb[0].mxu0 %v431
      %v548 = vpop.f32.mrb[0].mxu0
      %v549 = vadd.f32 0.0, %v548
      %v550 = vpop.f32.mrb[0].mxu0
      %551 = vmatprep.mubr.f32.mxu0 0.0
      %552 = vmatmul.mubr.f32.gmra.mrb[0].mxu0 %v434
      %v553 = vpop.f32.mrb[0].mxu0
      %v554 = vadd.f32 0.0, %v553
      %v555 = vpop.f32.mrb[0].mxu0
      %556 = vmatprep.mubr.f32.mxu0 0.0
      %557 = vmatmul.mubr.f32.gmra.mrb[0].mxu0 %v437
      %v558 = vpop.f32.mrb[0].mxu0
      %v559 = vadd.f32 0.0, %v558
      %v560 = vpop.f32.mrb[0].mxu0
      %561 = vmatprep.mubr.f32.mxu0 0.0
      %562 = vmatmul.mubr.f32.gmra.mrb[0].mxu0 %v440
      %v563 = vpop.f32.mrb[0].mxu0
      %v564 = vadd.f32 0.0, %v563
      %v565 = vpop.f32.mrb[0].mxu0
      %566 = vmatprep.mubr.f32.mxu0 0.0
      %567 = vmatmul.mubr.f32.gmra.mrb[0].mxu0 %v443
      %v568 = vpop.f32.mrb[0].mxu0
      %v569 = vadd.f32 0.0, %v568
      %v570 = vpop.f32.mrb[0].mxu0
      %571 = vmatprep.mubr.f32.mxu0 0.0
      %572 = vmatmul.mubr.f32.gmra.mrb[0].mxu0 %v446
      %v573 = vpop.f32.mrb[0].mxu0
      %v574 = vadd.f32 0.0, %v573
      %v575 = vpop.f32.mrb[0].mxu0
      %576 = vmatprep.mubr.f32.mxu0 0.0
      %577 = vmatmul.mubr.f32.gmra.mrb[0].mxu0 %v449
      %v578 = vpop.f32.mrb[0].mxu0
      %v579 = vadd.f32 0.0, %v578
      %v580 = vpop.f32.mrb[0].mxu0
      %581 = vmatprep.mubr.f32.mxu0 0.0
      %582 = vmatmul.mubr.f32.gmra.mrb[0].mxu0 %v452
      %v583 = vpop.f32.mrb[0].mxu0
      %v584 = vadd.f32 0.0, %v583
      %v585 = vpop.f32.mrb[0].mxu0
      %586 = vmatprep.mubr.f32.mxu0 0.0
      %587 = vmatmul.mubr.f32.gmra.mrb[0].mxu0 %v455
      %v588 = vpop.f32.mrb[0].mxu0
      %v589 = vadd.f32 0.0, %v588
      %v590 = vpop.f32.mrb[0].mxu0
      %591 = vmatprep.mubr.f32.mxu0 0.0
      %592 = vmatmul.mubr.f32.gmra.mrb[0].mxu0 %v458
      %v593 = vpop.f32.mrb[0].mxu0
      %v594 = vadd.f32 0.0, %v593
      %v595 = vpop.f32.mrb[0].mxu0
      %596 = vmatprep.mubr.f32.mxu0 0.0
      %597 = vmatmul.mubr.f32.gmra.mrb[0].mxu0 %v461
      %v598 = vpop.f32.mrb[0].mxu0
      %v599 = vadd.f32 0.0, %v598
      %v600 = vpop.f32.mrb[0].mxu0
      %601 = vmatprep.mubr.f32.mxu0 0.0
      %602 = vmatmul.mubr.f32.gmra.mrb[0].mxu0 %v464
      %v603 = vpop.f32.mrb[0].mxu0
      %v604 = vadd.f32 0.0, %v603
      %v605 = vpop.f32.mrb[0].mxu0
      %606 = vmatprep.mubr.f32.mxu0 0.0
      %607 = vmatmul.mubr.f32.gmra.mrb[0].mxu0 %v467
      %v608 = vpop.f32.mrb[0].mxu0
      %v609 = vadd.f32 0.0, %v608
      %v610 = vpop.f32.mrb[0].mxu0
      %611 = vmatprep.mubr.f32.mxu0 0.0
      %612 = vmatmul.mubr.f32.gmra.mrb[0].mxu0 %v470
      %v613 = vpop.f32.mrb[0].mxu0
      %v614 = vadd.f32 0.0, %v613
      %v615 = vpop.f32.mrb[0].mxu0
      %616 = vmatprep.mubr.f32.mxu0 0.0
      %617 = vmatmul.mubr.f32.gmra.mrb[0].mxu0 %v473
      %v618 = vpop.f32.mrb[0].mxu0
      %v619 = vadd.f32 0.0, %v618
      %v620 = vpop.f32.mrb[0].mxu0
      %621 = vmatprep.mubr.f32.mxu0 0.0
      %622 = vmatmul.mubr.f32.gmra.mrb[0].mxu0 %v476
      %v623 = vpop.f32.mrb[0].mxu0
      %v624 = vadd.f32 0.0, %v623
      %v625 = vpop.f32.mrb[0].mxu0
      %626 = vdwg.mxu0
      %v627 = vsel %vm380, 1, 0
      %v628 = vsel %vm381, 1, 0
      %v629 = vsel %vm382, 1, 0
      %v630 = vsel %vm383, 1, 0
      %v631 = vsel %vm384, 1, 0
      %v632 = vsel %vm385, 1, 0
      %v633 = vsel %vm386, 1, 0
      %v634 = vsel %vm387, 1, 0
      %v635 = vsel %vm388, 1, 0
      %v636 = vsel %vm389, 1, 0
      %v637 = vsel %vm390, 1, 0
      %v638 = vsel %vm391, 1, 0
      %v639 = vsel %vm392, 1, 0
      %v640 = vsel %vm393, 1, 0
      %v641 = vsel %vm394, 1, 0
      %v642 = vsel %vm395, 1, 0
      %vm643 = vcmp.eq.s32.totalorder %v627, 1
      %vm644 = vcmp.eq.s32.totalorder %v628, 1
      %vm645 = vcmp.eq.s32.totalorder %v629, 1
      %vm646 = vcmp.eq.s32.totalorder %v630, 1
      %vm647 = vcmp.eq.s32.totalorder %v631, 1
      %vm648 = vcmp.eq.s32.totalorder %v632, 1
      %vm649 = vcmp.eq.s32.totalorder %v633, 1
      %vm650 = vcmp.eq.s32.totalorder %v634, 1
      %vm651 = vcmp.eq.s32.totalorder %v635, 1
      %vm652 = vcmp.eq.s32.totalorder %v636, 1
      %vm653 = vcmp.eq.s32.totalorder %v637, 1
      %vm654 = vcmp.eq.s32.totalorder %v638, 1
      %vm655 = vcmp.eq.s32.totalorder %v639, 1
      %vm656 = vcmp.eq.s32.totalorder %v640, 1
      %vm657 = vcmp.eq.s32.totalorder %v641, 1
      %vm658 = vcmp.eq.s32.totalorder %v642, 1
      %v659 = vsel %vm643, %v549, 0.0
      %v660 = vsel %vm644, %v554, 0.0
      %v661 = vsel %vm645, %v559, 0.0
      %v662 = vsel %vm646, %v564, 0.0
      %v663 = vsel %vm647, %v569, 0.0
      %v664 = vsel %vm648, %v574, 0.0
      %v665 = vsel %vm649, %v579, 0.0
      %v666 = vsel %vm650, %v584, 0.0
      %v667 = vsel %vm651, %v589, 0.0
      %v668 = vsel %vm652, %v594, 0.0
      %v669 = vsel %vm653, %v599, 0.0
      %v670 = vsel %vm654, %v604, 0.0
      %v671 = vsel %vm655, %v609, 0.0
      %v672 = vsel %vm656, %v614, 0.0
      %v673 = vsel %vm657, %v619, 0.0
      %v674 = vsel %vm658, %v624, 0.0
      %v675 = vadd.f32 %v659, 0.0
      %v676 = vadd.f32 %v660, 0.0
      %v677 = vadd.f32 %v661, 0.0
      %v678 = vadd.f32 %v662, 0.0
      %v679 = vadd.f32 %v663, 0.0
      %v680 = vadd.f32 %v664, 0.0
      %v681 = vadd.f32 %v665, 0.0
      %v682 = vadd.f32 %v666, 0.0
      %v683 = vadd.f32 %v667, 0.0
      %v684 = vadd.f32 %v668, 0.0
      %v685 = vadd.f32 %v669, 0.0
      %v686 = vadd.f32 %v670, 0.0
      %v687 = vadd.f32 %v671, 0.0
      %v688 = vadd.f32 %v672, 0.0
      %v689 = vadd.f32 %v673, 0.0
      %v690 = vadd.f32 %v674, 0.0
      %v691 = vld [vmem:[%s165 + $0x1] sm:$0xff]
      %v692 = vld [vmem:[%s165 + $0x9] sm:$0xff]
      %v693 = vld [vmem:[%s165 + $0x11] sm:$0xff]
      %v694 = vld [vmem:[%s165 + $0x19] sm:$0xff]
      %v695 = vld [vmem:[%s165 + $0x21] sm:$0xff]
      %v696 = vld [vmem:[%s165 + $0x29] sm:$0xff]
      %v697 = vld [vmem:[%s165 + $0x31] sm:$0xff]
      %v698 = vld [vmem:[%s165 + $0x39] sm:$0xff]
      %v699 = vld [vmem:[%s165 + $0x41] sm:$0xff]
      %v700 = vld [vmem:[%s165 + $0x49] sm:$0xff]
      %v701 = vld [vmem:[%s165 + $0x51] sm:$0xff]
      %v702 = vld [vmem:[%s165 + $0x59] sm:$0xff]
      %v703 = vld [vmem:[%s165 + $0x61] sm:$0xff]
      %v704 = vld [vmem:[%s165 + $0x69] sm:$0xff]
      %v705 = vld [vmem:[%s165 + $0x71] sm:$0xff]
      %v706 = vld [vmem:[%s165 + $0x79] sm:$0xff]
      %s707 = scalar_lea.vmem %s1, 4
      %v708 = vld [vmem:[%s707] sm:$0xf]
      %v710 = vsel %vm429, %v691, 0
      %v713 = vsel %vm429, %v692, 0
      %v716 = vsel %vm429, %v693, 0
      %v719 = vsel %vm429, %v694, 0
      %v722 = vsel %vm429, %v695, 0
      %v725 = vsel %vm429, %v696, 0
      %v728 = vsel %vm429, %v697, 0
      %v731 = vsel %vm429, %v698, 0
      %v734 = vsel %vm429, %v699, 0
      %v737 = vsel %vm429, %v700, 0
      %v740 = vsel %vm429, %v701, 0
      %v743 = vsel %vm429, %v702, 0
      %v746 = vsel %vm429, %v703, 0
      %v749 = vsel %vm429, %v704, 0
      %v752 = vsel %vm429, %v705, 0
      %v755 = vsel %vm429, %v706, 0
      %v758 = vsel %vm478, %v708, 0
      %760 = vmatprep.subr.mxu0 0.0
      %761 = vmatpush1.msra.mxu0 %v758
      %762 = vmatprep.subr.mxu0 0.0
      %763 = vmatpush1.msra.mxu0 0.0
      %764 = vmatprep.subr.mxu0 0.0
      %765 = vmatpush1.msra.mxu0 0.0
      %766 = vmatprep.subr.mxu0 0.0
      %767 = vmatpush1.msra.mxu0 0.0
      %768 = vmatprep.subr.mxu0 0.0
      %769 = vmatpush1.msra.mxu0 0.0
      %770 = vmatprep.subr.mxu0 0.0
      %771 = vmatpush1.msra.mxu0 0.0
      %772 = vmatprep.subr.mxu0 0.0
      %773 = vmatpush1.msra.mxu0 0.0
      %774 = vmatprep.subr.mxu0 0.0
      %775 = vmatpush1.msra.mxu0 0.0
      %776 = vmatprep.subr.mxu0 0.0
      %777 = vmatpush1.msra.mxu0 0.0
      %778 = vmatprep.subr.mxu0 0.0
      %779 = vmatpush1.msra.mxu0 0.0
      %780 = vmatprep.subr.mxu0 0.0
      %781 = vmatpush1.msra.mxu0 0.0
      %782 = vmatprep.subr.mxu0 0.0
      %783 = vmatpush1.msra.mxu0 0.0
      %784 = vmatprep.subr.mxu0 0.0
      %785 = vmatpush1.msra.mxu0 0.0
      %786 = vmatprep.subr.mxu0 0.0
      %787 = vmatpush1.msra.mxu0 0.0
      %788 = vmatprep.subr.mxu0 0.0
      %789 = vmatpush1.msra.mxu0 0.0
      %790 = vmatprep.subr.mxu0 0.0
      %791 = vmatpush1.msra.mxu0 0.0
      %792 = vmatprep.subr.mxu0 0.0
      %793 = vmatpush1.msra.mxu0 0.0
      %794 = vmatprep.subr.mxu0 0.0
      %795 = vmatpush1.msra.mxu0 0.0
      %796 = vmatprep.subr.mxu0 0.0
      %797 = vmatpush1.msra.mxu0 0.0
      %798 = vmatprep.subr.mxu0 0.0
      %799 = vmatpush1.msra.mxu0 0.0
      %800 = vmatprep.subr.mxu0 0.0
      %801 = vmatpush1.msra.mxu0 0.0
      %802 = vmatprep.subr.mxu0 0.0
      %803 = vmatpush1.msra.mxu0 0.0
      %804 = vmatprep.subr.mxu0 0.0
      %805 = vmatpush1.msra.mxu0 0.0
      %806 = vmatprep.subr.mxu0 0.0
      %807 = vmatpush1.msra.mxu0 0.0
      %808 = vmatprep.subr.mxu0 0.0
      %809 = vmatpush1.msra.mxu0 0.0
      %810 = vmatprep.subr.mxu0 0.0
      %811 = vmatpush1.msra.mxu0 0.0
      %812 = vmatprep.subr.mxu0 0.0
      %813 = vmatpush1.msra.mxu0 0.0
      %814 = vmatprep.subr.mxu0 0.0
      %815 = vmatpush1.msra.mxu0 0.0
      %816 = vmatprep.subr.mxu0 0.0
      %817 = vmatpush1.msra.mxu0 0.0
      %818 = vmatprep.subr.mxu0 0.0
      %819 = vmatpush1.msra.mxu0 0.0
      %820 = vmatprep.subr.mxu0 0.0
      %821 = vmatpush1.msra.mxu0 0.0
      %822 = vmatprep.subr.mxu0 0.0
      %823 = vmatpush1.msra.mxu0 0.0
      %824 = vmatprep.mubr.f32.mxu0 0.0
      %825 = vmatmul.mubr.f32.gmra.mrb[0].mxu0 %v710
      %v826 = vpop.f32.mrb[0].mxu0
      %v827 = vadd.f32 0.0, %v826
      %v828 = vpop.f32.mrb[0].mxu0
      %829 = vmatprep.mubr.f32.mxu0 0.0
      %830 = vmatmul.mubr.f32.gmra.mrb[0].mxu0 %v713
      %v831 = vpop.f32.mrb[0].mxu0
      %v832 = vadd.f32 0.0, %v831
      %v833 = vpop.f32.mrb[0].mxu0
      %834 = vmatprep.mubr.f32.mxu0 0.0
      %835 = vmatmul.mubr.f32.gmra.mrb[0].mxu0 %v716
      %v836 = vpop.f32.mrb[0].mxu0
      %v837 = vadd.f32 0.0, %v836
      %v838 = vpop.f32.mrb[0].mxu0
      %839 = vmatprep.mubr.f32.mxu0 0.0
      %840 = vmatmul.mubr.f32.gmra.mrb[0].mxu0 %v719
      %v841 = vpop.f32.mrb[0].mxu0
      %v842 = vadd.f32 0.0, %v841
      %v843 = vpop.f32.mrb[0].mxu0
      %844 = vmatprep.mubr.f32.mxu0 0.0
      %845 = vmatmul.mubr.f32.gmra.mrb[0].mxu0 %v722
      %v846 = vpop.f32.mrb[0].mxu0
      %v847 = vadd.f32 0.0, %v846
      %v848 = vpop.f32.mrb[0].mxu0
      %849 = vmatprep.mubr.f32.mxu0 0.0
      %850 = vmatmul.mubr.f32.gmra.mrb[0].mxu0 %v725
      %v851 = vpop.f32.mrb[0].mxu0
      %v852 = vadd.f32 0.0, %v851
      %v853 = vpop.f32.mrb[0].mxu0
      %854 = vmatprep.mubr.f32.mxu0 0.0
      %855 = vmatmul.mubr.f32.gmra.mrb[0].mxu0 %v728
      %v856 = vpop.f32.mrb[0].mxu0
      %v857 = vadd.f32 0.0, %v856
      %v858 = vpop.f32.mrb[0].mxu0
      %859 = vmatprep.mubr.f32.mxu0 0.0
      %860 = vmatmul.mubr.f32.gmra.mrb[0].mxu0 %v731
      %v861 = vpop.f32.mrb[0].mxu0
      %v862 = vadd.f32 0.0, %v861
      %v863 = vpop.f32.mrb[0].mxu0
      %864 = vmatprep.mubr.f32.mxu0 0.0
      %865 = vmatmul.mubr.f32.gmra.mrb[0].mxu0 %v734
      %v866 = vpop.f32.mrb[0].mxu0
      %v867 = vadd.f32 0.0, %v866
      %v868 = vpop.f32.mrb[0].mxu0
      %869 = vmatprep.mubr.f32.mxu0 0.0
      %870 = vmatmul.mubr.f32.gmra.mrb[0].mxu0 %v737
      %v871 = vpop.f32.mrb[0].mxu0
      %v872 = vadd.f32 0.0, %v871
      %v873 = vpop.f32.mrb[0].mxu0
      %874 = vmatprep.mubr.f32.mxu0 0.0
      %875 = vmatmul.mubr.f32.gmra.mrb[0].mxu0 %v740
      %v876 = vpop.f32.mrb[0].mxu0
      %v877 = vadd.f32 0.0, %v876
      %v878 = vpop.f32.mrb[0].mxu0
      %879 = vmatprep.mubr.f32.mxu0 0.0
      %880 = vmatmul.mubr.f32.gmra.mrb[0].mxu0 %v743
      %v881 = vpop.f32.mrb[0].mxu0
      %v882 = vadd.f32 0.0, %v881
      %v883 = vpop.f32.mrb[0].mxu0
      %884 = vmatprep.mubr.f32.mxu0 0.0
      %885 = vmatmul.mubr.f32.gmra.mrb[0].mxu0 %v746
      %v886 = vpop.f32.mrb[0].mxu0
      %v887 = vadd.f32 0.0, %v886
      %v888 = vpop.f32.mrb[0].mxu0
      %889 = vmatprep.mubr.f32.mxu0 0.0
      %890 = vmatmul.mubr.f32.gmra.mrb[0].mxu0 %v749
      %v891 = vpop.f32.mrb[0].mxu0
      %v892 = vadd.f32 0.0, %v891
      %v893 = vpop.f32.mrb[0].mxu0
      %894 = vmatprep.mubr.f32.mxu0 0.0
      %895 = vmatmul.mubr.f32.gmra.mrb[0].mxu0 %v752
      %v896 = vpop.f32.mrb[0].mxu0
      %v897 = vadd.f32 0.0, %v896
      %v898 = vpop.f32.mrb[0].mxu0
      %899 = vmatprep.mubr.f32.mxu0 0.0
      %900 = vmatmul.mubr.f32.gmra.mrb[0].mxu0 %v755
      %v901 = vpop.f32.mrb[0].mxu0
      %v902 = vadd.f32 0.0, %v901
      %v903 = vpop.f32.mrb[0].mxu0
      %904 = vdwg.mxu0
      %v905 = vadd.f32 %v675, %v827
      %v906 = vadd.f32 %v676, %v832
      %v907 = vadd.f32 %v677, %v837
      %v908 = vadd.f32 %v678, %v842
      %v909 = vadd.f32 %v679, %v847
      %v910 = vadd.f32 %v680, %v852
      %v911 = vadd.f32 %v681, %v857
      %v912 = vadd.f32 %v682, %v862
      %v913 = vadd.f32 %v683, %v867
      %v914 = vadd.f32 %v684, %v872
      %v915 = vadd.f32 %v685, %v877
      %v916 = vadd.f32 %v686, %v882
      %v917 = vadd.f32 %v687, %v887
      %v918 = vadd.f32 %v688, %v892
      %v919 = vadd.f32 %v689, %v897
      %v920 = vadd.f32 %v690, %v902
      %v921 = vld [vmem:[%s165 + $0x2] sm:$0xff]
      %v922 = vld [vmem:[%s165 + $0xa] sm:$0xff]
      %v923 = vld [vmem:[%s165 + $0x12] sm:$0xff]
      %v924 = vld [vmem:[%s165 + $0x1a] sm:$0xff]
      %v925 = vld [vmem:[%s165 + $0x22] sm:$0xff]
      %v926 = vld [vmem:[%s165 + $0x2a] sm:$0xff]
      %v927 = vld [vmem:[%s165 + $0x32] sm:$0xff]
      %v928 = vld [vmem:[%s165 + $0x3a] sm:$0xff]
      %v929 = vld [vmem:[%s165 + $0x42] sm:$0xff]
      %v930 = vld [vmem:[%s165 + $0x4a] sm:$0xff]
      %v931 = vld [vmem:[%s165 + $0x52] sm:$0xff]
      %v932 = vld [vmem:[%s165 + $0x5a] sm:$0xff]
      %v933 = vld [vmem:[%s165 + $0x62] sm:$0xff]
      %v934 = vld [vmem:[%s165 + $0x6a] sm:$0xff]
      %v935 = vld [vmem:[%s165 + $0x72] sm:$0xff]
      %v936 = vld [vmem:[%s165 + $0x7a] sm:$0xff]
      %s937 = scalar_lea.vmem %s1, 8
      %v938 = vld [vmem:[%s937] sm:$0xf]
      %v940 = vsel %vm429, %v921, 0
      %v943 = vsel %vm429, %v922, 0
      %v946 = vsel %vm429, %v923, 0
      %v949 = vsel %vm429, %v924, 0
      %v952 = vsel %vm429, %v925, 0
      %v955 = vsel %vm429, %v926, 0
      %v958 = vsel %vm429, %v927, 0
      %v961 = vsel %vm429, %v928, 0
      %v964 = vsel %vm429, %v929, 0
      %v967 = vsel %vm429, %v930, 0
      %v970 = vsel %vm429, %v931, 0
      %v973 = vsel %vm429, %v932, 0
      %v976 = vsel %vm429, %v933, 0
      %v979 = vsel %vm429, %v934, 0
      %v982 = vsel %vm429, %v935, 0
      %v985 = vsel %vm429, %v936, 0
      %v988 = vsel %vm478, %v938, 0
      %990 = vmatprep.subr.mxu0 0.0
      %991 = vmatpush1.msra.mxu0 %v988
      %992 = vmatprep.subr.mxu0 0.0
      %993 = vmatpush1.msra.mxu0 0.0
      %994 = vmatprep.subr.mxu0 0.0
      %995 = vmatpush1.msra.mxu0 0.0
      %996 = vmatprep.subr.mxu0 0.0
      %997 = vmatpush1.msra.mxu0 0.0
      %998 = vmatprep.subr.mxu0 0.0
      %999 = vmatpush1.msra.mxu0 0.0
      %1000 = vmatprep.subr.mxu0 0.0
      %1001 = vmatpush1.msra.mxu0 0.0
      %1002 = vmatprep.subr.mxu0 0.0
      %1003 = vmatpush1.msra.mxu0 0.0
      %1004 = vmatprep.subr.mxu0 0.0
      %1005 = vmatpush1.msra.mxu0 0.0
      %1006 = vmatprep.subr.mxu0 0.0
      %1007 = vmatpush1.msra.mxu0 0.0
      %1008 = vmatprep.subr.mxu0 0.0
      %1009 = vmatpush1.msra.mxu0 0.0
      %1010 = vmatprep.subr.mxu0 0.0
      %1011 = vmatpush1.msra.mxu0 0.0
      %1012 = vmatprep.subr.mxu0 0.0
      %1013 = vmatpush1.msra.mxu0 0.0
      %1014 = vmatprep.subr.mxu0 0.0
      %1015 = vmatpush1.msra.mxu0 0.0
      %1016 = vmatprep.subr.mxu0 0.0
      %1017 = vmatpush1.msra.mxu0 0.0
      %1018 = vmatprep.subr.mxu0 0.0
      %1019 = vmatpush1.msra.mxu0 0.0
      %1020 = vmatprep.subr.mxu0 0.0
      %1021 = vmatpush1.msra.mxu0 0.0
      %1022 = vmatprep.subr.mxu0 0.0
      %1023 = vmatpush1.msra.mxu0 0.0
      %1024 = vmatprep.subr.mxu0 0.0
      %1025 = vmatpush1.msra.mxu0 0.0
      %1026 = vmatprep.subr.mxu0 0.0
      %1027 = vmatpush1.msra.mxu0 0.0
      %1028 = vmatprep.subr.mxu0 0.0
      %1029 = vmatpush1.msra.mxu0 0.0
      %1030 = vmatprep.subr.mxu0 0.0
      %1031 = vmatpush1.msra.mxu0 0.0
      %1032 = vmatprep.subr.mxu0 0.0
      %1033 = vmatpush1.msra.mxu0 0.0
      %1034 = vmatprep.subr.mxu0 0.0
      %1035 = vmatpush1.msra.mxu0 0.0
      %1036 = vmatprep.subr.mxu0 0.0
      %1037 = vmatpush1.msra.mxu0 0.0
      %1038 = vmatprep.subr.mxu0 0.0
      %1039 = vmatpush1.msra.mxu0 0.0
      %1040 = vmatprep.subr.mxu0 0.0
      %1041 = vmatpush1.msra.mxu0 0.0
      %1042 = vmatprep.subr.mxu0 0.0
      %1043 = vmatpush1.msra.mxu0 0.0
      %1044 = vmatprep.subr.mxu0 0.0
      %1045 = vmatpush1.msra.mxu0 0.0
      %1046 = vmatprep.subr.mxu0 0.0
      %1047 = vmatpush1.msra.mxu0 0.0
      %1048 = vmatprep.subr.mxu0 0.0
      %1049 = vmatpush1.msra.mxu0 0.0
      %1050 = vmatprep.subr.mxu0 0.0
      %1051 = vmatpush1.msra.mxu0 0.0
      %1052 = vmatprep.subr.mxu0 0.0
      %1053 = vmatpush1.msra.mxu0 0.0
      %1054 = vmatprep.mubr.f32.mxu0 0.0
      %1055 = vmatmul.mubr.f32.gmra.mrb[0].mxu0 %v940
      %v1056 = vpop.f32.mrb[0].mxu0
      %v1057 = vadd.f32 0.0, %v1056
      %v1058 = vpop.f32.mrb[0].mxu0
      %1059 = vmatprep.mubr.f32.mxu0 0.0
      %1060 = vmatmul.mubr.f32.gmra.mrb[0].mxu0 %v943
      %v1061 = vpop.f32.mrb[0].mxu0
      %v1062 = vadd.f32 0.0, %v1061
      %v1063 = vpop.f32.mrb[0].mxu0
      %1064 = vmatprep.mubr.f32.mxu0 0.0
      %1065 = vmatmul.mubr.f32.gmra.mrb[0].mxu0 %v946
      %v1066 = vpop.f32.mrb[0].mxu0
      %v1067 = vadd.f32 0.0, %v1066
      %v1068 = vpop.f32.mrb[0].mxu0
      %1069 = vmatprep.mubr.f32.mxu0 0.0
      %1070 = vmatmul.mubr.f32.gmra.mrb[0].mxu0 %v949
      %v1071 = vpop.f32.mrb[0].mxu0
      %v1072 = vadd.f32 0.0, %v1071
      %v1073 = vpop.f32.mrb[0].mxu0
      %1074 = vmatprep.mubr.f32.mxu0 0.0
      %1075 = vmatmul.mubr.f32.gmra.mrb[0].mxu0 %v952
      %v1076 = vpop.f32.mrb[0].mxu0
      %v1077 = vadd.f32 0.0, %v1076
      %v1078 = vpop.f32.mrb[0].mxu0
      %1079 = vmatprep.mubr.f32.mxu0 0.0
      %1080 = vmatmul.mubr.f32.gmra.mrb[0].mxu0 %v955
      %v1081 = vpop.f32.mrb[0].mxu0
      %v1082 = vadd.f32 0.0, %v1081
      %v1083 = vpop.f32.mrb[0].mxu0
      %1084 = vmatprep.mubr.f32.mxu0 0.0
      %1085 = vmatmul.mubr.f32.gmra.mrb[0].mxu0 %v958
      %v1086 = vpop.f32.mrb[0].mxu0
      %v1087 = vadd.f32 0.0, %v1086
      %v1088 = vpop.f32.mrb[0].mxu0
      %1089 = vmatprep.mubr.f32.mxu0 0.0
      %1090 = vmatmul.mubr.f32.gmra.mrb[0].mxu0 %v961
      %v1091 = vpop.f32.mrb[0].mxu0
      %v1092 = vadd.f32 0.0, %v1091
      %v1093 = vpop.f32.mrb[0].mxu0
      %1094 = vmatprep.mubr.f32.mxu0 0.0
      %1095 = vmatmul.mubr.f32.gmra.mrb[0].mxu0 %v964
      %v1096 = vpop.f32.mrb[0].mxu0
      %v1097 = vadd.f32 0.0, %v1096
      %v1098 = vpop.f32.mrb[0].mxu0
      %1099 = vmatprep.mubr.f32.mxu0 0.0
      %1100 = vmatmul.mubr.f32.gmra.mrb[0].mxu0 %v967
      %v1101 = vpop.f32.mrb[0].mxu0
      %v1102 = vadd.f32 0.0, %v1101
      %v1103 = vpop.f32.mrb[0].mxu0
      %1104 = vmatprep.mubr.f32.mxu0 0.0
      %1105 = vmatmul.mubr.f32.gmra.mrb[0].mxu0 %v970
      %v1106 = vpop.f32.mrb[0].mxu0
      %v1107 = vadd.f32 0.0, %v1106
      %v1108 = vpop.f32.mrb[0].mxu0
      %1109 = vmatprep.mubr.f32.mxu0 0.0
      %1110 = vmatmul.mubr.f32.gmra.mrb[0].mxu0 %v973
      %v1111 = vpop.f32.mrb[0].mxu0
      %v1112 = vadd.f32 0.0, %v1111
      %v1113 = vpop.f32.mrb[0].mxu0
      %1114 = vmatprep.mubr.f32.mxu0 0.0
      %1115 = vmatmul.mubr.f32.gmra.mrb[0].mxu0 %v976
      %v1116 = vpop.f32.mrb[0].mxu0
      %v1117 = vadd.f32 0.0, %v1116
      %v1118 = vpop.f32.mrb[0].mxu0
      %1119 = vmatprep.mubr.f32.mxu0 0.0
      %1120 = vmatmul.mubr.f32.gmra.mrb[0].mxu0 %v979
      %v1121 = vpop.f32.mrb[0].mxu0
      %v1122 = vadd.f32 0.0, %v1121
      %v1123 = vpop.f32.mrb[0].mxu0
      %1124 = vmatprep.mubr.f32.mxu0 0.0
      %1125 = vmatmul.mubr.f32.gmra.mrb[0].mxu0 %v982
      %v1126 = vpop.f32.mrb[0].mxu0
      %v1127 = vadd.f32 0.0, %v1126
      %v1128 = vpop.f32.mrb[0].mxu0
      %1129 = vmatprep.mubr.f32.mxu0 0.0
      %1130 = vmatmul.mubr.f32.gmra.mrb[0].mxu0 %v985
      %v1131 = vpop.f32.mrb[0].mxu0
      %v1132 = vadd.f32 0.0, %v1131
      %v1133 = vpop.f32.mrb[0].mxu0
      %1134 = vdwg.mxu0
      %v1135 = vsel %vm396, 1, 0
      %v1136 = vsel %vm397, 1, 0
      %v1137 = vsel %vm398, 1, 0
      %v1138 = vsel %vm399, 1, 0
      %v1139 = vsel %vm400, 1, 0
      %v1140 = vsel %vm401, 1, 0
      %v1141 = vsel %vm402, 1, 0
      %v1142 = vsel %vm403, 1, 0
      %v1143 = vsel %vm404, 1, 0
      %v1144 = vsel %vm405, 1, 0
      %v1145 = vsel %vm406, 1, 0
      %v1146 = vsel %vm407, 1, 0
      %v1147 = vsel %vm408, 1, 0
      %v1148 = vsel %vm409, 1, 0
      %v1149 = vsel %vm410, 1, 0
      %v1150 = vsel %vm411, 1, 0
      %vm1151 = vcmp.eq.s32.totalorder %v1135, 1
      %vm1152 = vcmp.eq.s32.totalorder %v1136, 1
      %vm1153 = vcmp.eq.s32.totalorder %v1137, 1
      %vm1154 = vcmp.eq.s32.totalorder %v1138, 1
      %vm1155 = vcmp.eq.s32.totalorder %v1139, 1
      %vm1156 = vcmp.eq.s32.totalorder %v1140, 1
      %vm1157 = vcmp.eq.s32.totalorder %v1141, 1
      %vm1158 = vcmp.eq.s32.totalorder %v1142, 1
      %vm1159 = vcmp.eq.s32.totalorder %v1143, 1
      %vm1160 = vcmp.eq.s32.totalorder %v1144, 1
      %vm1161 = vcmp.eq.s32.totalorder %v1145, 1
      %vm1162 = vcmp.eq.s32.totalorder %v1146, 1
      %vm1163 = vcmp.eq.s32.totalorder %v1147, 1
      %vm1164 = vcmp.eq.s32.totalorder %v1148, 1
      %vm1165 = vcmp.eq.s32.totalorder %v1149, 1
      %vm1166 = vcmp.eq.s32.totalorder %v1150, 1
      %v1167 = vsel %vm1151, %v1057, 0.0
      %v1168 = vsel %vm1152, %v1062, 0.0
      %v1169 = vsel %vm1153, %v1067, 0.0
      %v1170 = vsel %vm1154, %v1072, 0.0
      %v1171 = vsel %vm1155, %v1077, 0.0
      %v1172 = vsel %vm1156, %v1082, 0.0
      %v1173 = vsel %vm1157, %v1087, 0.0
      %v1174 = vsel %vm1158, %v1092, 0.0
      %v1175 = vsel %vm1159, %v1097, 0.0
      %v1176 = vsel %vm1160, %v1102, 0.0
      %v1177 = vsel %vm1161, %v1107, 0.0
      %v1178 = vsel %vm1162, %v1112, 0.0
      %v1179 = vsel %vm1163, %v1117, 0.0
      %v1180 = vsel %vm1164, %v1122, 0.0
      %v1181 = vsel %vm1165, %v1127, 0.0
      %v1182 = vsel %vm1166, %v1132, 0.0
      %v1183 = vadd.f32 %v905, %v1167
      %v1184 = vadd.f32 %v906, %v1168
      %v1185 = vadd.f32 %v907, %v1169
      %v1186 = vadd.f32 %v908, %v1170
      %v1187 = vadd.f32 %v909, %v1171
      %v1188 = vadd.f32 %v910, %v1172
      %v1189 = vadd.f32 %v911, %v1173
      %v1190 = vadd.f32 %v912, %v1174
      %v1191 = vadd.f32 %v913, %v1175
      %v1192 = vadd.f32 %v914, %v1176
      %v1193 = vadd.f32 %v915, %v1177
      %v1194 = vadd.f32 %v916, %v1178
      %v1195 = vadd.f32 %v917, %v1179
      %v1196 = vadd.f32 %v918, %v1180
      %v1197 = vadd.f32 %v919, %v1181
      %v1198 = vadd.f32 %v920, %v1182
      %v1199 = vld [vmem:[%s165 + $0x10] sm:$0xff]
      %v1200 = vld [vmem:[%s165 + $0x18] sm:$0xff]
      %v1201 = vld [vmem:[%s165 + $0x20] sm:$0xff]
      %v1202 = vld [vmem:[%s165 + $0x28] sm:$0xff]
      %v1203 = vld [vmem:[%s165 + $0x30] sm:$0xff]
      %v1204 = vld [vmem:[%s165 + $0x38] sm:$0xff]
      %v1205 = vld [vmem:[%s165 + $0x40] sm:$0xff]
      %v1206 = vld [vmem:[%s165 + $0x48] sm:$0xff]
      %v1207 = vld [vmem:[%s165 + $0x50] sm:$0xff]
      %v1208 = vld [vmem:[%s165 + $0x58] sm:$0xff]
      %v1209 = vld [vmem:[%s165 + $0x60] sm:$0xff]
      %v1210 = vld [vmem:[%s165 + $0x68] sm:$0xff]
      %v1211 = vld [vmem:[%s165 + $0x70] sm:$0xff]
      %v1212 = vld [vmem:[%s165 + $0x78] sm:$0xff]
      %v1213 = vld [vmem:[%s165 + $0x80] sm:$0xff]
      %v1214 = vld [vmem:[%s165 + $0x88] sm:$0xff]
      %s1215 = scalar_lea.vmem %s1, 12
      %v1216 = vld [vmem:[%s1215] sm:$0xf]
      %v1218 = vsel %vm429, %v1199, 0
      %v1221 = vsel %vm429, %v1200, 0
      %v1224 = vsel %vm429, %v1201, 0
      %v1227 = vsel %vm429, %v1202, 0
      %v1230 = vsel %vm429, %v1203, 0
      %v1233 = vsel %vm429, %v1204, 0
      %v1236 = vsel %vm429, %v1205, 0
      %v1239 = vsel %vm429, %v1206, 0
      %v1242 = vsel %vm429, %v1207, 0
      %v1245 = vsel %vm429, %v1208, 0
      %v1248 = vsel %vm429, %v1209, 0
      %v1251 = vsel %vm429, %v1210, 0
      %v1254 = vsel %vm429, %v1211, 0
      %v1257 = vsel %vm429, %v1212, 0
      %v1260 = vsel %vm429, %v1213, 0
      %v1263 = vsel %vm429, %v1214, 0
      %v1266 = vsel %vm478, %v1216, 0
      %1268 = vmatprep.subr.mxu0 0.0
      %1269 = vmatpush1.msra.mxu0 %v1266
      %1270 = vmatprep.subr.mxu0 0.0
      %1271 = vmatpush1.msra.mxu0 0.0
      %1272 = vmatprep.subr.mxu0 0.0
      %1273 = vmatpush1.msra.mxu0 0.0
      %1274 = vmatprep.subr.mxu0 0.0
      %1275 = vmatpush1.msra.mxu0 0.0
      %1276 = vmatprep.subr.mxu0 0.0
      %1277 = vmatpush1.msra.mxu0 0.0
      %1278 = vmatprep.subr.mxu0 0.0
      %1279 = vmatpush1.msra.mxu0 0.0
      %1280 = vmatprep.subr.mxu0 0.0
      %1281 = vmatpush1.msra.mxu0 0.0
      %1282 = vmatprep.subr.mxu0 0.0
      %1283 = vmatpush1.msra.mxu0 0.0
      %1284 = vmatprep.subr.mxu0 0.0
      %1285 = vmatpush1.msra.mxu0 0.0
      %1286 = vmatprep.subr.mxu0 0.0
      %1287 = vmatpush1.msra.mxu0 0.0
      %1288 = vmatprep.subr.mxu0 0.0
      %1289 = vmatpush1.msra.mxu0 0.0
      %1290 = vmatprep.subr.mxu0 0.0
      %1291 = vmatpush1.msra.mxu0 0.0
      %1292 = vmatprep.subr.mxu0 0.0
      %1293 = vmatpush1.msra.mxu0 0.0
      %1294 = vmatprep.subr.mxu0 0.0
      %1295 = vmatpush1.msra.mxu0 0.0
      %1296 = vmatprep.subr.mxu0 0.0
      %1297 = vmatpush1.msra.mxu0 0.0
      %1298 = vmatprep.subr.mxu0 0.0
      %1299 = vmatpush1.msra.mxu0 0.0
      %1300 = vmatprep.subr.mxu0 0.0
      %1301 = vmatpush1.msra.mxu0 0.0
      %1302 = vmatprep.subr.mxu0 0.0
      %1303 = vmatpush1.msra.mxu0 0.0
      %1304 = vmatprep.subr.mxu0 0.0
      %1305 = vmatpush1.msra.mxu0 0.0
      %1306 = vmatprep.subr.mxu0 0.0
      %1307 = vmatpush1.msra.mxu0 0.0
      %1308 = vmatprep.subr.mxu0 0.0
      %1309 = vmatpush1.msra.mxu0 0.0
      %1310 = vmatprep.subr.mxu0 0.0
      %1311 = vmatpush1.msra.mxu0 0.0
      %1312 = vmatprep.subr.mxu0 0.0
      %1313 = vmatpush1.msra.mxu0 0.0
      %1314 = vmatprep.subr.mxu0 0.0
      %1315 = vmatpush1.msra.mxu0 0.0
      %1316 = vmatprep.subr.mxu0 0.0
      %1317 = vmatpush1.msra.mxu0 0.0
      %1318 = vmatprep.subr.mxu0 0.0
      %1319 = vmatpush1.msra.mxu0 0.0
      %1320 = vmatprep.subr.mxu0 0.0
      %1321 = vmatpush1.msra.mxu0 0.0
      %1322 = vmatprep.subr.mxu0 0.0
      %1323 = vmatpush1.msra.mxu0 0.0
      %1324 = vmatprep.subr.mxu0 0.0
      %1325 = vmatpush1.msra.mxu0 0.0
      %1326 = vmatprep.subr.mxu0 0.0
      %1327 = vmatpush1.msra.mxu0 0.0
      %1328 = vmatprep.subr.mxu0 0.0
      %1329 = vmatpush1.msra.mxu0 0.0
      %1330 = vmatprep.subr.mxu0 0.0
      %1331 = vmatpush1.msra.mxu0 0.0
      %1332 = vmatprep.mubr.f32.mxu0 0.0
      %1333 = vmatmul.mubr.f32.gmra.mrb[0].mxu0 %v1218
      %v1334 = vpop.f32.mrb[0].mxu0
      %v1335 = vadd.f32 0.0, %v1334
      %v1336 = vpop.f32.mrb[0].mxu0
      %1337 = vmatprep.mubr.f32.mxu0 0.0
      %1338 = vmatmul.mubr.f32.gmra.mrb[0].mxu0 %v1221
      %v1339 = vpop.f32.mrb[0].mxu0
      %v1340 = vadd.f32 0.0, %v1339
      %v1341 = vpop.f32.mrb[0].mxu0
      %1342 = vmatprep.mubr.f32.mxu0 0.0
      %1343 = vmatmul.mubr.f32.gmra.mrb[0].mxu0 %v1224
      %v1344 = vpop.f32.mrb[0].mxu0
      %v1345 = vadd.f32 0.0, %v1344
      %v1346 = vpop.f32.mrb[0].mxu0
      %1347 = vmatprep.mubr.f32.mxu0 0.0
      %1348 = vmatmul.mubr.f32.gmra.mrb[0].mxu0 %v1227
      %v1349 = vpop.f32.mrb[0].mxu0
      %v1350 = vadd.f32 0.0, %v1349
      %v1351 = vpop.f32.mrb[0].mxu0
      %1352 = vmatprep.mubr.f32.mxu0 0.0
      %1353 = vmatmul.mubr.f32.gmra.mrb[0].mxu0 %v1230
      %v1354 = vpop.f32.mrb[0].mxu0
      %v1355 = vadd.f32 0.0, %v1354
      %v1356 = vpop.f32.mrb[0].mxu0
      %1357 = vmatprep.mubr.f32.mxu0 0.0
      %1358 = vmatmul.mubr.f32.gmra.mrb[0].mxu0 %v1233
      %v1359 = vpop.f32.mrb[0].mxu0
      %v1360 = vadd.f32 0.0, %v1359
      %v1361 = vpop.f32.mrb[0].mxu0
      %1362 = vmatprep.mubr.f32.mxu0 0.0
      %1363 = vmatmul.mubr.f32.gmra.mrb[0].mxu0 %v1236
      %v1364 = vpop.f32.mrb[0].mxu0
      %v1365 = vadd.f32 0.0, %v1364
      %v1366 = vpop.f32.mrb[0].mxu0
      %1367 = vmatprep.mubr.f32.mxu0 0.0
      %1368 = vmatmul.mubr.f32.gmra.mrb[0].mxu0 %v1239
      %v1369 = vpop.f32.mrb[0].mxu0
      %v1370 = vadd.f32 0.0, %v1369
      %v1371 = vpop.f32.mrb[0].mxu0
      %1372 = vmatprep.mubr.f32.mxu0 0.0
      %1373 = vmatmul.mubr.f32.gmra.mrb[0].mxu0 %v1242
      %v1374 = vpop.f32.mrb[0].mxu0
      %v1375 = vadd.f32 0.0, %v1374
      %v1376 = vpop.f32.mrb[0].mxu0
      %1377 = vmatprep.mubr.f32.mxu0 0.0
      %1378 = vmatmul.mubr.f32.gmra.mrb[0].mxu0 %v1245
      %v1379 = vpop.f32.mrb[0].mxu0
      %v1380 = vadd.f32 0.0, %v1379
      %v1381 = vpop.f32.mrb[0].mxu0
      %1382 = vmatprep.mubr.f32.mxu0 0.0
      %1383 = vmatmul.mubr.f32.gmra.mrb[0].mxu0 %v1248
      %v1384 = vpop.f32.mrb[0].mxu0
      %v1385 = vadd.f32 0.0, %v1384
      %v1386 = vpop.f32.mrb[0].mxu0
      %1387 = vmatprep.mubr.f32.mxu0 0.0
      %1388 = vmatmul.mubr.f32.gmra.mrb[0].mxu0 %v1251
      %v1389 = vpop.f32.mrb[0].mxu0
      %v1390 = vadd.f32 0.0, %v1389
      %v1391 = vpop.f32.mrb[0].mxu0
      %1392 = vmatprep.mubr.f32.mxu0 0.0
      %1393 = vmatmul.mubr.f32.gmra.mrb[0].mxu0 %v1254
      %v1394 = vpop.f32.mrb[0].mxu0
      %v1395 = vadd.f32 0.0, %v1394
      %v1396 = vpop.f32.mrb[0].mxu0
      %1397 = vmatprep.mubr.f32.mxu0 0.0
      %1398 = vmatmul.mubr.f32.gmra.mrb[0].mxu0 %v1257
      %v1399 = vpop.f32.mrb[0].mxu0
      %v1400 = vadd.f32 0.0, %v1399
      %v1401 = vpop.f32.mrb[0].mxu0
      %1402 = vmatprep.mubr.f32.mxu0 0.0
      %1403 = vmatmul.mubr.f32.gmra.mrb[0].mxu0 %v1260
      %v1404 = vpop.f32.mrb[0].mxu0
      %v1405 = vadd.f32 0.0, %v1404
      %v1406 = vpop.f32.mrb[0].mxu0
      %1407 = vmatprep.mubr.f32.mxu0 0.0
      %1408 = vmatmul.mubr.f32.gmra.mrb[0].mxu0 %v1263
      %v1409 = vpop.f32.mrb[0].mxu0
      %v1410 = vadd.f32 0.0, %v1409
      %v1411 = vpop.f32.mrb[0].mxu0
      %1412 = vdwg.mxu0
      %v1413 = vsel %vm643, %v1335, 0.0
      %v1414 = vsel %vm644, %v1340, 0.0
      %v1415 = vsel %vm645, %v1345, 0.0
      %v1416 = vsel %vm646, %v1350, 0.0
      %v1417 = vsel %vm647, %v1355, 0.0
      %v1418 = vsel %vm648, %v1360, 0.0
      %v1419 = vsel %vm649, %v1365, 0.0
      %v1420 = vsel %vm650, %v1370, 0.0
      %v1421 = vsel %vm651, %v1375, 0.0
      %v1422 = vsel %vm652, %v1380, 0.0
      %v1423 = vsel %vm653, %v1385, 0.0
      %v1424 = vsel %vm654, %v1390, 0.0
      %v1425 = vsel %vm655, %v1395, 0.0
      %v1426 = vsel %vm656, %v1400, 0.0
      %v1427 = vsel %vm657, %v1405, 0.0
      %v1428 = vsel %vm658, %v1410, 0.0
      %v1429 = vadd.f32 %v1183, %v1413
      %v1430 = vadd.f32 %v1184, %v1414
      %v1431 = vadd.f32 %v1185, %v1415
      %v1432 = vadd.f32 %v1186, %v1416
      %v1433 = vadd.f32 %v1187, %v1417
      %v1434 = vadd.f32 %v1188, %v1418
      %v1435 = vadd.f32 %v1189, %v1419
      %v1436 = vadd.f32 %v1190, %v1420
      %v1437 = vadd.f32 %v1191, %v1421
      %v1438 = vadd.f32 %v1192, %v1422
      %v1439 = vadd.f32 %v1193, %v1423
      %v1440 = vadd.f32 %v1194, %v1424
      %v1441 = vadd.f32 %v1195, %v1425
      %v1442 = vadd.f32 %v1196, %v1426
      %v1443 = vadd.f32 %v1197, %v1427
      %v1444 = vadd.f32 %v1198, %v1428
      %v1445 = vld [vmem:[%s165 + $0x11] sm:$0xff]
      %v1446 = vld [vmem:[%s165 + $0x19] sm:$0xff]
      %v1447 = vld [vmem:[%s165 + $0x21] sm:$0xff]
      %v1448 = vld [vmem:[%s165 + $0x29] sm:$0xff]
      %v1449 = vld [vmem:[%s165 + $0x31] sm:$0xff]
      %v1450 = vld [vmem:[%s165 + $0x39] sm:$0xff]
      %v1451 = vld [vmem:[%s165 + $0x41] sm:$0xff]
      %v1452 = vld [vmem:[%s165 + $0x49] sm:$0xff]
      %v1453 = vld [vmem:[%s165 + $0x51] sm:$0xff]
      %v1454 = vld [vmem:[%s165 + $0x59] sm:$0xff]
      %v1455 = vld [vmem:[%s165 + $0x61] sm:$0xff]
      %v1456 = vld [vmem:[%s165 + $0x69] sm:$0xff]
      %v1457 = vld [vmem:[%s165 + $0x71] sm:$0xff]
      %v1458 = vld [vmem:[%s165 + $0x79] sm:$0xff]
      %v1459 = vld [vmem:[%s165 + $0x81] sm:$0xff]
      %v1460 = vld [vmem:[%s165 + $0x89] sm:$0xff]
      %s1461 = scalar_lea.vmem %s1, 16
      %v1462 = vld [vmem:[%s1461] sm:$0xf]
      %v1464 = vsel %vm429, %v1445, 0
      %v1467 = vsel %vm429, %v1446, 0
      %v1470 = vsel %vm429, %v1447, 0
      %v1473 = vsel %vm429, %v1448, 0
      %v1476 = vsel %vm429, %v1449, 0
      %v1479 = vsel %vm429, %v1450, 0
      %v1482 = vsel %vm429, %v1451, 0
      %v1485 = vsel %vm429, %v1452, 0
      %v1488 = vsel %vm429, %v1453, 0
      %v1491 = vsel %vm429, %v1454, 0
      %v1494 = vsel %vm429, %v1455, 0
      %v1497 = vsel %vm429, %v1456, 0
      %v1500 = vsel %vm429, %v1457, 0
      %v1503 = vsel %vm429, %v1458, 0
      %v1506 = vsel %vm429, %v1459, 0
      %v1509 = vsel %vm429, %v1460, 0
      %v1512 = vsel %vm478, %v1462, 0
      %1514 = vmatprep.subr.mxu0 0.0
      %1515 = vmatpush1.msra.mxu0 %v1512
      %1516 = vmatprep.subr.mxu0 0.0
      %1517 = vmatpush1.msra.mxu0 0.0
      %1518 = vmatprep.subr.mxu0 0.0
      %1519 = vmatpush1.msra.mxu0 0.0
      %1520 = vmatprep.subr.mxu0 0.0
      %1521 = vmatpush1.msra.mxu0 0.0
      %1522 = vmatprep.subr.mxu0 0.0
      %1523 = vmatpush1.msra.mxu0 0.0
      %1524 = vmatprep.subr.mxu0 0.0
      %1525 = vmatpush1.msra.mxu0 0.0
      %1526 = vmatprep.subr.mxu0 0.0
      %1527 = vmatpush1.msra.mxu0 0.0
      %1528 = vmatprep.subr.mxu0 0.0
      %1529 = vmatpush1.msra.mxu0 0.0
      %1530 = vmatprep.subr.mxu0 0.0
      %1531 = vmatpush1.msra.mxu0 0.0
      %1532 = vmatprep.subr.mxu0 0.0
      %1533 = vmatpush1.msra.mxu0 0.0
      %1534 = vmatprep.subr.mxu0 0.0
      %1535 = vmatpush1.msra.mxu0 0.0
      %1536 = vmatprep.subr.mxu0 0.0
      %1537 = vmatpush1.msra.mxu0 0.0
      %1538 = vmatprep.subr.mxu0 0.0
      %1539 = vmatpush1.msra.mxu0 0.0
      %1540 = vmatprep.subr.mxu0 0.0
      %1541 = vmatpush1.msra.mxu0 0.0
      %1542 = vmatprep.subr.mxu0 0.0
      %1543 = vmatpush1.msra.mxu0 0.0
      %1544 = vmatprep.subr.mxu0 0.0
      %1545 = vmatpush1.msra.mxu0 0.0
      %1546 = vmatprep.subr.mxu0 0.0
      %1547 = vmatpush1.msra.mxu0 0.0
      %1548 = vmatprep.subr.mxu0 0.0
      %1549 = vmatpush1.msra.mxu0 0.0
      %1550 = vmatprep.subr.mxu0 0.0
      %1551 = vmatpush1.msra.mxu0 0.0
      %1552 = vmatprep.subr.mxu0 0.0
      %1553 = vmatpush1.msra.mxu0 0.0
      %1554 = vmatprep.subr.mxu0 0.0
      %1555 = vmatpush1.msra.mxu0 0.0
      %1556 = vmatprep.subr.mxu0 0.0
      %1557 = vmatpush1.msra.mxu0 0.0
      %1558 = vmatprep.subr.mxu0 0.0
      %1559 = vmatpush1.msra.mxu0 0.0
      %1560 = vmatprep.subr.mxu0 0.0
      %1561 = vmatpush1.msra.mxu0 0.0
      %1562 = vmatprep.subr.mxu0 0.0
      %1563 = vmatpush1.msra.mxu0 0.0
      %1564 = vmatprep.subr.mxu0 0.0
      %1565 = vmatpush1.msra.mxu0 0.0
      %1566 = vmatprep.subr.mxu0 0.0
      %1567 = vmatpush1.msra.mxu0 0.0
      %1568 = vmatprep.subr.mxu0 0.0
      %1569 = vmatpush1.msra.mxu0 0.0
      %1570 = vmatprep.subr.mxu0 0.0
      %1571 = vmatpush1.msra.mxu0 0.0
      %1572 = vmatprep.subr.mxu0 0.0
      %1573 = vmatpush1.msra.mxu0 0.0
      %1574 = vmatprep.subr.mxu0 0.0
      %1575 = vmatpush1.msra.mxu0 0.0
      %1576 = vmatprep.subr.mxu0 0.0
      %1577 = vmatpush1.msra.mxu0 0.0
      %1578 = vmatprep.mubr.f32.mxu0 0.0
      %1579 = vmatmul.mubr.f32.gmra.mrb[0].mxu0 %v1464
      %v1580 = vpop.f32.mrb[0].mxu0
      %v1581 = vadd.f32 0.0, %v1580
      %v1582 = vpop.f32.mrb[0].mxu0
      %1583 = vmatprep.mubr.f32.mxu0 0.0
      %1584 = vmatmul.mubr.f32.gmra.mrb[0].mxu0 %v1467
      %v1585 = vpop.f32.mrb[0].mxu0
      %v1586 = vadd.f32 0.0, %v1585
      %v1587 = vpop.f32.mrb[0].mxu0
      %1588 = vmatprep.mubr.f32.mxu0 0.0
      %1589 = vmatmul.mubr.f32.gmra.mrb[0].mxu0 %v1470
      %v1590 = vpop.f32.mrb[0].mxu0
      %v1591 = vadd.f32 0.0, %v1590
      %v1592 = vpop.f32.mrb[0].mxu0
      %1593 = vmatprep.mubr.f32.mxu0 0.0
      %1594 = vmatmul.mubr.f32.gmra.mrb[0].mxu0 %v1473
      %v1595 = vpop.f32.mrb[0].mxu0
      %v1596 = vadd.f32 0.0, %v1595
      %v1597 = vpop.f32.mrb[0].mxu0
      %1598 = vmatprep.mubr.f32.mxu0 0.0
      %1599 = vmatmul.mubr.f32.gmra.mrb[0].mxu0 %v1476
      %v1600 = vpop.f32.mrb[0].mxu0
      %v1601 = vadd.f32 0.0, %v1600
      %v1602 = vpop.f32.mrb[0].mxu0
      %1603 = vmatprep.mubr.f32.mxu0 0.0
      %1604 = vmatmul.mubr.f32.gmra.mrb[0].mxu0 %v1479
      %v1605 = vpop.f32.mrb[0].mxu0
      %v1606 = vadd.f32 0.0, %v1605
      %v1607 = vpop.f32.mrb[0].mxu0
      %1608 = vmatprep.mubr.f32.mxu0 0.0
      %1609 = vmatmul.mubr.f32.gmra.mrb[0].mxu0 %v1482
      %v1610 = vpop.f32.mrb[0].mxu0
      %v1611 = vadd.f32 0.0, %v1610
      %v1612 = vpop.f32.mrb[0].mxu0
      %1613 = vmatprep.mubr.f32.mxu0 0.0
      %1614 = vmatmul.mubr.f32.gmra.mrb[0].mxu0 %v1485
      %v1615 = vpop.f32.mrb[0].mxu0
      %v1616 = vadd.f32 0.0, %v1615
      %v1617 = vpop.f32.mrb[0].mxu0
      %1618 = vmatprep.mubr.f32.mxu0 0.0
      %1619 = vmatmul.mubr.f32.gmra.mrb[0].mxu0 %v1488
      %v1620 = vpop.f32.mrb[0].mxu0
      %v1621 = vadd.f32 0.0, %v1620
      %v1622 = vpop.f32.mrb[0].mxu0
      %1623 = vmatprep.mubr.f32.mxu0 0.0
      %1624 = vmatmul.mubr.f32.gmra.mrb[0].mxu0 %v1491
      %v1625 = vpop.f32.mrb[0].mxu0
      %v1626 = vadd.f32 0.0, %v1625
      %v1627 = vpop.f32.mrb[0].mxu0
      %1628 = vmatprep.mubr.f32.mxu0 0.0
      %1629 = vmatmul.mubr.f32.gmra.mrb[0].mxu0 %v1494
      %v1630 = vpop.f32.mrb[0].mxu0
      %v1631 = vadd.f32 0.0, %v1630
      %v1632 = vpop.f32.mrb[0].mxu0
      %1633 = vmatprep.mubr.f32.mxu0 0.0
      %1634 = vmatmul.mubr.f32.gmra.mrb[0].mxu0 %v1497
      %v1635 = vpop.f32.mrb[0].mxu0
      %v1636 = vadd.f32 0.0, %v1635
      %v1637 = vpop.f32.mrb[0].mxu0
      %1638 = vmatprep.mubr.f32.mxu0 0.0
      %1639 = vmatmul.mubr.f32.gmra.mrb[0].mxu0 %v1500
      %v1640 = vpop.f32.mrb[0].mxu0
      %v1641 = vadd.f32 0.0, %v1640
      %v1642 = vpop.f32.mrb[0].mxu0
      %1643 = vmatprep.mubr.f32.mxu0 0.0
      %1644 = vmatmul.mubr.f32.gmra.mrb[0].mxu0 %v1503
      %v1645 = vpop.f32.mrb[0].mxu0
      %v1646 = vadd.f32 0.0, %v1645
      %v1647 = vpop.f32.mrb[0].mxu0
      %1648 = vmatprep.mubr.f32.mxu0 0.0
      %1649 = vmatmul.mubr.f32.gmra.mrb[0].mxu0 %v1506
      %v1650 = vpop.f32.mrb[0].mxu0
      %v1651 = vadd.f32 0.0, %v1650
      %v1652 = vpop.f32.mrb[0].mxu0
      %1653 = vmatprep.mubr.f32.mxu0 0.0
      %1654 = vmatmul.mubr.f32.gmra.mrb[0].mxu0 %v1509
      %v1655 = vpop.f32.mrb[0].mxu0
      %v1656 = vadd.f32 0.0, %v1655
      %v1657 = vpop.f32.mrb[0].mxu0
      %1658 = vdwg.mxu0
      %v1659 = vadd.f32 %v1429, %v1581
      %v1660 = vadd.f32 %v1430, %v1586
      %v1661 = vadd.f32 %v1431, %v1591
      %v1662 = vadd.f32 %v1432, %v1596
      %v1663 = vadd.f32 %v1433, %v1601
      %v1664 = vadd.f32 %v1434, %v1606
      %v1665 = vadd.f32 %v1435, %v1611
      %v1666 = vadd.f32 %v1436, %v1616
      %v1667 = vadd.f32 %v1437, %v1621
      %v1668 = vadd.f32 %v1438, %v1626
      %v1669 = vadd.f32 %v1439, %v1631
      %v1670 = vadd.f32 %v1440, %v1636
      %v1671 = vadd.f32 %v1441, %v1641
      %v1672 = vadd.f32 %v1442, %v1646
      %v1673 = vadd.f32 %v1443, %v1651
      %v1674 = vadd.f32 %v1444, %v1656
      %v1675 = vld [vmem:[%s165 + $0x12] sm:$0xff]
      %v1676 = vld [vmem:[%s165 + $0x1a] sm:$0xff]
      %v1677 = vld [vmem:[%s165 + $0x22] sm:$0xff]
      %v1678 = vld [vmem:[%s165 + $0x2a] sm:$0xff]
      %v1679 = vld [vmem:[%s165 + $0x32] sm:$0xff]
      %v1680 = vld [vmem:[%s165 + $0x3a] sm:$0xff]
      %v1681 = vld [vmem:[%s165 + $0x42] sm:$0xff]
      %v1682 = vld [vmem:[%s165 + $0x4a] sm:$0xff]
      %v1683 = vld [vmem:[%s165 + $0x52] sm:$0xff]
      %v1684 = vld [vmem:[%s165 + $0x5a] sm:$0xff]
      %v1685 = vld [vmem:[%s165 + $0x62] sm:$0xff]
      %v1686 = vld [vmem:[%s165 + $0x6a] sm:$0xff]
      %v1687 = vld [vmem:[%s165 + $0x72] sm:$0xff]
      %v1688 = vld [vmem:[%s165 + $0x7a] sm:$0xff]
      %v1689 = vld [vmem:[%s165 + $0x82] sm:$0xff]
      %v1690 = vld [vmem:[%s165 + $0x8a] sm:$0xff]
      %s1691 = scalar_lea.vmem %s1, 20
      %v1692 = vld [vmem:[%s1691] sm:$0xf]
      %v1694 = vsel %vm429, %v1675, 0
      %v1697 = vsel %vm429, %v1676, 0
      %v1700 = vsel %vm429, %v1677, 0
      %v1703 = vsel %vm429, %v1678, 0
      %v1706 = vsel %vm429, %v1679, 0
      %v1709 = vsel %vm429, %v1680, 0
      %v1712 = vsel %vm429, %v1681, 0
      %v1715 = vsel %vm429, %v1682, 0
      %v1718 = vsel %vm429, %v1683, 0
      %v1721 = vsel %vm429, %v1684, 0
      %v1724 = vsel %vm429, %v1685, 0
      %v1727 = vsel %vm429, %v1686, 0
      %v1730 = vsel %vm429, %v1687, 0
      %v1733 = vsel %vm429, %v1688, 0
      %v1736 = vsel %vm429, %v1689, 0
      %v1739 = vsel %vm429, %v1690, 0
      %v1742 = vsel %vm478, %v1692, 0
      %1744 = vmatprep.subr.mxu0 0.0
      %1745 = vmatpush1.msra.mxu0 %v1742
      %1746 = vmatprep.subr.mxu0 0.0
      %1747 = vmatpush1.msra.mxu0 0.0
      %1748 = vmatprep.subr.mxu0 0.0
      %1749 = vmatpush1.msra.mxu0 0.0
      %1750 = vmatprep.subr.mxu0 0.0
      %1751 = vmatpush1.msra.mxu0 0.0
      %1752 = vmatprep.subr.mxu0 0.0
      %1753 = vmatpush1.msra.mxu0 0.0
      %1754 = vmatprep.subr.mxu0 0.0
      %1755 = vmatpush1.msra.mxu0 0.0
      %1756 = vmatprep.subr.mxu0 0.0
      %1757 = vmatpush1.msra.mxu0 0.0
      %1758 = vmatprep.subr.mxu0 0.0
      %1759 = vmatpush1.msra.mxu0 0.0
      %1760 = vmatprep.subr.mxu0 0.0
      %1761 = vmatpush1.msra.mxu0 0.0
      %1762 = vmatprep.subr.mxu0 0.0
      %1763 = vmatpush1.msra.mxu0 0.0
      %1764 = vmatprep.subr.mxu0 0.0
      %1765 = vmatpush1.msra.mxu0 0.0
      %1766 = vmatprep.subr.mxu0 0.0
      %1767 = vmatpush1.msra.mxu0 0.0
      %1768 = vmatprep.subr.mxu0 0.0
      %1769 = vmatpush1.msra.mxu0 0.0
      %1770 = vmatprep.subr.mxu0 0.0
      %1771 = vmatpush1.msra.mxu0 0.0
      %1772 = vmatprep.subr.mxu0 0.0
      %1773 = vmatpush1.msra.mxu0 0.0
      %1774 = vmatprep.subr.mxu0 0.0
      %1775 = vmatpush1.msra.mxu0 0.0
      %1776 = vmatprep.subr.mxu0 0.0
      %1777 = vmatpush1.msra.mxu0 0.0
      %1778 = vmatprep.subr.mxu0 0.0
      %1779 = vmatpush1.msra.mxu0 0.0
      %1780 = vmatprep.subr.mxu0 0.0
      %1781 = vmatpush1.msra.mxu0 0.0
      %1782 = vmatprep.subr.mxu0 0.0
      %1783 = vmatpush1.msra.mxu0 0.0
      %1784 = vmatprep.subr.mxu0 0.0
      %1785 = vmatpush1.msra.mxu0 0.0
      %1786 = vmatprep.subr.mxu0 0.0
      %1787 = vmatpush1.msra.mxu0 0.0
      %1788 = vmatprep.subr.mxu0 0.0
      %1789 = vmatpush1.msra.mxu0 0.0
      %1790 = vmatprep.subr.mxu0 0.0
      %1791 = vmatpush1.msra.mxu0 0.0
      %1792 = vmatprep.subr.mxu0 0.0
      %1793 = vmatpush1.msra.mxu0 0.0
      %1794 = vmatprep.subr.mxu0 0.0
      %1795 = vmatpush1.msra.mxu0 0.0
      %1796 = vmatprep.subr.mxu0 0.0
      %1797 = vmatpush1.msra.mxu0 0.0
      %1798 = vmatprep.subr.mxu0 0.0
      %1799 = vmatpush1.msra.mxu0 0.0
      %1800 = vmatprep.subr.mxu0 0.0
      %1801 = vmatpush1.msra.mxu0 0.0
      %1802 = vmatprep.subr.mxu0 0.0
      %1803 = vmatpush1.msra.mxu0 0.0
      %1804 = vmatprep.subr.mxu0 0.0
      %1805 = vmatpush1.msra.mxu0 0.0
      %1806 = vmatprep.subr.mxu0 0.0
      %1807 = vmatpush1.msra.mxu0 0.0
      %1808 = vmatprep.mubr.f32.mxu0 0.0
      %1809 = vmatmul.mubr.f32.gmra.mrb[0].mxu0 %v1694
      %v1810 = vpop.f32.mrb[0].mxu0
      %v1811 = vadd.f32 0.0, %v1810
      %v1812 = vpop.f32.mrb[0].mxu0
      %1813 = vmatprep.mubr.f32.mxu0 0.0
      %1814 = vmatmul.mubr.f32.gmra.mrb[0].mxu0 %v1697
      %v1815 = vpop.f32.mrb[0].mxu0
      %v1816 = vadd.f32 0.0, %v1815
      %v1817 = vpop.f32.mrb[0].mxu0
      %1818 = vmatprep.mubr.f32.mxu0 0.0
      %1819 = vmatmul.mubr.f32.gmra.mrb[0].mxu0 %v1700
      %v1820 = vpop.f32.mrb[0].mxu0
      %v1821 = vadd.f32 0.0, %v1820
      %v1822 = vpop.f32.mrb[0].mxu0
      %1823 = vmatprep.mubr.f32.mxu0 0.0
      %1824 = vmatmul.mubr.f32.gmra.mrb[0].mxu0 %v1703
      %v1825 = vpop.f32.mrb[0].mxu0
      %v1826 = vadd.f32 0.0, %v1825
      %v1827 = vpop.f32.mrb[0].mxu0
      %1828 = vmatprep.mubr.f32.mxu0 0.0
      %1829 = vmatmul.mubr.f32.gmra.mrb[0].mxu0 %v1706
      %v1830 = vpop.f32.mrb[0].mxu0
      %v1831 = vadd.f32 0.0, %v1830
      %v1832 = vpop.f32.mrb[0].mxu0
      %1833 = vmatprep.mubr.f32.mxu0 0.0
      %1834 = vmatmul.mubr.f32.gmra.mrb[0].mxu0 %v1709
      %v1835 = vpop.f32.mrb[0].mxu0
      %v1836 = vadd.f32 0.0, %v1835
      %v1837 = vpop.f32.mrb[0].mxu0
      %1838 = vmatprep.mubr.f32.mxu0 0.0
      %1839 = vmatmul.mubr.f32.gmra.mrb[0].mxu0 %v1712
      %v1840 = vpop.f32.mrb[0].mxu0
      %v1841 = vadd.f32 0.0, %v1840
      %v1842 = vpop.f32.mrb[0].mxu0
      %1843 = vmatprep.mubr.f32.mxu0 0.0
      %1844 = vmatmul.mubr.f32.gmra.mrb[0].mxu0 %v1715
      %v1845 = vpop.f32.mrb[0].mxu0
      %v1846 = vadd.f32 0.0, %v1845
      %v1847 = vpop.f32.mrb[0].mxu0
      %1848 = vmatprep.mubr.f32.mxu0 0.0
      %1849 = vmatmul.mubr.f32.gmra.mrb[0].mxu0 %v1718
      %v1850 = vpop.f32.mrb[0].mxu0
      %v1851 = vadd.f32 0.0, %v1850
      %v1852 = vpop.f32.mrb[0].mxu0
      %1853 = vmatprep.mubr.f32.mxu0 0.0
      %1854 = vmatmul.mubr.f32.gmra.mrb[0].mxu0 %v1721
      %v1855 = vpop.f32.mrb[0].mxu0
      %v1856 = vadd.f32 0.0, %v1855
      %v1857 = vpop.f32.mrb[0].mxu0
      %1858 = vmatprep.mubr.f32.mxu0 0.0
      %1859 = vmatmul.mubr.f32.gmra.mrb[0].mxu0 %v1724
      %v1860 = vpop.f32.mrb[0].mxu0
      %v1861 = vadd.f32 0.0, %v1860
      %v1862 = vpop.f32.mrb[0].mxu0
      %1863 = vmatprep.mubr.f32.mxu0 0.0
      %1864 = vmatmul.mubr.f32.gmra.mrb[0].mxu0 %v1727
      %v1865 = vpop.f32.mrb[0].mxu0
      %v1866 = vadd.f32 0.0, %v1865
      %v1867 = vpop.f32.mrb[0].mxu0
      %1868 = vmatprep.mubr.f32.mxu0 0.0
      %1869 = vmatmul.mubr.f32.gmra.mrb[0].mxu0 %v1730
      %v1870 = vpop.f32.mrb[0].mxu0
      %v1871 = vadd.f32 0.0, %v1870
      %v1872 = vpop.f32.mrb[0].mxu0
      %1873 = vmatprep.mubr.f32.mxu0 0.0
      %1874 = vmatmul.mubr.f32.gmra.mrb[0].mxu0 %v1733
      %v1875 = vpop.f32.mrb[0].mxu0
      %v1876 = vadd.f32 0.0, %v1875
      %v1877 = vpop.f32.mrb[0].mxu0
      %1878 = vmatprep.mubr.f32.mxu0 0.0
      %1879 = vmatmul.mubr.f32.gmra.mrb[0].mxu0 %v1736
      %v1880 = vpop.f32.mrb[0].mxu0
      %v1881 = vadd.f32 0.0, %v1880
      %v1882 = vpop.f32.mrb[0].mxu0
      %1883 = vmatprep.mubr.f32.mxu0 0.0
      %1884 = vmatmul.mubr.f32.gmra.mrb[0].mxu0 %v1739
      %v1885 = vpop.f32.mrb[0].mxu0
      %v1886 = vadd.f32 0.0, %v1885
      %v1887 = vpop.f32.mrb[0].mxu0
      %1888 = vdwg.mxu0
      %v1889 = vsel %vm1151, %v1811, 0.0
      %v1890 = vsel %vm1152, %v1816, 0.0
      %v1891 = vsel %vm1153, %v1821, 0.0
      %v1892 = vsel %vm1154, %v1826, 0.0
      %v1893 = vsel %vm1155, %v1831, 0.0
      %v1894 = vsel %vm1156, %v1836, 0.0
      %v1895 = vsel %vm1157, %v1841, 0.0
      %v1896 = vsel %vm1158, %v1846, 0.0
      %v1897 = vsel %vm1159, %v1851, 0.0
      %v1898 = vsel %vm1160, %v1856, 0.0
      %v1899 = vsel %vm1161, %v1861, 0.0
      %v1900 = vsel %vm1162, %v1866, 0.0
      %v1901 = vsel %vm1163, %v1871, 0.0
      %v1902 = vsel %vm1164, %v1876, 0.0
      %v1903 = vsel %vm1165, %v1881, 0.0
      %v1904 = vsel %vm1166, %v1886, 0.0
      %v1905 = vadd.f32 %v1659, %v1889
      %v1906 = vadd.f32 %v1660, %v1890
      %v1907 = vadd.f32 %v1661, %v1891
      %v1908 = vadd.f32 %v1662, %v1892
      %v1909 = vadd.f32 %v1663, %v1893
      %v1910 = vadd.f32 %v1664, %v1894
      %v1911 = vadd.f32 %v1665, %v1895
      %v1912 = vadd.f32 %v1666, %v1896
      %v1913 = vadd.f32 %v1667, %v1897
      %v1914 = vadd.f32 %v1668, %v1898
      %v1915 = vadd.f32 %v1669, %v1899
      %v1916 = vadd.f32 %v1670, %v1900
      %v1917 = vadd.f32 %v1671, %v1901
      %v1918 = vadd.f32 %v1672, %v1902
      %v1919 = vadd.f32 %v1673, %v1903
      %v1920 = vadd.f32 %v1674, %v1904
      %v1921 = vld [vmem:[%s165 + $0x20] sm:$0xff]
      %v1922 = vld [vmem:[%s165 + $0x28] sm:$0xff]
      %v1923 = vld [vmem:[%s165 + $0x30] sm:$0xff]
      %v1924 = vld [vmem:[%s165 + $0x38] sm:$0xff]
      %v1925 = vld [vmem:[%s165 + $0x40] sm:$0xff]
      %v1926 = vld [vmem:[%s165 + $0x48] sm:$0xff]
      %v1927 = vld [vmem:[%s165 + $0x50] sm:$0xff]
      %v1928 = vld [vmem:[%s165 + $0x58] sm:$0xff]
      %v1929 = vld [vmem:[%s165 + $0x60] sm:$0xff]
      %v1930 = vld [vmem:[%s165 + $0x68] sm:$0xff]
      %v1931 = vld [vmem:[%s165 + $0x70] sm:$0xff]
      %v1932 = vld [vmem:[%s165 + $0x78] sm:$0xff]
      %v1933 = vld [vmem:[%s165 + $0x80] sm:$0xff]
      %v1934 = vld [vmem:[%s165 + $0x88] sm:$0xff]
      %v1935 = vld [vmem:[%s165 + $0x90] sm:$0xff]
      %v1936 = vld [vmem:[%s165 + $0x98] sm:$0xff]
      %s1937 = scalar_lea.vmem %s1, 24
      %v1938 = vld [vmem:[%s1937] sm:$0xf]
      %v1940 = vsel %vm429, %v1921, 0
      %v1943 = vsel %vm429, %v1922, 0
      %v1946 = vsel %vm429, %v1923, 0
      %v1949 = vsel %vm429, %v1924, 0
      %v1952 = vsel %vm429, %v1925, 0
      %v1955 = vsel %vm429, %v1926, 0
      %v1958 = vsel %vm429, %v1927, 0
      %v1961 = vsel %vm429, %v1928, 0
      %v1964 = vsel %vm429, %v1929, 0
      %v1967 = vsel %vm429, %v1930, 0
      %v1970 = vsel %vm429, %v1931, 0
      %v1973 = vsel %vm429, %v1932, 0
      %v1976 = vsel %vm429, %v1933, 0
      %v1979 = vsel %vm429, %v1934, 0
      %v1982 = vsel %vm429, %v1935, 0
      %v1985 = vsel %vm429, %v1936, 0
      %v1988 = vsel %vm478, %v1938, 0
      %1990 = vmatprep.subr.mxu0 0.0
      %1991 = vmatpush1.msra.mxu0 %v1988
      %1992 = vmatprep.subr.mxu0 0.0
      %1993 = vmatpush1.msra.mxu0 0.0
      %1994 = vmatprep.subr.mxu0 0.0
      %1995 = vmatpush1.msra.mxu0 0.0
      %1996 = vmatprep.subr.mxu0 0.0
      %1997 = vmatpush1.msra.mxu0 0.0
      %1998 = vmatprep.subr.mxu0 0.0
      %1999 = vmatpush1.msra.mxu0 0.0
      %2000 = vmatprep.subr.mxu0 0.0
      %2001 = vmatpush1.msra.mxu0 0.0
      %2002 = vmatprep.subr.mxu0 0.0
      %2003 = vmatpush1.msra.mxu0 0.0
      %2004 = vmatprep.subr.mxu0 0.0
      %2005 = vmatpush1.msra.mxu0 0.0
      %2006 = vmatprep.subr.mxu0 0.0
      %2007 = vmatpush1.msra.mxu0 0.0
      %2008 = vmatprep.subr.mxu0 0.0
      %2009 = vmatpush1.msra.mxu0 0.0
      %2010 = vmatprep.subr.mxu0 0.0
      %2011 = vmatpush1.msra.mxu0 0.0
      %2012 = vmatprep.subr.mxu0 0.0
      %2013 = vmatpush1.msra.mxu0 0.0
      %2014 = vmatprep.subr.mxu0 0.0
      %2015 = vmatpush1.msra.mxu0 0.0
      %2016 = vmatprep.subr.mxu0 0.0
      %2017 = vmatpush1.msra.mxu0 0.0
      %2018 = vmatprep.subr.mxu0 0.0
      %2019 = vmatpush1.msra.mxu0 0.0
      %2020 = vmatprep.subr.mxu0 0.0
      %2021 = vmatpush1.msra.mxu0 0.0
      %2022 = vmatprep.subr.mxu0 0.0
      %2023 = vmatpush1.msra.mxu0 0.0
      %2024 = vmatprep.subr.mxu0 0.0
      %2025 = vmatpush1.msra.mxu0 0.0
      %2026 = vmatprep.subr.mxu0 0.0
      %2027 = vmatpush1.msra.mxu0 0.0
      %2028 = vmatprep.subr.mxu0 0.0
      %2029 = vmatpush1.msra.mxu0 0.0
      %2030 = vmatprep.subr.mxu0 0.0
      %2031 = vmatpush1.msra.mxu0 0.0
      %2032 = vmatprep.subr.mxu0 0.0
      %2033 = vmatpush1.msra.mxu0 0.0
      %2034 = vmatprep.subr.mxu0 0.0
      %2035 = vmatpush1.msra.mxu0 0.0
      %2036 = vmatprep.subr.mxu0 0.0
      %2037 = vmatpush1.msra.mxu0 0.0
      %2038 = vmatprep.subr.mxu0 0.0
      %2039 = vmatpush1.msra.mxu0 0.0
      %2040 = vmatprep.subr.mxu0 0.0
      %2041 = vmatpush1.msra.mxu0 0.0
      %2042 = vmatprep.subr.mxu0 0.0
      %2043 = vmatpush1.msra.mxu0 0.0
      %2044 = vmatprep.subr.mxu0 0.0
      %2045 = vmatpush1.msra.mxu0 0.0
      %2046 = vmatprep.subr.mxu0 0.0
      %2047 = vmatpush1.msra.mxu0 0.0
      %2048 = vmatprep.subr.mxu0 0.0
      %2049 = vmatpush1.msra.mxu0 0.0
      %2050 = vmatprep.subr.mxu0 0.0
      %2051 = vmatpush1.msra.mxu0 0.0
      %2052 = vmatprep.subr.mxu0 0.0
      %2053 = vmatpush1.msra.mxu0 0.0
      %2054 = vmatprep.mubr.f32.mxu0 0.0
      %2055 = vmatmul.mubr.f32.gmra.mrb[0].mxu0 %v1940
      %v2056 = vpop.f32.mrb[0].mxu0
      %v2057 = vadd.f32 0.0, %v2056
      %v2058 = vpop.f32.mrb[0].mxu0
      %2059 = vmatprep.mubr.f32.mxu0 0.0
      %2060 = vmatmul.mubr.f32.gmra.mrb[0].mxu0 %v1943
      %v2061 = vpop.f32.mrb[0].mxu0
      %v2062 = vadd.f32 0.0, %v2061
      %v2063 = vpop.f32.mrb[0].mxu0
      %2064 = vmatprep.mubr.f32.mxu0 0.0
      %2065 = vmatmul.mubr.f32.gmra.mrb[0].mxu0 %v1946
      %v2066 = vpop.f32.mrb[0].mxu0
      %v2067 = vadd.f32 0.0, %v2066
      %v2068 = vpop.f32.mrb[0].mxu0
      %2069 = vmatprep.mubr.f32.mxu0 0.0
      %2070 = vmatmul.mubr.f32.gmra.mrb[0].mxu0 %v1949
      %v2071 = vpop.f32.mrb[0].mxu0
      %v2072 = vadd.f32 0.0, %v2071
      %v2073 = vpop.f32.mrb[0].mxu0
      %2074 = vmatprep.mubr.f32.mxu0 0.0
      %2075 = vmatmul.mubr.f32.gmra.mrb[0].mxu0 %v1952
      %v2076 = vpop.f32.mrb[0].mxu0
      %v2077 = vadd.f32 0.0, %v2076
      %v2078 = vpop.f32.mrb[0].mxu0
      %2079 = vmatprep.mubr.f32.mxu0 0.0
      %2080 = vmatmul.mubr.f32.gmra.mrb[0].mxu0 %v1955
      %v2081 = vpop.f32.mrb[0].mxu0
      %v2082 = vadd.f32 0.0, %v2081
      %v2083 = vpop.f32.mrb[0].mxu0
      %2084 = vmatprep.mubr.f32.mxu0 0.0
      %2085 = vmatmul.mubr.f32.gmra.mrb[0].mxu0 %v1958
      %v2086 = vpop.f32.mrb[0].mxu0
      %v2087 = vadd.f32 0.0, %v2086
      %v2088 = vpop.f32.mrb[0].mxu0
      %2089 = vmatprep.mubr.f32.mxu0 0.0
      %2090 = vmatmul.mubr.f32.gmra.mrb[0].mxu0 %v1961
      %v2091 = vpop.f32.mrb[0].mxu0
      %v2092 = vadd.f32 0.0, %v2091
      %v2093 = vpop.f32.mrb[0].mxu0
      %2094 = vmatprep.mubr.f32.mxu0 0.0
      %2095 = vmatmul.mubr.f32.gmra.mrb[0].mxu0 %v1964
      %v2096 = vpop.f32.mrb[0].mxu0
      %v2097 = vadd.f32 0.0, %v2096
      %v2098 = vpop.f32.mrb[0].mxu0
      %2099 = vmatprep.mubr.f32.mxu0 0.0
      %2100 = vmatmul.mubr.f32.gmra.mrb[0].mxu0 %v1967
      %v2101 = vpop.f32.mrb[0].mxu0
      %v2102 = vadd.f32 0.0, %v2101
      %v2103 = vpop.f32.mrb[0].mxu0
      %2104 = vmatprep.mubr.f32.mxu0 0.0
      %2105 = vmatmul.mubr.f32.gmra.mrb[0].mxu0 %v1970
      %v2106 = vpop.f32.mrb[0].mxu0
      %v2107 = vadd.f32 0.0, %v2106
      %v2108 = vpop.f32.mrb[0].mxu0
      %2109 = vmatprep.mubr.f32.mxu0 0.0
      %2110 = vmatmul.mubr.f32.gmra.mrb[0].mxu0 %v1973
      %v2111 = vpop.f32.mrb[0].mxu0
      %v2112 = vadd.f32 0.0, %v2111
      %v2113 = vpop.f32.mrb[0].mxu0
      %2114 = vmatprep.mubr.f32.mxu0 0.0
      %2115 = vmatmul.mubr.f32.gmra.mrb[0].mxu0 %v1976
      %v2116 = vpop.f32.mrb[0].mxu0
      %v2117 = vadd.f32 0.0, %v2116
      %v2118 = vpop.f32.mrb[0].mxu0
      %2119 = vmatprep.mubr.f32.mxu0 0.0
      %2120 = vmatmul.mubr.f32.gmra.mrb[0].mxu0 %v1979
      %v2121 = vpop.f32.mrb[0].mxu0
      %v2122 = vadd.f32 0.0, %v2121
      %v2123 = vpop.f32.mrb[0].mxu0
      %2124 = vmatprep.mubr.f32.mxu0 0.0
      %2125 = vmatmul.mubr.f32.gmra.mrb[0].mxu0 %v1982
      %v2126 = vpop.f32.mrb[0].mxu0
      %v2127 = vadd.f32 0.0, %v2126
      %v2128 = vpop.f32.mrb[0].mxu0
      %2129 = vmatprep.mubr.f32.mxu0 0.0
      %2130 = vmatmul.mubr.f32.gmra.mrb[0].mxu0 %v1985
      %v2131 = vpop.f32.mrb[0].mxu0
      %v2132 = vadd.f32 0.0, %v2131
      %v2133 = vpop.f32.mrb[0].mxu0
      %2134 = vdwg.mxu0
      %v2135 = vsel %vm643, %v2057, 0.0
      %v2136 = vsel %vm644, %v2062, 0.0
      %v2137 = vsel %vm645, %v2067, 0.0
      %v2138 = vsel %vm646, %v2072, 0.0
      %v2139 = vsel %vm647, %v2077, 0.0
      %v2140 = vsel %vm648, %v2082, 0.0
      %v2141 = vsel %vm649, %v2087, 0.0
      %v2142 = vsel %vm650, %v2092, 0.0
      %v2143 = vsel %vm651, %v2097, 0.0
      %v2144 = vsel %vm652, %v2102, 0.0
      %v2145 = vsel %vm653, %v2107, 0.0
      %v2146 = vsel %vm654, %v2112, 0.0
      %v2147 = vsel %vm655, %v2117, 0.0
      %v2148 = vsel %vm656, %v2122, 0.0
      %v2149 = vsel %vm657, %v2127, 0.0
      %v2150 = vsel %vm658, %v2132, 0.0
      %v2151 = vadd.f32 %v1905, %v2135
      %v2152 = vadd.f32 %v1906, %v2136
      %v2153 = vadd.f32 %v1907, %v2137
      %v2154 = vadd.f32 %v1908, %v2138
      %v2155 = vadd.f32 %v1909, %v2139
      %v2156 = vadd.f32 %v1910, %v2140
      %v2157 = vadd.f32 %v1911, %v2141
      %v2158 = vadd.f32 %v1912, %v2142
      %v2159 = vadd.f32 %v1913, %v2143
      %v2160 = vadd.f32 %v1914, %v2144
      %v2161 = vadd.f32 %v1915, %v2145
      %v2162 = vadd.f32 %v1916, %v2146
      %v2163 = vadd.f32 %v1917, %v2147
      %v2164 = vadd.f32 %v1918, %v2148
      %v2165 = vadd.f32 %v1919, %v2149
      %v2166 = vadd.f32 %v1920, %v2150
      %v2167 = vld [vmem:[%s165 + $0x21] sm:$0xff]
      %v2168 = vld [vmem:[%s165 + $0x29] sm:$0xff]
      %v2169 = vld [vmem:[%s165 + $0x31] sm:$0xff]
      %v2170 = vld [vmem:[%s165 + $0x39] sm:$0xff]
      %v2171 = vld [vmem:[%s165 + $0x41] sm:$0xff]
      %v2172 = vld [vmem:[%s165 + $0x49] sm:$0xff]
      %v2173 = vld [vmem:[%s165 + $0x51] sm:$0xff]
      %v2174 = vld [vmem:[%s165 + $0x59] sm:$0xff]
      %v2175 = vld [vmem:[%s165 + $0x61] sm:$0xff]
      %v2176 = vld [vmem:[%s165 + $0x69] sm:$0xff]
      %v2177 = vld [vmem:[%s165 + $0x71] sm:$0xff]
      %v2178 = vld [vmem:[%s165 + $0x79] sm:$0xff]
      %v2179 = vld [vmem:[%s165 + $0x81] sm:$0xff]
      %v2180 = vld [vmem:[%s165 + $0x89] sm:$0xff]
      %v2181 = vld [vmem:[%s165 + $0x91] sm:$0xff]
      %v2182 = vld [vmem:[%s165 + $0x99] sm:$0xff]
      %s2183 = scalar_lea.vmem %s1, 28
      %v2184 = vld [vmem:[%s2183] sm:$0xf]
      %v2186 = vsel %vm429, %v2167, 0
      %v2189 = vsel %vm429, %v2168, 0
      %v2192 = vsel %vm429, %v2169, 0
      %v2195 = vsel %vm429, %v2170, 0
      %v2198 = vsel %vm429, %v2171, 0
      %v2201 = vsel %vm429, %v2172, 0
      %v2204 = vsel %vm429, %v2173, 0
      %v2207 = vsel %vm429, %v2174, 0
      %v2210 = vsel %vm429, %v2175, 0
      %v2213 = vsel %vm429, %v2176, 0
      %v2216 = vsel %vm429, %v2177, 0
      %v2219 = vsel %vm429, %v2178, 0
      %v2222 = vsel %vm429, %v2179, 0
      %v2225 = vsel %vm429, %v2180, 0
      %v2228 = vsel %vm429, %v2181, 0
      %v2231 = vsel %vm429, %v2182, 0
      %v2234 = vsel %vm478, %v2184, 0
      %2236 = vmatprep.subr.mxu0 0.0
      %2237 = vmatpush1.msra.mxu0 %v2234
      %2238 = vmatprep.subr.mxu0 0.0
      %2239 = vmatpush1.msra.mxu0 0.0
      %2240 = vmatprep.subr.mxu0 0.0
      %2241 = vmatpush1.msra.mxu0 0.0
      %2242 = vmatprep.subr.mxu0 0.0
      %2243 = vmatpush1.msra.mxu0 0.0
      %2244 = vmatprep.subr.mxu0 0.0
      %2245 = vmatpush1.msra.mxu0 0.0
      %2246 = vmatprep.subr.mxu0 0.0
      %2247 = vmatpush1.msra.mxu0 0.0
      %2248 = vmatprep.subr.mxu0 0.0
      %2249 = vmatpush1.msra.mxu0 0.0
      %2250 = vmatprep.subr.mxu0 0.0
      %2251 = vmatpush1.msra.mxu0 0.0
      %2252 = vmatprep.subr.mxu0 0.0
      %2253 = vmatpush1.msra.mxu0 0.0
      %2254 = vmatprep.subr.mxu0 0.0
      %2255 = vmatpush1.msra.mxu0 0.0
      %2256 = vmatprep.subr.mxu0 0.0
      %2257 = vmatpush1.msra.mxu0 0.0
      %2258 = vmatprep.subr.mxu0 0.0
      %2259 = vmatpush1.msra.mxu0 0.0
      %2260 = vmatprep.subr.mxu0 0.0
      %2261 = vmatpush1.msra.mxu0 0.0
      %2262 = vmatprep.subr.mxu0 0.0
      %2263 = vmatpush1.msra.mxu0 0.0
      %2264 = vmatprep.subr.mxu0 0.0
      %2265 = vmatpush1.msra.mxu0 0.0
      %2266 = vmatprep.subr.mxu0 0.0
      %2267 = vmatpush1.msra.mxu0 0.0
      %2268 = vmatprep.subr.mxu0 0.0
      %2269 = vmatpush1.msra.mxu0 0.0
      %2270 = vmatprep.subr.mxu0 0.0
      %2271 = vmatpush1.msra.mxu0 0.0
      %2272 = vmatprep.subr.mxu0 0.0
      %2273 = vmatpush1.msra.mxu0 0.0
      %2274 = vmatprep.subr.mxu0 0.0
      %2275 = vmatpush1.msra.mxu0 0.0
      %2276 = vmatprep.subr.mxu0 0.0
      %2277 = vmatpush1.msra.mxu0 0.0
      %2278 = vmatprep.subr.mxu0 0.0
      %2279 = vmatpush1.msra.mxu0 0.0
      %2280 = vmatprep.subr.mxu0 0.0
      %2281 = vmatpush1.msra.mxu0 0.0
      %2282 = vmatprep.subr.mxu0 0.0
      %2283 = vmatpush1.msra.mxu0 0.0
      %2284 = vmatprep.subr.mxu0 0.0
      %2285 = vmatpush1.msra.mxu0 0.0
      %2286 = vmatprep.subr.mxu0 0.0
      %2287 = vmatpush1.msra.mxu0 0.0
      %2288 = vmatprep.subr.mxu0 0.0
      %2289 = vmatpush1.msra.mxu0 0.0
      %2290 = vmatprep.subr.mxu0 0.0
      %2291 = vmatpush1.msra.mxu0 0.0
      %2292 = vmatprep.subr.mxu0 0.0
      %2293 = vmatpush1.msra.mxu0 0.0
      %2294 = vmatprep.subr.mxu0 0.0
      %2295 = vmatpush1.msra.mxu0 0.0
      %2296 = vmatprep.subr.mxu0 0.0
      %2297 = vmatpush1.msra.mxu0 0.0
      %2298 = vmatprep.subr.mxu0 0.0
      %2299 = vmatpush1.msra.mxu0 0.0
      %2300 = vmatprep.mubr.f32.mxu0 0.0
      %2301 = vmatmul.mubr.f32.gmra.mrb[0].mxu0 %v2186
      %v2302 = vpop.f32.mrb[0].mxu0
      %v2303 = vadd.f32 0.0, %v2302
      %v2304 = vpop.f32.mrb[0].mxu0
      %2305 = vmatprep.mubr.f32.mxu0 0.0
      %2306 = vmatmul.mubr.f32.gmra.mrb[0].mxu0 %v2189
      %v2307 = vpop.f32.mrb[0].mxu0
      %v2308 = vadd.f32 0.0, %v2307
      %v2309 = vpop.f32.mrb[0].mxu0
      %2310 = vmatprep.mubr.f32.mxu0 0.0
      %2311 = vmatmul.mubr.f32.gmra.mrb[0].mxu0 %v2192
      %v2312 = vpop.f32.mrb[0].mxu0
      %v2313 = vadd.f32 0.0, %v2312
      %v2314 = vpop.f32.mrb[0].mxu0
      %2315 = vmatprep.mubr.f32.mxu0 0.0
      %2316 = vmatmul.mubr.f32.gmra.mrb[0].mxu0 %v2195
      %v2317 = vpop.f32.mrb[0].mxu0
      %v2318 = vadd.f32 0.0, %v2317
      %v2319 = vpop.f32.mrb[0].mxu0
      %2320 = vmatprep.mubr.f32.mxu0 0.0
      %2321 = vmatmul.mubr.f32.gmra.mrb[0].mxu0 %v2198
      %v2322 = vpop.f32.mrb[0].mxu0
      %v2323 = vadd.f32 0.0, %v2322
      %v2324 = vpop.f32.mrb[0].mxu0
      %2325 = vmatprep.mubr.f32.mxu0 0.0
      %2326 = vmatmul.mubr.f32.gmra.mrb[0].mxu0 %v2201
      %v2327 = vpop.f32.mrb[0].mxu0
      %v2328 = vadd.f32 0.0, %v2327
      %v2329 = vpop.f32.mrb[0].mxu0
      %2330 = vmatprep.mubr.f32.mxu0 0.0
      %2331 = vmatmul.mubr.f32.gmra.mrb[0].mxu0 %v2204
      %v2332 = vpop.f32.mrb[0].mxu0
      %v2333 = vadd.f32 0.0, %v2332
      %v2334 = vpop.f32.mrb[0].mxu0
      %2335 = vmatprep.mubr.f32.mxu0 0.0
      %2336 = vmatmul.mubr.f32.gmra.mrb[0].mxu0 %v2207
      %v2337 = vpop.f32.mrb[0].mxu0
      %v2338 = vadd.f32 0.0, %v2337
      %v2339 = vpop.f32.mrb[0].mxu0
      %2340 = vmatprep.mubr.f32.mxu0 0.0
      %2341 = vmatmul.mubr.f32.gmra.mrb[0].mxu0 %v2210
      %v2342 = vpop.f32.mrb[0].mxu0
      %v2343 = vadd.f32 0.0, %v2342
      %v2344 = vpop.f32.mrb[0].mxu0
      %2345 = vmatprep.mubr.f32.mxu0 0.0
      %2346 = vmatmul.mubr.f32.gmra.mrb[0].mxu0 %v2213
      %v2347 = vpop.f32.mrb[0].mxu0
      %v2348 = vadd.f32 0.0, %v2347
      %v2349 = vpop.f32.mrb[0].mxu0
      %2350 = vmatprep.mubr.f32.mxu0 0.0
      %2351 = vmatmul.mubr.f32.gmra.mrb[0].mxu0 %v2216
      %v2352 = vpop.f32.mrb[0].mxu0
      %v2353 = vadd.f32 0.0, %v2352
      %v2354 = vpop.f32.mrb[0].mxu0
      %2355 = vmatprep.mubr.f32.mxu0 0.0
      %2356 = vmatmul.mubr.f32.gmra.mrb[0].mxu0 %v2219
      %v2357 = vpop.f32.mrb[0].mxu0
      %v2358 = vadd.f32 0.0, %v2357
      %v2359 = vpop.f32.mrb[0].mxu0
      %2360 = vmatprep.mubr.f32.mxu0 0.0
      %2361 = vmatmul.mubr.f32.gmra.mrb[0].mxu0 %v2222
      %v2362 = vpop.f32.mrb[0].mxu0
      %v2363 = vadd.f32 0.0, %v2362
      %v2364 = vpop.f32.mrb[0].mxu0
      %2365 = vmatprep.mubr.f32.mxu0 0.0
      %2366 = vmatmul.mubr.f32.gmra.mrb[0].mxu0 %v2225
      %v2367 = vpop.f32.mrb[0].mxu0
      %v2368 = vadd.f32 0.0, %v2367
      %v2369 = vpop.f32.mrb[0].mxu0
      %2370 = vmatprep.mubr.f32.mxu0 0.0
      %2371 = vmatmul.mubr.f32.gmra.mrb[0].mxu0 %v2228
      %v2372 = vpop.f32.mrb[0].mxu0
      %v2373 = vadd.f32 0.0, %v2372
      %v2374 = vpop.f32.mrb[0].mxu0
      %2375 = vmatprep.mubr.f32.mxu0 0.0
      %2376 = vmatmul.mubr.f32.gmra.mrb[0].mxu0 %v2231
      %v2377 = vpop.f32.mrb[0].mxu0
      %v2378 = vadd.f32 0.0, %v2377
      %v2379 = vpop.f32.mrb[0].mxu0
      %2380 = vdwg.mxu0
      %v2381 = vadd.f32 %v2151, %v2303
      %v2382 = vadd.f32 %v2152, %v2308
      %v2383 = vadd.f32 %v2153, %v2313
      %v2384 = vadd.f32 %v2154, %v2318
      %v2385 = vadd.f32 %v2155, %v2323
      %v2386 = vadd.f32 %v2156, %v2328
      %v2387 = vadd.f32 %v2157, %v2333
      %v2388 = vadd.f32 %v2158, %v2338
      %v2389 = vadd.f32 %v2159, %v2343
      %v2390 = vadd.f32 %v2160, %v2348
      %v2391 = vadd.f32 %v2161, %v2353
      %v2392 = vadd.f32 %v2162, %v2358
      %v2393 = vadd.f32 %v2163, %v2363
      %v2394 = vadd.f32 %v2164, %v2368
      %v2395 = vadd.f32 %v2165, %v2373
      %v2396 = vadd.f32 %v2166, %v2378
      %v2397 = vld [vmem:[%s165 + $0x22] sm:$0xff]
      %v2398 = vld [vmem:[%s165 + $0x2a] sm:$0xff]
      %v2399 = vld [vmem:[%s165 + $0x32] sm:$0xff]
      %v2400 = vld [vmem:[%s165 + $0x3a] sm:$0xff]
      %v2401 = vld [vmem:[%s165 + $0x42] sm:$0xff]
      %v2402 = vld [vmem:[%s165 + $0x4a] sm:$0xff]
      %v2403 = vld [vmem:[%s165 + $0x52] sm:$0xff]
      %v2404 = vld [vmem:[%s165 + $0x5a] sm:$0xff]
      %v2405 = vld [vmem:[%s165 + $0x62] sm:$0xff]
      %v2406 = vld [vmem:[%s165 + $0x6a] sm:$0xff]
      %v2407 = vld [vmem:[%s165 + $0x72] sm:$0xff]
      %v2408 = vld [vmem:[%s165 + $0x7a] sm:$0xff]
      %v2409 = vld [vmem:[%s165 + $0x82] sm:$0xff]
      %v2410 = vld [vmem:[%s165 + $0x8a] sm:$0xff]
      %v2411 = vld [vmem:[%s165 + $0x92] sm:$0xff]
      %v2412 = vld [vmem:[%s165 + $0x9a] sm:$0xff]
      %s2413 = scalar_lea.vmem %s1, 32
      %v2414 = vld [vmem:[%s2413] sm:$0xf]
      %v2416 = vsel %vm429, %v2397, 0
      %v2419 = vsel %vm429, %v2398, 0
      %v2422 = vsel %vm429, %v2399, 0
      %v2425 = vsel %vm429, %v2400, 0
      %v2428 = vsel %vm429, %v2401, 0
      %v2431 = vsel %vm429, %v2402, 0
      %v2434 = vsel %vm429, %v2403, 0
      %v2437 = vsel %vm429, %v2404, 0
      %v2440 = vsel %vm429, %v2405, 0
      %v2443 = vsel %vm429, %v2406, 0
      %v2446 = vsel %vm429, %v2407, 0
      %v2449 = vsel %vm429, %v2408, 0
      %v2452 = vsel %vm429, %v2409, 0
      %v2455 = vsel %vm429, %v2410, 0
      %v2458 = vsel %vm429, %v2411, 0
      %v2461 = vsel %vm429, %v2412, 0
      %v2464 = vsel %vm478, %v2414, 0
      %2466 = vmatprep.subr.mxu0 0.0
      %2467 = vmatpush1.msra.mxu0 %v2464
      %2468 = vmatprep.subr.mxu0 0.0
      %2469 = vmatpush1.msra.mxu0 0.0
      %2470 = vmatprep.subr.mxu0 0.0
      %2471 = vmatpush1.msra.mxu0 0.0
      %2472 = vmatprep.subr.mxu0 0.0
      %2473 = vmatpush1.msra.mxu0 0.0
      %2474 = vmatprep.subr.mxu0 0.0
      %2475 = vmatpush1.msra.mxu0 0.0
      %2476 = vmatprep.subr.mxu0 0.0
      %2477 = vmatpush1.msra.mxu0 0.0
      %2478 = vmatprep.subr.mxu0 0.0
      %2479 = vmatpush1.msra.mxu0 0.0
      %2480 = vmatprep.subr.mxu0 0.0
      %2481 = vmatpush1.msra.mxu0 0.0
      %2482 = vmatprep.subr.mxu0 0.0
      %2483 = vmatpush1.msra.mxu0 0.0
      %2484 = vmatprep.subr.mxu0 0.0
      %2485 = vmatpush1.msra.mxu0 0.0
      %2486 = vmatprep.subr.mxu0 0.0
      %2487 = vmatpush1.msra.mxu0 0.0
      %2488 = vmatprep.subr.mxu0 0.0
      %2489 = vmatpush1.msra.mxu0 0.0
      %2490 = vmatprep.subr.mxu0 0.0
      %2491 = vmatpush1.msra.mxu0 0.0
      %2492 = vmatprep.subr.mxu0 0.0
      %2493 = vmatpush1.msra.mxu0 0.0
      %2494 = vmatprep.subr.mxu0 0.0
      %2495 = vmatpush1.msra.mxu0 0.0
      %2496 = vmatprep.subr.mxu0 0.0
      %2497 = vmatpush1.msra.mxu0 0.0
      %2498 = vmatprep.subr.mxu0 0.0
      %2499 = vmatpush1.msra.mxu0 0.0
      %2500 = vmatprep.subr.mxu0 0.0
      %2501 = vmatpush1.msra.mxu0 0.0
      %2502 = vmatprep.subr.mxu0 0.0
      %2503 = vmatpush1.msra.mxu0 0.0
      %2504 = vmatprep.subr.mxu0 0.0
      %2505 = vmatpush1.msra.mxu0 0.0
      %2506 = vmatprep.subr.mxu0 0.0
      %2507 = vmatpush1.msra.mxu0 0.0
      %2508 = vmatprep.subr.mxu0 0.0
      %2509 = vmatpush1.msra.mxu0 0.0
      %2510 = vmatprep.subr.mxu0 0.0
      %2511 = vmatpush1.msra.mxu0 0.0
      %2512 = vmatprep.subr.mxu0 0.0
      %2513 = vmatpush1.msra.mxu0 0.0
      %2514 = vmatprep.subr.mxu0 0.0
      %2515 = vmatpush1.msra.mxu0 0.0
      %2516 = vmatprep.subr.mxu0 0.0
      %2517 = vmatpush1.msra.mxu0 0.0
      %2518 = vmatprep.subr.mxu0 0.0
      %2519 = vmatpush1.msra.mxu0 0.0
      %2520 = vmatprep.subr.mxu0 0.0
      %2521 = vmatpush1.msra.mxu0 0.0
      %2522 = vmatprep.subr.mxu0 0.0
      %2523 = vmatpush1.msra.mxu0 0.0
      %2524 = vmatprep.subr.mxu0 0.0
      %2525 = vmatpush1.msra.mxu0 0.0
      %2526 = vmatprep.subr.mxu0 0.0
      %2527 = vmatpush1.msra.mxu0 0.0
      %2528 = vmatprep.subr.mxu0 0.0
      %2529 = vmatpush1.msra.mxu0 0.0
      %2530 = vmatprep.mubr.f32.mxu0 0.0
      %2531 = vmatmul.mubr.f32.gmra.mrb[0].mxu0 %v2416
      %v2532 = vpop.f32.mrb[0].mxu0
      %v2533 = vadd.f32 0.0, %v2532
      %v2534 = vpop.f32.mrb[0].mxu0
      %2535 = vmatprep.mubr.f32.mxu0 0.0
      %2536 = vmatmul.mubr.f32.gmra.mrb[0].mxu0 %v2419
      %v2537 = vpop.f32.mrb[0].mxu0
      %v2538 = vadd.f32 0.0, %v2537
      %v2539 = vpop.f32.mrb[0].mxu0
      %2540 = vmatprep.mubr.f32.mxu0 0.0
      %2541 = vmatmul.mubr.f32.gmra.mrb[0].mxu0 %v2422
      %v2542 = vpop.f32.mrb[0].mxu0
      %v2543 = vadd.f32 0.0, %v2542
      %v2544 = vpop.f32.mrb[0].mxu0
      %2545 = vmatprep.mubr.f32.mxu0 0.0
      %2546 = vmatmul.mubr.f32.gmra.mrb[0].mxu0 %v2425
      %v2547 = vpop.f32.mrb[0].mxu0
      %v2548 = vadd.f32 0.0, %v2547
      %v2549 = vpop.f32.mrb[0].mxu0
      %2550 = vmatprep.mubr.f32.mxu0 0.0
      %2551 = vmatmul.mubr.f32.gmra.mrb[0].mxu0 %v2428
      %v2552 = vpop.f32.mrb[0].mxu0
      %v2553 = vadd.f32 0.0, %v2552
      %v2554 = vpop.f32.mrb[0].mxu0
      %2555 = vmatprep.mubr.f32.mxu0 0.0
      %2556 = vmatmul.mubr.f32.gmra.mrb[0].mxu0 %v2431
      %v2557 = vpop.f32.mrb[0].mxu0
      %v2558 = vadd.f32 0.0, %v2557
      %v2559 = vpop.f32.mrb[0].mxu0
      %2560 = vmatprep.mubr.f32.mxu0 0.0
      %2561 = vmatmul.mubr.f32.gmra.mrb[0].mxu0 %v2434
      %v2562 = vpop.f32.mrb[0].mxu0
      %v2563 = vadd.f32 0.0, %v2562
      %v2564 = vpop.f32.mrb[0].mxu0
      %2565 = vmatprep.mubr.f32.mxu0 0.0
      %2566 = vmatmul.mubr.f32.gmra.mrb[0].mxu0 %v2437
      %v2567 = vpop.f32.mrb[0].mxu0
      %v2568 = vadd.f32 0.0, %v2567
      %v2569 = vpop.f32.mrb[0].mxu0
      %2570 = vmatprep.mubr.f32.mxu0 0.0
      %2571 = vmatmul.mubr.f32.gmra.mrb[0].mxu0 %v2440
      %v2572 = vpop.f32.mrb[0].mxu0
      %v2573 = vadd.f32 0.0, %v2572
      %v2574 = vpop.f32.mrb[0].mxu0
      %2575 = vmatprep.mubr.f32.mxu0 0.0
      %2576 = vmatmul.mubr.f32.gmra.mrb[0].mxu0 %v2443
      %v2577 = vpop.f32.mrb[0].mxu0
      %v2578 = vadd.f32 0.0, %v2577
      %v2579 = vpop.f32.mrb[0].mxu0
      %2580 = vmatprep.mubr.f32.mxu0 0.0
      %2581 = vmatmul.mubr.f32.gmra.mrb[0].mxu0 %v2446
      %v2582 = vpop.f32.mrb[0].mxu0
      %v2583 = vadd.f32 0.0, %v2582
      %v2584 = vpop.f32.mrb[0].mxu0
      %2585 = vmatprep.mubr.f32.mxu0 0.0
      %2586 = vmatmul.mubr.f32.gmra.mrb[0].mxu0 %v2449
      %v2587 = vpop.f32.mrb[0].mxu0
      %v2588 = vadd.f32 0.0, %v2587
      %v2589 = vpop.f32.mrb[0].mxu0
      %2590 = vmatprep.mubr.f32.mxu0 0.0
      %2591 = vmatmul.mubr.f32.gmra.mrb[0].mxu0 %v2452
      %v2592 = vpop.f32.mrb[0].mxu0
      %v2593 = vadd.f32 0.0, %v2592
      %v2594 = vpop.f32.mrb[0].mxu0
      %2595 = vmatprep.mubr.f32.mxu0 0.0
      %2596 = vmatmul.mubr.f32.gmra.mrb[0].mxu0 %v2455
      %v2597 = vpop.f32.mrb[0].mxu0
      %v2598 = vadd.f32 0.0, %v2597
      %v2599 = vpop.f32.mrb[0].mxu0
      %2600 = vmatprep.mubr.f32.mxu0 0.0
      %2601 = vmatmul.mubr.f32.gmra.mrb[0].mxu0 %v2458
      %v2602 = vpop.f32.mrb[0].mxu0
      %v2603 = vadd.f32 0.0, %v2602
      %v2604 = vpop.f32.mrb[0].mxu0
      %2605 = vmatprep.mubr.f32.mxu0 0.0
      %2606 = vmatmul.mubr.f32.gmra.mrb[0].mxu0 %v2461
      %v2607 = vpop.f32.mrb[0].mxu0
      %v2608 = vadd.f32 0.0, %v2607
      %v2609 = vpop.f32.mrb[0].mxu0
      %2610 = vdwg.mxu0
      %v2611 = vsel %vm1151, %v2533, 0.0
      %v2612 = vsel %vm1152, %v2538, 0.0
      %v2613 = vsel %vm1153, %v2543, 0.0
      %v2614 = vsel %vm1154, %v2548, 0.0
      %v2615 = vsel %vm1155, %v2553, 0.0
      %v2616 = vsel %vm1156, %v2558, 0.0
      %v2617 = vsel %vm1157, %v2563, 0.0
      %v2618 = vsel %vm1158, %v2568, 0.0
      %v2619 = vsel %vm1159, %v2573, 0.0
      %v2620 = vsel %vm1160, %v2578, 0.0
      %v2621 = vsel %vm1161, %v2583, 0.0
      %v2622 = vsel %vm1162, %v2588, 0.0
      %v2623 = vsel %vm1163, %v2593, 0.0
      %v2624 = vsel %vm1164, %v2598, 0.0
      %v2625 = vsel %vm1165, %v2603, 0.0
      %v2626 = vsel %vm1166, %v2608, 0.0
      %v2627 = vadd.f32 %v2381, %v2611
      %v2628 = vadd.f32 %v2382, %v2612
      %v2629 = vadd.f32 %v2383, %v2613
      %v2630 = vadd.f32 %v2384, %v2614
      %v2631 = vadd.f32 %v2385, %v2615
      %v2632 = vadd.f32 %v2386, %v2616
      %v2633 = vadd.f32 %v2387, %v2617
      %v2634 = vadd.f32 %v2388, %v2618
      %v2635 = vadd.f32 %v2389, %v2619
      %v2636 = vadd.f32 %v2390, %v2620
      %v2637 = vadd.f32 %v2391, %v2621
      %v2638 = vadd.f32 %v2392, %v2622
      %v2639 = vadd.f32 %v2393, %v2623
      %v2640 = vadd.f32 %v2394, %v2624
      %v2641 = vadd.f32 %v2395, %v2625
      %v2642 = vadd.f32 %v2396, %v2626
      %v2643 = vld [vmem:[%s2] sm:$0x1]
      %v2645 = vlaneseq
      %v2646 = vshrl.u32 %v2645, 7
      %v2647 = vsub.s32 0, %v2646
      %v2648 = vrot.slane %v2643, %v2647
      %v2650 = vadd.f32 %v2627, %v2648
      %v2651 = vadd.f32 %v2628, %v2648
      %v2652 = vadd.f32 %v2629, %v2648
      %v2653 = vadd.f32 %v2630, %v2648
      %v2654 = vadd.f32 %v2631, %v2648
      %v2655 = vadd.f32 %v2632, %v2648
      %v2656 = vadd.f32 %v2633, %v2648
      %v2657 = vadd.f32 %v2634, %v2648
      %v2658 = vadd.f32 %v2635, %v2648
      %v2659 = vadd.f32 %v2636, %v2648
      %v2660 = vadd.f32 %v2637, %v2648
      %v2661 = vadd.f32 %v2638, %v2648
      %v2662 = vadd.f32 %v2639, %v2648
      %v2663 = vadd.f32 %v2640, %v2648
      %v2664 = vadd.f32 %v2641, %v2648
      %v2665 = vadd.f32 %v2642, %v2648
      %v2666 = vmul.f32 %v2650, 1.442695
      %v2667 = vpow.pop %v2666
      %v2668 = vmul.f32 %v2651, 1.442695
      %v2669 = vpow.pop %v2668
      %v2670 = vmul.f32 %v2652, 1.442695
      %v2671 = vpow.pop %v2670
      %v2672 = vmul.f32 %v2653, 1.442695
      %v2673 = vpow.pop %v2672
      %v2674 = vmul.f32 %v2654, 1.442695
      %v2675 = vpow.pop %v2674
      %v2676 = vmul.f32 %v2655, 1.442695
      %v2677 = vpow.pop %v2676
      %v2678 = vmul.f32 %v2656, 1.442695
      %v2679 = vpow.pop %v2678
      %v2680 = vmul.f32 %v2657, 1.442695
      %v2681 = vpow.pop %v2680
      %v2682 = vmul.f32 %v2658, 1.442695
      %v2683 = vpow.pop %v2682
      %v2684 = vmul.f32 %v2659, 1.442695
      %v2685 = vpow.pop %v2684
      %v2686 = vmul.f32 %v2660, 1.442695
      %v2687 = vpow.pop %v2686
      %v2688 = vmul.f32 %v2661, 1.442695
      %v2689 = vpow.pop %v2688
      %v2690 = vmul.f32 %v2662, 1.442695
      %v2691 = vpow.pop %v2690
      %v2692 = vmul.f32 %v2663, 1.442695
      %v2693 = vpow.pop %v2692
      %v2694 = vmul.f32 %v2664, 1.442695
      %v2695 = vpow.pop %v2694
      %v2696 = vmul.f32 %v2665, 1.442695
      %v2697 = vpow.pop %v2696
      %v2698 = vadd.f32 %v2667, 2.0
      %v2699 = vadd.f32 %v2669, 2.0
      %v2700 = vadd.f32 %v2671, 2.0
      %v2701 = vadd.f32 %v2673, 2.0
      %v2702 = vadd.f32 %v2675, 2.0
      %v2703 = vadd.f32 %v2677, 2.0
      %v2704 = vadd.f32 %v2679, 2.0
      %v2705 = vadd.f32 %v2681, 2.0
      %v2706 = vadd.f32 %v2683, 2.0
      %v2707 = vadd.f32 %v2685, 2.0
      %v2708 = vadd.f32 %v2687, 2.0
      %v2709 = vadd.f32 %v2689, 2.0
      %v2710 = vadd.f32 %v2691, 2.0
      %v2711 = vadd.f32 %v2693, 2.0
      %v2712 = vadd.f32 %v2695, 2.0
      %v2713 = vadd.f32 %v2697, 2.0
      %v2714 = vmul.f32 %v2667, %v2698
      %v2715 = vmul.f32 %v2669, %v2699
      %v2716 = vmul.f32 %v2671, %v2700
      %v2717 = vmul.f32 %v2673, %v2701
      %v2718 = vmul.f32 %v2675, %v2702
      %v2719 = vmul.f32 %v2677, %v2703
      %v2720 = vmul.f32 %v2679, %v2704
      %v2721 = vmul.f32 %v2681, %v2705
      %v2722 = vmul.f32 %v2683, %v2706
      %v2723 = vmul.f32 %v2685, %v2707
      %v2724 = vmul.f32 %v2687, %v2708
      %v2725 = vmul.f32 %v2689, %v2709
      %v2726 = vmul.f32 %v2691, %v2710
      %v2727 = vmul.f32 %v2693, %v2711
      %v2728 = vmul.f32 %v2695, %v2712
      %v2729 = vmul.f32 %v2697, %v2713
      %v2730 = vadd.f32 %v2714, 2.0
      %v2731 = vadd.f32 %v2715, 2.0
      %v2732 = vadd.f32 %v2716, 2.0
      %v2733 = vadd.f32 %v2717, 2.0
      %v2734 = vadd.f32 %v2718, 2.0
      %v2735 = vadd.f32 %v2719, 2.0
      %v2736 = vadd.f32 %v2720, 2.0
      %v2737 = vadd.f32 %v2721, 2.0
      %v2738 = vadd.f32 %v2722, 2.0
      %v2739 = vadd.f32 %v2723, 2.0
      %v2740 = vadd.f32 %v2724, 2.0
      %v2741 = vadd.f32 %v2725, 2.0
      %v2742 = vadd.f32 %v2726, 2.0
      %v2743 = vadd.f32 %v2727, 2.0
      %v2744 = vadd.f32 %v2728, 2.0
      %v2745 = vadd.f32 %v2729, 2.0
      %v2746 = vrcp.pop %v2730
      %v2747 = vrcp.pop %v2731
      %v2748 = vrcp.pop %v2732
      %v2749 = vrcp.pop %v2733
      %v2750 = vrcp.pop %v2734
      %v2751 = vrcp.pop %v2735
      %v2752 = vrcp.pop %v2736
      %v2753 = vrcp.pop %v2737
      %v2754 = vrcp.pop %v2738
      %v2755 = vrcp.pop %v2739
      %v2756 = vrcp.pop %v2740
      %v2757 = vrcp.pop %v2741
      %v2758 = vrcp.pop %v2742
      %v2759 = vrcp.pop %v2743
      %v2760 = vrcp.pop %v2744
      %v2761 = vrcp.pop %v2745
      %v2762 = vmul.f32 %v2714, %v2746
      %v2763 = vmul.f32 %v2715, %v2747
      %v2764 = vmul.f32 %v2716, %v2748
      %v2765 = vmul.f32 %v2717, %v2749
      %v2766 = vmul.f32 %v2718, %v2750
      %v2767 = vmul.f32 %v2719, %v2751
      %v2768 = vmul.f32 %v2720, %v2752
      %v2769 = vmul.f32 %v2721, %v2753
      %v2770 = vmul.f32 %v2722, %v2754
      %v2771 = vmul.f32 %v2723, %v2755
      %v2772 = vmul.f32 %v2724, %v2756
      %v2773 = vmul.f32 %v2725, %v2757
      %v2774 = vmul.f32 %v2726, %v2758
      %v2775 = vmul.f32 %v2727, %v2759
      %v2776 = vmul.f32 %v2728, %v2760
      %v2777 = vmul.f32 %v2729, %v2761
      %vm2778 = vcmp.gt.f32.partialorder %v2650, 20.0
      %vm2779 = vcmp.gt.f32.partialorder %v2651, 20.0
      %vm2780 = vcmp.gt.f32.partialorder %v2652, 20.0
      %vm2781 = vcmp.gt.f32.partialorder %v2653, 20.0
      %vm2782 = vcmp.gt.f32.partialorder %v2654, 20.0
      %vm2783 = vcmp.gt.f32.partialorder %v2655, 20.0
      %vm2784 = vcmp.gt.f32.partialorder %v2656, 20.0
      %vm2785 = vcmp.gt.f32.partialorder %v2657, 20.0
      %vm2786 = vcmp.gt.f32.partialorder %v2658, 20.0
      %vm2787 = vcmp.gt.f32.partialorder %v2659, 20.0
      %vm2788 = vcmp.gt.f32.partialorder %v2660, 20.0
      %vm2789 = vcmp.gt.f32.partialorder %v2661, 20.0
      %vm2790 = vcmp.gt.f32.partialorder %v2662, 20.0
      %vm2791 = vcmp.gt.f32.partialorder %v2663, 20.0
      %vm2792 = vcmp.gt.f32.partialorder %v2664, 20.0
      %vm2793 = vcmp.gt.f32.partialorder %v2665, 20.0
      %v2794 = vmul.f32 %v2650, %v2762
      %v2795 = vmul.f32 %v2651, %v2763
      %v2796 = vmul.f32 %v2652, %v2764
      %v2797 = vmul.f32 %v2653, %v2765
      %v2798 = vmul.f32 %v2654, %v2766
      %v2799 = vmul.f32 %v2655, %v2767
      %v2800 = vmul.f32 %v2656, %v2768
      %v2801 = vmul.f32 %v2657, %v2769
      %v2802 = vmul.f32 %v2658, %v2770
      %v2803 = vmul.f32 %v2659, %v2771
      %v2804 = vmul.f32 %v2660, %v2772
      %v2805 = vmul.f32 %v2661, %v2773
      %v2806 = vmul.f32 %v2662, %v2774
      %v2807 = vmul.f32 %v2663, %v2775
      %v2808 = vmul.f32 %v2664, %v2776
      %v2809 = vmul.f32 %v2665, %v2777
      %v2810 = vsel %vm2778, %v2650, %v2794
      %v2811 = vsel %vm2779, %v2651, %v2795
      %v2812 = vsel %vm2780, %v2652, %v2796
      %v2813 = vsel %vm2781, %v2653, %v2797
      %v2814 = vsel %vm2782, %v2654, %v2798
      %v2815 = vsel %vm2783, %v2655, %v2799
      %v2816 = vsel %vm2784, %v2656, %v2800
      %v2817 = vsel %vm2785, %v2657, %v2801
      %v2818 = vsel %vm2786, %v2658, %v2802
      %v2819 = vsel %vm2787, %v2659, %v2803
      %v2820 = vsel %vm2788, %v2660, %v2804
      %v2821 = vsel %vm2789, %v2661, %v2805
      %v2822 = vsel %vm2790, %v2662, %v2806
      %v2823 = vsel %vm2791, %v2663, %v2807
      %v2824 = vsel %vm2792, %v2664, %v2808
      %v2825 = vsel %vm2793, %v2665, %v2809
      %vm2826 = vcmask 64512
      %2827 = vst.msk [vmem:[%s170] sm:$0xff] %vm2826, %v2810
      %2828 = vst.msk [vmem:[%s170 + $0x8] sm:$0xff] %vm2826, %v2811
      %2829 = vst.msk [vmem:[%s170 + $0x10] sm:$0xff] %vm2826, %v2812
      %2830 = vst.msk [vmem:[%s170 + $0x18] sm:$0xff] %vm2826, %v2813
      %2831 = vst.msk [vmem:[%s170 + $0x20] sm:$0xff] %vm2826, %v2814
      %2832 = vst.msk [vmem:[%s170 + $0x28] sm:$0xff] %vm2826, %v2815
      %2833 = vst.msk [vmem:[%s170 + $0x30] sm:$0xff] %vm2826, %v2816
      %2834 = vst.msk [vmem:[%s170 + $0x38] sm:$0xff] %vm2826, %v2817
      %2835 = vst.msk [vmem:[%s170 + $0x40] sm:$0xff] %vm2826, %v2818
      %2836 = vst.msk [vmem:[%s170 + $0x48] sm:$0xff] %vm2826, %v2819
      %2837 = vst.msk [vmem:[%s170 + $0x50] sm:$0xff] %vm2826, %v2820
      %2838 = vst.msk [vmem:[%s170 + $0x58] sm:$0xff] %vm2826, %v2821
      %2839 = vst.msk [vmem:[%s170 + $0x60] sm:$0xff] %vm2826, %v2822
      %2840 = vst.msk [vmem:[%s170 + $0x68] sm:$0xff] %vm2826, %v2823
      %2841 = vst.msk [vmem:[%s170 + $0x70] sm:$0xff] %vm2826, %v2824
      %2842 = vst.msk [vmem:[%s170 + $0x78] sm:$0xff] %vm2826, %v2825
      %p2843 = scmp.lt.s32.totalorder %s14, 3
      %s2844 = scalar_select %p2843, %s14, 3
      %s2845 = smul.addr %s2844, 16
      %s2846 = smul.addr %s2845, 8
      %s2847 = scalar_lea.vmem %s3, %s2846
      // Predicated region
      $region33: #{resblock_body.3} parent=31 // pred_check
        %p2848 = pneg %p100
      $region34: #{resblock_body.3} parent=31 // pred_check_branch
        %2850 = sbr.rel (%p2848) target = $region36
      $region35: #{resblock_body.3} parent=31 // pred_region
        _
      $region36: #{resblock_body.3} parent=31 // pred_fallthru
        _
    $region32: #{resblock_body.3} parent=5 // pred_fallthru
      _
    %p2851 = scmp.le.s32.totalorder 2, %s9
    // Predicated region
    $region37: #{resblock_body.3} parent=5 // pred_check
      %p2852 = pneg %p2851
    $region38: #{resblock_body.3} parent=5 // pred_check_branch
      %2854 = sbr.rel (%p2852) target = $region40
    $region39: #{resblock_body.3} parent=5 // pred_region
      %s2855 = ssub.s32 %s9, 2
      // Predicated region
      $region41: #{resblock_body.3} parent=39 // pred_check
        %p2856 = pneg %p106
      $region42: #{resblock_body.3} parent=39 // pred_check_branch
        %2858 = sbr.rel (%p2856) target = $region44
      $region43: #{resblock_body.3} parent=39 // pred_region
        %p2859 = scmp.lt.s32.totalorder %s15, 3
        %s2860 = scalar_select %p2859, %s15, 3
        %s2861 = smul.addr %s2860, 16
        %s2862 = smul.addr %s2861, 8
        %s2863 = scalar_lea.vmem %s3, %s2862
      $region44: #{resblock_body.3} parent=39 // pred_fallthru
        _
    $region40: #{resblock_body.3} parent=5 // pred_fallthru
      _
  $region6: #{resblock_body.3} parent=0 // loop_footer
    %s13 = sadd.s32 1, %s9
  $region7: #{resblock_body.3} parent=0 // loop_footer_branch
    %8 = sbr.rel target = $region3
  $region8: #{resblock_body.3} parent=0 // loop_exit
    _

// kernel: resblock_body.4
$region0: #{resblock_body.4}
  #allocation0 [shape = 'u32[]', space=smem, size = 0x4, offset = 0x4, fixed_abs, tag = 'smem constant byte address 0x4 - core index']
  #allocation1 [shape = 'u32[144,128]{1,0:T(1,128)}', space=vmem, size = 0x12000, scoped, tag = 'internal scratch']
  %s0 = inlined_call_operand.vmem [shape: f32[4,162,4], index: 0, kind: input, shape index: {}]
  %s1 = inlined_call_operand.vmem [shape: f32[9,4,4], index: 1, kind: input, shape index: {}]
  %s2 = inlined_call_operand.vmem [shape: f32[1,4], index: 2, kind: input, shape index: {}]
  %s3 = inlined_call_operand.vmem [shape: f32[4,128,4], index: 3, kind: output, shape index: {}]
  %s4 = sld [smem:[#allocation0]]
  $region45: #{resblock_body.4} parent=0
    _
  %s6 = ssub.s32 1, %s4
  %s7 = scalar_select 0, %s6, %s4
  loop: start=0, step=1, limit=6
  $region2: #{resblock_body.4} parent=0 // loop_pre_header
    _
  $region3: #{resblock_body.4} parent=0 // loop_header
    %s9 = sphi 0, %s13
    %p10 = scmp.ge.s32.totalorder %s9, 6
    %s19 = sphi 0, %s21
    %s22 = sphi 0, %s19
    %s23 = sphi 0, %s22
    %s39 = sphi 0, %s23
    %s43 = sphi 0, %s43
    %s45 = sphi 0, %s43
    %s46 = sphi 0, %s45
    %s60 = sphi 0, %s46
    %s64 = sphi 0, %s64
    %s66 = sphi 0, %s64
    %s67 = sphi 0, %s66
    %s81 = sphi 0, %s67
    %s87 = sphi 0, %s89
    %s90 = sphi 0, %s87
    %s91 = sphi 0, %s90
    %s107 = sphi 0, %s91
  $region4: #{resblock_body.4} parent=0 // loop_header_branch
    %12 = sbr.rel (%p10) target = $region8
  $region5: #{resblock_body.4} parent=0 // loop_body
    %s14 = ssub.s32 %s9, 1
    %s15 = ssub.s32 %s9, 2
    %s16 = sadd.s32 %s9, 1
    %s17 = ssub.s32 %s9, %s16
    %p18 = scmp.eq.s32.totalorder %s17, 0
    %s20 = sadd.s32 %s19, 1
    %s21 = scalar_select %p18, %s19, %s20
    %p24 = pneg %p18
    %p25 = scmp.eq.s32.totalorder %s9, 3
    %p26 = por %p24, %p25
    %p27 = scmp.ne.s32.totalorder %s19, %s22
    %p28 = scmp.eq.s32.totalorder %s9, 0
    %p29 = por %p27, %p28
    %p30 = scmp.ne.s32.totalorder %s19, %s22
    %p31 = scmp.eq.s32.totalorder %s14, 3
    %p32 = por %p30, %p31
    %p33 = scmp.ne.s32.totalorder %s22, %s23
    %p34 = scmp.eq.s32.totalorder %s14, 0
    %p35 = por %p33, %p34
    %p36 = scmp.ne.s32.totalorder %s22, %s23
    %p37 = scmp.eq.s32.totalorder %s15, 3
    %p38 = por %p36, %p37
    %p40 = scmp.ne.s32.totalorder %s23, %s39
    %p41 = scmp.eq.s32.totalorder %s15, 0
    %p42 = por %p40, %p41
    %s44 = sadd.s32 %s43, 1
    %p47 = scmp.eq.s32.totalorder %s9, 3
    %p48 = scmp.ne.s32.totalorder %s43, %s45
    %p49 = scmp.eq.s32.totalorder %s9, 0
    %p50 = por %p48, %p49
    %p51 = scmp.ne.s32.totalorder %s43, %s45
    %p52 = scmp.eq.s32.totalorder %s14, 3
    %p53 = por %p51, %p52
    %p54 = scmp.ne.s32.totalorder %s45, %s46
    %p55 = scmp.eq.s32.totalorder %s14, 0
    %p56 = por %p54, %p55
    %p57 = scmp.ne.s32.totalorder %s45, %s46
    %p58 = scmp.eq.s32.totalorder %s15, 3
    %p59 = por %p57, %p58
    %p61 = scmp.ne.s32.totalorder %s46, %s60
    %p62 = scmp.eq.s32.totalorder %s15, 0
    %p63 = por %p61, %p62
    %s65 = sadd.s32 %s64, 1
    %p68 = scmp.eq.s32.totalorder %s9, 3
    %p69 = scmp.ne.s32.totalorder %s64, %s66
    %p70 = scmp.eq.s32.totalorder %s9, 0
    %p71 = por %p69, %p70
    %p72 = scmp.ne.s32.totalorder %s64, %s66
    %p73 = scmp.eq.s32.totalorder %s14, 3
    %p74 = por %p72, %p73
    %p75 = scmp.ne.s32.totalorder %s66, %s67
    %p76 = scmp.eq.s32.totalorder %s14, 0
    %p77 = por %p75, %p76
    %p78 = scmp.ne.s32.totalorder %s66, %s67
    %p79 = scmp.eq.s32.totalorder %s15, 3
    %p80 = por %p78, %p79
    %p82 = scmp.ne.s32.totalorder %s67, %s81
    %p83 = scmp.eq.s32.totalorder %s15, 0
    %p84 = por %p82, %p83
    %s85 = ssub.s32 %s9, %s16
    %p86 = scmp.eq.s32.totalorder %s85, 0
    %s88 = sadd.s32 %s87, 1
    %s89 = scalar_select %p86, %s87, %s88
    %p92 = pneg %p86
    %p93 = scmp.eq.s32.totalorder %s9, 3
    %p94 = por %p92, %p93
    %p95 = scmp.ne.s32.totalorder %s87, %s90
    %p96 = scmp.eq.s32.totalorder %s9, 0
    %p97 = por %p95, %p96
    %p98 = scmp.ne.s32.totalorder %s87, %s90
    %p99 = scmp.eq.s32.totalorder %s14, 3
    %p100 = por %p98, %p99
    %p101 = scmp.ne.s32.totalorder %s90, %s91
    %p102 = scmp.eq.s32.totalorder %s14, 0
    %p103 = por %p101, %p102
    %p104 = scmp.ne.s32.totalorder %s90, %s91
    %p105 = scmp.eq.s32.totalorder %s15, 3
    %p106 = por %p104, %p105
    %p108 = scmp.ne.s32.totalorder %s91, %s107
    %p109 = scmp.eq.s32.totalorder %s15, 0
    %p110 = por %p108, %p109
    %p111 = scmp.le.s32.totalorder 1, %s9
    %p112 = scmp.lt.s32.totalorder %s9, 5
    %p113 = pnand %p111, %p112
    %p114 = pneg %p113
    // Predicated region
    $region9: #{resblock_body.4} parent=5 // pred_check
      _
    $region10: #{resblock_body.4} parent=5 // pred_check_branch
      %116 = sbr.rel (%p113) target = $region12
    $region11: #{resblock_body.4} parent=5 // pred_region
      %s117 = ssub.s32 %s9, 1
      // Predicated region
      $region13: #{resblock_body.4} parent=11 // pred_check
        %p118 = pneg %p56
      $region14: #{resblock_body.4} parent=11 // pred_check_branch
        %120 = sbr.rel (%p118) target = $region16
      $region15: #{resblock_body.4} parent=11 // pred_region
        _
      $region16: #{resblock_body.4} parent=11 // pred_fallthru
        _
      // Predicated region
      $region17: #{resblock_body.4} parent=11 // pred_check
        %p121 = pneg %p77
      $region18: #{resblock_body.4} parent=11 // pred_check_branch
        %123 = sbr.rel (%p121) target = $region20
      $region19: #{resblock_body.4} parent=11 // pred_region
        _
      $region20: #{resblock_body.4} parent=11 // pred_fallthru
        _
    $region12: #{resblock_body.4} parent=5 // pred_fallthru
      _
    %p124 = scmp.lt.s32.totalorder %s9, 4
    // Predicated region
    $region21: #{resblock_body.4} parent=5 // pred_check
      %p125 = pneg %p124
    $region22: #{resblock_body.4} parent=5 // pred_check_branch
      %127 = sbr.rel (%p125) target = $region24
    $region23: #{resblock_body.4} parent=5 // pred_region
      // Predicated region
      $region25: #{resblock_body.4} parent=23 // pred_check
        %p128 = pneg %p29
      $region26: #{resblock_body.4} parent=23 // pred_check_branch
        %130 = sbr.rel (%p128) target = $region28
      $region27: #{resblock_body.4} parent=23 // pred_region
        %p131 = scmp.lt.s32.totalorder %s9, 3
        %s132 = scalar_select %p131, %s9, 3
        %s133 = smul.addr %s132, 21
        %s134 = smul.addr %s133, 8
        %s135 = scalar_lea.vmem %s0, %s134
      $region28: #{resblock_body.4} parent=23 // pred_fallthru
        _
    $region24: #{resblock_body.4} parent=5 // pred_fallthru
      _
    %p136 = scmp.le.s32.totalorder 1, %s9
    %p137 = scmp.lt.s32.totalorder %s9, 5
    %p138 = pnand %p136, %p137
    %p139 = pneg %p138
    // Predicated region
    $region29: #{resblock_body.4} parent=5 // pred_check
      _
    $region30: #{resblock_body.4} parent=5 // pred_check_branch
      %141 = sbr.rel (%p138) target = $region32
    $region31: #{resblock_body.4} parent=5 // pred_region
      %s142 = ssub.s32 %s9, 1
      %p143 = scmp.lt.s32.totalorder %s14, 3
      %s144 = scalar_select %p143, %s14, 3
      %s145 = smul.addr %s144, 21
      %s146 = smul.addr %s145, 8
      %s147 = scalar_lea.vmem %s0, %s146
      %p148 = pneg %p35
      %p149 = pneg %p32
      %p150 = pneg %p56
      %p151 = pneg %p53
      %p152 = pneg %p77
      %p153 = pneg %p74
      %p154 = pneg %p103
      %p155 = pneg %p100
      %p156 = scmp.lt.s32.totalorder %s14, 3
      %s157 = scalar_select %p156, %s14, 3
      %s158 = smul.addr %s157, 16
      %s159 = smul.addr %s158, 8
      %s160 = scalar_lea.vmem %s3, %s159
      %p161 = scmp.lt.s32.totalorder %s14, 3
      %s162 = scalar_select %p161, %s14, 3
      %s163 = smul.addr %s162, 21
      %s164 = smul.addr %s163, 8
      %s165 = scalar_lea.vmem %s0, %s164
      %p166 = scmp.lt.s32.totalorder %s14, 3
      %s167 = scalar_select %p166, %s14, 3
      %s168 = smul.addr %s167, 16
      %s169 = smul.addr %s168, 8
      %s170 = scalar_lea.vmem %s3, %s169
      %v171 = vlaneseq
      %v172 = vshrl.u32 %v171, 7
      %v173 = vadd.s32 %v172, 8
      %v174 = vadd.s32 %v172, 16
      %v175 = vadd.s32 %v172, 24
      %v176 = vadd.s32 %v172, 32
      %v177 = vadd.s32 %v172, 40
      %v178 = vadd.s32 %v172, 48
      %v179 = vadd.s32 %v172, 56
      %v180 = vadd.s32 %v172, 64
      %v181 = vadd.s32 %v172, 72
      %v182 = vadd.s32 %v172, 80
      %v183 = vadd.s32 %v172, 88
      %v184 = vadd.s32 %v172, 96
      %v185 = vadd.s32 %v172, 104
      %v186 = vadd.s32 %v172, 112
      %v187 = vadd.s32 %v172, 120
      %vm188 = vcmp.lt.s32.totalorder %v172, 0
      %v189 = vsub.s32 0, %v172
      %v190 = vsel %vm188, %v189, %v172
      %v191 = vshrl.u32 %v190, 4
      %v192 = vand.u32 %v190, 15
      %v193 = vsub.s32 0, %v192
      %v194 = vsel %vm188, %v193, %v192
      %vm195 = vcmp.lt.s32.totalorder %v173, 0
      %v196 = vsub.s32 0, %v173
      %v197 = vsel %vm195, %v196, %v173
      %v198 = vshrl.u32 %v197, 4
      %v199 = vand.u32 %v197, 15
      %v200 = vsub.s32 0, %v199
      %v201 = vsel %vm195, %v200, %v199
      %vm202 = vcmp.lt.s32.totalorder %v174, 0
      %v203 = vsub.s32 0, %v174
      %v204 = vsel %vm202, %v203, %v174
      %v205 = vshrl.u32 %v204, 4
      %v206 = vand.u32 %v204, 15
      %v207 = vsub.s32 0, %v206
      %v208 = vsel %vm202, %v207, %v206
      %vm209 = vcmp.lt.s32.totalorder %v175, 0
      %v210 = vsub.s32 0, %v175
      %v211 = vsel %vm209, %v210, %v175
      %v212 = vshrl.u32 %v211, 4
      %v213 = vand.u32 %v211, 15
      %v214 = vsub.s32 0, %v213
      %v215 = vsel %vm209, %v214, %v213
      %vm216 = vcmp.lt.s32.totalorder %v176, 0
      %v217 = vsub.s32 0, %v176
      %v218 = vsel %vm216, %v217, %v176
      %v219 = vshrl.u32 %v218, 4
      %v220 = vand.u32 %v218, 15
      %v221 = vsub.s32 0, %v220
      %v222 = vsel %vm216, %v221, %v220
      %vm223 = vcmp.lt.s32.totalorder %v177, 0
      %v224 = vsub.s32 0, %v177
      %v225 = vsel %vm223, %v224, %v177
      %v226 = vshrl.u32 %v225, 4
      %v227 = vand.u32 %v225, 15
      %v228 = vsub.s32 0, %v227
      %v229 = vsel %vm223, %v228, %v227
      %vm230 = vcmp.lt.s32.totalorder %v178, 0
      %v231 = vsub.s32 0, %v178
      %v232 = vsel %vm230, %v231, %v178
      %v233 = vshrl.u32 %v232, 4
      %v234 = vand.u32 %v232, 15
      %v235 = vsub.s32 0, %v234
      %v236 = vsel %vm230, %v235, %v234
      %vm237 = vcmp.lt.s32.totalorder %v179, 0
      %v238 = vsub.s32 0, %v179
      %v239 = vsel %vm237, %v238, %v179
      %v240 = vshrl.u32 %v239, 4
      %v241 = vand.u32 %v239, 15
      %v242 = vsub.s32 0, %v241
      %v243 = vsel %vm237, %v242, %v241
      %vm244 = vcmp.lt.s32.totalorder %v180, 0
      %v245 = vsub.s32 0, %v180
      %v246 = vsel %vm244, %v245, %v180
      %v247 = vshrl.u32 %v246, 4
      %v248 = vand.u32 %v246, 15
      %v249 = vsub.s32 0, %v248
      %v250 = vsel %vm244, %v249, %v248
      %vm251 = vcmp.lt.s32.totalorder %v181, 0
      %v252 = vsub.s32 0, %v181
      %v253 = vsel %vm251, %v252, %v181
      %v254 = vshrl.u32 %v253, 4
      %v255 = vand.u32 %v253, 15
      %v256 = vsub.s32 0, %v255
      %v257 = vsel %vm251, %v256, %v255
      %vm258 = vcmp.lt.s32.totalorder %v182, 0
      %v259 = vsub.s32 0, %v182
      %v260 = vsel %vm258, %v259, %v182
      %v261 = vshrl.u32 %v260, 4
      %v262 = vand.u32 %v260, 15
      %v263 = vsub.s32 0, %v262
      %v264 = vsel %vm258, %v263, %v262
      %vm265 = vcmp.lt.s32.totalorder %v183, 0
      %v266 = vsub.s32 0, %v183
      %v267 = vsel %vm265, %v266, %v183
      %v268 = vshrl.u32 %v267, 4
      %v269 = vand.u32 %v267, 15
      %v270 = vsub.s32 0, %v269
      %v271 = vsel %vm265, %v270, %v269
      %vm272 = vcmp.lt.s32.totalorder %v184, 0
      %v273 = vsub.s32 0, %v184
      %v274 = vsel %vm272, %v273, %v184
      %v275 = vshrl.u32 %v274, 4
      %v276 = vand.u32 %v274, 15
      %v277 = vsub.s32 0, %v276
      %v278 = vsel %vm272, %v277, %v276
      %vm279 = vcmp.lt.s32.totalorder %v185, 0
      %v280 = vsub.s32 0, %v185
      %v281 = vsel %vm279, %v280, %v185
      %v282 = vshrl.u32 %v281, 4
      %v283 = vand.u32 %v281, 15
      %v284 = vsub.s32 0, %v283
      %v285 = vsel %vm279, %v284, %v283
      %vm286 = vcmp.lt.s32.totalorder %v186, 0
      %v287 = vsub.s32 0, %v186
      %v288 = vsel %vm286, %v287, %v186
      %v289 = vshrl.u32 %v288, 4
      %v290 = vand.u32 %v288, 15
      %v291 = vsub.s32 0, %v290
      %v292 = vsel %vm286, %v291, %v290
      %vm293 = vcmp.lt.s32.totalorder %v187, 0
      %v294 = vsub.s32 0, %v187
      %v295 = vsel %vm293, %v294, %v187
      %v296 = vshrl.u32 %v295, 4
      %v297 = vand.u32 %v295, 15
      %v298 = vsub.s32 0, %v297
      %v299 = vsel %vm293, %v298, %v297
      %vm300 = vcmp.ne.s32.totalorder %v194, 0
      %vm301 = vcmp.ne.s32.totalorder %v201, 0
      %vm302 = vcmp.ne.s32.totalorder %v208, 0
      %vm303 = vcmp.ne.s32.totalorder %v215, 0
      %vm304 = vcmp.ne.s32.totalorder %v222, 0
      %vm305 = vcmp.ne.s32.totalorder %v229, 0
      %vm306 = vcmp.ne.s32.totalorder %v236, 0
      %vm307 = vcmp.ne.s32.totalorder %v243, 0
      %vm308 = vcmp.ne.s32.totalorder %v250, 0
      %vm309 = vcmp.ne.s32.totalorder %v257, 0
      %vm310 = vcmp.ne.s32.totalorder %v264, 0
      %vm311 = vcmp.ne.s32.totalorder %v271, 0
      %vm312 = vcmp.ne.s32.totalorder %v278, 0
      %vm313 = vcmp.ne.s32.totalorder %v285, 0
      %vm314 = vcmp.ne.s32.totalorder %v292, 0
      %vm315 = vcmp.ne.s32.totalorder %v299, 0
      %vm316 = vcmp.lt.s32.totalorder %v194, 0
      %vm317 = vcmp.lt.s32.totalorder %v201, 0
      %vm318 = vcmp.lt.s32.totalorder %v208, 0
      %vm319 = vcmp.lt.s32.totalorder %v215, 0
      %vm320 = vcmp.lt.s32.totalorder %v222, 0
      %vm321 = vcmp.lt.s32.totalorder %v229, 0
      %vm322 = vcmp.lt.s32.totalorder %v236, 0
      %vm323 = vcmp.lt.s32.totalorder %v243, 0
      %vm324 = vcmp.lt.s32.totalorder %v250, 0
      %vm325 = vcmp.lt.s32.totalorder %v257, 0
      %vm326 = vcmp.lt.s32.totalorder %v264, 0
      %vm327 = vcmp.lt.s32.totalorder %v271, 0
      %vm328 = vcmp.lt.s32.totalorder %v278, 0
      %vm329 = vcmp.lt.s32.totalorder %v285, 0
      %vm330 = vcmp.lt.s32.totalorder %v292, 0
      %vm331 = vcmp.lt.s32.totalorder %v299, 0
      %vm332 = vmand %vm316, %vm300
      %vm333 = vmand %vm317, %vm301
      %vm334 = vmand %vm318, %vm302
      %vm335 = vmand %vm319, %vm303
      %vm336 = vmand %vm320, %vm304
      %vm337 = vmand %vm321, %vm305
      %vm338 = vmand %vm322, %vm306
      %vm339 = vmand %vm323, %vm307
      %vm340 = vmand %vm324, %vm308
      %vm341 = vmand %vm325, %vm309
      %vm342 = vmand %vm326, %vm310
      %vm343 = vmand %vm327, %vm311
      %vm344 = vmand %vm328, %vm312
      %vm345 = vmand %vm329, %vm313
      %vm346 = vmand %vm330, %vm314
      %vm347 = vmand %vm331, %vm315
      %v348 = vadd.s32 %v194, 16
      %v349 = vadd.s32 %v201, 16
      %v350 = vadd.s32 %v208, 16
      %v351 = vadd.s32 %v215, 16
      %v352 = vadd.s32 %v222, 16
      %v353 = vadd.s32 %v229, 16
      %v354 = vadd.s32 %v236, 16
      %v355 = vadd.s32 %v243, 16
      %v356 = vadd.s32 %v250, 16
      %v357 = vadd.s32 %v257, 16
      %v358 = vadd.s32 %v264, 16
      %v359 = vadd.s32 %v271, 16
      %v360 = vadd.s32 %v278, 16
      %v361 = vadd.s32 %v285, 16
      %v362 = vadd.s32 %v292, 16
      %v363 = vadd.s32 %v299, 16
      %v364 = vsel %vm332, %v348, %v194
      %v365 = vsel %vm333, %v349, %v201
      %v366 = vsel %vm334, %v350, %v208
      %v367 = vsel %vm335, %v351, %v215
      %v368 = vsel %vm336, %v352, %v222
      %v369 = vsel %vm337, %v353, %v229
      %v370 = vsel %vm338, %v354, %v236
      %v371 = vsel %vm339, %v355, %v243
      %v372 = vsel %vm340, %v356, %v250
      %v373 = vsel %vm341, %v357, %v257
      %v374 = vsel %vm342, %v358, %v264
      %v375 = vsel %vm343, %v359, %v271
      %v376 = vsel %vm344, %v360, %v278
      %v377 = vsel %vm345, %v361, %v285
      %v378 = vsel %vm346, %v362, %v292
      %v379 = vsel %vm347, %v363, %v299
      %vm380 = vcmp.ne.s32.totalorder %v364, 0
      %vm381 = vcmp.ne.s32.totalorder %v365, 0
      %vm382 = vcmp.ne.s32.totalorder %v366, 0
      %vm383 = vcmp.ne.s32.totalorder %v367, 0
      %vm384 = vcmp.ne.s32.totalorder %v368, 0
      %vm385 = vcmp.ne.s32.totalorder %v369, 0
      %vm386 = vcmp.ne.s32.totalorder %v370, 0
      %vm387 = vcmp.ne.s32.totalorder %v371, 0
      %vm388 = vcmp.ne.s32.totalorder %v372, 0
      %vm389 = vcmp.ne.s32.totalorder %v373, 0
      %vm390 = vcmp.ne.s32.totalorder %v374, 0
      %vm391 = vcmp.ne.s32.totalorder %v375, 0
      %vm392 = vcmp.ne.s32.totalorder %v376, 0
      %vm393 = vcmp.ne.s32.totalorder %v377, 0
      %vm394 = vcmp.ne.s32.totalorder %v378, 0
      %vm395 = vcmp.ne.s32.totalorder %v379, 0
      %vm396 = vcmp.ne.s32.totalorder %v364, 15
      %vm397 = vcmp.ne.s32.totalorder %v365, 15
      %vm398 = vcmp.ne.s32.totalorder %v366, 15
      %vm399 = vcmp.ne.s32.totalorder %v367, 15
      %vm400 = vcmp.ne.s32.totalorder %v368, 15
      %vm401 = vcmp.ne.s32.totalorder %v369, 15
      %vm402 = vcmp.ne.s32.totalorder %v370, 15
      %vm403 = vcmp.ne.s32.totalorder %v371, 15
      %vm404 = vcmp.ne.s32.totalorder %v372, 15
      %vm405 = vcmp.ne.s32.totalorder %v373, 15
      %vm406 = vcmp.ne.s32.totalorder %v374, 15
      %vm407 = vcmp.ne.s32.totalorder %v375, 15
      %vm408 = vcmp.ne.s32.totalorder %v376, 15
      %vm409 = vcmp.ne.s32.totalorder %v377, 15
      %vm410 = vcmp.ne.s32.totalorder %v378, 15
      %vm411 = vcmp.ne.s32.totalorder %v379, 15
      %v412 = vld [vmem:[%s165] sm:$0xff]
      %v413 = vld [vmem:[%s165 + $0x8] sm:$0xff]
      %v414 = vld [vmem:[%s165 + $0x10] sm:$0xff]
      %v415 = vld [vmem:[%s165 + $0x18] sm:$0xff]
      %v416 = vld [vmem:[%s165 + $0x20] sm:$0xff]
      %v417 = vld [vmem:[%s165 + $0x28] sm:$0xff]
      %v418 = vld [vmem:[%s165 + $0x30] sm:$0xff]
      %v419 = vld [vmem:[%s165 + $0x38] sm:$0xff]
      %v420 = vld [vmem:[%s165 + $0x40] sm:$0xff]
      %v421 = vld [vmem:[%s165 + $0x48] sm:$0xff]
      %v422 = vld [vmem:[%s165 + $0x50] sm:$0xff]
      %v423 = vld [vmem:[%s165 + $0x58] sm:$0xff]
      %v424 = vld [vmem:[%s165 + $0x60] sm:$0xff]
      %v425 = vld [vmem:[%s165 + $0x68] sm:$0xff]
      %v426 = vld [vmem:[%s165 + $0x70] sm:$0xff]
      %v427 = vld [vmem:[%s165 + $0x78] sm:$0xff]
      %v428 = vld [vmem:[%s1] sm:$0xf]
      %vm429 = vcmask 31744
      %v431 = vsel %vm429, %v412, 0
      %v434 = vsel %vm429, %v413, 0
      %v437 = vsel %vm429, %v414, 0
      %v440 = vsel %vm429, %v415, 0
      %v443 = vsel %vm429, %v416, 0
      %v446 = vsel %vm429, %v417, 0
      %v449 = vsel %vm429, %v418, 0
      %v452 = vsel %vm429, %v419, 0
      %v455 = vsel %vm429, %v420, 0
      %v458 = vsel %vm429, %v421, 0
      %v461 = vsel %vm429, %v422, 0
      %v464 = vsel %vm429, %v423, 0
      %v467 = vsel %vm429, %v424, 0
      %v470 = vsel %vm429, %v425, 0
      %v473 = vsel %vm429, %v426, 0
      %v476 = vsel %vm429, %v427, 0
      %vm478 = vcmask 1043456
      %v480 = vsel %vm478, %v428, 0
      %482 = vmatprep.subr.mxu0 0.0
      %483 = vmatpush1.msra.mxu0 %v480
      %484 = vmatprep.subr.mxu0 0.0
      %485 = vmatpush1.msra.mxu0 0.0
      %486 = vmatprep.subr.mxu0 0.0
      %487 = vmatpush1.msra.mxu0 0.0
      %488 = vmatprep.subr.mxu0 0.0
      %489 = vmatpush1.msra.mxu0 0.0
      %490 = vmatprep.subr.mxu0 0.0
      %491 = vmatpush1.msra.mxu0 0.0
      %492 = vmatprep.subr.mxu0 0.0
      %493 = vmatpush1.msra.mxu0 0.0
      %494 = vmatprep.subr.mxu0 0.0
      %495 = vmatpush1.msra.mxu0 0.0
      %496 = vmatprep.subr.mxu0 0.0
      %497 = vmatpush1.msra.mxu0 0.0
      %498 = vmatprep.subr.mxu0 0.0
      %499 = vmatpush1.msra.mxu0 0.0
      %500 = vmatprep.subr.mxu0 0.0
      %501 = vmatpush1.msra.mxu0 0.0
      %502 = vmatprep.subr.mxu0 0.0
      %503 = vmatpush1.msra.mxu0 0.0
      %504 = vmatprep.subr.mxu0 0.0
      %505 = vmatpush1.msra.mxu0 0.0
      %506 = vmatprep.subr.mxu0 0.0
      %507 = vmatpush1.msra.mxu0 0.0
      %508 = vmatprep.subr.mxu0 0.0
      %509 = vmatpush1.msra.mxu0 0.0
      %510 = vmatprep.subr.mxu0 0.0
      %511 = vmatpush1.msra.mxu0 0.0
      %512 = vmatprep.subr.mxu0 0.0
      %513 = vmatpush1.msra.mxu0 0.0
      %514 = vmatprep.subr.mxu0 0.0
      %515 = vmatpush1.msra.mxu0 0.0
      %516 = vmatprep.subr.mxu0 0.0
      %517 = vmatpush1.msra.mxu0 0.0
      %518 = vmatprep.subr.mxu0 0.0
      %519 = vmatpush1.msra.mxu0 0.0
      %520 = vmatprep.subr.mxu0 0.0
      %521 = vmatpush1.msra.mxu0 0.0
      %522 = vmatprep.subr.mxu0 0.0
      %523 = vmatpush1.msra.mxu0 0.0
      %524 = vmatprep.subr.mxu0 0.0
      %525 = vmatpush1.msra.mxu0 0.0
      %526 = vmatprep.subr.mxu0 0.0
      %527 = vmatpush1.msra.mxu0 0.0
      %528 = vmatprep.subr.mxu0 0.0
      %529 = vmatpush1.msra.mxu0 0.0
      %530 = vmatprep.subr.mxu0 0.0
      %531 = vmatpush1.msra.mxu0 0.0
      %532 = vmatprep.subr.mxu0 0.0
      %533 = vmatpush1.msra.mxu0 0.0
      %534 = vmatprep.subr.mxu0 0.0
      %535 = vmatpush1.msra.mxu0 0.0
      %536 = vmatprep.subr.mxu0 0.0
      %537 = vmatpush1.msra.mxu0 0.0
      %538 = vmatprep.subr.mxu0 0.0
      %539 = vmatpush1.msra.mxu0 0.0
      %540 = vmatprep.subr.mxu0 0.0
      %541 = vmatpush1.msra.mxu0 0.0
      %542 = vmatprep.subr.mxu0 0.0
      %543 = vmatpush1.msra.mxu0 0.0
      %544 = vmatprep.subr.mxu0 0.0
      %545 = vmatpush1.msra.mxu0 0.0
      %546 = vmatprep.mubr.f32.mxu0 0.0
      %547 = vmatmul.mubr.f32.gmra.mrb[0].mxu0 %v431
      %v548 = vpop.f32.mrb[0].mxu0
      %v549 = vadd.f32 0.0, %v548
      %v550 = vpop.f32.mrb[0].mxu0
      %551 = vmatprep.mubr.f32.mxu0 0.0
      %552 = vmatmul.mubr.f32.gmra.mrb[0].mxu0 %v434
      %v553 = vpop.f32.mrb[0].mxu0
      %v554 = vadd.f32 0.0, %v553
      %v555 = vpop.f32.mrb[0].mxu0
      %556 = vmatprep.mubr.f32.mxu0 0.0
      %557 = vmatmul.mubr.f32.gmra.mrb[0].mxu0 %v437
      %v558 = vpop.f32.mrb[0].mxu0
      %v559 = vadd.f32 0.0, %v558
      %v560 = vpop.f32.mrb[0].mxu0
      %561 = vmatprep.mubr.f32.mxu0 0.0
      %562 = vmatmul.mubr.f32.gmra.mrb[0].mxu0 %v440
      %v563 = vpop.f32.mrb[0].mxu0
      %v564 = vadd.f32 0.0, %v563
      %v565 = vpop.f32.mrb[0].mxu0
      %566 = vmatprep.mubr.f32.mxu0 0.0
      %567 = vmatmul.mubr.f32.gmra.mrb[0].mxu0 %v443
      %v568 = vpop.f32.mrb[0].mxu0
      %v569 = vadd.f32 0.0, %v568
      %v570 = vpop.f32.mrb[0].mxu0
      %571 = vmatprep.mubr.f32.mxu0 0.0
      %572 = vmatmul.mubr.f32.gmra.mrb[0].mxu0 %v446
      %v573 = vpop.f32.mrb[0].mxu0
      %v574 = vadd.f32 0.0, %v573
      %v575 = vpop.f32.mrb[0].mxu0
      %576 = vmatprep.mubr.f32.mxu0 0.0
      %577 = vmatmul.mubr.f32.gmra.mrb[0].mxu0 %v449
      %v578 = vpop.f32.mrb[0].mxu0
      %v579 = vadd.f32 0.0, %v578
      %v580 = vpop.f32.mrb[0].mxu0
      %581 = vmatprep.mubr.f32.mxu0 0.0
      %582 = vmatmul.mubr.f32.gmra.mrb[0].mxu0 %v452
      %v583 = vpop.f32.mrb[0].mxu0
      %v584 = vadd.f32 0.0, %v583
      %v585 = vpop.f32.mrb[0].mxu0
      %586 = vmatprep.mubr.f32.mxu0 0.0
      %587 = vmatmul.mubr.f32.gmra.mrb[0].mxu0 %v455
      %v588 = vpop.f32.mrb[0].mxu0
      %v589 = vadd.f32 0.0, %v588
      %v590 = vpop.f32.mrb[0].mxu0
      %591 = vmatprep.mubr.f32.mxu0 0.0
      %592 = vmatmul.mubr.f32.gmra.mrb[0].mxu0 %v458
      %v593 = vpop.f32.mrb[0].mxu0
      %v594 = vadd.f32 0.0, %v593
      %v595 = vpop.f32.mrb[0].mxu0
      %596 = vmatprep.mubr.f32.mxu0 0.0
      %597 = vmatmul.mubr.f32.gmra.mrb[0].mxu0 %v461
      %v598 = vpop.f32.mrb[0].mxu0
      %v599 = vadd.f32 0.0, %v598
      %v600 = vpop.f32.mrb[0].mxu0
      %601 = vmatprep.mubr.f32.mxu0 0.0
      %602 = vmatmul.mubr.f32.gmra.mrb[0].mxu0 %v464
      %v603 = vpop.f32.mrb[0].mxu0
      %v604 = vadd.f32 0.0, %v603
      %v605 = vpop.f32.mrb[0].mxu0
      %606 = vmatprep.mubr.f32.mxu0 0.0
      %607 = vmatmul.mubr.f32.gmra.mrb[0].mxu0 %v467
      %v608 = vpop.f32.mrb[0].mxu0
      %v609 = vadd.f32 0.0, %v608
      %v610 = vpop.f32.mrb[0].mxu0
      %611 = vmatprep.mubr.f32.mxu0 0.0
      %612 = vmatmul.mubr.f32.gmra.mrb[0].mxu0 %v470
      %v613 = vpop.f32.mrb[0].mxu0
      %v614 = vadd.f32 0.0, %v613
      %v615 = vpop.f32.mrb[0].mxu0
      %616 = vmatprep.mubr.f32.mxu0 0.0
      %617 = vmatmul.mubr.f32.gmra.mrb[0].mxu0 %v473
      %v618 = vpop.f32.mrb[0].mxu0
      %v619 = vadd.f32 0.0, %v618
      %v620 = vpop.f32.mrb[0].mxu0
      %621 = vmatprep.mubr.f32.mxu0 0.0
      %622 = vmatmul.mubr.f32.gmra.mrb[0].mxu0 %v476
      %v623 = vpop.f32.mrb[0].mxu0
      %v624 = vadd.f32 0.0, %v623
      %v625 = vpop.f32.mrb[0].mxu0
      %626 = vdwg.mxu0
      %v627 = vsel %vm380, 1, 0
      %v628 = vsel %vm381, 1, 0
      %v629 = vsel %vm382, 1, 0
      %v630 = vsel %vm383, 1, 0
      %v631 = vsel %vm384, 1, 0
      %v632 = vsel %vm385, 1, 0
      %v633 = vsel %vm386, 1, 0
      %v634 = vsel %vm387, 1, 0
      %v635 = vsel %vm388, 1, 0
      %v636 = vsel %vm389, 1, 0
      %v637 = vsel %vm390, 1, 0
      %v638 = vsel %vm391, 1, 0
      %v639 = vsel %vm392, 1, 0
      %v640 = vsel %vm393, 1, 0
      %v641 = vsel %vm394, 1, 0
      %v642 = vsel %vm395, 1, 0
      %vm643 = vcmp.eq.s32.totalorder %v627, 1
      %vm644 = vcmp.eq.s32.totalorder %v628, 1
      %vm645 = vcmp.eq.s32.totalorder %v629, 1
      %vm646 = vcmp.eq.s32.totalorder %v630, 1
      %vm647 = vcmp.eq.s32.totalorder %v631, 1
      %vm648 = vcmp.eq.s32.totalorder %v632, 1
      %vm649 = vcmp.eq.s32.totalorder %v633, 1
      %vm650 = vcmp.eq.s32.totalorder %v634, 1
      %vm651 = vcmp.eq.s32.totalorder %v635, 1
      %vm652 = vcmp.eq.s32.totalorder %v636, 1
      %vm653 = vcmp.eq.s32.totalorder %v637, 1
      %vm654 = vcmp.eq.s32.totalorder %v638, 1
      %vm655 = vcmp.eq.s32.totalorder %v639, 1
      %vm656 = vcmp.eq.s32.totalorder %v640, 1
      %vm657 = vcmp.eq.s32.totalorder %v641, 1
      %vm658 = vcmp.eq.s32.totalorder %v642, 1
      %v659 = vsel %vm643, %v549, 0.0
      %v660 = vsel %vm644, %v554, 0.0
      %v661 = vsel %vm645, %v559, 0.0
      %v662 = vsel %vm646, %v564, 0.0
      %v663 = vsel %vm647, %v569, 0.0
      %v664 = vsel %vm648, %v574, 0.0
      %v665 = vsel %vm649, %v579, 0.0
      %v666 = vsel %vm650, %v584, 0.0
      %v667 = vsel %vm651, %v589, 0.0
      %v668 = vsel %vm652, %v594, 0.0
      %v669 = vsel %vm653, %v599, 0.0
      %v670 = vsel %vm654, %v604, 0.0
      %v671 = vsel %vm655, %v609, 0.0
      %v672 = vsel %vm656, %v614, 0.0
      %v673 = vsel %vm657, %v619, 0.0
      %v674 = vsel %vm658, %v624, 0.0
      %v675 = vadd.f32 %v659, 0.0
      %v676 = vadd.f32 %v660, 0.0
      %v677 = vadd.f32 %v661, 0.0
      %v678 = vadd.f32 %v662, 0.0
      %v679 = vadd.f32 %v663, 0.0
      %v680 = vadd.f32 %v664, 0.0
      %v681 = vadd.f32 %v665, 0.0
      %v682 = vadd.f32 %v666, 0.0
      %v683 = vadd.f32 %v667, 0.0
      %v684 = vadd.f32 %v668, 0.0
      %v685 = vadd.f32 %v669, 0.0
      %v686 = vadd.f32 %v670, 0.0
      %v687 = vadd.f32 %v671, 0.0
      %v688 = vadd.f32 %v672, 0.0
      %v689 = vadd.f32 %v673, 0.0
      %v690 = vadd.f32 %v674, 0.0
      %v691 = vld [vmem:[%s165 + $0x1] sm:$0xff]
      %v692 = vld [vmem:[%s165 + $0x9] sm:$0xff]
      %v693 = vld [vmem:[%s165 + $0x11] sm:$0xff]
      %v694 = vld [vmem:[%s165 + $0x19] sm:$0xff]
      %v695 = vld [vmem:[%s165 + $0x21] sm:$0xff]
      %v696 = vld [vmem:[%s165 + $0x29] sm:$0xff]
      %v697 = vld [vmem:[%s165 + $0x31] sm:$0xff]
      %v698 = vld [vmem:[%s165 + $0x39] sm:$0xff]
      %v699 = vld [vmem:[%s165 + $0x41] sm:$0xff]
      %v700 = vld [vmem:[%s165 + $0x49] sm:$0xff]
      %v701 = vld [vmem:[%s165 + $0x51] sm:$0xff]
      %v702 = vld [vmem:[%s165 + $0x59] sm:$0xff]
      %v703 = vld [vmem:[%s165 + $0x61] sm:$0xff]
      %v704 = vld [vmem:[%s165 + $0x69] sm:$0xff]
      %v705 = vld [vmem:[%s165 + $0x71] sm:$0xff]
      %v706 = vld [vmem:[%s165 + $0x79] sm:$0xff]
      %s707 = scalar_lea.vmem %s1, 4
      %v708 = vld [vmem:[%s707] sm:$0xf]
      %v710 = vsel %vm429, %v691, 0
      %v713 = vsel %vm429, %v692, 0
      %v716 = vsel %vm429, %v693, 0
      %v719 = vsel %vm429, %v694, 0
      %v722 = vsel %vm429, %v695, 0
      %v725 = vsel %vm429, %v696, 0
      %v728 = vsel %vm429, %v697, 0
      %v731 = vsel %vm429, %v698, 0
      %v734 = vsel %vm429, %v699, 0
      %v737 = vsel %vm429, %v700, 0
      %v740 = vsel %vm429, %v701, 0
      %v743 = vsel %vm429, %v702, 0
      %v746 = vsel %vm429, %v703, 0
      %v749 = vsel %vm429, %v704, 0
      %v752 = vsel %vm429, %v705, 0
      %v755 = vsel %vm429, %v706, 0
      %v758 = vsel %vm478, %v708, 0
      %760 = vmatprep.subr.mxu0 0.0
      %761 = vmatpush1.msra.mxu0 %v758
      %762 = vmatprep.subr.mxu0 0.0
      %763 = vmatpush1.msra.mxu0 0.0
      %764 = vmatprep.subr.mxu0 0.0
      %765 = vmatpush1.msra.mxu0 0.0
      %766 = vmatprep.subr.mxu0 0.0
      %767 = vmatpush1.msra.mxu0 0.0
      %768 = vmatprep.subr.mxu0 0.0
      %769 = vmatpush1.msra.mxu0 0.0
      %770 = vmatprep.subr.mxu0 0.0
      %771 = vmatpush1.msra.mxu0 0.0
      %772 = vmatprep.subr.mxu0 0.0
      %773 = vmatpush1.msra.mxu0 0.0
      %774 = vmatprep.subr.mxu0 0.0
      %775 = vmatpush1.msra.mxu0 0.0
      %776 = vmatprep.subr.mxu0 0.0
      %777 = vmatpush1.msra.mxu0 0.0
      %778 = vmatprep.subr.mxu0 0.0
      %779 = vmatpush1.msra.mxu0 0.0
      %780 = vmatprep.subr.mxu0 0.0
      %781 = vmatpush1.msra.mxu0 0.0
      %782 = vmatprep.subr.mxu0 0.0
      %783 = vmatpush1.msra.mxu0 0.0
      %784 = vmatprep.subr.mxu0 0.0
      %785 = vmatpush1.msra.mxu0 0.0
      %786 = vmatprep.subr.mxu0 0.0
      %787 = vmatpush1.msra.mxu0 0.0
      %788 = vmatprep.subr.mxu0 0.0
      %789 = vmatpush1.msra.mxu0 0.0
      %790 = vmatprep.subr.mxu0 0.0
      %791 = vmatpush1.msra.mxu0 0.0
      %792 = vmatprep.subr.mxu0 0.0
      %793 = vmatpush1.msra.mxu0 0.0
      %794 = vmatprep.subr.mxu0 0.0
      %795 = vmatpush1.msra.mxu0 0.0
      %796 = vmatprep.subr.mxu0 0.0
      %797 = vmatpush1.msra.mxu0 0.0
      %798 = vmatprep.subr.mxu0 0.0
      %799 = vmatpush1.msra.mxu0 0.0
      %800 = vmatprep.subr.mxu0 0.0
      %801 = vmatpush1.msra.mxu0 0.0
      %802 = vmatprep.subr.mxu0 0.0
      %803 = vmatpush1.msra.mxu0 0.0
      %804 = vmatprep.subr.mxu0 0.0
      %805 = vmatpush1.msra.mxu0 0.0
      %806 = vmatprep.subr.mxu0 0.0
      %807 = vmatpush1.msra.mxu0 0.0
      %808 = vmatprep.subr.mxu0 0.0
      %809 = vmatpush1.msra.mxu0 0.0
      %810 = vmatprep.subr.mxu0 0.0
      %811 = vmatpush1.msra.mxu0 0.0
      %812 = vmatprep.subr.mxu0 0.0
      %813 = vmatpush1.msra.mxu0 0.0
      %814 = vmatprep.subr.mxu0 0.0
      %815 = vmatpush1.msra.mxu0 0.0
      %816 = vmatprep.subr.mxu0 0.0
      %817 = vmatpush1.msra.mxu0 0.0
      %818 = vmatprep.subr.mxu0 0.0
      %819 = vmatpush1.msra.mxu0 0.0
      %820 = vmatprep.subr.mxu0 0.0
      %821 = vmatpush1.msra.mxu0 0.0
      %822 = vmatprep.subr.mxu0 0.0
      %823 = vmatpush1.msra.mxu0 0.0
      %824 = vmatprep.mubr.f32.mxu0 0.0
      %825 = vmatmul.mubr.f32.gmra.mrb[0].mxu0 %v710
      %v826 = vpop.f32.mrb[0].mxu0
      %v827 = vadd.f32 0.0, %v826
      %v828 = vpop.f32.mrb[0].mxu0
      %829 = vmatprep.mubr.f32.mxu0 0.0
      %830 = vmatmul.mubr.f32.gmra.mrb[0].mxu0 %v713
      %v831 = vpop.f32.mrb[0].mxu0
      %v832 = vadd.f32 0.0, %v831
      %v833 = vpop.f32.mrb[0].mxu0
      %834 = vmatprep.mubr.f32.mxu0 0.0
      %835 = vmatmul.mubr.f32.gmra.mrb[0].mxu0 %v716
      %v836 = vpop.f32.mrb[0].mxu0
      %v837 = vadd.f32 0.0, %v836
      %v838 = vpop.f32.mrb[0].mxu0
      %839 = vmatprep.mubr.f32.mxu0 0.0
      %840 = vmatmul.mubr.f32.gmra.mrb[0].mxu0 %v719
      %v841 = vpop.f32.mrb[0].mxu0
      %v842 = vadd.f32 0.0, %v841
      %v843 = vpop.f32.mrb[0].mxu0
      %844 = vmatprep.mubr.f32.mxu0 0.0
      %845 = vmatmul.mubr.f32.gmra.mrb[0].mxu0 %v722
      %v846 = vpop.f32.mrb[0].mxu0
      %v847 = vadd.f32 0.0, %v846
      %v848 = vpop.f32.mrb[0].mxu0
      %849 = vmatprep.mubr.f32.mxu0 0.0
      %850 = vmatmul.mubr.f32.gmra.mrb[0].mxu0 %v725
      %v851 = vpop.f32.mrb[0].mxu0
      %v852 = vadd.f32 0.0, %v851
      %v853 = vpop.f32.mrb[0].mxu0
      %854 = vmatprep.mubr.f32.mxu0 0.0
      %855 = vmatmul.mubr.f32.gmra.mrb[0].mxu0 %v728
      %v856 = vpop.f32.mrb[0].mxu0
      %v857 = vadd.f32 0.0, %v856
      %v858 = vpop.f32.mrb[0].mxu0
      %859 = vmatprep.mubr.f32.mxu0 0.0
      %860 = vmatmul.mubr.f32.gmra.mrb[0].mxu0 %v731
      %v861 = vpop.f32.mrb[0].mxu0
      %v862 = vadd.f32 0.0, %v861
      %v863 = vpop.f32.mrb[0].mxu0
      %864 = vmatprep.mubr.f32.mxu0 0.0
      %865 = vmatmul.mubr.f32.gmra.mrb[0].mxu0 %v734
      %v866 = vpop.f32.mrb[0].mxu0
      %v867 = vadd.f32 0.0, %v866
      %v868 = vpop.f32.mrb[0].mxu0
      %869 = vmatprep.mubr.f32.mxu0 0.0
      %870 = vmatmul.mubr.f32.gmra.mrb[0].mxu0 %v737
      %v871 = vpop.f32.mrb[0].mxu0
      %v872 = vadd.f32 0.0, %v871
      %v873 = vpop.f32.mrb[0].mxu0
      %874 = vmatprep.mubr.f32.mxu0 0.0
      %875 = vmatmul.mubr.f32.gmra.mrb[0].mxu0 %v740
      %v876 = vpop.f32.mrb[0].mxu0
      %v877 = vadd.f32 0.0, %v876
      %v878 = vpop.f32.mrb[0].mxu0
      %879 = vmatprep.mubr.f32.mxu0 0.0
      %880 = vmatmul.mubr.f32.gmra.mrb[0].mxu0 %v743
      %v881 = vpop.f32.mrb[0].mxu0
      %v882 = vadd.f32 0.0, %v881
      %v883 = vpop.f32.mrb[0].mxu0
      %884 = vmatprep.mubr.f32.mxu0 0.0
      %885 = vmatmul.mubr.f32.gmra.mrb[0].mxu0 %v746
      %v886 = vpop.f32.mrb[0].mxu0
      %v887 = vadd.f32 0.0, %v886
      %v888 = vpop.f32.mrb[0].mxu0
      %889 = vmatprep.mubr.f32.mxu0 0.0
      %890 = vmatmul.mubr.f32.gmra.mrb[0].mxu0 %v749
      %v891 = vpop.f32.mrb[0].mxu0
      %v892 = vadd.f32 0.0, %v891
      %v893 = vpop.f32.mrb[0].mxu0
      %894 = vmatprep.mubr.f32.mxu0 0.0
      %895 = vmatmul.mubr.f32.gmra.mrb[0].mxu0 %v752
      %v896 = vpop.f32.mrb[0].mxu0
      %v897 = vadd.f32 0.0, %v896
      %v898 = vpop.f32.mrb[0].mxu0
      %899 = vmatprep.mubr.f32.mxu0 0.0
      %900 = vmatmul.mubr.f32.gmra.mrb[0].mxu0 %v755
      %v901 = vpop.f32.mrb[0].mxu0
      %v902 = vadd.f32 0.0, %v901
      %v903 = vpop.f32.mrb[0].mxu0
      %904 = vdwg.mxu0
      %v905 = vadd.f32 %v675, %v827
      %v906 = vadd.f32 %v676, %v832
      %v907 = vadd.f32 %v677, %v837
      %v908 = vadd.f32 %v678, %v842
      %v909 = vadd.f32 %v679, %v847
      %v910 = vadd.f32 %v680, %v852
      %v911 = vadd.f32 %v681, %v857
      %v912 = vadd.f32 %v682, %v862
      %v913 = vadd.f32 %v683, %v867
      %v914 = vadd.f32 %v684, %v872
      %v915 = vadd.f32 %v685, %v877
      %v916 = vadd.f32 %v686, %v882
      %v917 = vadd.f32 %v687, %v887
      %v918 = vadd.f32 %v688, %v892
      %v919 = vadd.f32 %v689, %v897
      %v920 = vadd.f32 %v690, %v902
      %v921 = vld [vmem:[%s165 + $0x2] sm:$0xff]
      %v922 = vld [vmem:[%s165 + $0xa] sm:$0xff]
      %v923 = vld [vmem:[%s165 + $0x12] sm:$0xff]
      %v924 = vld [vmem:[%s165 + $0x1a] sm:$0xff]
      %v925 = vld [vmem:[%s165 + $0x22] sm:$0xff]
      %v926 = vld [vmem:[%s165 + $0x2a] sm:$0xff]
      %v927 = vld [vmem:[%s165 + $0x32] sm:$0xff]
      %v928 = vld [vmem:[%s165 + $0x3a] sm:$0xff]
      %v929 = vld [vmem:[%s165 + $0x42] sm:$0xff]
      %v930 = vld [vmem:[%s165 + $0x4a] sm:$0xff]
      %v931 = vld [vmem:[%s165 + $0x52] sm:$0xff]
      %v932 = vld [vmem:[%s165 + $0x5a] sm:$0xff]
      %v933 = vld [vmem:[%s165 + $0x62] sm:$0xff]
      %v934 = vld [vmem:[%s165 + $0x6a] sm:$0xff]
      %v935 = vld [vmem:[%s165 + $0x72] sm:$0xff]
      %v936 = vld [vmem:[%s165 + $0x7a] sm:$0xff]
      %s937 = scalar_lea.vmem %s1, 8
      %v938 = vld [vmem:[%s937] sm:$0xf]
      %v940 = vsel %vm429, %v921, 0
      %v943 = vsel %vm429, %v922, 0
      %v946 = vsel %vm429, %v923, 0
      %v949 = vsel %vm429, %v924, 0
      %v952 = vsel %vm429, %v925, 0
      %v955 = vsel %vm429, %v926, 0
      %v958 = vsel %vm429, %v927, 0
      %v961 = vsel %vm429, %v928, 0
      %v964 = vsel %vm429, %v929, 0
      %v967 = vsel %vm429, %v930, 0
      %v970 = vsel %vm429, %v931, 0
      %v973 = vsel %vm429, %v932, 0
      %v976 = vsel %vm429, %v933, 0
      %v979 = vsel %vm429, %v934, 0
      %v982 = vsel %vm429, %v935, 0
      %v985 = vsel %vm429, %v936, 0
      %v988 = vsel %vm478, %v938, 0
      %990 = vmatprep.subr.mxu0 0.0
      %991 = vmatpush1.msra.mxu0 %v988
      %992 = vmatprep.subr.mxu0 0.0
      %993 = vmatpush1.msra.mxu0 0.0
      %994 = vmatprep.subr.mxu0 0.0
      %995 = vmatpush1.msra.mxu0 0.0
      %996 = vmatprep.subr.mxu0 0.0
      %997 = vmatpush1.msra.mxu0 0.0
      %998 = vmatprep.subr.mxu0 0.0
      %999 = vmatpush1.msra.mxu0 0.0
      %1000 = vmatprep.subr.mxu0 0.0
      %1001 = vmatpush1.msra.mxu0 0.0
      %1002 = vmatprep.subr.mxu0 0.0
      %1003 = vmatpush1.msra.mxu0 0.0
      %1004 = vmatprep.subr.mxu0 0.0
      %1005 = vmatpush1.msra.mxu0 0.0
      %1006 = vmatprep.subr.mxu0 0.0
      %1007 = vmatpush1.msra.mxu0 0.0
      %1008 = vmatprep.subr.mxu0 0.0
      %1009 = vmatpush1.msra.mxu0 0.0
      %1010 = vmatprep.subr.mxu0 0.0
      %1011 = vmatpush1.msra.mxu0 0.0
      %1012 = vmatprep.subr.mxu0 0.0
      %1013 = vmatpush1.msra.mxu0 0.0
      %1014 = vmatprep.subr.mxu0 0.0
      %1015 = vmatpush1.msra.mxu0 0.0
      %1016 = vmatprep.subr.mxu0 0.0
      %1017 = vmatpush1.msra.mxu0 0.0
      %1018 = vmatprep.subr.mxu0 0.0
      %1019 = vmatpush1.msra.mxu0 0.0
      %1020 = vmatprep.subr.mxu0 0.0
      %1021 = vmatpush1.msra.mxu0 0.0
      %1022 = vmatprep.subr.mxu0 0.0
      %1023 = vmatpush1.msra.mxu0 0.0
      %1024 = vmatprep.subr.mxu0 0.0
      %1025 = vmatpush1.msra.mxu0 0.0
      %1026 = vmatprep.subr.mxu0 0.0
      %1027 = vmatpush1.msra.mxu0 0.0
      %1028 = vmatprep.subr.mxu0 0.0
      %1029 = vmatpush1.msra.mxu0 0.0
      %1030 = vmatprep.subr.mxu0 0.0
      %1031 = vmatpush1.msra.mxu0 0.0
      %1032 = vmatprep.subr.mxu0 0.0
      %1033 = vmatpush1.msra.mxu0 0.0
      %1034 = vmatprep.subr.mxu0 0.0
      %1035 = vmatpush1.msra.mxu0 0.0
      %1036 = vmatprep.subr.mxu0 0.0
      %1037 = vmatpush1.msra.mxu0 0.0
      %1038 = vmatprep.subr.mxu0 0.0
      %1039 = vmatpush1.msra.mxu0 0.0
      %1040 = vmatprep.subr.mxu0 0.0
      %1041 = vmatpush1.msra.mxu0 0.0
      %1042 = vmatprep.subr.mxu0 0.0
      %1043 = vmatpush1.msra.mxu0 0.0
      %1044 = vmatprep.subr.mxu0 0.0
      %1045 = vmatpush1.msra.mxu0 0.0
      %1046 = vmatprep.subr.mxu0 0.0
      %1047 = vmatpush1.msra.mxu0 0.0
      %1048 = vmatprep.subr.mxu0 0.0
      %1049 = vmatpush1.msra.mxu0 0.0
      %1050 = vmatprep.subr.mxu0 0.0
      %1051 = vmatpush1.msra.mxu0 0.0
      %1052 = vmatprep.subr.mxu0 0.0
      %1053 = vmatpush1.msra.mxu0 0.0
      %1054 = vmatprep.mubr.f32.mxu0 0.0
      %1055 = vmatmul.mubr.f32.gmra.mrb[0].mxu0 %v940
      %v1056 = vpop.f32.mrb[0].mxu0
      %v1057 = vadd.f32 0.0, %v1056
      %v1058 = vpop.f32.mrb[0].mxu0
      %1059 = vmatprep.mubr.f32.mxu0 0.0
      %1060 = vmatmul.mubr.f32.gmra.mrb[0].mxu0 %v943
      %v1061 = vpop.f32.mrb[0].mxu0
      %v1062 = vadd.f32 0.0, %v1061
      %v1063 = vpop.f32.mrb[0].mxu0
      %1064 = vmatprep.mubr.f32.mxu0 0.0
      %1065 = vmatmul.mubr.f32.gmra.mrb[0].mxu0 %v946
      %v1066 = vpop.f32.mrb[0].mxu0
      %v1067 = vadd.f32 0.0, %v1066
      %v1068 = vpop.f32.mrb[0].mxu0
      %1069 = vmatprep.mubr.f32.mxu0 0.0
      %1070 = vmatmul.mubr.f32.gmra.mrb[0].mxu0 %v949
      %v1071 = vpop.f32.mrb[0].mxu0
      %v1072 = vadd.f32 0.0, %v1071
      %v1073 = vpop.f32.mrb[0].mxu0
      %1074 = vmatprep.mubr.f32.mxu0 0.0
      %1075 = vmatmul.mubr.f32.gmra.mrb[0].mxu0 %v952
      %v1076 = vpop.f32.mrb[0].mxu0
      %v1077 = vadd.f32 0.0, %v1076
      %v1078 = vpop.f32.mrb[0].mxu0
      %1079 = vmatprep.mubr.f32.mxu0 0.0
      %1080 = vmatmul.mubr.f32.gmra.mrb[0].mxu0 %v955
      %v1081 = vpop.f32.mrb[0].mxu0
      %v1082 = vadd.f32 0.0, %v1081
      %v1083 = vpop.f32.mrb[0].mxu0
      %1084 = vmatprep.mubr.f32.mxu0 0.0
      %1085 = vmatmul.mubr.f32.gmra.mrb[0].mxu0 %v958
      %v1086 = vpop.f32.mrb[0].mxu0
      %v1087 = vadd.f32 0.0, %v1086
      %v1088 = vpop.f32.mrb[0].mxu0
      %1089 = vmatprep.mubr.f32.mxu0 0.0
      %1090 = vmatmul.mubr.f32.gmra.mrb[0].mxu0 %v961
      %v1091 = vpop.f32.mrb[0].mxu0
      %v1092 = vadd.f32 0.0, %v1091
      %v1093 = vpop.f32.mrb[0].mxu0
      %1094 = vmatprep.mubr.f32.mxu0 0.0
      %1095 = vmatmul.mubr.f32.gmra.mrb[0].mxu0 %v964
      %v1096 = vpop.f32.mrb[0].mxu0
      %v1097 = vadd.f32 0.0, %v1096
      %v1098 = vpop.f32.mrb[0].mxu0
      %1099 = vmatprep.mubr.f32.mxu0 0.0
      %1100 = vmatmul.mubr.f32.gmra.mrb[0].mxu0 %v967
      %v1101 = vpop.f32.mrb[0].mxu0
      %v1102 = vadd.f32 0.0, %v1101
      %v1103 = vpop.f32.mrb[0].mxu0
      %1104 = vmatprep.mubr.f32.mxu0 0.0
      %1105 = vmatmul.mubr.f32.gmra.mrb[0].mxu0 %v970
      %v1106 = vpop.f32.mrb[0].mxu0
      %v1107 = vadd.f32 0.0, %v1106
      %v1108 = vpop.f32.mrb[0].mxu0
      %1109 = vmatprep.mubr.f32.mxu0 0.0
      %1110 = vmatmul.mubr.f32.gmra.mrb[0].mxu0 %v973
      %v1111 = vpop.f32.mrb[0].mxu0
      %v1112 = vadd.f32 0.0, %v1111
      %v1113 = vpop.f32.mrb[0].mxu0
      %1114 = vmatprep.mubr.f32.mxu0 0.0
      %1115 = vmatmul.mubr.f32.gmra.mrb[0].mxu0 %v976
      %v1116 = vpop.f32.mrb[0].mxu0
      %v1117 = vadd.f32 0.0, %v1116
      %v1118 = vpop.f32.mrb[0].mxu0
      %1119 = vmatprep.mubr.f32.mxu0 0.0
      %1120 = vmatmul.mubr.f32.gmra.mrb[0].mxu0 %v979
      %v1121 = vpop.f32.mrb[0].mxu0
      %v1122 = vadd.f32 0.0, %v1121
      %v1123 = vpop.f32.mrb[0].mxu0
      %1124 = vmatprep.mubr.f32.mxu0 0.0
      %1125 = vmatmul.mubr.f32.gmra.mrb[0].mxu0 %v982
      %v1126 = vpop.f32.mrb[0].mxu0
      %v1127 = vadd.f32 0.0, %v1126
      %v1128 = vpop.f32.mrb[0].mxu0
      %1129 = vmatprep.mubr.f32.mxu0 0.0
      %1130 = vmatmul.mubr.f32.gmra.mrb[0].mxu0 %v985
      %v1131 = vpop.f32.mrb[0].mxu0
      %v1132 = vadd.f32 0.0, %v1131
      %v1133 = vpop.f32.mrb[0].mxu0
      %1134 = vdwg.mxu0
      %v1135 = vsel %vm396, 1, 0
      %v1136 = vsel %vm397, 1, 0
      %v1137 = vsel %vm398, 1, 0
      %v1138 = vsel %vm399, 1, 0
      %v1139 = vsel %vm400, 1, 0
      %v1140 = vsel %vm401, 1, 0
      %v1141 = vsel %vm402, 1, 0
      %v1142 = vsel %vm403, 1, 0
      %v1143 = vsel %vm404, 1, 0
      %v1144 = vsel %vm405, 1, 0
      %v1145 = vsel %vm406, 1, 0
      %v1146 = vsel %vm407, 1, 0
      %v1147 = vsel %vm408, 1, 0
      %v1148 = vsel %vm409, 1, 0
      %v1149 = vsel %vm410, 1, 0
      %v1150 = vsel %vm411, 1, 0
      %vm1151 = vcmp.eq.s32.totalorder %v1135, 1
      %vm1152 = vcmp.eq.s32.totalorder %v1136, 1
      %vm1153 = vcmp.eq.s32.totalorder %v1137, 1
      %vm1154 = vcmp.eq.s32.totalorder %v1138, 1
      %vm1155 = vcmp.eq.s32.totalorder %v1139, 1
      %vm1156 = vcmp.eq.s32.totalorder %v1140, 1
      %vm1157 = vcmp.eq.s32.totalorder %v1141, 1
      %vm1158 = vcmp.eq.s32.totalorder %v1142, 1
      %vm1159 = vcmp.eq.s32.totalorder %v1143, 1
      %vm1160 = vcmp.eq.s32.totalorder %v1144, 1
      %vm1161 = vcmp.eq.s32.totalorder %v1145, 1
      %vm1162 = vcmp.eq.s32.totalorder %v1146, 1
      %vm1163 = vcmp.eq.s32.totalorder %v1147, 1
      %vm1164 = vcmp.eq.s32.totalorder %v1148, 1
      %vm1165 = vcmp.eq.s32.totalorder %v1149, 1
      %vm1166 = vcmp.eq.s32.totalorder %v1150, 1
      %v1167 = vsel %vm1151, %v1057, 0.0
      %v1168 = vsel %vm1152, %v1062, 0.0
      %v1169 = vsel %vm1153, %v1067, 0.0
      %v1170 = vsel %vm1154, %v1072, 0.0
      %v1171 = vsel %vm1155, %v1077, 0.0
      %v1172 = vsel %vm1156, %v1082, 0.0
      %v1173 = vsel %vm1157, %v1087, 0.0
      %v1174 = vsel %vm1158, %v1092, 0.0
      %v1175 = vsel %vm1159, %v1097, 0.0
      %v1176 = vsel %vm1160, %v1102, 0.0
      %v1177 = vsel %vm1161, %v1107, 0.0
      %v1178 = vsel %vm1162, %v1112, 0.0
      %v1179 = vsel %vm1163, %v1117, 0.0
      %v1180 = vsel %vm1164, %v1122, 0.0
      %v1181 = vsel %vm1165, %v1127, 0.0
      %v1182 = vsel %vm1166, %v1132, 0.0
      %v1183 = vadd.f32 %v905, %v1167
      %v1184 = vadd.f32 %v906, %v1168
      %v1185 = vadd.f32 %v907, %v1169
      %v1186 = vadd.f32 %v908, %v1170
      %v1187 = vadd.f32 %v909, %v1171
      %v1188 = vadd.f32 %v910, %v1172
      %v1189 = vadd.f32 %v911, %v1173
      %v1190 = vadd.f32 %v912, %v1174
      %v1191 = vadd.f32 %v913, %v1175
      %v1192 = vadd.f32 %v914, %v1176
      %v1193 = vadd.f32 %v915, %v1177
      %v1194 = vadd.f32 %v916, %v1178
      %v1195 = vadd.f32 %v917, %v1179
      %v1196 = vadd.f32 %v918, %v1180
      %v1197 = vadd.f32 %v919, %v1181
      %v1198 = vadd.f32 %v920, %v1182
      %v1199 = vld [vmem:[%s165 + $0x10] sm:$0xff]
      %v1200 = vld [vmem:[%s165 + $0x18] sm:$0xff]
      %v1201 = vld [vmem:[%s165 + $0x20] sm:$0xff]
      %v1202 = vld [vmem:[%s165 + $0x28] sm:$0xff]
      %v1203 = vld [vmem:[%s165 + $0x30] sm:$0xff]
      %v1204 = vld [vmem:[%s165 + $0x38] sm:$0xff]
      %v1205 = vld [vmem:[%s165 + $0x40] sm:$0xff]
      %v1206 = vld [vmem:[%s165 + $0x48] sm:$0xff]
      %v1207 = vld [vmem:[%s165 + $0x50] sm:$0xff]
      %v1208 = vld [vmem:[%s165 + $0x58] sm:$0xff]
      %v1209 = vld [vmem:[%s165 + $0x60] sm:$0xff]
      %v1210 = vld [vmem:[%s165 + $0x68] sm:$0xff]
      %v1211 = vld [vmem:[%s165 + $0x70] sm:$0xff]
      %v1212 = vld [vmem:[%s165 + $0x78] sm:$0xff]
      %v1213 = vld [vmem:[%s165 + $0x80] sm:$0xff]
      %v1214 = vld [vmem:[%s165 + $0x88] sm:$0xff]
      %s1215 = scalar_lea.vmem %s1, 12
      %v1216 = vld [vmem:[%s1215] sm:$0xf]
      %v1218 = vsel %vm429, %v1199, 0
      %v1221 = vsel %vm429, %v1200, 0
      %v1224 = vsel %vm429, %v1201, 0
      %v1227 = vsel %vm429, %v1202, 0
      %v1230 = vsel %vm429, %v1203, 0
      %v1233 = vsel %vm429, %v1204, 0
      %v1236 = vsel %vm429, %v1205, 0
      %v1239 = vsel %vm429, %v1206, 0
      %v1242 = vsel %vm429, %v1207, 0
      %v1245 = vsel %vm429, %v1208, 0
      %v1248 = vsel %vm429, %v1209, 0
      %v1251 = vsel %vm429, %v1210, 0
      %v1254 = vsel %vm429, %v1211, 0
      %v1257 = vsel %vm429, %v1212, 0
      %v1260 = vsel %vm429, %v1213, 0
      %v1263 = vsel %vm429, %v1214, 0
      %v1266 = vsel %vm478, %v1216, 0
      %1268 = vmatprep.subr.mxu0 0.0
      %1269 = vmatpush1.msra.mxu0 %v1266
      %1270 = vmatprep.subr.mxu0 0.0
      %1271 = vmatpush1.msra.mxu0 0.0
      %1272 = vmatprep.subr.mxu0 0.0
      %1273 = vmatpush1.msra.mxu0 0.0
      %1274 = vmatprep.subr.mxu0 0.0
      %1275 = vmatpush1.msra.mxu0 0.0
      %1276 = vmatprep.subr.mxu0 0.0
      %1277 = vmatpush1.msra.mxu0 0.0
      %1278 = vmatprep.subr.mxu0 0.0
      %1279 = vmatpush1.msra.mxu0 0.0
      %1280 = vmatprep.subr.mxu0 0.0
      %1281 = vmatpush1.msra.mxu0 0.0
      %1282 = vmatprep.subr.mxu0 0.0
      %1283 = vmatpush1.msra.mxu0 0.0
      %1284 = vmatprep.subr.mxu0 0.0
      %1285 = vmatpush1.msra.mxu0 0.0
      %1286 = vmatprep.subr.mxu0 0.0
      %1287 = vmatpush1.msra.mxu0 0.0
      %1288 = vmatprep.subr.mxu0 0.0
      %1289 = vmatpush1.msra.mxu0 0.0
      %1290 = vmatprep.subr.mxu0 0.0
      %1291 = vmatpush1.msra.mxu0 0.0
      %1292 = vmatprep.subr.mxu0 0.0
      %1293 = vmatpush1.msra.mxu0 0.0
      %1294 = vmatprep.subr.mxu0 0.0
      %1295 = vmatpush1.msra.mxu0 0.0
      %1296 = vmatprep.subr.mxu0 0.0
      %1297 = vmatpush1.msra.mxu0 0.0
      %1298 = vmatprep.subr.mxu0 0.0
      %1299 = vmatpush1.msra.mxu0 0.0
      %1300 = vmatprep.subr.mxu0 0.0
      %1301 = vmatpush1.msra.mxu0 0.0
      %1302 = vmatprep.subr.mxu0 0.0
      %1303 = vmatpush1.msra.mxu0 0.0
      %1304 = vmatprep.subr.mxu0 0.0
      %1305 = vmatpush1.msra.mxu0 0.0
      %1306 = vmatprep.subr.mxu0 0.0
      %1307 = vmatpush1.msra.mxu0 0.0
      %1308 = vmatprep.subr.mxu0 0.0
      %1309 = vmatpush1.msra.mxu0 0.0
      %1310 = vmatprep.subr.mxu0 0.0
      %1311 = vmatpush1.msra.mxu0 0.0
      %1312 = vmatprep.subr.mxu0 0.0
      %1313 = vmatpush1.msra.mxu0 0.0
      %1314 = vmatprep.subr.mxu0 0.0
      %1315 = vmatpush1.msra.mxu0 0.0
      %1316 = vmatprep.subr.mxu0 0.0
      %1317 = vmatpush1.msra.mxu0 0.0
      %1318 = vmatprep.subr.mxu0 0.0
      %1319 = vmatpush1.msra.mxu0 0.0
      %1320 = vmatprep.subr.mxu0 0.0
      %1321 = vmatpush1.msra.mxu0 0.0
      %1322 = vmatprep.subr.mxu0 0.0
      %1323 = vmatpush1.msra.mxu0 0.0
      %1324 = vmatprep.subr.mxu0 0.0
      %1325 = vmatpush1.msra.mxu0 0.0
      %1326 = vmatprep.subr.mxu0 0.0
      %1327 = vmatpush1.msra.mxu0 0.0
      %1328 = vmatprep.subr.mxu0 0.0
      %1329 = vmatpush1.msra.mxu0 0.0
      %1330 = vmatprep.subr.mxu0 0.0
      %1331 = vmatpush1.msra.mxu0 0.0
      %1332 = vmatprep.mubr.f32.mxu0 0.0
      %1333 = vmatmul.mubr.f32.gmra.mrb[0].mxu0 %v1218
      %v1334 = vpop.f32.mrb[0].mxu0
      %v1335 = vadd.f32 0.0, %v1334
      %v1336 = vpop.f32.mrb[0].mxu0
      %1337 = vmatprep.mubr.f32.mxu0 0.0
      %1338 = vmatmul.mubr.f32.gmra.mrb[0].mxu0 %v1221
      %v1339 = vpop.f32.mrb[0].mxu0
      %v1340 = vadd.f32 0.0, %v1339
      %v1341 = vpop.f32.mrb[0].mxu0
      %1342 = vmatprep.mubr.f32.mxu0 0.0
      %1343 = vmatmul.mubr.f32.gmra.mrb[0].mxu0 %v1224
      %v1344 = vpop.f32.mrb[0].mxu0
      %v1345 = vadd.f32 0.0, %v1344
      %v1346 = vpop.f32.mrb[0].mxu0
      %1347 = vmatprep.mubr.f32.mxu0 0.0
      %1348 = vmatmul.mubr.f32.gmra.mrb[0].mxu0 %v1227
      %v1349 = vpop.f32.mrb[0].mxu0
      %v1350 = vadd.f32 0.0, %v1349
      %v1351 = vpop.f32.mrb[0].mxu0
      %1352 = vmatprep.mubr.f32.mxu0 0.0
      %1353 = vmatmul.mubr.f32.gmra.mrb[0].mxu0 %v1230
      %v1354 = vpop.f32.mrb[0].mxu0
      %v1355 = vadd.f32 0.0, %v1354
      %v1356 = vpop.f32.mrb[0].mxu0
      %1357 = vmatprep.mubr.f32.mxu0 0.0
      %1358 = vmatmul.mubr.f32.gmra.mrb[0].mxu0 %v1233
      %v1359 = vpop.f32.mrb[0].mxu0
      %v1360 = vadd.f32 0.0, %v1359
      %v1361 = vpop.f32.mrb[0].mxu0
      %1362 = vmatprep.mubr.f32.mxu0 0.0
      %1363 = vmatmul.mubr.f32.gmra.mrb[0].mxu0 %v1236
      %v1364 = vpop.f32.mrb[0].mxu0
      %v1365 = vadd.f32 0.0, %v1364
      %v1366 = vpop.f32.mrb[0].mxu0
      %1367 = vmatprep.mubr.f32.mxu0 0.0
      %1368 = vmatmul.mubr.f32.gmra.mrb[0].mxu0 %v1239
      %v1369 = vpop.f32.mrb[0].mxu0
      %v1370 = vadd.f32 0.0, %v1369
      %v1371 = vpop.f32.mrb[0].mxu0
      %1372 = vmatprep.mubr.f32.mxu0 0.0
      %1373 = vmatmul.mubr.f32.gmra.mrb[0].mxu0 %v1242
      %v1374 = vpop.f32.mrb[0].mxu0
      %v1375 = vadd.f32 0.0, %v1374
      %v1376 = vpop.f32.mrb[0].mxu0
      %1377 = vmatprep.mubr.f32.mxu0 0.0
      %1378 = vmatmul.mubr.f32.gmra.mrb[0].mxu0 %v1245
      %v1379 = vpop.f32.mrb[0].mxu0
      %v1380 = vadd.f32 0.0, %v1379
      %v1381 = vpop.f32.mrb[0].mxu0
      %1382 = vmatprep.mubr.f32.mxu0 0.0
      %1383 = vmatmul.mubr.f32.gmra.mrb[0].mxu0 %v1248
      %v1384 = vpop.f32.mrb[0].mxu0
      %v1385 = vadd.f32 0.0, %v1384
      %v1386 = vpop.f32.mrb[0].mxu0
      %1387 = vmatprep.mubr.f32.mxu0 0.0
      %1388 = vmatmul.mubr.f32.gmra.mrb[0].mxu0 %v1251
      %v1389 = vpop.f32.mrb[0].mxu0
      %v1390 = vadd.f32 0.0, %v1389
      %v1391 = vpop.f32.mrb[0].mxu0
      %1392 = vmatprep.mubr.f32.mxu0 0.0
      %1393 = vmatmul.mubr.f32.gmra.mrb[0].mxu0 %v1254
      %v1394 = vpop.f32.mrb[0].mxu0
      %v1395 = vadd.f32 0.0, %v1394
      %v1396 = vpop.f32.mrb[0].mxu0
      %1397 = vmatprep.mubr.f32.mxu0 0.0
      %1398 = vmatmul.mubr.f32.gmra.mrb[0].mxu0 %v1257
      %v1399 = vpop.f32.mrb[0].mxu0
      %v1400 = vadd.f32 0.0, %v1399
      %v1401 = vpop.f32.mrb[0].mxu0
      %1402 = vmatprep.mubr.f32.mxu0 0.0
      %1403 = vmatmul.mubr.f32.gmra.mrb[0].mxu0 %v1260
      %v1404 = vpop.f32.mrb[0].mxu0
      %v1405 = vadd.f32 0.0, %v1404
      %v1406 = vpop.f32.mrb[0].mxu0
      %1407 = vmatprep.mubr.f32.mxu0 0.0
      %1408 = vmatmul.mubr.f32.gmra.mrb[0].mxu0 %v1263
      %v1409 = vpop.f32.mrb[0].mxu0
      %v1410 = vadd.f32 0.0, %v1409
      %v1411 = vpop.f32.mrb[0].mxu0
      %1412 = vdwg.mxu0
      %v1413 = vsel %vm643, %v1335, 0.0
      %v1414 = vsel %vm644, %v1340, 0.0
      %v1415 = vsel %vm645, %v1345, 0.0
      %v1416 = vsel %vm646, %v1350, 0.0
      %v1417 = vsel %vm647, %v1355, 0.0
      %v1418 = vsel %vm648, %v1360, 0.0
      %v1419 = vsel %vm649, %v1365, 0.0
      %v1420 = vsel %vm650, %v1370, 0.0
      %v1421 = vsel %vm651, %v1375, 0.0
      %v1422 = vsel %vm652, %v1380, 0.0
      %v1423 = vsel %vm653, %v1385, 0.0
      %v1424 = vsel %vm654, %v1390, 0.0
      %v1425 = vsel %vm655, %v1395, 0.0
      %v1426 = vsel %vm656, %v1400, 0.0
      %v1427 = vsel %vm657, %v1405, 0.0
      %v1428 = vsel %vm658, %v1410, 0.0
      %v1429 = vadd.f32 %v1183, %v1413
      %v1430 = vadd.f32 %v1184, %v1414
      %v1431 = vadd.f32 %v1185, %v1415
      %v1432 = vadd.f32 %v1186, %v1416
      %v1433 = vadd.f32 %v1187, %v1417
      %v1434 = vadd.f32 %v1188, %v1418
      %v1435 = vadd.f32 %v1189, %v1419
      %v1436 = vadd.f32 %v1190, %v1420
      %v1437 = vadd.f32 %v1191, %v1421
      %v1438 = vadd.f32 %v1192, %v1422
      %v1439 = vadd.f32 %v1193, %v1423
      %v1440 = vadd.f32 %v1194, %v1424
      %v1441 = vadd.f32 %v1195, %v1425
      %v1442 = vadd.f32 %v1196, %v1426
      %v1443 = vadd.f32 %v1197, %v1427
      %v1444 = vadd.f32 %v1198, %v1428
      %v1445 = vld [vmem:[%s165 + $0x11] sm:$0xff]
      %v1446 = vld [vmem:[%s165 + $0x19] sm:$0xff]
      %v1447 = vld [vmem:[%s165 + $0x21] sm:$0xff]
      %v1448 = vld [vmem:[%s165 + $0x29] sm:$0xff]
      %v1449 = vld [vmem:[%s165 + $0x31] sm:$0xff]
      %v1450 = vld [vmem:[%s165 + $0x39] sm:$0xff]
      %v1451 = vld [vmem:[%s165 + $0x41] sm:$0xff]
      %v1452 = vld [vmem:[%s165 + $0x49] sm:$0xff]
      %v1453 = vld [vmem:[%s165 + $0x51] sm:$0xff]
      %v1454 = vld [vmem:[%s165 + $0x59] sm:$0xff]
      %v1455 = vld [vmem:[%s165 + $0x61] sm:$0xff]
      %v1456 = vld [vmem:[%s165 + $0x69] sm:$0xff]
      %v1457 = vld [vmem:[%s165 + $0x71] sm:$0xff]
      %v1458 = vld [vmem:[%s165 + $0x79] sm:$0xff]
      %v1459 = vld [vmem:[%s165 + $0x81] sm:$0xff]
      %v1460 = vld [vmem:[%s165 + $0x89] sm:$0xff]
      %s1461 = scalar_lea.vmem %s1, 16
      %v1462 = vld [vmem:[%s1461] sm:$0xf]
      %v1464 = vsel %vm429, %v1445, 0
      %v1467 = vsel %vm429, %v1446, 0
      %v1470 = vsel %vm429, %v1447, 0
      %v1473 = vsel %vm429, %v1448, 0
      %v1476 = vsel %vm429, %v1449, 0
      %v1479 = vsel %vm429, %v1450, 0
      %v1482 = vsel %vm429, %v1451, 0
      %v1485 = vsel %vm429, %v1452, 0
      %v1488 = vsel %vm429, %v1453, 0
      %v1491 = vsel %vm429, %v1454, 0
      %v1494 = vsel %vm429, %v1455, 0
      %v1497 = vsel %vm429, %v1456, 0
      %v1500 = vsel %vm429, %v1457, 0
      %v1503 = vsel %vm429, %v1458, 0
      %v1506 = vsel %vm429, %v1459, 0
      %v1509 = vsel %vm429, %v1460, 0
      %v1512 = vsel %vm478, %v1462, 0
      %1514 = vmatprep.subr.mxu0 0.0
      %1515 = vmatpush1.msra.mxu0 %v1512
      %1516 = vmatprep.subr.mxu0 0.0
      %1517 = vmatpush1.msra.mxu0 0.0
      %1518 = vmatprep.subr.mxu0 0.0
      %1519 = vmatpush1.msra.mxu0 0.0
      %1520 = vmatprep.subr.mxu0 0.0
      %1521 = vmatpush1.msra.mxu0 0.0
      %1522 = vmatprep.subr.mxu0 0.0
      %1523 = vmatpush1.msra.mxu0 0.0
      %1524 = vmatprep.subr.mxu0 0.0
      %1525 = vmatpush1.msra.mxu0 0.0
      %1526 = vmatprep.subr.mxu0 0.0
      %1527 = vmatpush1.msra.mxu0 0.0
      %1528 = vmatprep.subr.mxu0 0.0
      %1529 = vmatpush1.msra.mxu0 0.0
      %1530 = vmatprep.subr.mxu0 0.0
      %1531 = vmatpush1.msra.mxu0 0.0
      %1532 = vmatprep.subr.mxu0 0.0
      %1533 = vmatpush1.msra.mxu0 0.0
      %1534 = vmatprep.subr.mxu0 0.0
      %1535 = vmatpush1.msra.mxu0 0.0
      %1536 = vmatprep.subr.mxu0 0.0
      %1537 = vmatpush1.msra.mxu0 0.0
      %1538 = vmatprep.subr.mxu0 0.0
      %1539 = vmatpush1.msra.mxu0 0.0
      %1540 = vmatprep.subr.mxu0 0.0
      %1541 = vmatpush1.msra.mxu0 0.0
      %1542 = vmatprep.subr.mxu0 0.0
      %1543 = vmatpush1.msra.mxu0 0.0
      %1544 = vmatprep.subr.mxu0 0.0
      %1545 = vmatpush1.msra.mxu0 0.0
      %1546 = vmatprep.subr.mxu0 0.0
      %1547 = vmatpush1.msra.mxu0 0.0
      %1548 = vmatprep.subr.mxu0 0.0
      %1549 = vmatpush1.msra.mxu0 0.0
      %1550 = vmatprep.subr.mxu0 0.0
      %1551 = vmatpush1.msra.mxu0 0.0
      %1552 = vmatprep.subr.mxu0 0.0
      %1553 = vmatpush1.msra.mxu0 0.0
      %1554 = vmatprep.subr.mxu0 0.0
      %1555 = vmatpush1.msra.mxu0 0.0
      %1556 = vmatprep.subr.mxu0 0.0
      %1557 = vmatpush1.msra.mxu0 0.0
      %1558 = vmatprep.subr.mxu0 0.0
      %1559 = vmatpush1.msra.mxu0 0.0
      %1560 = vmatprep.subr.mxu0 0.0
      %1561 = vmatpush1.msra.mxu0 0.0
      %1562 = vmatprep.subr.mxu0 0.0
      %1563 = vmatpush1.msra.mxu0 0.0
      %1564 = vmatprep.subr.mxu0 0.0
      %1565 = vmatpush1.msra.mxu0 0.0
      %1566 = vmatprep.subr.mxu0 0.0
      %1567 = vmatpush1.msra.mxu0 0.0
      %1568 = vmatprep.subr.mxu0 0.0
      %1569 = vmatpush1.msra.mxu0 0.0
      %1570 = vmatprep.subr.mxu0 0.0
      %1571 = vmatpush1.msra.mxu0 0.0
      %1572 = vmatprep.subr.mxu0 0.0
      %1573 = vmatpush1.msra.mxu0 0.0
      %1574 = vmatprep.subr.mxu0 0.0
      %1575 = vmatpush1.msra.mxu0 0.0
      %1576 = vmatprep.subr.mxu0 0.0
      %1577 = vmatpush1.msra.mxu0 0.0
      %1578 = vmatprep.mubr.f32.mxu0 0.0
      %1579 = vmatmul.mubr.f32.gmra.mrb[0].mxu0 %v1464
      %v1580 = vpop.f32.mrb[0].mxu0
      %v1581 = vadd.f32 0.0, %v1580
      %v1582 = vpop.f32.mrb[0].mxu0
      %1583 = vmatprep.mubr.f32.mxu0 0.0
      %1584 = vmatmul.mubr.f32.gmra.mrb[0].mxu0 %v1467
      %v1585 = vpop.f32.mrb[0].mxu0
      %v1586 = vadd.f32 0.0, %v1585
      %v1587 = vpop.f32.mrb[0].mxu0
      %1588 = vmatprep.mubr.f32.mxu0 0.0
      %1589 = vmatmul.mubr.f32.gmra.mrb[0].mxu0 %v1470
      %v1590 = vpop.f32.mrb[0].mxu0
      %v1591 = vadd.f32 0.0, %v1590
      %v1592 = vpop.f32.mrb[0].mxu0
      %1593 = vmatprep.mubr.f32.mxu0 0.0
      %1594 = vmatmul.mubr.f32.gmra.mrb[0].mxu0 %v1473
      %v1595 = vpop.f32.mrb[0].mxu0
      %v1596 = vadd.f32 0.0, %v1595
      %v1597 = vpop.f32.mrb[0].mxu0
      %1598 = vmatprep.mubr.f32.mxu0 0.0
      %1599 = vmatmul.mubr.f32.gmra.mrb[0].mxu0 %v1476
      %v1600 = vpop.f32.mrb[0].mxu0
      %v1601 = vadd.f32 0.0, %v1600
      %v1602 = vpop.f32.mrb[0].mxu0
      %1603 = vmatprep.mubr.f32.mxu0 0.0
      %1604 = vmatmul.mubr.f32.gmra.mrb[0].mxu0 %v1479
      %v1605 = vpop.f32.mrb[0].mxu0
      %v1606 = vadd.f32 0.0, %v1605
      %v1607 = vpop.f32.mrb[0].mxu0
      %1608 = vmatprep.mubr.f32.mxu0 0.0
      %1609 = vmatmul.mubr.f32.gmra.mrb[0].mxu0 %v1482
      %v1610 = vpop.f32.mrb[0].mxu0
      %v1611 = vadd.f32 0.0, %v1610
      %v1612 = vpop.f32.mrb[0].mxu0
      %1613 = vmatprep.mubr.f32.mxu0 0.0
      %1614 = vmatmul.mubr.f32.gmra.mrb[0].mxu0 %v1485
      %v1615 = vpop.f32.mrb[0].mxu0
      %v1616 = vadd.f32 0.0, %v1615
      %v1617 = vpop.f32.mrb[0].mxu0
      %1618 = vmatprep.mubr.f32.mxu0 0.0
      %1619 = vmatmul.mubr.f32.gmra.mrb[0].mxu0 %v1488
      %v1620 = vpop.f32.mrb[0].mxu0
      %v1621 = vadd.f32 0.0, %v1620
      %v1622 = vpop.f32.mrb[0].mxu0
      %1623 = vmatprep.mubr.f32.mxu0 0.0
      %1624 = vmatmul.mubr.f32.gmra.mrb[0].mxu0 %v1491
      %v1625 = vpop.f32.mrb[0].mxu0
      %v1626 = vadd.f32 0.0, %v1625
      %v1627 = vpop.f32.mrb[0].mxu0
      %1628 = vmatprep.mubr.f32.mxu0 0.0
      %1629 = vmatmul.mubr.f32.gmra.mrb[0].mxu0 %v1494
      %v1630 = vpop.f32.mrb[0].mxu0
      %v1631 = vadd.f32 0.0, %v1630
      %v1632 = vpop.f32.mrb[0].mxu0
      %1633 = vmatprep.mubr.f32.mxu0 0.0
      %1634 = vmatmul.mubr.f32.gmra.mrb[0].mxu0 %v1497
      %v1635 = vpop.f32.mrb[0].mxu0
      %v1636 = vadd.f32 0.0, %v1635
      %v1637 = vpop.f32.mrb[0].mxu0
      %1638 = vmatprep.mubr.f32.mxu0 0.0
      %1639 = vmatmul.mubr.f32.gmra.mrb[0].mxu0 %v1500
      %v1640 = vpop.f32.mrb[0].mxu0
      %v1641 = vadd.f32 0.0, %v1640
      %v1642 = vpop.f32.mrb[0].mxu0
      %1643 = vmatprep.mubr.f32.mxu0 0.0
      %1644 = vmatmul.mubr.f32.gmra.mrb[0].mxu0 %v1503
      %v1645 = vpop.f32.mrb[0].mxu0
      %v1646 = vadd.f32 0.0, %v1645
      %v1647 = vpop.f32.mrb[0].mxu0
      %1648 = vmatprep.mubr.f32.mxu0 0.0
      %1649 = vmatmul.mubr.f32.gmra.mrb[0].mxu0 %v1506
      %v1650 = vpop.f32.mrb[0].mxu0
      %v1651 = vadd.f32 0.0, %v1650
      %v1652 = vpop.f32.mrb[0].mxu0
      %1653 = vmatprep.mubr.f32.mxu0 0.0
      %1654 = vmatmul.mubr.f32.gmra.mrb[0].mxu0 %v1509
      %v1655 = vpop.f32.mrb[0].mxu0
      %v1656 = vadd.f32 0.0, %v1655
      %v1657 = vpop.f32.mrb[0].mxu0
      %1658 = vdwg.mxu0
      %v1659 = vadd.f32 %v1429, %v1581
      %v1660 = vadd.f32 %v1430, %v1586
      %v1661 = vadd.f32 %v1431, %v1591
      %v1662 = vadd.f32 %v1432, %v1596
      %v1663 = vadd.f32 %v1433, %v1601
      %v1664 = vadd.f32 %v1434, %v1606
      %v1665 = vadd.f32 %v1435, %v1611
      %v1666 = vadd.f32 %v1436, %v1616
      %v1667 = vadd.f32 %v1437, %v1621
      %v1668 = vadd.f32 %v1438, %v1626
      %v1669 = vadd.f32 %v1439, %v1631
      %v1670 = vadd.f32 %v1440, %v1636
      %v1671 = vadd.f32 %v1441, %v1641
      %v1672 = vadd.f32 %v1442, %v1646
      %v1673 = vadd.f32 %v1443, %v1651
      %v1674 = vadd.f32 %v1444, %v1656
      %v1675 = vld [vmem:[%s165 + $0x12] sm:$0xff]
      %v1676 = vld [vmem:[%s165 + $0x1a] sm:$0xff]
      %v1677 = vld [vmem:[%s165 + $0x22] sm:$0xff]
      %v1678 = vld [vmem:[%s165 + $0x2a] sm:$0xff]
      %v1679 = vld [vmem:[%s165 + $0x32] sm:$0xff]
      %v1680 = vld [vmem:[%s165 + $0x3a] sm:$0xff]
      %v1681 = vld [vmem:[%s165 + $0x42] sm:$0xff]
      %v1682 = vld [vmem:[%s165 + $0x4a] sm:$0xff]
      %v1683 = vld [vmem:[%s165 + $0x52] sm:$0xff]
      %v1684 = vld [vmem:[%s165 + $0x5a] sm:$0xff]
      %v1685 = vld [vmem:[%s165 + $0x62] sm:$0xff]
      %v1686 = vld [vmem:[%s165 + $0x6a] sm:$0xff]
      %v1687 = vld [vmem:[%s165 + $0x72] sm:$0xff]
      %v1688 = vld [vmem:[%s165 + $0x7a] sm:$0xff]
      %v1689 = vld [vmem:[%s165 + $0x82] sm:$0xff]
      %v1690 = vld [vmem:[%s165 + $0x8a] sm:$0xff]
      %s1691 = scalar_lea.vmem %s1, 20
      %v1692 = vld [vmem:[%s1691] sm:$0xf]
      %v1694 = vsel %vm429, %v1675, 0
      %v1697 = vsel %vm429, %v1676, 0
      %v1700 = vsel %vm429, %v1677, 0
      %v1703 = vsel %vm429, %v1678, 0
      %v1706 = vsel %vm429, %v1679, 0
      %v1709 = vsel %vm429, %v1680, 0
      %v1712 = vsel %vm429, %v1681, 0
      %v1715 = vsel %vm429, %v1682, 0
      %v1718 = vsel %vm429, %v1683, 0
      %v1721 = vsel %vm429, %v1684, 0
      %v1724 = vsel %vm429, %v1685, 0
      %v1727 = vsel %vm429, %v1686, 0
      %v1730 = vsel %vm429, %v1687, 0
      %v1733 = vsel %vm429, %v1688, 0
      %v1736 = vsel %vm429, %v1689, 0
      %v1739 = vsel %vm429, %v1690, 0
      %v1742 = vsel %vm478, %v1692, 0
      %1744 = vmatprep.subr.mxu0 0.0
      %1745 = vmatpush1.msra.mxu0 %v1742
      %1746 = vmatprep.subr.mxu0 0.0
      %1747 = vmatpush1.msra.mxu0 0.0
      %1748 = vmatprep.subr.mxu0 0.0
      %1749 = vmatpush1.msra.mxu0 0.0
      %1750 = vmatprep.subr.mxu0 0.0
      %1751 = vmatpush1.msra.mxu0 0.0
      %1752 = vmatprep.subr.mxu0 0.0
      %1753 = vmatpush1.msra.mxu0 0.0
      %1754 = vmatprep.subr.mxu0 0.0
      %1755 = vmatpush1.msra.mxu0 0.0
      %1756 = vmatprep.subr.mxu0 0.0
      %1757 = vmatpush1.msra.mxu0 0.0
      %1758 = vmatprep.subr.mxu0 0.0
      %1759 = vmatpush1.msra.mxu0 0.0
      %1760 = vmatprep.subr.mxu0 0.0
      %1761 = vmatpush1.msra.mxu0 0.0
      %1762 = vmatprep.subr.mxu0 0.0
      %1763 = vmatpush1.msra.mxu0 0.0
      %1764 = vmatprep.subr.mxu0 0.0
      %1765 = vmatpush1.msra.mxu0 0.0
      %1766 = vmatprep.subr.mxu0 0.0
      %1767 = vmatpush1.msra.mxu0 0.0
      %1768 = vmatprep.subr.mxu0 0.0
      %1769 = vmatpush1.msra.mxu0 0.0
      %1770 = vmatprep.subr.mxu0 0.0
      %1771 = vmatpush1.msra.mxu0 0.0
      %1772 = vmatprep.subr.mxu0 0.0
      %1773 = vmatpush1.msra.mxu0 0.0
      %1774 = vmatprep.subr.mxu0 0.0
      %1775 = vmatpush1.msra.mxu0 0.0
      %1776 = vmatprep.subr.mxu0 0.0
      %1777 = vmatpush1.msra.mxu0 0.0
      %1778 = vmatprep.subr.mxu0 0.0
      %1779 = vmatpush1.msra.mxu0 0.0
      %1780 = vmatprep.subr.mxu0 0.0
      %1781 = vmatpush1.msra.mxu0 0.0
      %1782 = vmatprep.subr.mxu0 0.0
      %1783 = vmatpush1.msra.mxu0 0.0
      %1784 = vmatprep.subr.mxu0 0.0
      %1785 = vmatpush1.msra.mxu0 0.0
      %1786 = vmatprep.subr.mxu0 0.0
      %1787 = vmatpush1.msra.mxu0 0.0
      %1788 = vmatprep.subr.mxu0 0.0
      %1789 = vmatpush1.msra.mxu0 0.0
      %1790 = vmatprep.subr.mxu0 0.0
      %1791 = vmatpush1.msra.mxu0 0.0
      %1792 = vmatprep.subr.mxu0 0.0
      %1793 = vmatpush1.msra.mxu0 0.0
      %1794 = vmatprep.subr.mxu0 0.0
      %1795 = vmatpush1.msra.mxu0 0.0
      %1796 = vmatprep.subr.mxu0 0.0
      %1797 = vmatpush1.msra.mxu0 0.0
      %1798 = vmatprep.subr.mxu0 0.0
      %1799 = vmatpush1.msra.mxu0 0.0
      %1800 = vmatprep.subr.mxu0 0.0
      %1801 = vmatpush1.msra.mxu0 0.0
      %1802 = vmatprep.subr.mxu0 0.0
      %1803 = vmatpush1.msra.mxu0 0.0
      %1804 = vmatprep.subr.mxu0 0.0
      %1805 = vmatpush1.msra.mxu0 0.0
      %1806 = vmatprep.subr.mxu0 0.0
      %1807 = vmatpush1.msra.mxu0 0.0
      %1808 = vmatprep.mubr.f32.mxu0 0.0
      %1809 = vmatmul.mubr.f32.gmra.mrb[0].mxu0 %v1694
      %v1810 = vpop.f32.mrb[0].mxu0
      %v1811 = vadd.f32 0.0, %v1810
      %v1812 = vpop.f32.mrb[0].mxu0
      %1813 = vmatprep.mubr.f32.mxu0 0.0
      %1814 = vmatmul.mubr.f32.gmra.mrb[0].mxu0 %v1697
      %v1815 = vpop.f32.mrb[0].mxu0
      %v1816 = vadd.f32 0.0, %v1815
      %v1817 = vpop.f32.mrb[0].mxu0
      %1818 = vmatprep.mubr.f32.mxu0 0.0
      %1819 = vmatmul.mubr.f32.gmra.mrb[0].mxu0 %v1700
      %v1820 = vpop.f32.mrb[0].mxu0
      %v1821 = vadd.f32 0.0, %v1820
      %v1822 = vpop.f32.mrb[0].mxu0
      %1823 = vmatprep.mubr.f32.mxu0 0.0
      %1824 = vmatmul.mubr.f32.gmra.mrb[0].mxu0 %v1703
      %v1825 = vpop.f32.mrb[0].mxu0
      %v1826 = vadd.f32 0.0, %v1825
      %v1827 = vpop.f32.mrb[0].mxu0
      %1828 = vmatprep.mubr.f32.mxu0 0.0
      %1829 = vmatmul.mubr.f32.gmra.mrb[0].mxu0 %v1706
      %v1830 = vpop.f32.mrb[0].mxu0
      %v1831 = vadd.f32 0.0, %v1830
      %v1832 = vpop.f32.mrb[0].mxu0
      %1833 = vmatprep.mubr.f32.mxu0 0.0
      %1834 = vmatmul.mubr.f32.gmra.mrb[0].mxu0 %v1709
      %v1835 = vpop.f32.mrb[0].mxu0
      %v1836 = vadd.f32 0.0, %v1835
      %v1837 = vpop.f32.mrb[0].mxu0
      %1838 = vmatprep.mubr.f32.mxu0 0.0
      %1839 = vmatmul.mubr.f32.gmra.mrb[0].mxu0 %v1712
      %v1840 = vpop.f32.mrb[0].mxu0
      %v1841 = vadd.f32 0.0, %v1840
      %v1842 = vpop.f32.mrb[0].mxu0
      %1843 = vmatprep.mubr.f32.mxu0 0.0
      %1844 = vmatmul.mubr.f32.gmra.mrb[0].mxu0 %v1715
      %v1845 = vpop.f32.mrb[0].mxu0
      %v1846 = vadd.f32 0.0, %v1845
      %v1847 = vpop.f32.mrb[0].mxu0
      %1848 = vmatprep.mubr.f32.mxu0 0.0
      %1849 = vmatmul.mubr.f32.gmra.mrb[0].mxu0 %v1718
      %v1850 = vpop.f32.mrb[0].mxu0
      %v1851 = vadd.f32 0.0, %v1850
      %v1852 = vpop.f32.mrb[0].mxu0
      %1853 = vmatprep.mubr.f32.mxu0 0.0
      %1854 = vmatmul.mubr.f32.gmra.mrb[0].mxu0 %v1721
      %v1855 = vpop.f32.mrb[0].mxu0
      %v1856 = vadd.f32 0.0, %v1855
      %v1857 = vpop.f32.mrb[0].mxu0
      %1858 = vmatprep.mubr.f32.mxu0 0.0
      %1859 = vmatmul.mubr.f32.gmra.mrb[0].mxu0 %v1724
      %v1860 = vpop.f32.mrb[0].mxu0
      %v1861 = vadd.f32 0.0, %v1860
      %v1862 = vpop.f32.mrb[0].mxu0
      %1863 = vmatprep.mubr.f32.mxu0 0.0
      %1864 = vmatmul.mubr.f32.gmra.mrb[0].mxu0 %v1727
      %v1865 = vpop.f32.mrb[0].mxu0
      %v1866 = vadd.f32 0.0, %v1865
      %v1867 = vpop.f32.mrb[0].mxu0
      %1868 = vmatprep.mubr.f32.mxu0 0.0
      %1869 = vmatmul.mubr.f32.gmra.mrb[0].mxu0 %v1730
      %v1870 = vpop.f32.mrb[0].mxu0
      %v1871 = vadd.f32 0.0, %v1870
      %v1872 = vpop.f32.mrb[0].mxu0
      %1873 = vmatprep.mubr.f32.mxu0 0.0
      %1874 = vmatmul.mubr.f32.gmra.mrb[0].mxu0 %v1733
      %v1875 = vpop.f32.mrb[0].mxu0
      %v1876 = vadd.f32 0.0, %v1875
      %v1877 = vpop.f32.mrb[0].mxu0
      %1878 = vmatprep.mubr.f32.mxu0 0.0
      %1879 = vmatmul.mubr.f32.gmra.mrb[0].mxu0 %v1736
      %v1880 = vpop.f32.mrb[0].mxu0
      %v1881 = vadd.f32 0.0, %v1880
      %v1882 = vpop.f32.mrb[0].mxu0
      %1883 = vmatprep.mubr.f32.mxu0 0.0
      %1884 = vmatmul.mubr.f32.gmra.mrb[0].mxu0 %v1739
      %v1885 = vpop.f32.mrb[0].mxu0
      %v1886 = vadd.f32 0.0, %v1885
      %v1887 = vpop.f32.mrb[0].mxu0
      %1888 = vdwg.mxu0
      %v1889 = vsel %vm1151, %v1811, 0.0
      %v1890 = vsel %vm1152, %v1816, 0.0
      %v1891 = vsel %vm1153, %v1821, 0.0
      %v1892 = vsel %vm1154, %v1826, 0.0
      %v1893 = vsel %vm1155, %v1831, 0.0
      %v1894 = vsel %vm1156, %v1836, 0.0
      %v1895 = vsel %vm1157, %v1841, 0.0
      %v1896 = vsel %vm1158, %v1846, 0.0
      %v1897 = vsel %vm1159, %v1851, 0.0
      %v1898 = vsel %vm1160, %v1856, 0.0
      %v1899 = vsel %vm1161, %v1861, 0.0
      %v1900 = vsel %vm1162, %v1866, 0.0
      %v1901 = vsel %vm1163, %v1871, 0.0
      %v1902 = vsel %vm1164, %v1876, 0.0
      %v1903 = vsel %vm1165, %v1881, 0.0
      %v1904 = vsel %vm1166, %v1886, 0.0
      %v1905 = vadd.f32 %v1659, %v1889
      %v1906 = vadd.f32 %v1660, %v1890
      %v1907 = vadd.f32 %v1661, %v1891
      %v1908 = vadd.f32 %v1662, %v1892
      %v1909 = vadd.f32 %v1663, %v1893
      %v1910 = vadd.f32 %v1664, %v1894
      %v1911 = vadd.f32 %v1665, %v1895
      %v1912 = vadd.f32 %v1666, %v1896
      %v1913 = vadd.f32 %v1667, %v1897
      %v1914 = vadd.f32 %v1668, %v1898
      %v1915 = vadd.f32 %v1669, %v1899
      %v1916 = vadd.f32 %v1670, %v1900
      %v1917 = vadd.f32 %v1671, %v1901
      %v1918 = vadd.f32 %v1672, %v1902
      %v1919 = vadd.f32 %v1673, %v1903
      %v1920 = vadd.f32 %v1674, %v1904
      %v1921 = vld [vmem:[%s165 + $0x20] sm:$0xff]
      %v1922 = vld [vmem:[%s165 + $0x28] sm:$0xff]
      %v1923 = vld [vmem:[%s165 + $0x30] sm:$0xff]
      %v1924 = vld [vmem:[%s165 + $0x38] sm:$0xff]
      %v1925 = vld [vmem:[%s165 + $0x40] sm:$0xff]
      %v1926 = vld [vmem:[%s165 + $0x48] sm:$0xff]
      %v1927 = vld [vmem:[%s165 + $0x50] sm:$0xff]
      %v1928 = vld [vmem:[%s165 + $0x58] sm:$0xff]
      %v1929 = vld [vmem:[%s165 + $0x60] sm:$0xff]
      %v1930 = vld [vmem:[%s165 + $0x68] sm:$0xff]
      %v1931 = vld [vmem:[%s165 + $0x70] sm:$0xff]
      %v1932 = vld [vmem:[%s165 + $0x78] sm:$0xff]
      %v1933 = vld [vmem:[%s165 + $0x80] sm:$0xff]
      %v1934 = vld [vmem:[%s165 + $0x88] sm:$0xff]
      %v1935 = vld [vmem:[%s165 + $0x90] sm:$0xff]
      %v1936 = vld [vmem:[%s165 + $0x98] sm:$0xff]
      %s1937 = scalar_lea.vmem %s1, 24
      %v1938 = vld [vmem:[%s1937] sm:$0xf]
      %v1940 = vsel %vm429, %v1921, 0
      %v1943 = vsel %vm429, %v1922, 0
      %v1946 = vsel %vm429, %v1923, 0
      %v1949 = vsel %vm429, %v1924, 0
      %v1952 = vsel %vm429, %v1925, 0
      %v1955 = vsel %vm429, %v1926, 0
      %v1958 = vsel %vm429, %v1927, 0
      %v1961 = vsel %vm429, %v1928, 0
      %v1964 = vsel %vm429, %v1929, 0
      %v1967 = vsel %vm429, %v1930, 0
      %v1970 = vsel %vm429, %v1931, 0
      %v1973 = vsel %vm429, %v1932, 0
      %v1976 = vsel %vm429, %v1933, 0
      %v1979 = vsel %vm429, %v1934, 0
      %v1982 = vsel %vm429, %v1935, 0
      %v1985 = vsel %vm429, %v1936, 0
      %v1988 = vsel %vm478, %v1938, 0
      %1990 = vmatprep.subr.mxu0 0.0
      %1991 = vmatpush1.msra.mxu0 %v1988
      %1992 = vmatprep.subr.mxu0 0.0
      %1993 = vmatpush1.msra.mxu0 0.0
      %1994 = vmatprep.subr.mxu0 0.0
      %1995 = vmatpush1.msra.mxu0 0.0
      %1996 = vmatprep.subr.mxu0 0.0
      %1997 = vmatpush1.msra.mxu0 0.0
      %1998 = vmatprep.subr.mxu0 0.0
      %1999 = vmatpush1.msra.mxu0 0.0
      %2000 = vmatprep.subr.mxu0 0.0
      %2001 = vmatpush1.msra.mxu0 0.0
      %2002 = vmatprep.subr.mxu0 0.0
      %2003 = vmatpush1.msra.mxu0 0.0
      %2004 = vmatprep.subr.mxu0 0.0
      %2005 = vmatpush1.msra.mxu0 0.0
      %2006 = vmatprep.subr.mxu0 0.0
      %2007 = vmatpush1.msra.mxu0 0.0
      %2008 = vmatprep.subr.mxu0 0.0
      %2009 = vmatpush1.msra.mxu0 0.0
      %2010 = vmatprep.subr.mxu0 0.0
      %2011 = vmatpush1.msra.mxu0 0.0
      %2012 = vmatprep.subr.mxu0 0.0
      %2013 = vmatpush1.msra.mxu0 0.0
      %2014 = vmatprep.subr.mxu0 0.0
      %2015 = vmatpush1.msra.mxu0 0.0
      %2016 = vmatprep.subr.mxu0 0.0
      %2017 = vmatpush1.msra.mxu0 0.0
      %2018 = vmatprep.subr.mxu0 0.0
      %2019 = vmatpush1.msra.mxu0 0.0
      %2020 = vmatprep.subr.mxu0 0.0
      %2021 = vmatpush1.msra.mxu0 0.0
      %2022 = vmatprep.subr.mxu0 0.0
      %2023 = vmatpush1.msra.mxu0 0.0
      %2024 = vmatprep.subr.mxu0 0.0
      %2025 = vmatpush1.msra.mxu0 0.0
      %2026 = vmatprep.subr.mxu0 0.0
      %2027 = vmatpush1.msra.mxu0 0.0
      %2028 = vmatprep.subr.mxu0 0.0
      %2029 = vmatpush1.msra.mxu0 0.0
      %2030 = vmatprep.subr.mxu0 0.0
      %2031 = vmatpush1.msra.mxu0 0.0
      %2032 = vmatprep.subr.mxu0 0.0
      %2033 = vmatpush1.msra.mxu0 0.0
      %2034 = vmatprep.subr.mxu0 0.0
      %2035 = vmatpush1.msra.mxu0 0.0
      %2036 = vmatprep.subr.mxu0 0.0
      %2037 = vmatpush1.msra.mxu0 0.0
      %2038 = vmatprep.subr.mxu0 0.0
      %2039 = vmatpush1.msra.mxu0 0.0
      %2040 = vmatprep.subr.mxu0 0.0
      %2041 = vmatpush1.msra.mxu0 0.0
      %2042 = vmatprep.subr.mxu0 0.0
      %2043 = vmatpush1.msra.mxu0 0.0
      %2044 = vmatprep.subr.mxu0 0.0
      %2045 = vmatpush1.msra.mxu0 0.0
      %2046 = vmatprep.subr.mxu0 0.0
      %2047 = vmatpush1.msra.mxu0 0.0
      %2048 = vmatprep.subr.mxu0 0.0
      %2049 = vmatpush1.msra.mxu0 0.0
      %2050 = vmatprep.subr.mxu0 0.0
      %2051 = vmatpush1.msra.mxu0 0.0
      %2052 = vmatprep.subr.mxu0 0.0
      %2053 = vmatpush1.msra.mxu0 0.0
      %2054 = vmatprep.mubr.f32.mxu0 0.0
      %2055 = vmatmul.mubr.f32.gmra.mrb[0].mxu0 %v1940
      %v2056 = vpop.f32.mrb[0].mxu0
      %v2057 = vadd.f32 0.0, %v2056
      %v2058 = vpop.f32.mrb[0].mxu0
      %2059 = vmatprep.mubr.f32.mxu0 0.0
      %2060 = vmatmul.mubr.f32.gmra.mrb[0].mxu0 %v1943
      %v2061 = vpop.f32.mrb[0].mxu0
      %v2062 = vadd.f32 0.0, %v2061
      %v2063 = vpop.f32.mrb[0].mxu0
      %2064 = vmatprep.mubr.f32.mxu0 0.0
      %2065 = vmatmul.mubr.f32.gmra.mrb[0].mxu0 %v1946
      %v2066 = vpop.f32.mrb[0].mxu0
      %v2067 = vadd.f32 0.0, %v2066
      %v2068 = vpop.f32.mrb[0].mxu0
      %2069 = vmatprep.mubr.f32.mxu0 0.0
      %2070 = vmatmul.mubr.f32.gmra.mrb[0].mxu0 %v1949
      %v2071 = vpop.f32.mrb[0].mxu0
      %v2072 = vadd.f32 0.0, %v2071
      %v2073 = vpop.f32.mrb[0].mxu0
      %2074 = vmatprep.mubr.f32.mxu0 0.0
      %2075 = vmatmul.mubr.f32.gmra.mrb[0].mxu0 %v1952
      %v2076 = vpop.f32.mrb[0].mxu0
      %v2077 = vadd.f32 0.0, %v2076
      %v2078 = vpop.f32.mrb[0].mxu0
      %2079 = vmatprep.mubr.f32.mxu0 0.0
      %2080 = vmatmul.mubr.f32.gmra.mrb[0].mxu0 %v1955
      %v2081 = vpop.f32.mrb[0].mxu0
      %v2082 = vadd.f32 0.0, %v2081
      %v2083 = vpop.f32.mrb[0].mxu0
      %2084 = vmatprep.mubr.f32.mxu0 0.0
      %2085 = vmatmul.mubr.f32.gmra.mrb[0].mxu0 %v1958
      %v2086 = vpop.f32.mrb[0].mxu0
      %v2087 = vadd.f32 0.0, %v2086
      %v2088 = vpop.f32.mrb[0].mxu0
      %2089 = vmatprep.mubr.f32.mxu0 0.0
      %2090 = vmatmul.mubr.f32.gmra.mrb[0].mxu0 %v1961
      %v2091 = vpop.f32.mrb[0].mxu0
      %v2092 = vadd.f32 0.0, %v2091
      %v2093 = vpop.f32.mrb[0].mxu0
      %2094 = vmatprep.mubr.f32.mxu0 0.0
      %2095 = vmatmul.mubr.f32.gmra.mrb[0].mxu0 %v1964
      %v2096 = vpop.f32.mrb[0].mxu0
      %v2097 = vadd.f32 0.0, %v2096
      %v2098 = vpop.f32.mrb[0].mxu0
      %2099 = vmatprep.mubr.f32.mxu0 0.0
      %2100 = vmatmul.mubr.f32.gmra.mrb[0].mxu0 %v1967
      %v2101 = vpop.f32.mrb[0].mxu0
      %v2102 = vadd.f32 0.0, %v2101
      %v2103 = vpop.f32.mrb[0].mxu0
      %2104 = vmatprep.mubr.f32.mxu0 0.0
      %2105 = vmatmul.mubr.f32.gmra.mrb[0].mxu0 %v1970
      %v2106 = vpop.f32.mrb[0].mxu0
      %v2107 = vadd.f32 0.0, %v2106
      %v2108 = vpop.f32.mrb[0].mxu0
      %2109 = vmatprep.mubr.f32.mxu0 0.0
      %2110 = vmatmul.mubr.f32.gmra.mrb[0].mxu0 %v1973
      %v2111 = vpop.f32.mrb[0].mxu0
      %v2112 = vadd.f32 0.0, %v2111
      %v2113 = vpop.f32.mrb[0].mxu0
      %2114 = vmatprep.mubr.f32.mxu0 0.0
      %2115 = vmatmul.mubr.f32.gmra.mrb[0].mxu0 %v1976
      %v2116 = vpop.f32.mrb[0].mxu0
      %v2117 = vadd.f32 0.0, %v2116
      %v2118 = vpop.f32.mrb[0].mxu0
      %2119 = vmatprep.mubr.f32.mxu0 0.0
      %2120 = vmatmul.mubr.f32.gmra.mrb[0].mxu0 %v1979
      %v2121 = vpop.f32.mrb[0].mxu0
      %v2122 = vadd.f32 0.0, %v2121
      %v2123 = vpop.f32.mrb[0].mxu0
      %2124 = vmatprep.mubr.f32.mxu0 0.0
      %2125 = vmatmul.mubr.f32.gmra.mrb[0].mxu0 %v1982
      %v2126 = vpop.f32.mrb[0].mxu0
      %v2127 = vadd.f32 0.0, %v2126
      %v2128 = vpop.f32.mrb[0].mxu0
      %2129 = vmatprep.mubr.f32.mxu0 0.0
      %2130 = vmatmul.mubr.f32.gmra.mrb[0].mxu0 %v1985
      %v2131 = vpop.f32.mrb[0].mxu0
      %v2132 = vadd.f32 0.0, %v2131
      %v2133 = vpop.f32.mrb[0].mxu0
      %2134 = vdwg.mxu0
      %v2135 = vsel %vm643, %v2057, 0.0
      %v2136 = vsel %vm644, %v2062, 0.0
      %v2137 = vsel %vm645, %v2067, 0.0
      %v2138 = vsel %vm646, %v2072, 0.0
      %v2139 = vsel %vm647, %v2077, 0.0
      %v2140 = vsel %vm648, %v2082, 0.0
      %v2141 = vsel %vm649, %v2087, 0.0
      %v2142 = vsel %vm650, %v2092, 0.0
      %v2143 = vsel %vm651, %v2097, 0.0
      %v2144 = vsel %vm652, %v2102, 0.0
      %v2145 = vsel %vm653, %v2107, 0.0
      %v2146 = vsel %vm654, %v2112, 0.0
      %v2147 = vsel %vm655, %v2117, 0.0
      %v2148 = vsel %vm656, %v2122, 0.0
      %v2149 = vsel %vm657, %v2127, 0.0
      %v2150 = vsel %vm658, %v2132, 0.0
      %v2151 = vadd.f32 %v1905, %v2135
      %v2152 = vadd.f32 %v1906, %v2136
      %v2153 = vadd.f32 %v1907, %v2137
      %v2154 = vadd.f32 %v1908, %v2138
      %v2155 = vadd.f32 %v1909, %v2139
      %v2156 = vadd.f32 %v1910, %v2140
      %v2157 = vadd.f32 %v1911, %v2141
      %v2158 = vadd.f32 %v1912, %v2142
      %v2159 = vadd.f32 %v1913, %v2143
      %v2160 = vadd.f32 %v1914, %v2144
      %v2161 = vadd.f32 %v1915, %v2145
      %v2162 = vadd.f32 %v1916, %v2146
      %v2163 = vadd.f32 %v1917, %v2147
      %v2164 = vadd.f32 %v1918, %v2148
      %v2165 = vadd.f32 %v1919, %v2149
      %v2166 = vadd.f32 %v1920, %v2150
      %v2167 = vld [vmem:[%s165 + $0x21] sm:$0xff]
      %v2168 = vld [vmem:[%s165 + $0x29] sm:$0xff]
      %v2169 = vld [vmem:[%s165 + $0x31] sm:$0xff]
      %v2170 = vld [vmem:[%s165 + $0x39] sm:$0xff]
      %v2171 = vld [vmem:[%s165 + $0x41] sm:$0xff]
      %v2172 = vld [vmem:[%s165 + $0x49] sm:$0xff]
      %v2173 = vld [vmem:[%s165 + $0x51] sm:$0xff]
      %v2174 = vld [vmem:[%s165 + $0x59] sm:$0xff]
      %v2175 = vld [vmem:[%s165 + $0x61] sm:$0xff]
      %v2176 = vld [vmem:[%s165 + $0x69] sm:$0xff]
      %v2177 = vld [vmem:[%s165 + $0x71] sm:$0xff]
      %v2178 = vld [vmem:[%s165 + $0x79] sm:$0xff]
      %v2179 = vld [vmem:[%s165 + $0x81] sm:$0xff]
      %v2180 = vld [vmem:[%s165 + $0x89] sm:$0xff]
      %v2181 = vld [vmem:[%s165 + $0x91] sm:$0xff]
      %v2182 = vld [vmem:[%s165 + $0x99] sm:$0xff]
      %s2183 = scalar_lea.vmem %s1, 28
      %v2184 = vld [vmem:[%s2183] sm:$0xf]
      %v2186 = vsel %vm429, %v2167, 0
      %v2189 = vsel %vm429, %v2168, 0
      %v2192 = vsel %vm429, %v2169, 0
      %v2195 = vsel %vm429, %v2170, 0
      %v2198 = vsel %vm429, %v2171, 0
      %v2201 = vsel %vm429, %v2172, 0
      %v2204 = vsel %vm429, %v2173, 0
      %v2207 = vsel %vm429, %v2174, 0
      %v2210 = vsel %vm429, %v2175, 0
      %v2213 = vsel %vm429, %v2176, 0
      %v2216 = vsel %vm429, %v2177, 0
      %v2219 = vsel %vm429, %v2178, 0
      %v2222 = vsel %vm429, %v2179, 0
      %v2225 = vsel %vm429, %v2180, 0
      %v2228 = vsel %vm429, %v2181, 0
      %v2231 = vsel %vm429, %v2182, 0
      %v2234 = vsel %vm478, %v2184, 0
      %2236 = vmatprep.subr.mxu0 0.0
      %2237 = vmatpush1.msra.mxu0 %v2234
      %2238 = vmatprep.subr.mxu0 0.0
      %2239 = vmatpush1.msra.mxu0 0.0
      %2240 = vmatprep.subr.mxu0 0.0
      %2241 = vmatpush1.msra.mxu0 0.0
      %2242 = vmatprep.subr.mxu0 0.0
      %2243 = vmatpush1.msra.mxu0 0.0
      %2244 = vmatprep.subr.mxu0 0.0
      %2245 = vmatpush1.msra.mxu0 0.0
      %2246 = vmatprep.subr.mxu0 0.0
      %2247 = vmatpush1.msra.mxu0 0.0
      %2248 = vmatprep.subr.mxu0 0.0
      %2249 = vmatpush1.msra.mxu0 0.0
      %2250 = vmatprep.subr.mxu0 0.0
      %2251 = vmatpush1.msra.mxu0 0.0
      %2252 = vmatprep.subr.mxu0 0.0
      %2253 = vmatpush1.msra.mxu0 0.0
      %2254 = vmatprep.subr.mxu0 0.0
      %2255 = vmatpush1.msra.mxu0 0.0
      %2256 = vmatprep.subr.mxu0 0.0
      %2257 = vmatpush1.msra.mxu0 0.0
      %2258 = vmatprep.subr.mxu0 0.0
      %2259 = vmatpush1.msra.mxu0 0.0
      %2260 = vmatprep.subr.mxu0 0.0
      %2261 = vmatpush1.msra.mxu0 0.0
      %2262 = vmatprep.subr.mxu0 0.0
      %2263 = vmatpush1.msra.mxu0 0.0
      %2264 = vmatprep.subr.mxu0 0.0
      %2265 = vmatpush1.msra.mxu0 0.0
      %2266 = vmatprep.subr.mxu0 0.0
      %2267 = vmatpush1.msra.mxu0 0.0
      %2268 = vmatprep.subr.mxu0 0.0
      %2269 = vmatpush1.msra.mxu0 0.0
      %2270 = vmatprep.subr.mxu0 0.0
      %2271 = vmatpush1.msra.mxu0 0.0
      %2272 = vmatprep.subr.mxu0 0.0
      %2273 = vmatpush1.msra.mxu0 0.0
      %2274 = vmatprep.subr.mxu0 0.0
      %2275 = vmatpush1.msra.mxu0 0.0
      %2276 = vmatprep.subr.mxu0 0.0
      %2277 = vmatpush1.msra.mxu0 0.0
      %2278 = vmatprep.subr.mxu0 0.0
      %2279 = vmatpush1.msra.mxu0 0.0
      %2280 = vmatprep.subr.mxu0 0.0
      %2281 = vmatpush1.msra.mxu0 0.0
      %2282 = vmatprep.subr.mxu0 0.0
      %2283 = vmatpush1.msra.mxu0 0.0
      %2284 = vmatprep.subr.mxu0 0.0
      %2285 = vmatpush1.msra.mxu0 0.0
      %2286 = vmatprep.subr.mxu0 0.0
      %2287 = vmatpush1.msra.mxu0 0.0
      %2288 = vmatprep.subr.mxu0 0.0
      %2289 = vmatpush1.msra.mxu0 0.0
      %2290 = vmatprep.subr.mxu0 0.0
      %2291 = vmatpush1.msra.mxu0 0.0
      %2292 = vmatprep.subr.mxu0 0.0
      %2293 = vmatpush1.msra.mxu0 0.0
      %2294 = vmatprep.subr.mxu0 0.0
      %2295 = vmatpush1.msra.mxu0 0.0
      %2296 = vmatprep.subr.mxu0 0.0
      %2297 = vmatpush1.msra.mxu0 0.0
      %2298 = vmatprep.subr.mxu0 0.0
      %2299 = vmatpush1.msra.mxu0 0.0
      %2300 = vmatprep.mubr.f32.mxu0 0.0
      %2301 = vmatmul.mubr.f32.gmra.mrb[0].mxu0 %v2186
      %v2302 = vpop.f32.mrb[0].mxu0
      %v2303 = vadd.f32 0.0, %v2302
      %v2304 = vpop.f32.mrb[0].mxu0
      %2305 = vmatprep.mubr.f32.mxu0 0.0
      %2306 = vmatmul.mubr.f32.gmra.mrb[0].mxu0 %v2189
      %v2307 = vpop.f32.mrb[0].mxu0
      %v2308 = vadd.f32 0.0, %v2307
      %v2309 = vpop.f32.mrb[0].mxu0
      %2310 = vmatprep.mubr.f32.mxu0 0.0
      %2311 = vmatmul.mubr.f32.gmra.mrb[0].mxu0 %v2192
      %v2312 = vpop.f32.mrb[0].mxu0
      %v2313 = vadd.f32 0.0, %v2312
      %v2314 = vpop.f32.mrb[0].mxu0
      %2315 = vmatprep.mubr.f32.mxu0 0.0
      %2316 = vmatmul.mubr.f32.gmra.mrb[0].mxu0 %v2195
      %v2317 = vpop.f32.mrb[0].mxu0
      %v2318 = vadd.f32 0.0, %v2317
      %v2319 = vpop.f32.mrb[0].mxu0
      %2320 = vmatprep.mubr.f32.mxu0 0.0
      %2321 = vmatmul.mubr.f32.gmra.mrb[0].mxu0 %v2198
      %v2322 = vpop.f32.mrb[0].mxu0
      %v2323 = vadd.f32 0.0, %v2322
      %v2324 = vpop.f32.mrb[0].mxu0
      %2325 = vmatprep.mubr.f32.mxu0 0.0
      %2326 = vmatmul.mubr.f32.gmra.mrb[0].mxu0 %v2201
      %v2327 = vpop.f32.mrb[0].mxu0
      %v2328 = vadd.f32 0.0, %v2327
      %v2329 = vpop.f32.mrb[0].mxu0
      %2330 = vmatprep.mubr.f32.mxu0 0.0
      %2331 = vmatmul.mubr.f32.gmra.mrb[0].mxu0 %v2204
      %v2332 = vpop.f32.mrb[0].mxu0
      %v2333 = vadd.f32 0.0, %v2332
      %v2334 = vpop.f32.mrb[0].mxu0
      %2335 = vmatprep.mubr.f32.mxu0 0.0
      %2336 = vmatmul.mubr.f32.gmra.mrb[0].mxu0 %v2207
      %v2337 = vpop.f32.mrb[0].mxu0
      %v2338 = vadd.f32 0.0, %v2337
      %v2339 = vpop.f32.mrb[0].mxu0
      %2340 = vmatprep.mubr.f32.mxu0 0.0
      %2341 = vmatmul.mubr.f32.gmra.mrb[0].mxu0 %v2210
      %v2342 = vpop.f32.mrb[0].mxu0
      %v2343 = vadd.f32 0.0, %v2342
      %v2344 = vpop.f32.mrb[0].mxu0
      %2345 = vmatprep.mubr.f32.mxu0 0.0
      %2346 = vmatmul.mubr.f32.gmra.mrb[0].mxu0 %v2213
      %v2347 = vpop.f32.mrb[0].mxu0
      %v2348 = vadd.f32 0.0, %v2347
      %v2349 = vpop.f32.mrb[0].mxu0
      %2350 = vmatprep.mubr.f32.mxu0 0.0
      %2351 = vmatmul.mubr.f32.gmra.mrb[0].mxu0 %v2216
      %v2352 = vpop.f32.mrb[0].mxu0
      %v2353 = vadd.f32 0.0, %v2352
      %v2354 = vpop.f32.mrb[0].mxu0
      %2355 = vmatprep.mubr.f32.mxu0 0.0
      %2356 = vmatmul.mubr.f32.gmra.mrb[0].mxu0 %v2219
      %v2357 = vpop.f32.mrb[0].mxu0
      %v2358 = vadd.f32 0.0, %v2357
      %v2359 = vpop.f32.mrb[0].mxu0
      %2360 = vmatprep.mubr.f32.mxu0 0.0
      %2361 = vmatmul.mubr.f32.gmra.mrb[0].mxu0 %v2222
      %v2362 = vpop.f32.mrb[0].mxu0
      %v2363 = vadd.f32 0.0, %v2362
      %v2364 = vpop.f32.mrb[0].mxu0
      %2365 = vmatprep.mubr.f32.mxu0 0.0
      %2366 = vmatmul.mubr.f32.gmra.mrb[0].mxu0 %v2225
      %v2367 = vpop.f32.mrb[0].mxu0
      %v2368 = vadd.f32 0.0, %v2367
      %v2369 = vpop.f32.mrb[0].mxu0
      %2370 = vmatprep.mubr.f32.mxu0 0.0
      %2371 = vmatmul.mubr.f32.gmra.mrb[0].mxu0 %v2228
      %v2372 = vpop.f32.mrb[0].mxu0
      %v2373 = vadd.f32 0.0, %v2372
      %v2374 = vpop.f32.mrb[0].mxu0
      %2375 = vmatprep.mubr.f32.mxu0 0.0
      %2376 = vmatmul.mubr.f32.gmra.mrb[0].mxu0 %v2231
      %v2377 = vpop.f32.mrb[0].mxu0
      %v2378 = vadd.f32 0.0, %v2377
      %v2379 = vpop.f32.mrb[0].mxu0
      %2380 = vdwg.mxu0
      %v2381 = vadd.f32 %v2151, %v2303
      %v2382 = vadd.f32 %v2152, %v2308
      %v2383 = vadd.f32 %v2153, %v2313
      %v2384 = vadd.f32 %v2154, %v2318
      %v2385 = vadd.f32 %v2155, %v2323
      %v2386 = vadd.f32 %v2156, %v2328
      %v2387 = vadd.f32 %v2157, %v2333
      %v2388 = vadd.f32 %v2158, %v2338
      %v2389 = vadd.f32 %v2159, %v2343
      %v2390 = vadd.f32 %v2160, %v2348
      %v2391 = vadd.f32 %v2161, %v2353
      %v2392 = vadd.f32 %v2162, %v2358
      %v2393 = vadd.f32 %v2163, %v2363
      %v2394 = vadd.f32 %v2164, %v2368
      %v2395 = vadd.f32 %v2165, %v2373
      %v2396 = vadd.f32 %v2166, %v2378
      %v2397 = vld [vmem:[%s165 + $0x22] sm:$0xff]
      %v2398 = vld [vmem:[%s165 + $0x2a] sm:$0xff]
      %v2399 = vld [vmem:[%s165 + $0x32] sm:$0xff]
      %v2400 = vld [vmem:[%s165 + $0x3a] sm:$0xff]
      %v2401 = vld [vmem:[%s165 + $0x42] sm:$0xff]
      %v2402 = vld [vmem:[%s165 + $0x4a] sm:$0xff]
      %v2403 = vld [vmem:[%s165 + $0x52] sm:$0xff]
      %v2404 = vld [vmem:[%s165 + $0x5a] sm:$0xff]
      %v2405 = vld [vmem:[%s165 + $0x62] sm:$0xff]
      %v2406 = vld [vmem:[%s165 + $0x6a] sm:$0xff]
      %v2407 = vld [vmem:[%s165 + $0x72] sm:$0xff]
      %v2408 = vld [vmem:[%s165 + $0x7a] sm:$0xff]
      %v2409 = vld [vmem:[%s165 + $0x82] sm:$0xff]
      %v2410 = vld [vmem:[%s165 + $0x8a] sm:$0xff]
      %v2411 = vld [vmem:[%s165 + $0x92] sm:$0xff]
      %v2412 = vld [vmem:[%s165 + $0x9a] sm:$0xff]
      %s2413 = scalar_lea.vmem %s1, 32
      %v2414 = vld [vmem:[%s2413] sm:$0xf]
      %v2416 = vsel %vm429, %v2397, 0
      %v2419 = vsel %vm429, %v2398, 0
      %v2422 = vsel %vm429, %v2399, 0
      %v2425 = vsel %vm429, %v2400, 0
      %v2428 = vsel %vm429, %v2401, 0
      %v2431 = vsel %vm429, %v2402, 0
      %v2434 = vsel %vm429, %v2403, 0
      %v2437 = vsel %vm429, %v2404, 0
      %v2440 = vsel %vm429, %v2405, 0
      %v2443 = vsel %vm429, %v2406, 0
      %v2446 = vsel %vm429, %v2407, 0
      %v2449 = vsel %vm429, %v2408, 0
      %v2452 = vsel %vm429, %v2409, 0
      %v2455 = vsel %vm429, %v2410, 0
      %v2458 = vsel %vm429, %v2411, 0
      %v2461 = vsel %vm429, %v2412, 0
      %v2464 = vsel %vm478, %v2414, 0
      %2466 = vmatprep.subr.mxu0 0.0
      %2467 = vmatpush1.msra.mxu0 %v2464
      %2468 = vmatprep.subr.mxu0 0.0
      %2469 = vmatpush1.msra.mxu0 0.0
      %2470 = vmatprep.subr.mxu0 0.0
      %2471 = vmatpush1.msra.mxu0 0.0
      %2472 = vmatprep.subr.mxu0 0.0
      %2473 = vmatpush1.msra.mxu0 0.0
      %2474 = vmatprep.subr.mxu0 0.0
      %2475 = vmatpush1.msra.mxu0 0.0
      %2476 = vmatprep.subr.mxu0 0.0
      %2477 = vmatpush1.msra.mxu0 0.0
      %2478 = vmatprep.subr.mxu0 0.0
      %2479 = vmatpush1.msra.mxu0 0.0
      %2480 = vmatprep.subr.mxu0 0.0
      %2481 = vmatpush1.msra.mxu0 0.0
      %2482 = vmatprep.subr.mxu0 0.0
      %2483 = vmatpush1.msra.mxu0 0.0
      %2484 = vmatprep.subr.mxu0 0.0
      %2485 = vmatpush1.msra.mxu0 0.0
      %2486 = vmatprep.subr.mxu0 0.0
      %2487 = vmatpush1.msra.mxu0 0.0
      %2488 = vmatprep.subr.mxu0 0.0
      %2489 = vmatpush1.msra.mxu0 0.0
      %2490 = vmatprep.subr.mxu0 0.0
      %2491 = vmatpush1.msra.mxu0 0.0
      %2492 = vmatprep.subr.mxu0 0.0
      %2493 = vmatpush1.msra.mxu0 0.0
      %2494 = vmatprep.subr.mxu0 0.0
      %2495 = vmatpush1.msra.mxu0 0.0
      %2496 = vmatprep.subr.mxu0 0.0
      %2497 = vmatpush1.msra.mxu0 0.0
      %2498 = vmatprep.subr.mxu0 0.0
      %2499 = vmatpush1.msra.mxu0 0.0
      %2500 = vmatprep.subr.mxu0 0.0
      %2501 = vmatpush1.msra.mxu0 0.0
      %2502 = vmatprep.subr.mxu0 0.0
      %2503 = vmatpush1.msra.mxu0 0.0
      %2504 = vmatprep.subr.mxu0 0.0
      %2505 = vmatpush1.msra.mxu0 0.0
      %2506 = vmatprep.subr.mxu0 0.0
      %2507 = vmatpush1.msra.mxu0 0.0
      %2508 = vmatprep.subr.mxu0 0.0
      %2509 = vmatpush1.msra.mxu0 0.0
      %2510 = vmatprep.subr.mxu0 0.0
      %2511 = vmatpush1.msra.mxu0 0.0
      %2512 = vmatprep.subr.mxu0 0.0
      %2513 = vmatpush1.msra.mxu0 0.0
      %2514 = vmatprep.subr.mxu0 0.0
      %2515 = vmatpush1.msra.mxu0 0.0
      %2516 = vmatprep.subr.mxu0 0.0
      %2517 = vmatpush1.msra.mxu0 0.0
      %2518 = vmatprep.subr.mxu0 0.0
      %2519 = vmatpush1.msra.mxu0 0.0
      %2520 = vmatprep.subr.mxu0 0.0
      %2521 = vmatpush1.msra.mxu0 0.0
      %2522 = vmatprep.subr.mxu0 0.0
      %2523 = vmatpush1.msra.mxu0 0.0
      %2524 = vmatprep.subr.mxu0 0.0
      %2525 = vmatpush1.msra.mxu0 0.0
      %2526 = vmatprep.subr.mxu0 0.0
      %2527 = vmatpush1.msra.mxu0 0.0
      %2528 = vmatprep.subr.mxu0 0.0
      %2529 = vmatpush1.msra.mxu0 0.0
      %2530 = vmatprep.mubr.f32.mxu0 0.0
      %2531 = vmatmul.mubr.f32.gmra.mrb[0].mxu0 %v2416
      %v2532 = vpop.f32.mrb[0].mxu0
      %v2533 = vadd.f32 0.0, %v2532
      %v2534 = vpop.f32.mrb[0].mxu0
      %2535 = vmatprep.mubr.f32.mxu0 0.0
      %2536 = vmatmul.mubr.f32.gmra.mrb[0].mxu0 %v2419
      %v2537 = vpop.f32.mrb[0].mxu0
      %v2538 = vadd.f32 0.0, %v2537
      %v2539 = vpop.f32.mrb[0].mxu0
      %2540 = vmatprep.mubr.f32.mxu0 0.0
      %2541 = vmatmul.mubr.f32.gmra.mrb[0].mxu0 %v2422
      %v2542 = vpop.f32.mrb[0].mxu0
      %v2543 = vadd.f32 0.0, %v2542
      %v2544 = vpop.f32.mrb[0].mxu0
      %2545 = vmatprep.mubr.f32.mxu0 0.0
      %2546 = vmatmul.mubr.f32.gmra.mrb[0].mxu0 %v2425
      %v2547 = vpop.f32.mrb[0].mxu0
      %v2548 = vadd.f32 0.0, %v2547
      %v2549 = vpop.f32.mrb[0].mxu0
      %2550 = vmatprep.mubr.f32.mxu0 0.0
      %2551 = vmatmul.mubr.f32.gmra.mrb[0].mxu0 %v2428
      %v2552 = vpop.f32.mrb[0].mxu0
      %v2553 = vadd.f32 0.0, %v2552
      %v2554 = vpop.f32.mrb[0].mxu0
      %2555 = vmatprep.mubr.f32.mxu0 0.0
      %2556 = vmatmul.mubr.f32.gmra.mrb[0].mxu0 %v2431
      %v2557 = vpop.f32.mrb[0].mxu0
      %v2558 = vadd.f32 0.0, %v2557
      %v2559 = vpop.f32.mrb[0].mxu0
      %2560 = vmatprep.mubr.f32.mxu0 0.0
      %2561 = vmatmul.mubr.f32.gmra.mrb[0].mxu0 %v2434
      %v2562 = vpop.f32.mrb[0].mxu0
      %v2563 = vadd.f32 0.0, %v2562
      %v2564 = vpop.f32.mrb[0].mxu0
      %2565 = vmatprep.mubr.f32.mxu0 0.0
      %2566 = vmatmul.mubr.f32.gmra.mrb[0].mxu0 %v2437
      %v2567 = vpop.f32.mrb[0].mxu0
      %v2568 = vadd.f32 0.0, %v2567
      %v2569 = vpop.f32.mrb[0].mxu0
      %2570 = vmatprep.mubr.f32.mxu0 0.0
      %2571 = vmatmul.mubr.f32.gmra.mrb[0].mxu0 %v2440
      %v2572 = vpop.f32.mrb[0].mxu0
      %v2573 = vadd.f32 0.0, %v2572
      %v2574 = vpop.f32.mrb[0].mxu0
      %2575 = vmatprep.mubr.f32.mxu0 0.0
      %2576 = vmatmul.mubr.f32.gmra.mrb[0].mxu0 %v2443
      %v2577 = vpop.f32.mrb[0].mxu0
      %v2578 = vadd.f32 0.0, %v2577
      %v2579 = vpop.f32.mrb[0].mxu0
      %2580 = vmatprep.mubr.f32.mxu0 0.0
      %2581 = vmatmul.mubr.f32.gmra.mrb[0].mxu0 %v2446
      %v2582 = vpop.f32.mrb[0].mxu0
      %v2583 = vadd.f32 0.0, %v2582
      %v2584 = vpop.f32.mrb[0].mxu0
      %2585 = vmatprep.mubr.f32.mxu0 0.0
      %2586 = vmatmul.mubr.f32.gmra.mrb[0].mxu0 %v2449
      %v2587 = vpop.f32.mrb[0].mxu0
      %v2588 = vadd.f32 0.0, %v2587
      %v2589 = vpop.f32.mrb[0].mxu0
      %2590 = vmatprep.mubr.f32.mxu0 0.0
      %2591 = vmatmul.mubr.f32.gmra.mrb[0].mxu0 %v2452
      %v2592 = vpop.f32.mrb[0].mxu0
      %v2593 = vadd.f32 0.0, %v2592
      %v2594 = vpop.f32.mrb[0].mxu0
      %2595 = vmatprep.mubr.f32.mxu0 0.0
      %2596 = vmatmul.mubr.f32.gmra.mrb[0].mxu0 %v2455
      %v2597 = vpop.f32.mrb[0].mxu0
      %v2598 = vadd.f32 0.0, %v2597
      %v2599 = vpop.f32.mrb[0].mxu0
      %2600 = vmatprep.mubr.f32.mxu0 0.0
      %2601 = vmatmul.mubr.f32.gmra.mrb[0].mxu0 %v2458
      %v2602 = vpop.f32.mrb[0].mxu0
      %v2603 = vadd.f32 0.0, %v2602
      %v2604 = vpop.f32.mrb[0].mxu0
      %2605 = vmatprep.mubr.f32.mxu0 0.0
      %2606 = vmatmul.mubr.f32.gmra.mrb[0].mxu0 %v2461
      %v2607 = vpop.f32.mrb[0].mxu0
      %v2608 = vadd.f32 0.0, %v2607
      %v2609 = vpop.f32.mrb[0].mxu0
      %2610 = vdwg.mxu0
      %v2611 = vsel %vm1151, %v2533, 0.0
      %v2612 = vsel %vm1152, %v2538, 0.0
      %v2613 = vsel %vm1153, %v2543, 0.0
      %v2614 = vsel %vm1154, %v2548, 0.0
      %v2615 = vsel %vm1155, %v2553, 0.0
      %v2616 = vsel %vm1156, %v2558, 0.0
      %v2617 = vsel %vm1157, %v2563, 0.0
      %v2618 = vsel %vm1158, %v2568, 0.0
      %v2619 = vsel %vm1159, %v2573, 0.0
      %v2620 = vsel %vm1160, %v2578, 0.0
      %v2621 = vsel %vm1161, %v2583, 0.0
      %v2622 = vsel %vm1162, %v2588, 0.0
      %v2623 = vsel %vm1163, %v2593, 0.0
      %v2624 = vsel %vm1164, %v2598, 0.0
      %v2625 = vsel %vm1165, %v2603, 0.0
      %v2626 = vsel %vm1166, %v2608, 0.0
      %v2627 = vadd.f32 %v2381, %v2611
      %v2628 = vadd.f32 %v2382, %v2612
      %v2629 = vadd.f32 %v2383, %v2613
      %v2630 = vadd.f32 %v2384, %v2614
      %v2631 = vadd.f32 %v2385, %v2615
      %v2632 = vadd.f32 %v2386, %v2616
      %v2633 = vadd.f32 %v2387, %v2617
      %v2634 = vadd.f32 %v2388, %v2618
      %v2635 = vadd.f32 %v2389, %v2619
      %v2636 = vadd.f32 %v2390, %v2620
      %v2637 = vadd.f32 %v2391, %v2621
      %v2638 = vadd.f32 %v2392, %v2622
      %v2639 = vadd.f32 %v2393, %v2623
      %v2640 = vadd.f32 %v2394, %v2624
      %v2641 = vadd.f32 %v2395, %v2625
      %v2642 = vadd.f32 %v2396, %v2626
      %v2643 = vld [vmem:[%s2] sm:$0x1]
      %v2645 = vlaneseq
      %v2646 = vshrl.u32 %v2645, 7
      %v2647 = vsub.s32 0, %v2646
      %v2648 = vrot.slane %v2643, %v2647
      %v2650 = vadd.f32 %v2627, %v2648
      %v2651 = vadd.f32 %v2628, %v2648
      %v2652 = vadd.f32 %v2629, %v2648
      %v2653 = vadd.f32 %v2630, %v2648
      %v2654 = vadd.f32 %v2631, %v2648
      %v2655 = vadd.f32 %v2632, %v2648
      %v2656 = vadd.f32 %v2633, %v2648
      %v2657 = vadd.f32 %v2634, %v2648
      %v2658 = vadd.f32 %v2635, %v2648
      %v2659 = vadd.f32 %v2636, %v2648
      %v2660 = vadd.f32 %v2637, %v2648
      %v2661 = vadd.f32 %v2638, %v2648
      %v2662 = vadd.f32 %v2639, %v2648
      %v2663 = vadd.f32 %v2640, %v2648
      %v2664 = vadd.f32 %v2641, %v2648
      %v2665 = vadd.f32 %v2642, %v2648
      %v2666 = vmul.f32 %v2650, 1.442695
      %v2667 = vpow.pop %v2666
      %v2668 = vmul.f32 %v2651, 1.442695
      %v2669 = vpow.pop %v2668
      %v2670 = vmul.f32 %v2652, 1.442695
      %v2671 = vpow.pop %v2670
      %v2672 = vmul.f32 %v2653, 1.442695
      %v2673 = vpow.pop %v2672
      %v2674 = vmul.f32 %v2654, 1.442695
      %v2675 = vpow.pop %v2674
      %v2676 = vmul.f32 %v2655, 1.442695
      %v2677 = vpow.pop %v2676
      %v2678 = vmul.f32 %v2656, 1.442695
      %v2679 = vpow.pop %v2678
      %v2680 = vmul.f32 %v2657, 1.442695
      %v2681 = vpow.pop %v2680
      %v2682 = vmul.f32 %v2658, 1.442695
      %v2683 = vpow.pop %v2682
      %v2684 = vmul.f32 %v2659, 1.442695
      %v2685 = vpow.pop %v2684
      %v2686 = vmul.f32 %v2660, 1.442695
      %v2687 = vpow.pop %v2686
      %v2688 = vmul.f32 %v2661, 1.442695
      %v2689 = vpow.pop %v2688
      %v2690 = vmul.f32 %v2662, 1.442695
      %v2691 = vpow.pop %v2690
      %v2692 = vmul.f32 %v2663, 1.442695
      %v2693 = vpow.pop %v2692
      %v2694 = vmul.f32 %v2664, 1.442695
      %v2695 = vpow.pop %v2694
      %v2696 = vmul.f32 %v2665, 1.442695
      %v2697 = vpow.pop %v2696
      %v2698 = vadd.f32 %v2667, 2.0
      %v2699 = vadd.f32 %v2669, 2.0
      %v2700 = vadd.f32 %v2671, 2.0
      %v2701 = vadd.f32 %v2673, 2.0
      %v2702 = vadd.f32 %v2675, 2.0
      %v2703 = vadd.f32 %v2677, 2.0
      %v2704 = vadd.f32 %v2679, 2.0
      %v2705 = vadd.f32 %v2681, 2.0
      %v2706 = vadd.f32 %v2683, 2.0
      %v2707 = vadd.f32 %v2685, 2.0
      %v2708 = vadd.f32 %v2687, 2.0
      %v2709 = vadd.f32 %v2689, 2.0
      %v2710 = vadd.f32 %v2691, 2.0
      %v2711 = vadd.f32 %v2693, 2.0
      %v2712 = vadd.f32 %v2695, 2.0
      %v2713 = vadd.f32 %v2697, 2.0
      %v2714 = vmul.f32 %v2667, %v2698
      %v2715 = vmul.f32 %v2669, %v2699
      %v2716 = vmul.f32 %v2671, %v2700
      %v2717 = vmul.f32 %v2673, %v2701
      %v2718 = vmul.f32 %v2675, %v2702
      %v2719 = vmul.f32 %v2677, %v2703
      %v2720 = vmul.f32 %v2679, %v2704
      %v2721 = vmul.f32 %v2681, %v2705
      %v2722 = vmul.f32 %v2683, %v2706
      %v2723 = vmul.f32 %v2685, %v2707
      %v2724 = vmul.f32 %v2687, %v2708
      %v2725 = vmul.f32 %v2689, %v2709
      %v2726 = vmul.f32 %v2691, %v2710
      %v2727 = vmul.f32 %v2693, %v2711
      %v2728 = vmul.f32 %v2695, %v2712
      %v2729 = vmul.f32 %v2697, %v2713
      %v2730 = vadd.f32 %v2714, 2.0
      %v2731 = vadd.f32 %v2715, 2.0
      %v2732 = vadd.f32 %v2716, 2.0
      %v2733 = vadd.f32 %v2717, 2.0
      %v2734 = vadd.f32 %v2718, 2.0
      %v2735 = vadd.f32 %v2719, 2.0
      %v2736 = vadd.f32 %v2720, 2.0
      %v2737 = vadd.f32 %v2721, 2.0
      %v2738 = vadd.f32 %v2722, 2.0
      %v2739 = vadd.f32 %v2723, 2.0
      %v2740 = vadd.f32 %v2724, 2.0
      %v2741 = vadd.f32 %v2725, 2.0
      %v2742 = vadd.f32 %v2726, 2.0
      %v2743 = vadd.f32 %v2727, 2.0
      %v2744 = vadd.f32 %v2728, 2.0
      %v2745 = vadd.f32 %v2729, 2.0
      %v2746 = vrcp.pop %v2730
      %v2747 = vrcp.pop %v2731
      %v2748 = vrcp.pop %v2732
      %v2749 = vrcp.pop %v2733
      %v2750 = vrcp.pop %v2734
      %v2751 = vrcp.pop %v2735
      %v2752 = vrcp.pop %v2736
      %v2753 = vrcp.pop %v2737
      %v2754 = vrcp.pop %v2738
      %v2755 = vrcp.pop %v2739
      %v2756 = vrcp.pop %v2740
      %v2757 = vrcp.pop %v2741
      %v2758 = vrcp.pop %v2742
      %v2759 = vrcp.pop %v2743
      %v2760 = vrcp.pop %v2744
      %v2761 = vrcp.pop %v2745
      %v2762 = vmul.f32 %v2714, %v2746
      %v2763 = vmul.f32 %v2715, %v2747
      %v2764 = vmul.f32 %v2716, %v2748
      %v2765 = vmul.f32 %v2717, %v2749
      %v2766 = vmul.f32 %v2718, %v2750
      %v2767 = vmul.f32 %v2719, %v2751
      %v2768 = vmul.f32 %v2720, %v2752
      %v2769 = vmul.f32 %v2721, %v2753
      %v2770 = vmul.f32 %v2722, %v2754
      %v2771 = vmul.f32 %v2723, %v2755
      %v2772 = vmul.f32 %v2724, %v2756
      %v2773 = vmul.f32 %v2725, %v2757
      %v2774 = vmul.f32 %v2726, %v2758
      %v2775 = vmul.f32 %v2727, %v2759
      %v2776 = vmul.f32 %v2728, %v2760
      %v2777 = vmul.f32 %v2729, %v2761
      %vm2778 = vcmp.gt.f32.partialorder %v2650, 20.0
      %vm2779 = vcmp.gt.f32.partialorder %v2651, 20.0
      %vm2780 = vcmp.gt.f32.partialorder %v2652, 20.0
      %vm2781 = vcmp.gt.f32.partialorder %v2653, 20.0
      %vm2782 = vcmp.gt.f32.partialorder %v2654, 20.0
      %vm2783 = vcmp.gt.f32.partialorder %v2655, 20.0
      %vm2784 = vcmp.gt.f32.partialorder %v2656, 20.0
      %vm2785 = vcmp.gt.f32.partialorder %v2657, 20.0
      %vm2786 = vcmp.gt.f32.partialorder %v2658, 20.0
      %vm2787 = vcmp.gt.f32.partialorder %v2659, 20.0
      %vm2788 = vcmp.gt.f32.partialorder %v2660, 20.0
      %vm2789 = vcmp.gt.f32.partialorder %v2661, 20.0
      %vm2790 = vcmp.gt.f32.partialorder %v2662, 20.0
      %vm2791 = vcmp.gt.f32.partialorder %v2663, 20.0
      %vm2792 = vcmp.gt.f32.partialorder %v2664, 20.0
      %vm2793 = vcmp.gt.f32.partialorder %v2665, 20.0
      %v2794 = vmul.f32 %v2650, %v2762
      %v2795 = vmul.f32 %v2651, %v2763
      %v2796 = vmul.f32 %v2652, %v2764
      %v2797 = vmul.f32 %v2653, %v2765
      %v2798 = vmul.f32 %v2654, %v2766
      %v2799 = vmul.f32 %v2655, %v2767
      %v2800 = vmul.f32 %v2656, %v2768
      %v2801 = vmul.f32 %v2657, %v2769
      %v2802 = vmul.f32 %v2658, %v2770
      %v2803 = vmul.f32 %v2659, %v2771
      %v2804 = vmul.f32 %v2660, %v2772
      %v2805 = vmul.f32 %v2661, %v2773
      %v2806 = vmul.f32 %v2662, %v2774
      %v2807 = vmul.f32 %v2663, %v2775
      %v2808 = vmul.f32 %v2664, %v2776
      %v2809 = vmul.f32 %v2665, %v2777
      %v2810 = vsel %vm2778, %v2650, %v2794
      %v2811 = vsel %vm2779, %v2651, %v2795
      %v2812 = vsel %vm2780, %v2652, %v2796
      %v2813 = vsel %vm2781, %v2653, %v2797
      %v2814 = vsel %vm2782, %v2654, %v2798
      %v2815 = vsel %vm2783, %v2655, %v2799
      %v2816 = vsel %vm2784, %v2656, %v2800
      %v2817 = vsel %vm2785, %v2657, %v2801
      %v2818 = vsel %vm2786, %v2658, %v2802
      %v2819 = vsel %vm2787, %v2659, %v2803
      %v2820 = vsel %vm2788, %v2660, %v2804
      %v2821 = vsel %vm2789, %v2661, %v2805
      %v2822 = vsel %vm2790, %v2662, %v2806
      %v2823 = vsel %vm2791, %v2663, %v2807
      %v2824 = vsel %vm2792, %v2664, %v2808
      %v2825 = vsel %vm2793, %v2665, %v2809
      %2826 = vst.msk [vmem:[%s170] sm:$0xff] %vm429, %v2810
      %2827 = vst.msk [vmem:[%s170 + $0x8] sm:$0xff] %vm429, %v2811
      %2828 = vst.msk [vmem:[%s170 + $0x10] sm:$0xff] %vm429, %v2812
      %2829 = vst.msk [vmem:[%s170 + $0x18] sm:$0xff] %vm429, %v2813
      %2830 = vst.msk [vmem:[%s170 + $0x20] sm:$0xff] %vm429, %v2814
      %2831 = vst.msk [vmem:[%s170 + $0x28] sm:$0xff] %vm429, %v2815
      %2832 = vst.msk [vmem:[%s170 + $0x30] sm:$0xff] %vm429, %v2816
      %2833 = vst.msk [vmem:[%s170 + $0x38] sm:$0xff] %vm429, %v2817
      %2834 = vst.msk [vmem:[%s170 + $0x40] sm:$0xff] %vm429, %v2818
      %2835 = vst.msk [vmem:[%s170 + $0x48] sm:$0xff] %vm429, %v2819
      %2836 = vst.msk [vmem:[%s170 + $0x50] sm:$0xff] %vm429, %v2820
      %2837 = vst.msk [vmem:[%s170 + $0x58] sm:$0xff] %vm429, %v2821
      %2838 = vst.msk [vmem:[%s170 + $0x60] sm:$0xff] %vm429, %v2822
      %2839 = vst.msk [vmem:[%s170 + $0x68] sm:$0xff] %vm429, %v2823
      %2840 = vst.msk [vmem:[%s170 + $0x70] sm:$0xff] %vm429, %v2824
      %2841 = vst.msk [vmem:[%s170 + $0x78] sm:$0xff] %vm429, %v2825
      %p2842 = scmp.lt.s32.totalorder %s14, 3
      %s2843 = scalar_select %p2842, %s14, 3
      %s2844 = smul.addr %s2843, 16
      %s2845 = smul.addr %s2844, 8
      %s2846 = scalar_lea.vmem %s3, %s2845
      // Predicated region
      $region33: #{resblock_body.4} parent=31 // pred_check
        %p2847 = pneg %p100
      $region34: #{resblock_body.4} parent=31 // pred_check_branch
        %2849 = sbr.rel (%p2847) target = $region36
      $region35: #{resblock_body.4} parent=31 // pred_region
        _
      $region36: #{resblock_body.4} parent=31 // pred_fallthru
        _
    $region32: #{resblock_body.4} parent=5 // pred_fallthru
      _
    %p2850 = scmp.le.s32.totalorder 2, %s9
    // Predicated region
    $region37: #{resblock_body.4} parent=5 // pred_check
      %p2851 = pneg %p2850
    $region38: #{resblock_body.4} parent=5 // pred_check_branch
      %2853 = sbr.rel (%p2851) target = $region40
    $region39: #{resblock_body.4} parent=5 // pred_region
      %s2854 = ssub.s32 %s9, 2
      // Predicated region
      $region41: #{resblock_body.4} parent=39 // pred_check
        %p2855 = pneg %p106
      $region42: #{resblock_body.4} parent=39 // pred_check_branch
        %2857 = sbr.rel (%p2855) target = $region44
      $region43: #{resblock_body.4} parent=39 // pred_region
        %p2858 = scmp.lt.s32.totalorder %s15, 3
        %s2859 = scalar_select %p2858, %s15, 3
        %s2860 = smul.addr %s2859, 16
        %s2861 = smul.addr %s2860, 8
        %s2862 = scalar_lea.vmem %s3, %s2861
      $region44: #{resblock_body.4} parent=39 // pred_fallthru
        _
    $region40: #{resblock_body.4} parent=5 // pred_fallthru
      _
  $region6: #{resblock_body.4} parent=0 // loop_footer
    %s13 = sadd.s32 1, %s9
  $region7: #{resblock_body.4} parent=0 // loop_footer_branch
    %8 = sbr.rel target = $region3
  $region8: #{resblock_body.4} parent=0 // loop_exit
    _

// kernel: resblock_body.5
$region0: #{resblock_body.5}
  #allocation0 [shape = 'u32[]', space=smem, size = 0x4, offset = 0x4, fixed_abs, tag = 'smem constant byte address 0x4 - core index']
  #allocation1 [shape = 'u32[144,128]{1,0:T(1,128)}', space=vmem, size = 0x12000, scoped, tag = 'internal scratch']
  %s0 = inlined_call_operand.vmem [shape: f32[4,162,4], index: 0, kind: input, shape index: {}]
  %s1 = inlined_call_operand.vmem [shape: f32[4,128,8], index: 1, kind: input, shape index: {}]
  %s2 = inlined_call_operand.vmem [shape: f32[9,4,4], index: 2, kind: input, shape index: {}]
  %s3 = inlined_call_operand.vmem [shape: f32[1,4], index: 3, kind: input, shape index: {}]
  %s4 = inlined_call_operand.vmem [shape: f32[4,8], index: 4, kind: input, shape index: {}]
  %s5 = inlined_call_operand.vmem [shape: f32[4,8], index: 5, kind: input, shape index: {}]
  %s6 = inlined_call_operand.vmem [shape: f32[1,8], index: 6, kind: input, shape index: {}]
  %s7 = inlined_call_operand.hbm [shape: f32[4,128,16], index: 7, kind: output, shape index: {}]
  %s8 = sld [smem:[#allocation0]]
  $region61: #{resblock_body.5} parent=0
    _
  %s10 = ssub.s32 1, %s8
  %s11 = scalar_select 0, %s10, %s8
  $region1: #{resblock_body.5} parent=0
    #allocation2 [shape = 'u8[131072]{0}', space=vmem, size = 0x20000, scoped, tag = 'output window, operand 0']
    #allocation3 [shape = 's32[2]{0}', space=sflag, size = 0x8, scoped, tag = 'scoped memory for resblock_body.5']
    %12 = vsyncpa [#allocation3], 0
    %s13 = scalar_lea.sflag [#allocation3], 1
    %14 = vsyncpa %s13, 0
    loop: start=0, step=1, limit=6
    $region2: #{resblock_body.5} parent=1 // loop_pre_header
      _
    $region3: #{resblock_body.5} parent=1 // loop_header
      %s16 = sphi 0, %s20
      %p17 = scmp.ge.s32.totalorder %s16, 6
      %s26 = sphi 0, %s28
      %s29 = sphi 0, %s26
      %s30 = sphi 0, %s29
      %s46 = sphi 0, %s30
      %s52 = sphi 0, %s54
      %s55 = sphi 0, %s52
      %s56 = sphi 0, %s55
      %s72 = sphi 0, %s56
      %s76 = sphi 0, %s76
      %s78 = sphi 0, %s76
      %s79 = sphi 0, %s78
      %s93 = sphi 0, %s79
      %s97 = sphi 0, %s97
      %s99 = sphi 0, %s97
      %s100 = sphi 0, %s99
      %s114 = sphi 0, %s100
      %s118 = sphi 0, %s118
      %s120 = sphi 0, %s118
      %s121 = sphi 0, %s120
      %s135 = sphi 0, %s121
      %s139 = sphi 0, %s139
      %s141 = sphi 0, %s139
      %s142 = sphi 0, %s141
      %s156 = sphi 0, %s142
      %s160 = sphi 0, %s160
      %s162 = sphi 0, %s160
      %s163 = sphi 0, %s162
      %s177 = sphi 0, %s163
      %s183 = sphi 0, %s185
      %s186 = sphi 0, %s183
      %s187 = sphi 0, %s186
      %s203 = sphi 0, %s187
    $region4: #{resblock_body.5} parent=1 // loop_header_branch
      %19 = sbr.rel (%p17) target = $region8
    $region5: #{resblock_body.5} parent=1 // loop_body
      %s21 = ssub.s32 %s16, 1
      %s22 = ssub.s32 %s16, 2
      %s23 = sadd.s32 %s16, 1
      %s24 = ssub.s32 %s16, %s23
      %p25 = scmp.eq.s32.totalorder %s24, 0
      %s27 = sadd.s32 %s26, 1
      %s28 = scalar_select %p25, %s26, %s27
      %p31 = pneg %p25
      %p32 = scmp.eq.s32.totalorder %s16, 3
      %p33 = por %p31, %p32
      %p34 = scmp.ne.s32.totalorder %s26, %s29
      %p35 = scmp.eq.s32.totalorder %s16, 0
      %p36 = por %p34, %p35
      %p37 = scmp.ne.s32.totalorder %s26, %s29
      %p38 = scmp.eq.s32.totalorder %s21, 3
      %p39 = por %p37, %p38
      %p40 = scmp.ne.s32.totalorder %s29, %s30
      %p41 = scmp.eq.s32.totalorder %s21, 0
      %p42 = por %p40, %p41
      %p43 = scmp.ne.s32.totalorder %s29, %s30
      %p44 = scmp.eq.s32.totalorder %s22, 3
      %p45 = por %p43, %p44
      %p47 = scmp.ne.s32.totalorder %s30, %s46
      %p48 = scmp.eq.s32.totalorder %s22, 0
      %p49 = por %p47, %p48
      %s50 = ssub.s32 %s16, %s23
      %p51 = scmp.eq.s32.totalorder %s50, 0
      %s53 = sadd.s32 %s52, 1
      %s54 = scalar_select %p51, %s52, %s53
      %p57 = pneg %p51
      %p58 = scmp.eq.s32.totalorder %s16, 3
      %p59 = por %p57, %p58
      %p60 = scmp.ne.s32.totalorder %s52, %s55
      %p61 = scmp.eq.s32.totalorder %s16, 0
      %p62 = por %p60, %p61
      %p63 = scmp.ne.s32.totalorder %s52, %s55
      %p64 = scmp.eq.s32.totalorder %s21, 3
      %p65 = por %p63, %p64
      %p66 = scmp.ne.s32.totalorder %s55, %s56
      %p67 = scmp.eq.s32.totalorder %s21, 0
      %p68 = por %p66, %p67
      %p69 = scmp.ne.s32.totalorder %s55, %s56
      %p70 = scmp.eq.s32.totalorder %s22, 3
      %p71 = por %p69, %p70
      %p73 = scmp.ne.s32.totalorder %s56, %s72
      %p74 = scmp.eq.s32.totalorder %s22, 0
      %p75 = por %p73, %p74
      %s77 = sadd.s32 %s76, 1
      %p80 = scmp.eq.s32.totalorder %s16, 3
      %p81 = scmp.ne.s32.totalorder %s76, %s78
      %p82 = scmp.eq.s32.totalorder %s16, 0
      %p83 = por %p81, %p82
      %p84 = scmp.ne.s32.totalorder %s76, %s78
      %p85 = scmp.eq.s32.totalorder %s21, 3
      %p86 = por %p84, %p85
      %p87 = scmp.ne.s32.totalorder %s78, %s79
      %p88 = scmp.eq.s32.totalorder %s21, 0
      %p89 = por %p87, %p88
      %p90 = scmp.ne.s32.totalorder %s78, %s79
      %p91 = scmp.eq.s32.totalorder %s22, 3
      %p92 = por %p90, %p91
      %p94 = scmp.ne.s32.totalorder %s79, %s93
      %p95 = scmp.eq.s32.totalorder %s22, 0
      %p96 = por %p94, %p95
      %s98 = sadd.s32 %s97, 1
      %p101 = scmp.eq.s32.totalorder %s16, 3
      %p102 = scmp.ne.s32.totalorder %s97, %s99
      %p103 = scmp.eq.s32.totalorder %s16, 0
      %p104 = por %p102, %p103
      %p105 = scmp.ne.s32.totalorder %s97, %s99
      %p106 = scmp.eq.s32.totalorder %s21, 3
      %p107 = por %p105, %p106
      %p108 = scmp.ne.s32.totalorder %s99, %s100
      %p109 = scmp.eq.s32.totalorder %s21, 0
      %p110 = por %p108, %p109
      %p111 = scmp.ne.s32.totalorder %s99, %s100
      %p112 = scmp.eq.s32.totalorder %s22, 3
      %p113 = por %p111, %p112
      %p115 = scmp.ne.s32.totalorder %s100, %s114
      %p116 = scmp.eq.s32.totalorder %s22, 0
      %p117 = por %p115, %p116
      %s119 = sadd.s32 %s118, 1
      %p122 = scmp.eq.s32.totalorder %s16, 3
      %p123 = scmp.ne.s32.totalorder %s118, %s120
      %p124 = scmp.eq.s32.totalorder %s16, 0
      %p125 = por %p123, %p124
      %p126 = scmp.ne.s32.totalorder %s118, %s120
      %p127 = scmp.eq.s32.totalorder %s21, 3
      %p128 = por %p126, %p127
      %p129 = scmp.ne.s32.totalorder %s120, %s121
      %p130 = scmp.eq.s32.totalorder %s21, 0
      %p131 = por %p129, %p130
      %p132 = scmp.ne.s32.totalorder %s120, %s121
      %p133 = scmp.eq.s32.totalorder %s22, 3
      %p134 = por %p132, %p133
      %p136 = scmp.ne.s32.totalorder %s121, %s135
      %p137 = scmp.eq.s32.totalorder %s22, 0
      %p138 = por %p136, %p137
      %s140 = sadd.s32 %s139, 1
      %p143 = scmp.eq.s32.totalorder %s16, 3
      %p144 = scmp.ne.s32.totalorder %s139, %s141
      %p145 = scmp.eq.s32.totalorder %s16, 0
      %p146 = por %p144, %p145
      %p147 = scmp.ne.s32.totalorder %s139, %s141
      %p148 = scmp.eq.s32.totalorder %s21, 3
      %p149 = por %p147, %p148
      %p150 = scmp.ne.s32.totalorder %s141, %s142
      %p151 = scmp.eq.s32.totalorder %s21, 0
      %p152 = por %p150, %p151
      %p153 = scmp.ne.s32.totalorder %s141, %s142
      %p154 = scmp.eq.s32.totalorder %s22, 3
      %p155 = por %p153, %p154
      %p157 = scmp.ne.s32.totalorder %s142, %s156
      %p158 = scmp.eq.s32.totalorder %s22, 0
      %p159 = por %p157, %p158
      %s161 = sadd.s32 %s160, 1
      %p164 = scmp.eq.s32.totalorder %s16, 3
      %p165 = scmp.ne.s32.totalorder %s160, %s162
      %p166 = scmp.eq.s32.totalorder %s16, 0
      %p167 = por %p165, %p166
      %p168 = scmp.ne.s32.totalorder %s160, %s162
      %p169 = scmp.eq.s32.totalorder %s21, 3
      %p170 = por %p168, %p169
      %p171 = scmp.ne.s32.totalorder %s162, %s163
      %p172 = scmp.eq.s32.totalorder %s21, 0
      %p173 = por %p171, %p172
      %p174 = scmp.ne.s32.totalorder %s162, %s163
      %p175 = scmp.eq.s32.totalorder %s22, 3
      %p176 = por %p174, %p175
      %p178 = scmp.ne.s32.totalorder %s163, %s177
      %p179 = scmp.eq.s32.totalorder %s22, 0
      %p180 = por %p178, %p179
      %s181 = ssub.s32 %s16, %s23
      %p182 = scmp.eq.s32.totalorder %s181, 0
      %s184 = sadd.s32 %s183, 1
      %s185 = scalar_select %p182, %s183, %s184
      %p188 = pneg %p182
      %p189 = scmp.eq.s32.totalorder %s16, 3
      %p190 = por %p188, %p189
      %p191 = scmp.ne.s32.totalorder %s183, %s186
      %p192 = scmp.eq.s32.totalorder %s16, 0
      %p193 = por %p191, %p192
      %p194 = scmp.ne.s32.totalorder %s183, %s186
      %p195 = scmp.eq.s32.totalorder %s21, 3
      %p196 = por %p194, %p195
      %p197 = scmp.ne.s32.totalorder %s186, %s187
      %p198 = scmp.eq.s32.totalorder %s21, 0
      %p199 = por %p197, %p198
      %p200 = scmp.ne.s32.totalorder %s186, %s187
      %p201 = scmp.eq.s32.totalorder %s22, 3
      %p202 = por %p200, %p201
      %p204 = scmp.ne.s32.totalorder %s187, %s203
      %p205 = scmp.eq.s32.totalorder %s22, 0
      %p206 = por %p204, %p205
      %p207 = scmp.le.s32.totalorder 1, %s16
      %p208 = scmp.lt.s32.totalorder %s16, 5
      %p209 = pnand %p207, %p208
      %p210 = pneg %p209
      // Predicated region
      $region9: #{resblock_body.5} parent=5 // pred_check
        _
      $region10: #{resblock_body.5} parent=5 // pred_check_branch
        %212 = sbr.rel (%p209) target = $region12
      $region11: #{resblock_body.5} parent=5 // pred_region
        %s213 = ssub.s32 %s16, 1
        // Predicated region
        $region13: #{resblock_body.5} parent=11 // pred_check
          %p214 = pneg %p89
        $region14: #{resblock_body.5} parent=11 // pred_check_branch
          %216 = sbr.rel (%p214) target = $region16
        $region15: #{resblock_body.5} parent=11 // pred_region
          _
        $region16: #{resblock_body.5} parent=11 // pred_fallthru
          _
        // Predicated region
        $region17: #{resblock_body.5} parent=11 // pred_check
          %p217 = pneg %p110
        $region18: #{resblock_body.5} parent=11 // pred_check_branch
          %219 = sbr.rel (%p217) target = $region20
        $region19: #{resblock_body.5} parent=11 // pred_region
          _
        $region20: #{resblock_body.5} parent=11 // pred_fallthru
          _
        // Predicated region
        $region21: #{resblock_body.5} parent=11 // pred_check
          %p220 = pneg %p131
        $region22: #{resblock_body.5} parent=11 // pred_check_branch
          %222 = sbr.rel (%p220) target = $region24
        $region23: #{resblock_body.5} parent=11 // pred_region
          _
        $region24: #{resblock_body.5} parent=11 // pred_fallthru
          _
        // Predicated region
        $region25: #{resblock_body.5} parent=11 // pred_check
          %p223 = pneg %p152
        $region26: #{resblock_body.5} parent=11 // pred_check_branch
          %225 = sbr.rel (%p223) target = $region28
        $region27: #{resblock_body.5} parent=11 // pred_region
          _
        $region28: #{resblock_body.5} parent=11 // pred_fallthru
          _
        // Predicated region
        $region29: #{resblock_body.5} parent=11 // pred_check
          %p226 = pneg %p173
        $region30: #{resblock_body.5} parent=11 // pred_check_branch
          %228 = sbr.rel (%p226) target = $region32
        $region31: #{resblock_body.5} parent=11 // pred_region
          _
        $region32: #{resblock_body.5} parent=11 // pred_fallthru
          _
      $region12: #{resblock_body.5} parent=5 // pred_fallthru
        _
      %p229 = scmp.lt.s32.totalorder %s16, 4
      // Predicated region
      $region33: #{resblock_body.5} parent=5 // pred_check
        %p230 = pneg %p229
      $region34: #{resblock_body.5} parent=5 // pred_check_branch
        %232 = sbr.rel (%p230) target = $region36
      $region35: #{resblock_body.5} parent=5 // pred_region
        // Predicated region
        $region37: #{resblock_body.5} parent=35 // pred_check
          %p233 = pneg %p36
        $region38: #{resblock_body.5} parent=35 // pred_check_branch
          %235 = sbr.rel (%p233) target = $region40
        $region39: #{resblock_body.5} parent=35 // pred_region
          %p236 = scmp.lt.s32.totalorder %s16, 3
          %s237 = scalar_select %p236, %s16, 3
          %s238 = smul.addr %s237, 21
          %s239 = smul.addr %s238, 8
          %s240 = scalar_lea.vmem %s0, %s239
        $region40: #{resblock_body.5} parent=35 // pred_fallthru
          _
        // Predicated region
        $region41: #{resblock_body.5} parent=35 // pred_check
          %p241 = pneg %p62
        $region42: #{resblock_body.5} parent=35 // pred_check_branch
          %243 = sbr.rel (%p241) target = $region44
        $region43: #{resblock_body.5} parent=35 // pred_region
          %p244 = scmp.lt.s32.totalorder %s16, 3
          %s245 = scalar_select %p244, %s16, 3
          %s246 = smul.addr %s245, 16
          %s247 = smul.addr %s246, 8
          %s248 = scalar_lea.vmem %s1, %s247
        $region44: #{resblock_body.5} parent=35 // pred_fallthru
          _
      $region36: #{resblock_body.5} parent=5 // pred_fallthru
        _
      %p249 = scmp.le.s32.totalorder 1, %s16
      %p250 = scmp.lt.s32.totalorder %s16, 5
      %p251 = pnand %p249, %p250
      %p252 = pneg %p251
      // Predicated region
      $region45: #{resblock_body.5} parent=5 // pred_check
        _
      $region46: #{resblock_body.5} parent=5 // pred_check_branch
        %254 = sbr.rel (%p251) target = $region48
      $region47: #{resblock_body.5} parent=5 // pred_region
        %s255 = ssub.s32 %s16, 1
        %p256 = scmp.lt.s32.totalorder %s21, 3
        %s257 = scalar_select %p256, %s21, 3
        %s258 = smul.addr %s257, 21
        %s259 = smul.addr %s258, 8
        %s260 = scalar_lea.vmem %s0, %s259
        %p261 = pneg %p42
        %p262 = pneg %p39
        %p263 = scmp.lt.s32.totalorder %s21, 3
        %s264 = scalar_select %p263, %s21, 3
        %s265 = smul.addr %s264, 16
        %s266 = smul.addr %s265, 8
        %s267 = scalar_lea.vmem %s1, %s266
        %p268 = pneg %p68
        %p269 = pneg %p65
        %p270 = pneg %p89
        %p271 = pneg %p86
        %p272 = pneg %p110
        %p273 = pneg %p107
        %p274 = pneg %p131
        %p275 = pneg %p128
        %p276 = pneg %p152
        %p277 = pneg %p149
        %p278 = pneg %p173
        %p279 = pneg %p170
        %p280 = pneg %p199
        %p281 = pneg %p196
        %s282 = sand.u32 %s186, 1
        %s283 = scalar_lea.sflag [#allocation3], %s282
        %s284 = sand.u32 %s186, 1
        %s285 = smul.addr %s284, 128
        %s286 = scalar_lea.vmem [#allocation2], %s285
        %p287 = scmp.lt.s32.totalorder %s21, 3
        %s288 = scalar_select %p287, %s21, 3
        %s289 = smul.addr %s288, 21
        %s290 = smul.addr %s289, 8
        %s291 = scalar_lea.vmem %s0, %s290
        %p292 = scmp.lt.s32.totalorder %s21, 3
        %s293 = scalar_select %p292, %s21, 3
        %s294 = smul.addr %s293, 16
        %s295 = smul.addr %s294, 8
        %s296 = scalar_lea.vmem %s1, %s295
        %v297 = vlaneseq
        %v298 = vshrl.u32 %v297, 7
        %v299 = vadd.s32 %v298, 8
        %v300 = vadd.s32 %v298, 16
        %v301 = vadd.s32 %v298, 24
        %v302 = vadd.s32 %v298, 32
        %v303 = vadd.s32 %v298, 40
        %v304 = vadd.s32 %v298, 48
        %v305 = vadd.s32 %v298, 56
        %v306 = vadd.s32 %v298, 64
        %v307 = vadd.s32 %v298, 72
        %v308 = vadd.s32 %v298, 80
        %v309 = vadd.s32 %v298, 88
        %v310 = vadd.s32 %v298, 96
        %v311 = vadd.s32 %v298, 104
        %v312 = vadd.s32 %v298, 112
        %v313 = vadd.s32 %v298, 120
        %vm314 = vcmp.lt.s32.totalorder %v298, 0
        %v315 = vsub.s32 0, %v298
        %v316 = vsel %vm314, %v315, %v298
        %v317 = vshrl.u32 %v316, 4
        %v318 = vand.u32 %v316, 15
        %v319 = vsub.s32 0, %v318
        %v320 = vsel %vm314, %v319, %v318
        %vm321 = vcmp.lt.s32.totalorder %v299, 0
        %v322 = vsub.s32 0, %v299
        %v323 = vsel %vm321, %v322, %v299
        %v324 = vshrl.u32 %v323, 4
        %v325 = vand.u32 %v323, 15
        %v326 = vsub.s32 0, %v325
        %v327 = vsel %vm321, %v326, %v325
        %vm328 = vcmp.lt.s32.totalorder %v300, 0
        %v329 = vsub.s32 0, %v300
        %v330 = vsel %vm328, %v329, %v300
        %v331 = vshrl.u32 %v330, 4
        %v332 = vand.u32 %v330, 15
        %v333 = vsub.s32 0, %v332
        %v334 = vsel %vm328, %v333, %v332
        %vm335 = vcmp.lt.s32.totalorder %v301, 0
        %v336 = vsub.s32 0, %v301
        %v337 = vsel %vm335, %v336, %v301
        %v338 = vshrl.u32 %v337, 4
        %v339 = vand.u32 %v337, 15
        %v340 = vsub.s32 0, %v339
        %v341 = vsel %vm335, %v340, %v339
        %vm342 = vcmp.lt.s32.totalorder %v302, 0
        %v343 = vsub.s32 0, %v302
        %v344 = vsel %vm342, %v343, %v302
        %v345 = vshrl.u32 %v344, 4
        %v346 = vand.u32 %v344, 15
        %v347 = vsub.s32 0, %v346
        %v348 = vsel %vm342, %v347, %v346
        %vm349 = vcmp.lt.s32.totalorder %v303, 0
        %v350 = vsub.s32 0, %v303
        %v351 = vsel %vm349, %v350, %v303
        %v352 = vshrl.u32 %v351, 4
        %v353 = vand.u32 %v351, 15
        %v354 = vsub.s32 0, %v353
        %v355 = vsel %vm349, %v354, %v353
        %vm356 = vcmp.lt.s32.totalorder %v304, 0
        %v357 = vsub.s32 0, %v304
        %v358 = vsel %vm356, %v357, %v304
        %v359 = vshrl.u32 %v358, 4
        %v360 = vand.u32 %v358, 15
        %v361 = vsub.s32 0, %v360
        %v362 = vsel %vm356, %v361, %v360
        %vm363 = vcmp.lt.s32.totalorder %v305, 0
        %v364 = vsub.s32 0, %v305
        %v365 = vsel %vm363, %v364, %v305
        %v366 = vshrl.u32 %v365, 4
        %v367 = vand.u32 %v365, 15
        %v368 = vsub.s32 0, %v367
        %v369 = vsel %vm363, %v368, %v367
        %vm370 = vcmp.lt.s32.totalorder %v306, 0
        %v371 = vsub.s32 0, %v306
        %v372 = vsel %vm370, %v371, %v306
        %v373 = vshrl.u32 %v372, 4
        %v374 = vand.u32 %v372, 15
        %v375 = vsub.s32 0, %v374
        %v376 = vsel %vm370, %v375, %v374
        %vm377 = vcmp.lt.s32.totalorder %v307, 0
        %v378 = vsub.s32 0, %v307
        %v379 = vsel %vm377, %v378, %v307
        %v380 = vshrl.u32 %v379, 4
        %v381 = vand.u32 %v379, 15
        %v382 = vsub.s32 0, %v381
        %v383 = vsel %vm377, %v382, %v381
        %vm384 = vcmp.lt.s32.totalorder %v308, 0
        %v385 = vsub.s32 0, %v308
        %v386 = vsel %vm384, %v385, %v308
        %v387 = vshrl.u32 %v386, 4
        %v388 = vand.u32 %v386, 15
        %v389 = vsub.s32 0, %v388
        %v390 = vsel %vm384, %v389, %v388
        %vm391 = vcmp.lt.s32.totalorder %v309, 0
        %v392 = vsub.s32 0, %v309
        %v393 = vsel %vm391, %v392, %v309
        %v394 = vshrl.u32 %v393, 4
        %v395 = vand.u32 %v393, 15
        %v396 = vsub.s32 0, %v395
        %v397 = vsel %vm391, %v396, %v395
        %vm398 = vcmp.lt.s32.totalorder %v310, 0
        %v399 = vsub.s32 0, %v310
        %v400 = vsel %vm398, %v399, %v310
        %v401 = vshrl.u32 %v400, 4
        %v402 = vand.u32 %v400, 15
        %v403 = vsub.s32 0, %v402
        %v404 = vsel %vm398, %v403, %v402
        %vm405 = vcmp.lt.s32.totalorder %v311, 0
        %v406 = vsub.s32 0, %v311
        %v407 = vsel %vm405, %v406, %v311
        %v408 = vshrl.u32 %v407, 4
        %v409 = vand.u32 %v407, 15
        %v410 = vsub.s32 0, %v409
        %v411 = vsel %vm405, %v410, %v409
        %vm412 = vcmp.lt.s32.totalorder %v312, 0
        %v413 = vsub.s32 0, %v312
        %v414 = vsel %vm412, %v413, %v312
        %v415 = vshrl.u32 %v414, 4
        %v416 = vand.u32 %v414, 15
        %v417 = vsub.s32 0, %v416
        %v418 = vsel %vm412, %v417, %v416
        %vm419 = vcmp.lt.s32.totalorder %v313, 0
        %v420 = vsub.s32 0, %v313
        %v421 = vsel %vm419, %v420, %v313
        %v422 = vshrl.u32 %v421, 4
        %v423 = vand.u32 %v421, 15
        %v424 = vsub.s32 0, %v423
        %v425 = vsel %vm419, %v424, %v423
        %vm426 = vcmp.ne.s32.totalorder %v320, 0
        %vm427 = vcmp.ne.s32.totalorder %v327, 0
        %vm428 = vcmp.ne.s32.totalorder %v334, 0
        %vm429 = vcmp.ne.s32.totalorder %v341, 0
        %vm430 = vcmp.ne.s32.totalorder %v348, 0
        %vm431 = vcmp.ne.s32.totalorder %v355, 0
        %vm432 = vcmp.ne.s32.totalorder %v362, 0
        %vm433 = vcmp.ne.s32.totalorder %v369, 0
        %vm434 = vcmp.ne.s32.totalorder %v376, 0
        %vm435 = vcmp.ne.s32.totalorder %v383, 0
        %vm436 = vcmp.ne.s32.totalorder %v390, 0
        %vm437 = vcmp.ne.s32.totalorder %v397, 0
        %vm438 = vcmp.ne.s32.totalorder %v404, 0
        %vm439 = vcmp.ne.s32.totalorder %v411, 0
        %vm440 = vcmp.ne.s32.totalorder %v418, 0
        %vm441 = vcmp.ne.s32.totalorder %v425, 0
        %vm442 = vcmp.lt.s32.totalorder %v320, 0
        %vm443 = vcmp.lt.s32.totalorder %v327, 0
        %vm444 = vcmp.lt.s32.totalorder %v334, 0
        %vm445 = vcmp.lt.s32.totalorder %v341, 0
        %vm446 = vcmp.lt.s32.totalorder %v348, 0
        %vm447 = vcmp.lt.s32.totalorder %v355, 0
        %vm448 = vcmp.lt.s32.totalorder %v362, 0
        %vm449 = vcmp.lt.s32.totalorder %v369, 0
        %vm450 = vcmp.lt.s32.totalorder %v376, 0
        %vm451 = vcmp.lt.s32.totalorder %v383, 0
        %vm452 = vcmp.lt.s32.totalorder %v390, 0
        %vm453 = vcmp.lt.s32.totalorder %v397, 0
        %vm454 = vcmp.lt.s32.totalorder %v404, 0
        %vm455 = vcmp.lt.s32.totalorder %v411, 0
        %vm456 = vcmp.lt.s32.totalorder %v418, 0
        %vm457 = vcmp.lt.s32.totalorder %v425, 0
        %vm458 = vmand %vm442, %vm426
        %vm459 = vmand %vm443, %vm427
        %vm460 = vmand %vm444, %vm428
        %vm461 = vmand %vm445, %vm429
        %vm462 = vmand %vm446, %vm430
        %vm463 = vmand %vm447, %vm431
        %vm464 = vmand %vm448, %vm432
        %vm465 = vmand %vm449, %vm433
        %vm466 = vmand %vm450, %vm434
        %vm467 = vmand %vm451, %vm435
        %vm468 = vmand %vm452, %vm436
        %vm469 = vmand %vm453, %vm437
        %vm470 = vmand %vm454, %vm438
        %vm471 = vmand %vm455, %vm439
        %vm472 = vmand %vm456, %vm440
        %vm473 = vmand %vm457, %vm441
        %v474 = vadd.s32 %v320, 16
        %v475 = vadd.s32 %v327, 16
        %v476 = vadd.s32 %v334, 16
        %v477 = vadd.s32 %v341, 16
        %v478 = vadd.s32 %v348, 16
        %v479 = vadd.s32 %v355, 16
        %v480 = vadd.s32 %v362, 16
        %v481 = vadd.s32 %v369, 16
        %v482 = vadd.s32 %v376, 16
        %v483 = vadd.s32 %v383, 16
        %v484 = vadd.s32 %v390, 16
        %v485 = vadd.s32 %v397, 16
        %v486 = vadd.s32 %v404, 16
        %v487 = vadd.s32 %v411, 16
        %v488 = vadd.s32 %v418, 16
        %v489 = vadd.s32 %v425, 16
        %v490 = vsel %vm458, %v474, %v320
        %v491 = vsel %vm459, %v475, %v327
        %v492 = vsel %vm460, %v476, %v334
        %v493 = vsel %vm461, %v477, %v341
        %v494 = vsel %vm462, %v478, %v348
        %v495 = vsel %vm463, %v479, %v355
        %v496 = vsel %vm464, %v480, %v362
        %v497 = vsel %vm465, %v481, %v369
        %v498 = vsel %vm466, %v482, %v376
        %v499 = vsel %vm467, %v483, %v383
        %v500 = vsel %vm468, %v484, %v390
        %v501 = vsel %vm469, %v485, %v397
        %v502 = vsel %vm470, %v486, %v404
        %v503 = vsel %vm471, %v487, %v411
        %v504 = vsel %vm472, %v488, %v418
        %v505 = vsel %vm473, %v489, %v425
        %vm506 = vcmp.ne.s32.totalorder %v490, 0
        %vm507 = vcmp.ne.s32.totalorder %v491, 0
        %vm508 = vcmp.ne.s32.totalorder %v492, 0
        %vm509 = vcmp.ne.s32.totalorder %v493, 0
        %vm510 = vcmp.ne.s32.totalorder %v494, 0
        %vm511 = vcmp.ne.s32.totalorder %v495, 0
        %vm512 = vcmp.ne.s32.totalorder %v496, 0
        %vm513 = vcmp.ne.s32.totalorder %v497, 0
        %vm514 = vcmp.ne.s32.totalorder %v498, 0
        %vm515 = vcmp.ne.s32.totalorder %v499, 0
        %vm516 = vcmp.ne.s32.totalorder %v500, 0
        %vm517 = vcmp.ne.s32.totalorder %v501, 0
        %vm518 = vcmp.ne.s32.totalorder %v502, 0
        %vm519 = vcmp.ne.s32.totalorder %v503, 0
        %vm520 = vcmp.ne.s32.totalorder %v504, 0
        %vm521 = vcmp.ne.s32.totalorder %v505, 0
        %vm522 = vcmp.ne.s32.totalorder %v490, 15
        %vm523 = vcmp.ne.s32.totalorder %v491, 15
        %vm524 = vcmp.ne.s32.totalorder %v492, 15
        %vm525 = vcmp.ne.s32.totalorder %v493, 15
        %vm526 = vcmp.ne.s32.totalorder %v494, 15
        %vm527 = vcmp.ne.s32.totalorder %v495, 15
        %vm528 = vcmp.ne.s32.totalorder %v496, 15
        %vm529 = vcmp.ne.s32.totalorder %v497, 15
        %vm530 = vcmp.ne.s32.totalorder %v498, 15
        %vm531 = vcmp.ne.s32.totalorder %v499, 15
        %vm532 = vcmp.ne.s32.totalorder %v500, 15
        %vm533 = vcmp.ne.s32.totalorder %v501, 15
        %vm534 = vcmp.ne.s32.totalorder %v502, 15
        %vm535 = vcmp.ne.s32.totalorder %v503, 15
        %vm536 = vcmp.ne.s32.totalorder %v504, 15
        %vm537 = vcmp.ne.s32.totalorder %v505, 15
        %v538 = vld [vmem:[%s291] sm:$0xff]
        %v539 = vld [vmem:[%s291 + $0x8] sm:$0xff]
        %v540 = vld [vmem:[%s291 + $0x10] sm:$0xff]
        %v541 = vld [vmem:[%s291 + $0x18] sm:$0xff]
        %v542 = vld [vmem:[%s291 + $0x20] sm:$0xff]
        %v543 = vld [vmem:[%s291 + $0x28] sm:$0xff]
        %v544 = vld [vmem:[%s291 + $0x30] sm:$0xff]
        %v545 = vld [vmem:[%s291 + $0x38] sm:$0xff]
        %v546 = vld [vmem:[%s291 + $0x40] sm:$0xff]
        %v547 = vld [vmem:[%s291 + $0x48] sm:$0xff]
        %v548 = vld [vmem:[%s291 + $0x50] sm:$0xff]
        %v549 = vld [vmem:[%s291 + $0x58] sm:$0xff]
        %v550 = vld [vmem:[%s291 + $0x60] sm:$0xff]
        %v551 = vld [vmem:[%s291 + $0x68] sm:$0xff]
        %v552 = vld [vmem:[%s291 + $0x70] sm:$0xff]
        %v553 = vld [vmem:[%s291 + $0x78] sm:$0xff]
        %v554 = vld [vmem:[%s2] sm:$0xf]
        %vm555 = vcmask 31744
        %v557 = vsel %vm555, %v538, 0
        %v560 = vsel %vm555, %v539, 0
        %v563 = vsel %vm555, %v540, 0
        %v566 = vsel %vm555, %v541, 0
        %v569 = vsel %vm555, %v542, 0
        %v572 = vsel %vm555, %v543, 0
        %v575 = vsel %vm555, %v544, 0
        %v578 = vsel %vm555, %v545, 0
        %v581 = vsel %vm555, %v546, 0
        %v584 = vsel %vm555, %v547, 0
        %v587 = vsel %vm555, %v548, 0
        %v590 = vsel %vm555, %v549, 0
        %v593 = vsel %vm555, %v550, 0
        %v596 = vsel %vm555, %v551, 0
        %v599 = vsel %vm555, %v552, 0
        %v602 = vsel %vm555, %v553, 0
        %vm604 = vcmask 1043456
        %v606 = vsel %vm604, %v554, 0
        %608 = vmatprep.subr.mxu0 0.0
        %609 = vmatpush1.msra.mxu0 %v606
        %610 = vmatprep.subr.mxu0 0.0
        %611 = vmatpush1.msra.mxu0 0.0
        %612 = vmatprep.subr.mxu0 0.0
        %613 = vmatpush1.msra.mxu0 0.0
        %614 = vmatprep.subr.mxu0 0.0
        %615 = vmatpush1.msra.mxu0 0.0
        %616 = vmatprep.subr.mxu0 0.0
        %617 = vmatpush1.msra.mxu0 0.0
        %618 = vmatprep.subr.mxu0 0.0
        %619 = vmatpush1.msra.mxu0 0.0
        %620 = vmatprep.subr.mxu0 0.0
        %621 = vmatpush1.msra.mxu0 0.0
        %622 = vmatprep.subr.mxu0 0.0
        %623 = vmatpush1.msra.mxu0 0.0
        %624 = vmatprep.subr.mxu0 0.0
        %625 = vmatpush1.msra.mxu0 0.0
        %626 = vmatprep.subr.mxu0 0.0
        %627 = vmatpush1.msra.mxu0 0.0
        %628 = vmatprep.subr.mxu0 0.0
        %629 = vmatpush1.msra.mxu0 0.0
        %630 = vmatprep.subr.mxu0 0.0
        %631 = vmatpush1.msra.mxu0 0.0
        %632 = vmatprep.subr.mxu0 0.0
        %633 = vmatpush1.msra.mxu0 0.0
        %634 = vmatprep.subr.mxu0 0.0
        %635 = vmatpush1.msra.mxu0 0.0
        %636 = vmatprep.subr.mxu0 0.0
        %637 = vmatpush1.msra.mxu0 0.0
        %638 = vmatprep.subr.mxu0 0.0
        %639 = vmatpush1.msra.mxu0 0.0
        %640 = vmatprep.subr.mxu0 0.0
        %641 = vmatpush1.msra.mxu0 0.0
        %642 = vmatprep.subr.mxu0 0.0
        %643 = vmatpush1.msra.mxu0 0.0
        %644 = vmatprep.subr.mxu0 0.0
        %645 = vmatpush1.msra.mxu0 0.0
        %646 = vmatprep.subr.mxu0 0.0
        %647 = vmatpush1.msra.mxu0 0.0
        %648 = vmatprep.subr.mxu0 0.0
        %649 = vmatpush1.msra.mxu0 0.0
        %650 = vmatprep.subr.mxu0 0.0
        %651 = vmatpush1.msra.mxu0 0.0
        %652 = vmatprep.subr.mxu0 0.0
        %653 = vmatpush1.msra.mxu0 0.0
        %654 = vmatprep.subr.mxu0 0.0
        %655 = vmatpush1.msra.mxu0 0.0
        %656 = vmatprep.subr.mxu0 0.0
        %657 = vmatpush1.msra.mxu0 0.0
        %658 = vmatprep.subr.mxu0 0.0
        %659 = vmatpush1.msra.mxu0 0.0
        %660 = vmatprep.subr.mxu0 0.0
        %661 = vmatpush1.msra.mxu0 0.0
        %662 = vmatprep.subr.mxu0 0.0
        %663 = vmatpush1.msra.mxu0 0.0
        %664 = vmatprep.subr.mxu0 0.0
        %665 = vmatpush1.msra.mxu0 0.0
        %666 = vmatprep.subr.mxu0 0.0
        %667 = vmatpush1.msra.mxu0 0.0
        %668 = vmatprep.subr.mxu0 0.0
        %669 = vmatpush1.msra.mxu0 0.0
        %670 = vmatprep.subr.mxu0 0.0
        %671 = vmatpush1.msra.mxu0 0.0
        %672 = vmatprep.mubr.f32.mxu0 0.0
        %673 = vmatmul.mubr.f32.gmra.mrb[0].mxu0 %v557
        %v674 = vpop.f32.mrb[0].mxu0
        %v675 = vadd.f32 0.0, %v674
        %v676 = vpop.f32.mrb[0].mxu0
        %677 = vmatprep.mubr.f32.mxu0 0.0
        %678 = vmatmul.mubr.f32.gmra.mrb[0].mxu0 %v560
        %v679 = vpop.f32.mrb[0].mxu0
        %v680 = vadd.f32 0.0, %v679
        %v681 = vpop.f32.mrb[0].mxu0
        %682 = vmatprep.mubr.f32.mxu0 0.0
        %683 = vmatmul.mubr.f32.gmra.mrb[0].mxu0 %v563
        %v684 = vpop.f32.mrb[0].mxu0
        %v685 = vadd.f32 0.0, %v684
        %v686 = vpop.f32.mrb[0].mxu0
        %687 = vmatprep.mubr.f32.mxu0 0.0
        %688 = vmatmul.mubr.f32.gmra.mrb[0].mxu0 %v566
        %v689 = vpop.f32.mrb[0].mxu0
        %v690 = vadd.f32 0.0, %v689
        %v691 = vpop.f32.mrb[0].mxu0
        %692 = vmatprep.mubr.f32.mxu0 0.0
        %693 = vmatmul.mubr.f32.gmra.mrb[0].mxu0 %v569
        %v694 = vpop.f32.mrb[0].mxu0
        %v695 = vadd.f32 0.0, %v694
        %v696 = vpop.f32.mrb[0].mxu0
        %697 = vmatprep.mubr.f32.mxu0 0.0
        %698 = vmatmul.mubr.f32.gmra.mrb[0].mxu0 %v572
        %v699 = vpop.f32.mrb[0].mxu0
        %v700 = vadd.f32 0.0, %v699
        %v701 = vpop.f32.mrb[0].mxu0
        %702 = vmatprep.mubr.f32.mxu0 0.0
        %703 = vmatmul.mubr.f32.gmra.mrb[0].mxu0 %v575
        %v704 = vpop.f32.mrb[0].mxu0
        %v705 = vadd.f32 0.0, %v704
        %v706 = vpop.f32.mrb[0].mxu0
        %707 = vmatprep.mubr.f32.mxu0 0.0
        %708 = vmatmul.mubr.f32.gmra.mrb[0].mxu0 %v578
        %v709 = vpop.f32.mrb[0].mxu0
        %v710 = vadd.f32 0.0, %v709
        %v711 = vpop.f32.mrb[0].mxu0
        %712 = vmatprep.mubr.f32.mxu0 0.0
        %713 = vmatmul.mubr.f32.gmra.mrb[0].mxu0 %v581
        %v714 = vpop.f32.mrb[0].mxu0
        %v715 = vadd.f32 0.0, %v714
        %v716 = vpop.f32.mrb[0].mxu0
        %717 = vmatprep.mubr.f32.mxu0 0.0
        %718 = vmatmul.mubr.f32.gmra.mrb[0].mxu0 %v584
        %v719 = vpop.f32.mrb[0].mxu0
        %v720 = vadd.f32 0.0, %v719
        %v721 = vpop.f32.mrb[0].mxu0
        %722 = vmatprep.mubr.f32.mxu0 0.0
        %723 = vmatmul.mubr.f32.gmra.mrb[0].mxu0 %v587
        %v724 = vpop.f32.mrb[0].mxu0
        %v725 = vadd.f32 0.0, %v724
        %v726 = vpop.f32.mrb[0].mxu0
        %727 = vmatprep.mubr.f32.mxu0 0.0
        %728 = vmatmul.mubr.f32.gmra.mrb[0].mxu0 %v590
        %v729 = vpop.f32.mrb[0].mxu0
        %v730 = vadd.f32 0.0, %v729
        %v731 = vpop.f32.mrb[0].mxu0
        %732 = vmatprep.mubr.f32.mxu0 0.0
        %733 = vmatmul.mubr.f32.gmra.mrb[0].mxu0 %v593
        %v734 = vpop.f32.mrb[0].mxu0
        %v735 = vadd.f32 0.0, %v734
        %v736 = vpop.f32.mrb[0].mxu0
        %737 = vmatprep.mubr.f32.mxu0 0.0
        %738 = vmatmul.mubr.f32.gmra.mrb[0].mxu0 %v596
        %v739 = vpop.f32.mrb[0].mxu0
        %v740 = vadd.f32 0.0, %v739
        %v741 = vpop.f32.mrb[0].mxu0
        %742 = vmatprep.mubr.f32.mxu0 0.0
        %743 = vmatmul.mubr.f32.gmra.mrb[0].mxu0 %v599
        %v744 = vpop.f32.mrb[0].mxu0
        %v745 = vadd.f32 0.0, %v744
        %v746 = vpop.f32.mrb[0].mxu0
        %747 = vmatprep.mubr.f32.mxu0 0.0
        %748 = vmatmul.mubr.f32.gmra.mrb[0].mxu0 %v602
        %v749 = vpop.f32.mrb[0].mxu0
        %v750 = vadd.f32 0.0, %v749
        %v751 = vpop.f32.mrb[0].mxu0
        %752 = vdwg.mxu0
        %v753 = vsel %vm506, 1, 0
        %v754 = vsel %vm507, 1, 0
        %v755 = vsel %vm508, 1, 0
        %v756 = vsel %vm509, 1, 0
        %v757 = vsel %vm510, 1, 0
        %v758 = vsel %vm511, 1, 0
        %v759 = vsel %vm512, 1, 0
        %v760 = vsel %vm513, 1, 0
        %v761 = vsel %vm514, 1, 0
        %v762 = vsel %vm515, 1, 0
        %v763 = vsel %vm516, 1, 0
        %v764 = vsel %vm517, 1, 0
        %v765 = vsel %vm518, 1, 0
        %v766 = vsel %vm519, 1, 0
        %v767 = vsel %vm520, 1, 0
        %v768 = vsel %vm521, 1, 0
        %vm769 = vcmp.eq.s32.totalorder %v753, 1
        %vm770 = vcmp.eq.s32.totalorder %v754, 1
        %vm771 = vcmp.eq.s32.totalorder %v755, 1
        %vm772 = vcmp.eq.s32.totalorder %v756, 1
        %vm773 = vcmp.eq.s32.totalorder %v757, 1
        %vm774 = vcmp.eq.s32.totalorder %v758, 1
        %vm775 = vcmp.eq.s32.totalorder %v759, 1
        %vm776 = vcmp.eq.s32.totalorder %v760, 1
        %vm777 = vcmp.eq.s32.totalorder %v761, 1
        %vm778 = vcmp.eq.s32.totalorder %v762, 1
        %vm779 = vcmp.eq.s32.totalorder %v763, 1
        %vm780 = vcmp.eq.s32.totalorder %v764, 1
        %vm781 = vcmp.eq.s32.totalorder %v765, 1
        %vm782 = vcmp.eq.s32.totalorder %v766, 1
        %vm783 = vcmp.eq.s32.totalorder %v767, 1
        %vm784 = vcmp.eq.s32.totalorder %v768, 1
        %v785 = vsel %vm769, %v675, 0.0
        %v786 = vsel %vm770, %v680, 0.0
        %v787 = vsel %vm771, %v685, 0.0
        %v788 = vsel %vm772, %v690, 0.0
        %v789 = vsel %vm773, %v695, 0.0
        %v790 = vsel %vm774, %v700, 0.0
        %v791 = vsel %vm775, %v705, 0.0
        %v792 = vsel %vm776, %v710, 0.0
        %v793 = vsel %vm777, %v715, 0.0
        %v794 = vsel %vm778, %v720, 0.0
        %v795 = vsel %vm779, %v725, 0.0
        %v796 = vsel %vm780, %v730, 0.0
        %v797 = vsel %vm781, %v735, 0.0
        %v798 = vsel %vm782, %v740, 0.0
        %v799 = vsel %vm783, %v745, 0.0
        %v800 = vsel %vm784, %v750, 0.0
        %v801 = vadd.f32 %v785, 0.0
        %v802 = vadd.f32 %v786, 0.0
        %v803 = vadd.f32 %v787, 0.0
        %v804 = vadd.f32 %v788, 0.0
        %v805 = vadd.f32 %v789, 0.0
        %v806 = vadd.f32 %v790, 0.0
        %v807 = vadd.f32 %v791, 0.0
        %v808 = vadd.f32 %v792, 0.0
        %v809 = vadd.f32 %v793, 0.0
        %v810 = vadd.f32 %v794, 0.0
        %v811 = vadd.f32 %v795, 0.0
        %v812 = vadd.f32 %v796, 0.0
        %v813 = vadd.f32 %v797, 0.0
        %v814 = vadd.f32 %v798, 0.0
        %v815 = vadd.f32 %v799, 0.0
        %v816 = vadd.f32 %v800, 0.0
        %v817 = vld [vmem:[%s291 + $0x1] sm:$0xff]
        %v818 = vld [vmem:[%s291 + $0x9] sm:$0xff]
        %v819 = vld [vmem:[%s291 + $0x11] sm:$0xff]
        %v820 = vld [vmem:[%s291 + $0x19] sm:$0xff]
        %v821 = vld [vmem:[%s291 + $0x21] sm:$0xff]
        %v822 = vld [vmem:[%s291 + $0x29] sm:$0xff]
        %v823 = vld [vmem:[%s291 + $0x31] sm:$0xff]
        %v824 = vld [vmem:[%s291 + $0x39] sm:$0xff]
        %v825 = vld [vmem:[%s291 + $0x41] sm:$0xff]
        %v826 = vld [vmem:[%s291 + $0x49] sm:$0xff]
        %v827 = vld [vmem:[%s291 + $0x51] sm:$0xff]
        %v828 = vld [vmem:[%s291 + $0x59] sm:$0xff]
        %v829 = vld [vmem:[%s291 + $0x61] sm:$0xff]
        %v830 = vld [vmem:[%s291 + $0x69] sm:$0xff]
        %v831 = vld [vmem:[%s291 + $0x71] sm:$0xff]
        %v832 = vld [vmem:[%s291 + $0x79] sm:$0xff]
        %s833 = scalar_lea.vmem %s2, 4
        %v834 = vld [vmem:[%s833] sm:$0xf]
        %v836 = vsel %vm555, %v817, 0
        %v839 = vsel %vm555, %v818, 0
        %v842 = vsel %vm555, %v819, 0
        %v845 = vsel %vm555, %v820, 0
        %v848 = vsel %vm555, %v821, 0
        %v851 = vsel %vm555, %v822, 0
        %v854 = vsel %vm555, %v823, 0
        %v857 = vsel %vm555, %v824, 0
        %v860 = vsel %vm555, %v825, 0
        %v863 = vsel %vm555, %v826, 0
        %v866 = vsel %vm555, %v827, 0
        %v869 = vsel %vm555, %v828, 0
        %v872 = vsel %vm555, %v829, 0
        %v875 = vsel %vm555, %v830, 0
        %v878 = vsel %vm555, %v831, 0
        %v881 = vsel %vm555, %v832, 0
        %v884 = vsel %vm604, %v834, 0
        %886 = vmatprep.subr.mxu0 0.0
        %887 = vmatpush1.msra.mxu0 %v884
        %888 = vmatprep.subr.mxu0 0.0
        %889 = vmatpush1.msra.mxu0 0.0
        %890 = vmatprep.subr.mxu0 0.0
        %891 = vmatpush1.msra.mxu0 0.0
        %892 = vmatprep.subr.mxu0 0.0
        %893 = vmatpush1.msra.mxu0 0.0
        %894 = vmatprep.subr.mxu0 0.0
        %895 = vmatpush1.msra.mxu0 0.0
        %896 = vmatprep.subr.mxu0 0.0
        %897 = vmatpush1.msra.mxu0 0.0
        %898 = vmatprep.subr.mxu0 0.0
        %899 = vmatpush1.msra.mxu0 0.0
        %900 = vmatprep.subr.mxu0 0.0
        %901 = vmatpush1.msra.mxu0 0.0
        %902 = vmatprep.subr.mxu0 0.0
        %903 = vmatpush1.msra.mxu0 0.0
        %904 = vmatprep.subr.mxu0 0.0
        %905 = vmatpush1.msra.mxu0 0.0
        %906 = vmatprep.subr.mxu0 0.0
        %907 = vmatpush1.msra.mxu0 0.0
        %908 = vmatprep.subr.mxu0 0.0
        %909 = vmatpush1.msra.mxu0 0.0
        %910 = vmatprep.subr.mxu0 0.0
        %911 = vmatpush1.msra.mxu0 0.0
        %912 = vmatprep.subr.mxu0 0.0
        %913 = vmatpush1.msra.mxu0 0.0
        %914 = vmatprep.subr.mxu0 0.0
        %915 = vmatpush1.msra.mxu0 0.0
        %916 = vmatprep.subr.mxu0 0.0
        %917 = vmatpush1.msra.mxu0 0.0
        %918 = vmatprep.subr.mxu0 0.0
        %919 = vmatpush1.msra.mxu0 0.0
        %920 = vmatprep.subr.mxu0 0.0
        %921 = vmatpush1.msra.mxu0 0.0
        %922 = vmatprep.subr.mxu0 0.0
        %923 = vmatpush1.msra.mxu0 0.0
        %924 = vmatprep.subr.mxu0 0.0
        %925 = vmatpush1.msra.mxu0 0.0
        %926 = vmatprep.subr.mxu0 0.0
        %927 = vmatpush1.msra.mxu0 0.0
        %928 = vmatprep.subr.mxu0 0.0
        %929 = vmatpush1.msra.mxu0 0.0
        %930 = vmatprep.subr.mxu0 0.0
        %931 = vmatpush1.msra.mxu0 0.0
        %932 = vmatprep.subr.mxu0 0.0
        %933 = vmatpush1.msra.mxu0 0.0
        %934 = vmatprep.subr.mxu0 0.0
        %935 = vmatpush1.msra.mxu0 0.0
        %936 = vmatprep.subr.mxu0 0.0
        %937 = vmatpush1.msra.mxu0 0.0
        %938 = vmatprep.subr.mxu0 0.0
        %939 = vmatpush1.msra.mxu0 0.0
        %940 = vmatprep.subr.mxu0 0.0
        %941 = vmatpush1.msra.mxu0 0.0
        %942 = vmatprep.subr.mxu0 0.0
        %943 = vmatpush1.msra.mxu0 0.0
        %944 = vmatprep.subr.mxu0 0.0
        %945 = vmatpush1.msra.mxu0 0.0
        %946 = vmatprep.subr.mxu0 0.0
        %947 = vmatpush1.msra.mxu0 0.0
        %948 = vmatprep.subr.mxu0 0.0
        %949 = vmatpush1.msra.mxu0 0.0
        %950 = vmatprep.mubr.f32.mxu0 0.0
        %951 = vmatmul.mubr.f32.gmra.mrb[0].mxu0 %v836
        %v952 = vpop.f32.mrb[0].mxu0
        %v953 = vadd.f32 0.0, %v952
        %v954 = vpop.f32.mrb[0].mxu0
        %955 = vmatprep.mubr.f32.mxu0 0.0
        %956 = vmatmul.mubr.f32.gmra.mrb[0].mxu0 %v839
        %v957 = vpop.f32.mrb[0].mxu0
        %v958 = vadd.f32 0.0, %v957
        %v959 = vpop.f32.mrb[0].mxu0
        %960 = vmatprep.mubr.f32.mxu0 0.0
        %961 = vmatmul.mubr.f32.gmra.mrb[0].mxu0 %v842
        %v962 = vpop.f32.mrb[0].mxu0
        %v963 = vadd.f32 0.0, %v962
        %v964 = vpop.f32.mrb[0].mxu0
        %965 = vmatprep.mubr.f32.mxu0 0.0
        %966 = vmatmul.mubr.f32.gmra.mrb[0].mxu0 %v845
        %v967 = vpop.f32.mrb[0].mxu0
        %v968 = vadd.f32 0.0, %v967
        %v969 = vpop.f32.mrb[0].mxu0
        %970 = vmatprep.mubr.f32.mxu0 0.0
        %971 = vmatmul.mubr.f32.gmra.mrb[0].mxu0 %v848
        %v972 = vpop.f32.mrb[0].mxu0
        %v973 = vadd.f32 0.0, %v972
        %v974 = vpop.f32.mrb[0].mxu0
        %975 = vmatprep.mubr.f32.mxu0 0.0
        %976 = vmatmul.mubr.f32.gmra.mrb[0].mxu0 %v851
        %v977 = vpop.f32.mrb[0].mxu0
        %v978 = vadd.f32 0.0, %v977
        %v979 = vpop.f32.mrb[0].mxu0
        %980 = vmatprep.mubr.f32.mxu0 0.0
        %981 = vmatmul.mubr.f32.gmra.mrb[0].mxu0 %v854
        %v982 = vpop.f32.mrb[0].mxu0
        %v983 = vadd.f32 0.0, %v982
        %v984 = vpop.f32.mrb[0].mxu0
        %985 = vmatprep.mubr.f32.mxu0 0.0
        %986 = vmatmul.mubr.f32.gmra.mrb[0].mxu0 %v857
        %v987 = vpop.f32.mrb[0].mxu0
        %v988 = vadd.f32 0.0, %v987
        %v989 = vpop.f32.mrb[0].mxu0
        %990 = vmatprep.mubr.f32.mxu0 0.0
        %991 = vmatmul.mubr.f32.gmra.mrb[0].mxu0 %v860
        %v992 = vpop.f32.mrb[0].mxu0
        %v993 = vadd.f32 0.0, %v992
        %v994 = vpop.f32.mrb[0].mxu0
        %995 = vmatprep.mubr.f32.mxu0 0.0
        %996 = vmatmul.mubr.f32.gmra.mrb[0].mxu0 %v863
        %v997 = vpop.f32.mrb[0].mxu0
        %v998 = vadd.f32 0.0, %v997
        %v999 = vpop.f32.mrb[0].mxu0
        %1000 = vmatprep.mubr.f32.mxu0 0.0
        %1001 = vmatmul.mubr.f32.gmra.mrb[0].mxu0 %v866
        %v1002 = vpop.f32.mrb[0].mxu0
        %v1003 = vadd.f32 0.0, %v1002
        %v1004 = vpop.f32.mrb[0].mxu0
        %1005 = vmatprep.mubr.f32.mxu0 0.0
        %1006 = vmatmul.mubr.f32.gmra.mrb[0].mxu0 %v869
        %v1007 = vpop.f32.mrb[0].mxu0
        %v1008 = vadd.f32 0.0, %v1007
        %v1009 = vpop.f32.mrb[0].mxu0
        %1010 = vmatprep.mubr.f32.mxu0 0.0
        %1011 = vmatmul.mubr.f32.gmra.mrb[0].mxu0 %v872
        %v1012 = vpop.f32.mrb[0].mxu0
        %v1013 = vadd.f32 0.0, %v1012
        %v1014 = vpop.f32.mrb[0].mxu0
        %1015 = vmatprep.mubr.f32.mxu0 0.0
        %1016 = vmatmul.mubr.f32.gmra.mrb[0].mxu0 %v875
        %v1017 = vpop.f32.mrb[0].mxu0
        %v1018 = vadd.f32 0.0, %v1017
        %v1019 = vpop.f32.mrb[0].mxu0
        %1020 = vmatprep.mubr.f32.mxu0 0.0
        %1021 = vmatmul.mubr.f32.gmra.mrb[0].mxu0 %v878
        %v1022 = vpop.f32.mrb[0].mxu0
        %v1023 = vadd.f32 0.0, %v1022
        %v1024 = vpop.f32.mrb[0].mxu0
        %1025 = vmatprep.mubr.f32.mxu0 0.0
        %1026 = vmatmul.mubr.f32.gmra.mrb[0].mxu0 %v881
        %v1027 = vpop.f32.mrb[0].mxu0
        %v1028 = vadd.f32 0.0, %v1027
        %v1029 = vpop.f32.mrb[0].mxu0
        %1030 = vdwg.mxu0
        %v1031 = vadd.f32 %v801, %v953
        %v1032 = vadd.f32 %v802, %v958
        %v1033 = vadd.f32 %v803, %v963
        %v1034 = vadd.f32 %v804, %v968
        %v1035 = vadd.f32 %v805, %v973
        %v1036 = vadd.f32 %v806, %v978
        %v1037 = vadd.f32 %v807, %v983
        %v1038 = vadd.f32 %v808, %v988
        %v1039 = vadd.f32 %v809, %v993
        %v1040 = vadd.f32 %v810, %v998
        %v1041 = vadd.f32 %v811, %v1003
        %v1042 = vadd.f32 %v812, %v1008
        %v1043 = vadd.f32 %v813, %v1013
        %v1044 = vadd.f32 %v814, %v1018
        %v1045 = vadd.f32 %v815, %v1023
        %v1046 = vadd.f32 %v816, %v1028
        %v1047 = vld [vmem:[%s291 + $0x2] sm:$0xff]
        %v1048 = vld [vmem:[%s291 + $0xa] sm:$0xff]
        %v1049 = vld [vmem:[%s291 + $0x12] sm:$0xff]
        %v1050 = vld [vmem:[%s291 + $0x1a] sm:$0xff]
        %v1051 = vld [vmem:[%s291 + $0x22] sm:$0xff]
        %v1052 = vld [vmem:[%s291 + $0x2a] sm:$0xff]
        %v1053 = vld [vmem:[%s291 + $0x32] sm:$0xff]
        %v1054 = vld [vmem:[%s291 + $0x3a] sm:$0xff]
        %v1055 = vld [vmem:[%s291 + $0x42] sm:$0xff]
        %v1056 = vld [vmem:[%s291 + $0x4a] sm:$0xff]
        %v1057 = vld [vmem:[%s291 + $0x52] sm:$0xff]
        %v1058 = vld [vmem:[%s291 + $0x5a] sm:$0xff]
        %v1059 = vld [vmem:[%s291 + $0x62] sm:$0xff]
        %v1060 = vld [vmem:[%s291 + $0x6a] sm:$0xff]
        %v1061 = vld [vmem:[%s291 + $0x72] sm:$0xff]
        %v1062 = vld [vmem:[%s291 + $0x7a] sm:$0xff]
        %s1063 = scalar_lea.vmem %s2, 8
        %v1064 = vld [vmem:[%s1063] sm:$0xf]
        %v1066 = vsel %vm555, %v1047, 0
        %v1069 = vsel %vm555, %v1048, 0
        %v1072 = vsel %vm555, %v1049, 0
        %v1075 = vsel %vm555, %v1050, 0
        %v1078 = vsel %vm555, %v1051, 0
        %v1081 = vsel %vm555, %v1052, 0
        %v1084 = vsel %vm555, %v1053, 0
        %v1087 = vsel %vm555, %v1054, 0
        %v1090 = vsel %vm555, %v1055, 0
        %v1093 = vsel %vm555, %v1056, 0
        %v1096 = vsel %vm555, %v1057, 0
        %v1099 = vsel %vm555, %v1058, 0
        %v1102 = vsel %vm555, %v1059, 0
        %v1105 = vsel %vm555, %v1060, 0
        %v1108 = vsel %vm555, %v1061, 0
        %v1111 = vsel %vm555, %v1062, 0
        %v1114 = vsel %vm604, %v1064, 0
        %1116 = vmatprep.subr.mxu0 0.0
        %1117 = vmatpush1.msra.mxu0 %v1114
        %1118 = vmatprep.subr.mxu0 0.0
        %1119 = vmatpush1.msra.mxu0 0.0
        %1120 = vmatprep.subr.mxu0 0.0
        %1121 = vmatpush1.msra.mxu0 0.0
        %1122 = vmatprep.subr.mxu0 0.0
        %1123 = vmatpush1.msra.mxu0 0.0
        %1124 = vmatprep.subr.mxu0 0.0
        %1125 = vmatpush1.msra.mxu0 0.0
        %1126 = vmatprep.subr.mxu0 0.0
        %1127 = vmatpush1.msra.mxu0 0.0
        %1128 = vmatprep.subr.mxu0 0.0
        %1129 = vmatpush1.msra.mxu0 0.0
        %1130 = vmatprep.subr.mxu0 0.0
        %1131 = vmatpush1.msra.mxu0 0.0
        %1132 = vmatprep.subr.mxu0 0.0
        %1133 = vmatpush1.msra.mxu0 0.0
        %1134 = vmatprep.subr.mxu0 0.0
        %1135 = vmatpush1.msra.mxu0 0.0
        %1136 = vmatprep.subr.mxu0 0.0
        %1137 = vmatpush1.msra.mxu0 0.0
        %1138 = vmatprep.subr.mxu0 0.0
        %1139 = vmatpush1.msra.mxu0 0.0
        %1140 = vmatprep.subr.mxu0 0.0
        %1141 = vmatpush1.msra.mxu0 0.0
        %1142 = vmatprep.subr.mxu0 0.0
        %1143 = vmatpush1.msra.mxu0 0.0
        %1144 = vmatprep.subr.mxu0 0.0
        %1145 = vmatpush1.msra.mxu0 0.0
        %1146 = vmatprep.subr.mxu0 0.0
        %1147 = vmatpush1.msra.mxu0 0.0
        %1148 = vmatprep.subr.mxu0 0.0
        %1149 = vmatpush1.msra.mxu0 0.0
        %1150 = vmatprep.subr.mxu0 0.0
        %1151 = vmatpush1.msra.mxu0 0.0
        %1152 = vmatprep.subr.mxu0 0.0
        %1153 = vmatpush1.msra.mxu0 0.0
        %1154 = vmatprep.subr.mxu0 0.0
        %1155 = vmatpush1.msra.mxu0 0.0
        %1156 = vmatprep.subr.mxu0 0.0
        %1157 = vmatpush1.msra.mxu0 0.0
        %1158 = vmatprep.subr.mxu0 0.0
        %1159 = vmatpush1.msra.mxu0 0.0
        %1160 = vmatprep.subr.mxu0 0.0
        %1161 = vmatpush1.msra.mxu0 0.0
        %1162 = vmatprep.subr.mxu0 0.0
        %1163 = vmatpush1.msra.mxu0 0.0
        %1164 = vmatprep.subr.mxu0 0.0
        %1165 = vmatpush1.msra.mxu0 0.0
        %1166 = vmatprep.subr.mxu0 0.0
        %1167 = vmatpush1.msra.mxu0 0.0
        %1168 = vmatprep.subr.mxu0 0.0
        %1169 = vmatpush1.msra.mxu0 0.0
        %1170 = vmatprep.subr.mxu0 0.0
        %1171 = vmatpush1.msra.mxu0 0.0
        %1172 = vmatprep.subr.mxu0 0.0
        %1173 = vmatpush1.msra.mxu0 0.0
        %1174 = vmatprep.subr.mxu0 0.0
        %1175 = vmatpush1.msra.mxu0 0.0
        %1176 = vmatprep.subr.mxu0 0.0
        %1177 = vmatpush1.msra.mxu0 0.0
        %1178 = vmatprep.subr.mxu0 0.0
        %1179 = vmatpush1.msra.mxu0 0.0
        %1180 = vmatprep.mubr.f32.mxu0 0.0
        %1181 = vmatmul.mubr.f32.gmra.mrb[0].mxu0 %v1066
        %v1182 = vpop.f32.mrb[0].mxu0
        %v1183 = vadd.f32 0.0, %v1182
        %v1184 = vpop.f32.mrb[0].mxu0
        %1185 = vmatprep.mubr.f32.mxu0 0.0
        %1186 = vmatmul.mubr.f32.gmra.mrb[0].mxu0 %v1069
        %v1187 = vpop.f32.mrb[0].mxu0
        %v1188 = vadd.f32 0.0, %v1187
        %v1189 = vpop.f32.mrb[0].mxu0
        %1190 = vmatprep.mubr.f32.mxu0 0.0
        %1191 = vmatmul.mubr.f32.gmra.mrb[0].mxu0 %v1072
        %v1192 = vpop.f32.mrb[0].mxu0
        %v1193 = vadd.f32 0.0, %v1192
        %v1194 = vpop.f32.mrb[0].mxu0
        %1195 = vmatprep.mubr.f32.mxu0 0.0
        %1196 = vmatmul.mubr.f32.gmra.mrb[0].mxu0 %v1075
        %v1197 = vpop.f32.mrb[0].mxu0
        %v1198 = vadd.f32 0.0, %v1197
        %v1199 = vpop.f32.mrb[0].mxu0
        %1200 = vmatprep.mubr.f32.mxu0 0.0
        %1201 = vmatmul.mubr.f32.gmra.mrb[0].mxu0 %v1078
        %v1202 = vpop.f32.mrb[0].mxu0
        %v1203 = vadd.f32 0.0, %v1202
        %v1204 = vpop.f32.mrb[0].mxu0
        %1205 = vmatprep.mubr.f32.mxu0 0.0
        %1206 = vmatmul.mubr.f32.gmra.mrb[0].mxu0 %v1081
        %v1207 = vpop.f32.mrb[0].mxu0
        %v1208 = vadd.f32 0.0, %v1207
        %v1209 = vpop.f32.mrb[0].mxu0
        %1210 = vmatprep.mubr.f32.mxu0 0.0
        %1211 = vmatmul.mubr.f32.gmra.mrb[0].mxu0 %v1084
        %v1212 = vpop.f32.mrb[0].mxu0
        %v1213 = vadd.f32 0.0, %v1212
        %v1214 = vpop.f32.mrb[0].mxu0
        %1215 = vmatprep.mubr.f32.mxu0 0.0
        %1216 = vmatmul.mubr.f32.gmra.mrb[0].mxu0 %v1087
        %v1217 = vpop.f32.mrb[0].mxu0
        %v1218 = vadd.f32 0.0, %v1217
        %v1219 = vpop.f32.mrb[0].mxu0
        %1220 = vmatprep.mubr.f32.mxu0 0.0
        %1221 = vmatmul.mubr.f32.gmra.mrb[0].mxu0 %v1090
        %v1222 = vpop.f32.mrb[0].mxu0
        %v1223 = vadd.f32 0.0, %v1222
        %v1224 = vpop.f32.mrb[0].mxu0
        %1225 = vmatprep.mubr.f32.mxu0 0.0
        %1226 = vmatmul.mubr.f32.gmra.mrb[0].mxu0 %v1093
        %v1227 = vpop.f32.mrb[0].mxu0
        %v1228 = vadd.f32 0.0, %v1227
        %v1229 = vpop.f32.mrb[0].mxu0
        %1230 = vmatprep.mubr.f32.mxu0 0.0
        %1231 = vmatmul.mubr.f32.gmra.mrb[0].mxu0 %v1096
        %v1232 = vpop.f32.mrb[0].mxu0
        %v1233 = vadd.f32 0.0, %v1232
        %v1234 = vpop.f32.mrb[0].mxu0
        %1235 = vmatprep.mubr.f32.mxu0 0.0
        %1236 = vmatmul.mubr.f32.gmra.mrb[0].mxu0 %v1099
        %v1237 = vpop.f32.mrb[0].mxu0
        %v1238 = vadd.f32 0.0, %v1237
        %v1239 = vpop.f32.mrb[0].mxu0
        %1240 = vmatprep.mubr.f32.mxu0 0.0
        %1241 = vmatmul.mubr.f32.gmra.mrb[0].mxu0 %v1102
        %v1242 = vpop.f32.mrb[0].mxu0
        %v1243 = vadd.f32 0.0, %v1242
        %v1244 = vpop.f32.mrb[0].mxu0
        %1245 = vmatprep.mubr.f32.mxu0 0.0
        %1246 = vmatmul.mubr.f32.gmra.mrb[0].mxu0 %v1105
        %v1247 = vpop.f32.mrb[0].mxu0
        %v1248 = vadd.f32 0.0, %v1247
        %v1249 = vpop.f32.mrb[0].mxu0
        %1250 = vmatprep.mubr.f32.mxu0 0.0
        %1251 = vmatmul.mubr.f32.gmra.mrb[0].mxu0 %v1108
        %v1252 = vpop.f32.mrb[0].mxu0
        %v1253 = vadd.f32 0.0, %v1252
        %v1254 = vpop.f32.mrb[0].mxu0
        %1255 = vmatprep.mubr.f32.mxu0 0.0
        %1256 = vmatmul.mubr.f32.gmra.mrb[0].mxu0 %v1111
        %v1257 = vpop.f32.mrb[0].mxu0
        %v1258 = vadd.f32 0.0, %v1257
        %v1259 = vpop.f32.mrb[0].mxu0
        %1260 = vdwg.mxu0
        %v1261 = vsel %vm522, 1, 0
        %v1262 = vsel %vm523, 1, 0
        %v1263 = vsel %vm524, 1, 0
        %v1264 = vsel %vm525, 1, 0
        %v1265 = vsel %vm526, 1, 0
        %v1266 = vsel %vm527, 1, 0
        %v1267 = vsel %vm528, 1, 0
        %v1268 = vsel %vm529, 1, 0
        %v1269 = vsel %vm530, 1, 0
        %v1270 = vsel %vm531, 1, 0
        %v1271 = vsel %vm532, 1, 0
        %v1272 = vsel %vm533, 1, 0
        %v1273 = vsel %vm534, 1, 0
        %v1274 = vsel %vm535, 1, 0
        %v1275 = vsel %vm536, 1, 0
        %v1276 = vsel %vm537, 1, 0
        %vm1277 = vcmp.eq.s32.totalorder %v1261, 1
        %vm1278 = vcmp.eq.s32.totalorder %v1262, 1
        %vm1279 = vcmp.eq.s32.totalorder %v1263, 1
        %vm1280 = vcmp.eq.s32.totalorder %v1264, 1
        %vm1281 = vcmp.eq.s32.totalorder %v1265, 1
        %vm1282 = vcmp.eq.s32.totalorder %v1266, 1
        %vm1283 = vcmp.eq.s32.totalorder %v1267, 1
        %vm1284 = vcmp.eq.s32.totalorder %v1268, 1
        %vm1285 = vcmp.eq.s32.totalorder %v1269, 1
        %vm1286 = vcmp.eq.s32.totalorder %v1270, 1
        %vm1287 = vcmp.eq.s32.totalorder %v1271, 1
        %vm1288 = vcmp.eq.s32.totalorder %v1272, 1
        %vm1289 = vcmp.eq.s32.totalorder %v1273, 1
        %vm1290 = vcmp.eq.s32.totalorder %v1274, 1
        %vm1291 = vcmp.eq.s32.totalorder %v1275, 1
        %vm1292 = vcmp.eq.s32.totalorder %v1276, 1
        %v1293 = vsel %vm1277, %v1183, 0.0
        %v1294 = vsel %vm1278, %v1188, 0.0
        %v1295 = vsel %vm1279, %v1193, 0.0
        %v1296 = vsel %vm1280, %v1198, 0.0
        %v1297 = vsel %vm1281, %v1203, 0.0
        %v1298 = vsel %vm1282, %v1208, 0.0
        %v1299 = vsel %vm1283, %v1213, 0.0
        %v1300 = vsel %vm1284, %v1218, 0.0
        %v1301 = vsel %vm1285, %v1223, 0.0
        %v1302 = vsel %vm1286, %v1228, 0.0
        %v1303 = vsel %vm1287, %v1233, 0.0
        %v1304 = vsel %vm1288, %v1238, 0.0
        %v1305 = vsel %vm1289, %v1243, 0.0
        %v1306 = vsel %vm1290, %v1248, 0.0
        %v1307 = vsel %vm1291, %v1253, 0.0
        %v1308 = vsel %vm1292, %v1258, 0.0
        %v1309 = vadd.f32 %v1031, %v1293
        %v1310 = vadd.f32 %v1032, %v1294
        %v1311 = vadd.f32 %v1033, %v1295
        %v1312 = vadd.f32 %v1034, %v1296
        %v1313 = vadd.f32 %v1035, %v1297
        %v1314 = vadd.f32 %v1036, %v1298
        %v1315 = vadd.f32 %v1037, %v1299
        %v1316 = vadd.f32 %v1038, %v1300
        %v1317 = vadd.f32 %v1039, %v1301
        %v1318 = vadd.f32 %v1040, %v1302
        %v1319 = vadd.f32 %v1041, %v1303
        %v1320 = vadd.f32 %v1042, %v1304
        %v1321 = vadd.f32 %v1043, %v1305
        %v1322 = vadd.f32 %v1044, %v1306
        %v1323 = vadd.f32 %v1045, %v1307
        %v1324 = vadd.f32 %v1046, %v1308
        %v1325 = vld [vmem:[%s291 + $0x10] sm:$0xff]
        %v1326 = vld [vmem:[%s291 + $0x18] sm:$0xff]
        %v1327 = vld [vmem:[%s291 + $0x20] sm:$0xff]
        %v1328 = vld [vmem:[%s291 + $0x28] sm:$0xff]
        %v1329 = vld [vmem:[%s291 + $0x30] sm:$0xff]
        %v1330 = vld [vmem:[%s291 + $0x38] sm:$0xff]
        %v1331 = vld [vmem:[%s291 + $0x40] sm:$0xff]
        %v1332 = vld [vmem:[%s291 + $0x48] sm:$0xff]
        %v1333 = vld [vmem:[%s291 + $0x50] sm:$0xff]
        %v1334 = vld [vmem:[%s291 + $0x58] sm:$0xff]
        %v1335 = vld [vmem:[%s291 + $0x60] sm:$0xff]
        %v1336 = vld [vmem:[%s291 + $0x68] sm:$0xff]
        %v1337 = vld [vmem:[%s291 + $0x70] sm:$0xff]
        %v1338 = vld [vmem:[%s291 + $0x78] sm:$0xff]
        %v1339 = vld [vmem:[%s291 + $0x80] sm:$0xff]
        %v1340 = vld [vmem:[%s291 + $0x88] sm:$0xff]
        %s1341 = scalar_lea.vmem %s2, 12
        %v1342 = vld [vmem:[%s1341] sm:$0xf]
        %v1344 = vsel %vm555, %v1325, 0
        %v1347 = vsel %vm555, %v1326, 0
        %v1350 = vsel %vm555, %v1327, 0
        %v1353 = vsel %vm555, %v1328, 0
        %v1356 = vsel %vm555, %v1329, 0
        %v1359 = vsel %vm555, %v1330, 0
        %v1362 = vsel %vm555, %v1331, 0
        %v1365 = vsel %vm555, %v1332, 0
        %v1368 = vsel %vm555, %v1333, 0
        %v1371 = vsel %vm555, %v1334, 0
        %v1374 = vsel %vm555, %v1335, 0
        %v1377 = vsel %vm555, %v1336, 0
        %v1380 = vsel %vm555, %v1337, 0
        %v1383 = vsel %vm555, %v1338, 0
        %v1386 = vsel %vm555, %v1339, 0
        %v1389 = vsel %vm555, %v1340, 0
        %v1392 = vsel %vm604, %v1342, 0
        %1394 = vmatprep.subr.mxu0 0.0
        %1395 = vmatpush1.msra.mxu0 %v1392
        %1396 = vmatprep.subr.mxu0 0.0
        %1397 = vmatpush1.msra.mxu0 0.0
        %1398 = vmatprep.subr.mxu0 0.0
        %1399 = vmatpush1.msra.mxu0 0.0
        %1400 = vmatprep.subr.mxu0 0.0
        %1401 = vmatpush1.msra.mxu0 0.0
        %1402 = vmatprep.subr.mxu0 0.0
        %1403 = vmatpush1.msra.mxu0 0.0
        %1404 = vmatprep.subr.mxu0 0.0
        %1405 = vmatpush1.msra.mxu0 0.0
        %1406 = vmatprep.subr.mxu0 0.0
        %1407 = vmatpush1.msra.mxu0 0.0
        %1408 = vmatprep.subr.mxu0 0.0
        %1409 = vmatpush1.msra.mxu0 0.0
        %1410 = vmatprep.subr.mxu0 0.0
        %1411 = vmatpush1.msra.mxu0 0.0
        %1412 = vmatprep.subr.mxu0 0.0
        %1413 = vmatpush1.msra.mxu0 0.0
        %1414 = vmatprep.subr.mxu0 0.0
        %1415 = vmatpush1.msra.mxu0 0.0
        %1416 = vmatprep.subr.mxu0 0.0
        %1417 = vmatpush1.msra.mxu0 0.0
        %1418 = vmatprep.subr.mxu0 0.0
        %1419 = vmatpush1.msra.mxu0 0.0
        %1420 = vmatprep.subr.mxu0 0.0
        %1421 = vmatpush1.msra.mxu0 0.0
        %1422 = vmatprep.subr.mxu0 0.0
        %1423 = vmatpush1.msra.mxu0 0.0
        %1424 = vmatprep.subr.mxu0 0.0
        %1425 = vmatpush1.msra.mxu0 0.0
        %1426 = vmatprep.subr.mxu0 0.0
        %1427 = vmatpush1.msra.mxu0 0.0
        %1428 = vmatprep.subr.mxu0 0.0
        %1429 = vmatpush1.msra.mxu0 0.0
        %1430 = vmatprep.subr.mxu0 0.0
        %1431 = vmatpush1.msra.mxu0 0.0
        %1432 = vmatprep.subr.mxu0 0.0
        %1433 = vmatpush1.msra.mxu0 0.0
        %1434 = vmatprep.subr.mxu0 0.0
        %1435 = vmatpush1.msra.mxu0 0.0
        %1436 = vmatprep.subr.mxu0 0.0
        %1437 = vmatpush1.msra.mxu0 0.0
        %1438 = vmatprep.subr.mxu0 0.0
        %1439 = vmatpush1.msra.mxu0 0.0
        %1440 = vmatprep.subr.mxu0 0.0
        %1441 = vmatpush1.msra.mxu0 0.0
        %1442 = vmatprep.subr.mxu0 0.0
        %1443 = vmatpush1.msra.mxu0 0.0
        %1444 = vmatprep.subr.mxu0 0.0
        %1445 = vmatpush1.msra.mxu0 0.0
        %1446 = vmatprep.subr.mxu0 0.0
        %1447 = vmatpush1.msra.mxu0 0.0
        %1448 = vmatprep.subr.mxu0 0.0
        %1449 = vmatpush1.msra.mxu0 0.0
        %1450 = vmatprep.subr.mxu0 0.0
        %1451 = vmatpush1.msra.mxu0 0.0
        %1452 = vmatprep.subr.mxu0 0.0
        %1453 = vmatpush1.msra.mxu0 0.0
        %1454 = vmatprep.subr.mxu0 0.0
        %1455 = vmatpush1.msra.mxu0 0.0
        %1456 = vmatprep.subr.mxu0 0.0
        %1457 = vmatpush1.msra.mxu0 0.0
        %1458 = vmatprep.mubr.f32.mxu0 0.0
        %1459 = vmatmul.mubr.f32.gmra.mrb[0].mxu0 %v1344
        %v1460 = vpop.f32.mrb[0].mxu0
        %v1461 = vadd.f32 0.0, %v1460
        %v1462 = vpop.f32.mrb[0].mxu0
        %1463 = vmatprep.mubr.f32.mxu0 0.0
        %1464 = vmatmul.mubr.f32.gmra.mrb[0].mxu0 %v1347
        %v1465 = vpop.f32.mrb[0].mxu0
        %v1466 = vadd.f32 0.0, %v1465
        %v1467 = vpop.f32.mrb[0].mxu0
        %1468 = vmatprep.mubr.f32.mxu0 0.0
        %1469 = vmatmul.mubr.f32.gmra.mrb[0].mxu0 %v1350
        %v1470 = vpop.f32.mrb[0].mxu0
        %v1471 = vadd.f32 0.0, %v1470
        %v1472 = vpop.f32.mrb[0].mxu0
        %1473 = vmatprep.mubr.f32.mxu0 0.0
        %1474 = vmatmul.mubr.f32.gmra.mrb[0].mxu0 %v1353
        %v1475 = vpop.f32.mrb[0].mxu0
        %v1476 = vadd.f32 0.0, %v1475
        %v1477 = vpop.f32.mrb[0].mxu0
        %1478 = vmatprep.mubr.f32.mxu0 0.0
        %1479 = vmatmul.mubr.f32.gmra.mrb[0].mxu0 %v1356
        %v1480 = vpop.f32.mrb[0].mxu0
        %v1481 = vadd.f32 0.0, %v1480
        %v1482 = vpop.f32.mrb[0].mxu0
        %1483 = vmatprep.mubr.f32.mxu0 0.0
        %1484 = vmatmul.mubr.f32.gmra.mrb[0].mxu0 %v1359
        %v1485 = vpop.f32.mrb[0].mxu0
        %v1486 = vadd.f32 0.0, %v1485
        %v1487 = vpop.f32.mrb[0].mxu0
        %1488 = vmatprep.mubr.f32.mxu0 0.0
        %1489 = vmatmul.mubr.f32.gmra.mrb[0].mxu0 %v1362
        %v1490 = vpop.f32.mrb[0].mxu0
        %v1491 = vadd.f32 0.0, %v1490
        %v1492 = vpop.f32.mrb[0].mxu0
        %1493 = vmatprep.mubr.f32.mxu0 0.0
        %1494 = vmatmul.mubr.f32.gmra.mrb[0].mxu0 %v1365
        %v1495 = vpop.f32.mrb[0].mxu0
        %v1496 = vadd.f32 0.0, %v1495
        %v1497 = vpop.f32.mrb[0].mxu0
        %1498 = vmatprep.mubr.f32.mxu0 0.0
        %1499 = vmatmul.mubr.f32.gmra.mrb[0].mxu0 %v1368
        %v1500 = vpop.f32.mrb[0].mxu0
        %v1501 = vadd.f32 0.0, %v1500
        %v1502 = vpop.f32.mrb[0].mxu0
        %1503 = vmatprep.mubr.f32.mxu0 0.0
        %1504 = vmatmul.mubr.f32.gmra.mrb[0].mxu0 %v1371
        %v1505 = vpop.f32.mrb[0].mxu0
        %v1506 = vadd.f32 0.0, %v1505
        %v1507 = vpop.f32.mrb[0].mxu0
        %1508 = vmatprep.mubr.f32.mxu0 0.0
        %1509 = vmatmul.mubr.f32.gmra.mrb[0].mxu0 %v1374
        %v1510 = vpop.f32.mrb[0].mxu0
        %v1511 = vadd.f32 0.0, %v1510
        %v1512 = vpop.f32.mrb[0].mxu0
        %1513 = vmatprep.mubr.f32.mxu0 0.0
        %1514 = vmatmul.mubr.f32.gmra.mrb[0].mxu0 %v1377
        %v1515 = vpop.f32.mrb[0].mxu0
        %v1516 = vadd.f32 0.0, %v1515
        %v1517 = vpop.f32.mrb[0].mxu0
        %1518 = vmatprep.mubr.f32.mxu0 0.0
        %1519 = vmatmul.mubr.f32.gmra.mrb[0].mxu0 %v1380
        %v1520 = vpop.f32.mrb[0].mxu0
        %v1521 = vadd.f32 0.0, %v1520
        %v1522 = vpop.f32.mrb[0].mxu0
        %1523 = vmatprep.mubr.f32.mxu0 0.0
        %1524 = vmatmul.mubr.f32.gmra.mrb[0].mxu0 %v1383
        %v1525 = vpop.f32.mrb[0].mxu0
        %v1526 = vadd.f32 0.0, %v1525
        %v1527 = vpop.f32.mrb[0].mxu0
        %1528 = vmatprep.mubr.f32.mxu0 0.0
        %1529 = vmatmul.mubr.f32.gmra.mrb[0].mxu0 %v1386
        %v1530 = vpop.f32.mrb[0].mxu0
        %v1531 = vadd.f32 0.0, %v1530
        %v1532 = vpop.f32.mrb[0].mxu0
        %1533 = vmatprep.mubr.f32.mxu0 0.0
        %1534 = vmatmul.mubr.f32.gmra.mrb[0].mxu0 %v1389
        %v1535 = vpop.f32.mrb[0].mxu0
        %v1536 = vadd.f32 0.0, %v1535
        %v1537 = vpop.f32.mrb[0].mxu0
        %1538 = vdwg.mxu0
        %v1539 = vsel %vm769, %v1461, 0.0
        %v1540 = vsel %vm770, %v1466, 0.0
        %v1541 = vsel %vm771, %v1471, 0.0
        %v1542 = vsel %vm772, %v1476, 0.0
        %v1543 = vsel %vm773, %v1481, 0.0
        %v1544 = vsel %vm774, %v1486, 0.0
        %v1545 = vsel %vm775, %v1491, 0.0
        %v1546 = vsel %vm776, %v1496, 0.0
        %v1547 = vsel %vm777, %v1501, 0.0
        %v1548 = vsel %vm778, %v1506, 0.0
        %v1549 = vsel %vm779, %v1511, 0.0
        %v1550 = vsel %vm780, %v1516, 0.0
        %v1551 = vsel %vm781, %v1521, 0.0
        %v1552 = vsel %vm782, %v1526, 0.0
        %v1553 = vsel %vm783, %v1531, 0.0
        %v1554 = vsel %vm784, %v1536, 0.0
        %v1555 = vadd.f32 %v1309, %v1539
        %v1556 = vadd.f32 %v1310, %v1540
        %v1557 = vadd.f32 %v1311, %v1541
        %v1558 = vadd.f32 %v1312, %v1542
        %v1559 = vadd.f32 %v1313, %v1543
        %v1560 = vadd.f32 %v1314, %v1544
        %v1561 = vadd.f32 %v1315, %v1545
        %v1562 = vadd.f32 %v1316, %v1546
        %v1563 = vadd.f32 %v1317, %v1547
        %v1564 = vadd.f32 %v1318, %v1548
        %v1565 = vadd.f32 %v1319, %v1549
        %v1566 = vadd.f32 %v1320, %v1550
        %v1567 = vadd.f32 %v1321, %v1551
        %v1568 = vadd.f32 %v1322, %v1552
        %v1569 = vadd.f32 %v1323, %v1553
        %v1570 = vadd.f32 %v1324, %v1554
        %v1571 = vld [vmem:[%s291 + $0x11] sm:$0xff]
        %v1572 = vld [vmem:[%s291 + $0x19] sm:$0xff]
        %v1573 = vld [vmem:[%s291 + $0x21] sm:$0xff]
        %v1574 = vld [vmem:[%s291 + $0x29] sm:$0xff]
        %v1575 = vld [vmem:[%s291 + $0x31] sm:$0xff]
        %v1576 = vld [vmem:[%s291 + $0x39] sm:$0xff]
        %v1577 = vld [vmem:[%s291 + $0x41] sm:$0xff]
        %v1578 = vld [vmem:[%s291 + $0x49] sm:$0xff]
        %v1579 = vld [vmem:[%s291 + $0x51] sm:$0xff]
        %v1580 = vld [vmem:[%s291 + $0x59] sm:$0xff]
        %v1581 = vld [vmem:[%s291 + $0x61] sm:$0xff]
        %v1582 = vld [vmem:[%s291 + $0x69] sm:$0xff]
        %v1583 = vld [vmem:[%s291 + $0x71] sm:$0xff]
        %v1584 = vld [vmem:[%s291 + $0x79] sm:$0xff]
        %v1585 = vld [vmem:[%s291 + $0x81] sm:$0xff]
        %v1586 = vld [vmem:[%s291 + $0x89] sm:$0xff]
        %s1587 = scalar_lea.vmem %s2, 16
        %v1588 = vld [vmem:[%s1587] sm:$0xf]
        %v1590 = vsel %vm555, %v1571, 0
        %v1593 = vsel %vm555, %v1572, 0
        %v1596 = vsel %vm555, %v1573, 0
        %v1599 = vsel %vm555, %v1574, 0
        %v1602 = vsel %vm555, %v1575, 0
        %v1605 = vsel %vm555, %v1576, 0
        %v1608 = vsel %vm555, %v1577, 0
        %v1611 = vsel %vm555, %v1578, 0
        %v1614 = vsel %vm555, %v1579, 0
        %v1617 = vsel %vm555, %v1580, 0
        %v1620 = vsel %vm555, %v1581, 0
        %v1623 = vsel %vm555, %v1582, 0
        %v1626 = vsel %vm555, %v1583, 0
        %v1629 = vsel %vm555, %v1584, 0
        %v1632 = vsel %vm555, %v1585, 0
        %v1635 = vsel %vm555, %v1586, 0
        %v1638 = vsel %vm604, %v1588, 0
        %1640 = vmatprep.subr.mxu0 0.0
        %1641 = vmatpush1.msra.mxu0 %v1638
        %1642 = vmatprep.subr.mxu0 0.0
        %1643 = vmatpush1.msra.mxu0 0.0
        %1644 = vmatprep.subr.mxu0 0.0
        %1645 = vmatpush1.msra.mxu0 0.0
        %1646 = vmatprep.subr.mxu0 0.0
        %1647 = vmatpush1.msra.mxu0 0.0
        %1648 = vmatprep.subr.mxu0 0.0
        %1649 = vmatpush1.msra.mxu0 0.0
        %1650 = vmatprep.subr.mxu0 0.0
        %1651 = vmatpush1.msra.mxu0 0.0
        %1652 = vmatprep.subr.mxu0 0.0
        %1653 = vmatpush1.msra.mxu0 0.0
        %1654 = vmatprep.subr.mxu0 0.0
        %1655 = vmatpush1.msra.mxu0 0.0
        %1656 = vmatprep.subr.mxu0 0.0
        %1657 = vmatpush1.msra.mxu0 0.0
        %1658 = vmatprep.subr.mxu0 0.0
        %1659 = vmatpush1.msra.mxu0 0.0
        %1660 = vmatprep.subr.mxu0 0.0
        %1661 = vmatpush1.msra.mxu0 0.0
        %1662 = vmatprep.subr.mxu0 0.0
        %1663 = vmatpush1.msra.mxu0 0.0
        %1664 = vmatprep.subr.mxu0 0.0
        %1665 = vmatpush1.msra.mxu0 0.0
        %1666 = vmatprep.subr.mxu0 0.0
        %1667 = vmatpush1.msra.mxu0 0.0
        %1668 = vmatprep.subr.mxu0 0.0
        %1669 = vmatpush1.msra.mxu0 0.0
        %1670 = vmatprep.subr.mxu0 0.0
        %1671 = vmatpush1.msra.mxu0 0.0
        %1672 = vmatprep.subr.mxu0 0.0
        %1673 = vmatpush1.msra.mxu0 0.0
        %1674 = vmatprep.subr.mxu0 0.0
        %1675 = vmatpush1.msra.mxu0 0.0
        %1676 = vmatprep.subr.mxu0 0.0
        %1677 = vmatpush1.msra.mxu0 0.0
        %1678 = vmatprep.subr.mxu0 0.0
        %1679 = vmatpush1.msra.mxu0 0.0
        %1680 = vmatprep.subr.mxu0 0.0
        %1681 = vmatpush1.msra.mxu0 0.0
        %1682 = vmatprep.subr.mxu0 0.0
        %1683 = vmatpush1.msra.mxu0 0.0
        %1684 = vmatprep.subr.mxu0 0.0
        %1685 = vmatpush1.msra.mxu0 0.0
        %1686 = vmatprep.subr.mxu0 0.0
        %1687 = vmatpush1.msra.mxu0 0.0
        %1688 = vmatprep.subr.mxu0 0.0
        %1689 = vmatpush1.msra.mxu0 0.0
        %1690 = vmatprep.subr.mxu0 0.0
        %1691 = vmatpush1.msra.mxu0 0.0
        %1692 = vmatprep.subr.mxu0 0.0
        %1693 = vmatpush1.msra.mxu0 0.0
        %1694 = vmatprep.subr.mxu0 0.0
        %1695 = vmatpush1.msra.mxu0 0.0
        %1696 = vmatprep.subr.mxu0 0.0
        %1697 = vmatpush1.msra.mxu0 0.0
        %1698 = vmatprep.subr.mxu0 0.0
        %1699 = vmatpush1.msra.mxu0 0.0
        %1700 = vmatprep.subr.mxu0 0.0
        %1701 = vmatpush1.msra.mxu0 0.0
        %1702 = vmatprep.subr.mxu0 0.0
        %1703 = vmatpush1.msra.mxu0 0.0
        %1704 = vmatprep.mubr.f32.mxu0 0.0
        %1705 = vmatmul.mubr.f32.gmra.mrb[0].mxu0 %v1590
        %v1706 = vpop.f32.mrb[0].mxu0
        %v1707 = vadd.f32 0.0, %v1706
        %v1708 = vpop.f32.mrb[0].mxu0
        %1709 = vmatprep.mubr.f32.mxu0 0.0
        %1710 = vmatmul.mubr.f32.gmra.mrb[0].mxu0 %v1593
        %v1711 = vpop.f32.mrb[0].mxu0
        %v1712 = vadd.f32 0.0, %v1711
        %v1713 = vpop.f32.mrb[0].mxu0
        %1714 = vmatprep.mubr.f32.mxu0 0.0
        %1715 = vmatmul.mubr.f32.gmra.mrb[0].mxu0 %v1596
        %v1716 = vpop.f32.mrb[0].mxu0
        %v1717 = vadd.f32 0.0, %v1716
        %v1718 = vpop.f32.mrb[0].mxu0
        %1719 = vmatprep.mubr.f32.mxu0 0.0
        %1720 = vmatmul.mubr.f32.gmra.mrb[0].mxu0 %v1599
        %v1721 = vpop.f32.mrb[0].mxu0
        %v1722 = vadd.f32 0.0, %v1721
        %v1723 = vpop.f32.mrb[0].mxu0
        %1724 = vmatprep.mubr.f32.mxu0 0.0
        %1725 = vmatmul.mubr.f32.gmra.mrb[0].mxu0 %v1602
        %v1726 = vpop.f32.mrb[0].mxu0
        %v1727 = vadd.f32 0.0, %v1726
        %v1728 = vpop.f32.mrb[0].mxu0
        %1729 = vmatprep.mubr.f32.mxu0 0.0
        %1730 = vmatmul.mubr.f32.gmra.mrb[0].mxu0 %v1605
        %v1731 = vpop.f32.mrb[0].mxu0
        %v1732 = vadd.f32 0.0, %v1731
        %v1733 = vpop.f32.mrb[0].mxu0
        %1734 = vmatprep.mubr.f32.mxu0 0.0
        %1735 = vmatmul.mubr.f32.gmra.mrb[0].mxu0 %v1608
        %v1736 = vpop.f32.mrb[0].mxu0
        %v1737 = vadd.f32 0.0, %v1736
        %v1738 = vpop.f32.mrb[0].mxu0
        %1739 = vmatprep.mubr.f32.mxu0 0.0
        %1740 = vmatmul.mubr.f32.gmra.mrb[0].mxu0 %v1611
        %v1741 = vpop.f32.mrb[0].mxu0
        %v1742 = vadd.f32 0.0, %v1741
        %v1743 = vpop.f32.mrb[0].mxu0
        %1744 = vmatprep.mubr.f32.mxu0 0.0
        %1745 = vmatmul.mubr.f32.gmra.mrb[0].mxu0 %v1614
        %v1746 = vpop.f32.mrb[0].mxu0
        %v1747 = vadd.f32 0.0, %v1746
        %v1748 = vpop.f32.mrb[0].mxu0
        %1749 = vmatprep.mubr.f32.mxu0 0.0
        %1750 = vmatmul.mubr.f32.gmra.mrb[0].mxu0 %v1617
        %v1751 = vpop.f32.mrb[0].mxu0
        %v1752 = vadd.f32 0.0, %v1751
        %v1753 = vpop.f32.mrb[0].mxu0
        %1754 = vmatprep.mubr.f32.mxu0 0.0
        %1755 = vmatmul.mubr.f32.gmra.mrb[0].mxu0 %v1620
        %v1756 = vpop.f32.mrb[0].mxu0
        %v1757 = vadd.f32 0.0, %v1756
        %v1758 = vpop.f32.mrb[0].mxu0
        %1759 = vmatprep.mubr.f32.mxu0 0.0
        %1760 = vmatmul.mubr.f32.gmra.mrb[0].mxu0 %v1623
        %v1761 = vpop.f32.mrb[0].mxu0
        %v1762 = vadd.f32 0.0, %v1761
        %v1763 = vpop.f32.mrb[0].mxu0
        %1764 = vmatprep.mubr.f32.mxu0 0.0
        %1765 = vmatmul.mubr.f32.gmra.mrb[0].mxu0 %v1626
        %v1766 = vpop.f32.mrb[0].mxu0
        %v1767 = vadd.f32 0.0, %v1766
        %v1768 = vpop.f32.mrb[0].mxu0
        %1769 = vmatprep.mubr.f32.mxu0 0.0
        %1770 = vmatmul.mubr.f32.gmra.mrb[0].mxu0 %v1629
        %v1771 = vpop.f32.mrb[0].mxu0
        %v1772 = vadd.f32 0.0, %v1771
        %v1773 = vpop.f32.mrb[0].mxu0
        %1774 = vmatprep.mubr.f32.mxu0 0.0
        %1775 = vmatmul.mubr.f32.gmra.mrb[0].mxu0 %v1632
        %v1776 = vpop.f32.mrb[0].mxu0
        %v1777 = vadd.f32 0.0, %v1776
        %v1778 = vpop.f32.mrb[0].mxu0
        %1779 = vmatprep.mubr.f32.mxu0 0.0
        %1780 = vmatmul.mubr.f32.gmra.mrb[0].mxu0 %v1635
        %v1781 = vpop.f32.mrb[0].mxu0
        %v1782 = vadd.f32 0.0, %v1781
        %v1783 = vpop.f32.mrb[0].mxu0
        %1784 = vdwg.mxu0
        %v1785 = vadd.f32 %v1555, %v1707
        %v1786 = vadd.f32 %v1556, %v1712
        %v1787 = vadd.f32 %v1557, %v1717
        %v1788 = vadd.f32 %v1558, %v1722
        %v1789 = vadd.f32 %v1559, %v1727
        %v1790 = vadd.f32 %v1560, %v1732
        %v1791 = vadd.f32 %v1561, %v1737
        %v1792 = vadd.f32 %v1562, %v1742
        %v1793 = vadd.f32 %v1563, %v1747
        %v1794 = vadd.f32 %v1564, %v1752
        %v1795 = vadd.f32 %v1565, %v1757
        %v1796 = vadd.f32 %v1566, %v1762
        %v1797 = vadd.f32 %v1567, %v1767
        %v1798 = vadd.f32 %v1568, %v1772
        %v1799 = vadd.f32 %v1569, %v1777
        %v1800 = vadd.f32 %v1570, %v1782
        %v1801 = vld [vmem:[%s291 + $0x12] sm:$0xff]
        %v1802 = vld [vmem:[%s291 + $0x1a] sm:$0xff]
        %v1803 = vld [vmem:[%s291 + $0x22] sm:$0xff]
        %v1804 = vld [vmem:[%s291 + $0x2a] sm:$0xff]
        %v1805 = vld [vmem:[%s291 + $0x32] sm:$0xff]
        %v1806 = vld [vmem:[%s291 + $0x3a] sm:$0xff]
        %v1807 = vld [vmem:[%s291 + $0x42] sm:$0xff]
        %v1808 = vld [vmem:[%s291 + $0x4a] sm:$0xff]
        %v1809 = vld [vmem:[%s291 + $0x52] sm:$0xff]
        %v1810 = vld [vmem:[%s291 + $0x5a] sm:$0xff]
        %v1811 = vld [vmem:[%s291 + $0x62] sm:$0xff]
        %v1812 = vld [vmem:[%s291 + $0x6a] sm:$0xff]
        %v1813 = vld [vmem:[%s291 + $0x72] sm:$0xff]
        %v1814 = vld [vmem:[%s291 + $0x7a] sm:$0xff]
        %v1815 = vld [vmem:[%s291 + $0x82] sm:$0xff]
        %v1816 = vld [vmem:[%s291 + $0x8a] sm:$0xff]
        %s1817 = scalar_lea.vmem %s2, 20
        %v1818 = vld [vmem:[%s1817] sm:$0xf]
        %v1820 = vsel %vm555, %v1801, 0
        %v1823 = vsel %vm555, %v1802, 0
        %v1826 = vsel %vm555, %v1803, 0
        %v1829 = vsel %vm555, %v1804, 0
        %v1832 = vsel %vm555, %v1805, 0
        %v1835 = vsel %vm555, %v1806, 0
        %v1838 = vsel %vm555, %v1807, 0
        %v1841 = vsel %vm555, %v1808, 0
        %v1844 = vsel %vm555, %v1809, 0
        %v1847 = vsel %vm555, %v1810, 0
        %v1850 = vsel %vm555, %v1811, 0
        %v1853 = vsel %vm555, %v1812, 0
        %v1856 = vsel %vm555, %v1813, 0
        %v1859 = vsel %vm555, %v1814, 0
        %v1862 = vsel %vm555, %v1815, 0
        %v1865 = vsel %vm555, %v1816, 0
        %v1868 = vsel %vm604, %v1818, 0
        %1870 = vmatprep.subr.mxu0 0.0
        %1871 = vmatpush1.msra.mxu0 %v1868
        %1872 = vmatprep.subr.mxu0 0.0
        %1873 = vmatpush1.msra.mxu0 0.0
        %1874 = vmatprep.subr.mxu0 0.0
        %1875 = vmatpush1.msra.mxu0 0.0
        %1876 = vmatprep.subr.mxu0 0.0
        %1877 = vmatpush1.msra.mxu0 0.0
        %1878 = vmatprep.subr.mxu0 0.0
        %1879 = vmatpush1.msra.mxu0 0.0
        %1880 = vmatprep.subr.mxu0 0.0
        %1881 = vmatpush1.msra.mxu0 0.0
        %1882 = vmatprep.subr.mxu0 0.0
        %1883 = vmatpush1.msra.mxu0 0.0
        %1884 = vmatprep.subr.mxu0 0.0
        %1885 = vmatpush1.msra.mxu0 0.0
        %1886 = vmatprep.subr.mxu0 0.0
        %1887 = vmatpush1.msra.mxu0 0.0
        %1888 = vmatprep.subr.mxu0 0.0
        %1889 = vmatpush1.msra.mxu0 0.0
        %1890 = vmatprep.subr.mxu0 0.0
        %1891 = vmatpush1.msra.mxu0 0.0
        %1892 = vmatprep.subr.mxu0 0.0
        %1893 = vmatpush1.msra.mxu0 0.0
        %1894 = vmatprep.subr.mxu0 0.0
        %1895 = vmatpush1.msra.mxu0 0.0
        %1896 = vmatprep.subr.mxu0 0.0
        %1897 = vmatpush1.msra.mxu0 0.0
        %1898 = vmatprep.subr.mxu0 0.0
        %1899 = vmatpush1.msra.mxu0 0.0
        %1900 = vmatprep.subr.mxu0 0.0
        %1901 = vmatpush1.msra.mxu0 0.0
        %1902 = vmatprep.subr.mxu0 0.0
        %1903 = vmatpush1.msra.mxu0 0.0
        %1904 = vmatprep.subr.mxu0 0.0
        %1905 = vmatpush1.msra.mxu0 0.0
        %1906 = vmatprep.subr.mxu0 0.0
        %1907 = vmatpush1.msra.mxu0 0.0
        %1908 = vmatprep.subr.mxu0 0.0
        %1909 = vmatpush1.msra.mxu0 0.0
        %1910 = vmatprep.subr.mxu0 0.0
        %1911 = vmatpush1.msra.mxu0 0.0
        %1912 = vmatprep.subr.mxu0 0.0
        %1913 = vmatpush1.msra.mxu0 0.0
        %1914 = vmatprep.subr.mxu0 0.0
        %1915 = vmatpush1.msra.mxu0 0.0
        %1916 = vmatprep.subr.mxu0 0.0
        %1917 = vmatpush1.msra.mxu0 0.0
        %1918 = vmatprep.subr.mxu0 0.0
        %1919 = vmatpush1.msra.mxu0 0.0
        %1920 = vmatprep.subr.mxu0 0.0
        %1921 = vmatpush1.msra.mxu0 0.0
        %1922 = vmatprep.subr.mxu0 0.0
        %1923 = vmatpush1.msra.mxu0 0.0
        %1924 = vmatprep.subr.mxu0 0.0
        %1925 = vmatpush1.msra.mxu0 0.0
        %1926 = vmatprep.subr.mxu0 0.0
        %1927 = vmatpush1.msra.mxu0 0.0
        %1928 = vmatprep.subr.mxu0 0.0
        %1929 = vmatpush1.msra.mxu0 0.0
        %1930 = vmatprep.subr.mxu0 0.0
        %1931 = vmatpush1.msra.mxu0 0.0
        %1932 = vmatprep.subr.mxu0 0.0
        %1933 = vmatpush1.msra.mxu0 0.0
        %1934 = vmatprep.mubr.f32.mxu0 0.0
        %1935 = vmatmul.mubr.f32.gmra.mrb[0].mxu0 %v1820
        %v1936 = vpop.f32.mrb[0].mxu0
        %v1937 = vadd.f32 0.0, %v1936
        %v1938 = vpop.f32.mrb[0].mxu0
        %1939 = vmatprep.mubr.f32.mxu0 0.0
        %1940 = vmatmul.mubr.f32.gmra.mrb[0].mxu0 %v1823
        %v1941 = vpop.f32.mrb[0].mxu0
        %v1942 = vadd.f32 0.0, %v1941
        %v1943 = vpop.f32.mrb[0].mxu0
        %1944 = vmatprep.mubr.f32.mxu0 0.0
        %1945 = vmatmul.mubr.f32.gmra.mrb[0].mxu0 %v1826
        %v1946 = vpop.f32.mrb[0].mxu0
        %v1947 = vadd.f32 0.0, %v1946
        %v1948 = vpop.f32.mrb[0].mxu0
        %1949 = vmatprep.mubr.f32.mxu0 0.0
        %1950 = vmatmul.mubr.f32.gmra.mrb[0].mxu0 %v1829
        %v1951 = vpop.f32.mrb[0].mxu0
        %v1952 = vadd.f32 0.0, %v1951
        %v1953 = vpop.f32.mrb[0].mxu0
        %1954 = vmatprep.mubr.f32.mxu0 0.0
        %1955 = vmatmul.mubr.f32.gmra.mrb[0].mxu0 %v1832
        %v1956 = vpop.f32.mrb[0].mxu0
        %v1957 = vadd.f32 0.0, %v1956
        %v1958 = vpop.f32.mrb[0].mxu0
        %1959 = vmatprep.mubr.f32.mxu0 0.0
        %1960 = vmatmul.mubr.f32.gmra.mrb[0].mxu0 %v1835
        %v1961 = vpop.f32.mrb[0].mxu0
        %v1962 = vadd.f32 0.0, %v1961
        %v1963 = vpop.f32.mrb[0].mxu0
        %1964 = vmatprep.mubr.f32.mxu0 0.0
        %1965 = vmatmul.mubr.f32.gmra.mrb[0].mxu0 %v1838
        %v1966 = vpop.f32.mrb[0].mxu0
        %v1967 = vadd.f32 0.0, %v1966
        %v1968 = vpop.f32.mrb[0].mxu0
        %1969 = vmatprep.mubr.f32.mxu0 0.0
        %1970 = vmatmul.mubr.f32.gmra.mrb[0].mxu0 %v1841
        %v1971 = vpop.f32.mrb[0].mxu0
        %v1972 = vadd.f32 0.0, %v1971
        %v1973 = vpop.f32.mrb[0].mxu0
        %1974 = vmatprep.mubr.f32.mxu0 0.0
        %1975 = vmatmul.mubr.f32.gmra.mrb[0].mxu0 %v1844
        %v1976 = vpop.f32.mrb[0].mxu0
        %v1977 = vadd.f32 0.0, %v1976
        %v1978 = vpop.f32.mrb[0].mxu0
        %1979 = vmatprep.mubr.f32.mxu0 0.0
        %1980 = vmatmul.mubr.f32.gmra.mrb[0].mxu0 %v1847
        %v1981 = vpop.f32.mrb[0].mxu0
        %v1982 = vadd.f32 0.0, %v1981
        %v1983 = vpop.f32.mrb[0].mxu0
        %1984 = vmatprep.mubr.f32.mxu0 0.0
        %1985 = vmatmul.mubr.f32.gmra.mrb[0].mxu0 %v1850
        %v1986 = vpop.f32.mrb[0].mxu0
        %v1987 = vadd.f32 0.0, %v1986
        %v1988 = vpop.f32.mrb[0].mxu0
        %1989 = vmatprep.mubr.f32.mxu0 0.0
        %1990 = vmatmul.mubr.f32.gmra.mrb[0].mxu0 %v1853
        %v1991 = vpop.f32.mrb[0].mxu0
        %v1992 = vadd.f32 0.0, %v1991
        %v1993 = vpop.f32.mrb[0].mxu0
        %1994 = vmatprep.mubr.f32.mxu0 0.0
        %1995 = vmatmul.mubr.f32.gmra.mrb[0].mxu0 %v1856
        %v1996 = vpop.f32.mrb[0].mxu0
        %v1997 = vadd.f32 0.0, %v1996
        %v1998 = vpop.f32.mrb[0].mxu0
        %1999 = vmatprep.mubr.f32.mxu0 0.0
        %2000 = vmatmul.mubr.f32.gmra.mrb[0].mxu0 %v1859
        %v2001 = vpop.f32.mrb[0].mxu0
        %v2002 = vadd.f32 0.0, %v2001
        %v2003 = vpop.f32.mrb[0].mxu0
        %2004 = vmatprep.mubr.f32.mxu0 0.0
        %2005 = vmatmul.mubr.f32.gmra.mrb[0].mxu0 %v1862
        %v2006 = vpop.f32.mrb[0].mxu0
        %v2007 = vadd.f32 0.0, %v2006
        %v2008 = vpop.f32.mrb[0].mxu0
        %2009 = vmatprep.mubr.f32.mxu0 0.0
        %2010 = vmatmul.mubr.f32.gmra.mrb[0].mxu0 %v1865
        %v2011 = vpop.f32.mrb[0].mxu0
        %v2012 = vadd.f32 0.0, %v2011
        %v2013 = vpop.f32.mrb[0].mxu0
        %2014 = vdwg.mxu0
        %v2015 = vsel %vm1277, %v1937, 0.0
        %v2016 = vsel %vm1278, %v1942, 0.0
        %v2017 = vsel %vm1279, %v1947, 0.0
        %v2018 = vsel %vm1280, %v1952, 0.0
        %v2019 = vsel %vm1281, %v1957, 0.0
        %v2020 = vsel %vm1282, %v1962, 0.0
        %v2021 = vsel %vm1283, %v1967, 0.0
        %v2022 = vsel %vm1284, %v1972, 0.0
        %v2023 = vsel %vm1285, %v1977, 0.0
        %v2024 = vsel %vm1286, %v1982, 0.0
        %v2025 = vsel %vm1287, %v1987, 0.0
        %v2026 = vsel %vm1288, %v1992, 0.0
        %v2027 = vsel %vm1289, %v1997, 0.0
        %v2028 = vsel %vm1290, %v2002, 0.0
        %v2029 = vsel %vm1291, %v2007, 0.0
        %v2030 = vsel %vm1292, %v2012, 0.0
        %v2031 = vadd.f32 %v1785, %v2015
        %v2032 = vadd.f32 %v1786, %v2016
        %v2033 = vadd.f32 %v1787, %v2017
        %v2034 = vadd.f32 %v1788, %v2018
        %v2035 = vadd.f32 %v1789, %v2019
        %v2036 = vadd.f32 %v1790, %v2020
        %v2037 = vadd.f32 %v1791, %v2021
        %v2038 = vadd.f32 %v1792, %v2022
        %v2039 = vadd.f32 %v1793, %v2023
        %v2040 = vadd.f32 %v1794, %v2024
        %v2041 = vadd.f32 %v1795, %v2025
        %v2042 = vadd.f32 %v1796, %v2026
        %v2043 = vadd.f32 %v1797, %v2027
        %v2044 = vadd.f32 %v1798, %v2028
        %v2045 = vadd.f32 %v1799, %v2029
        %v2046 = vadd.f32 %v1800, %v2030
        %v2047 = vld [vmem:[%s291 + $0x20] sm:$0xff]
        %v2048 = vld [vmem:[%s291 + $0x28] sm:$0xff]
        %v2049 = vld [vmem:[%s291 + $0x30] sm:$0xff]
        %v2050 = vld [vmem:[%s291 + $0x38] sm:$0xff]
        %v2051 = vld [vmem:[%s291 + $0x40] sm:$0xff]
        %v2052 = vld [vmem:[%s291 + $0x48] sm:$0xff]
        %v2053 = vld [vmem:[%s291 + $0x50] sm:$0xff]
        %v2054 = vld [vmem:[%s291 + $0x58] sm:$0xff]
        %v2055 = vld [vmem:[%s291 + $0x60] sm:$0xff]
        %v2056 = vld [vmem:[%s291 + $0x68] sm:$0xff]
        %v2057 = vld [vmem:[%s291 + $0x70] sm:$0xff]
        %v2058 = vld [vmem:[%s291 + $0x78] sm:$0xff]
        %v2059 = vld [vmem:[%s291 + $0x80] sm:$0xff]
        %v2060 = vld [vmem:[%s291 + $0x88] sm:$0xff]
        %v2061 = vld [vmem:[%s291 + $0x90] sm:$0xff]
        %v2062 = vld [vmem:[%s291 + $0x98] sm:$0xff]
        %s2063 = scalar_lea.vmem %s2, 24
        %v2064 = vld [vmem:[%s2063] sm:$0xf]
        %v2066 = vsel %vm555, %v2047, 0
        %v2069 = vsel %vm555, %v2048, 0
        %v2072 = vsel %vm555, %v2049, 0
        %v2075 = vsel %vm555, %v2050, 0
        %v2078 = vsel %vm555, %v2051, 0
        %v2081 = vsel %vm555, %v2052, 0
        %v2084 = vsel %vm555, %v2053, 0
        %v2087 = vsel %vm555, %v2054, 0
        %v2090 = vsel %vm555, %v2055, 0
        %v2093 = vsel %vm555, %v2056, 0
        %v2096 = vsel %vm555, %v2057, 0
        %v2099 = vsel %vm555, %v2058, 0
        %v2102 = vsel %vm555, %v2059, 0
        %v2105 = vsel %vm555, %v2060, 0
        %v2108 = vsel %vm555, %v2061, 0
        %v2111 = vsel %vm555, %v2062, 0
        %v2114 = vsel %vm604, %v2064, 0
        %2116 = vmatprep.subr.mxu0 0.0
        %2117 = vmatpush1.msra.mxu0 %v2114
        %2118 = vmatprep.subr.mxu0 0.0
        %2119 = vmatpush1.msra.mxu0 0.0
        %2120 = vmatprep.subr.mxu0 0.0
        %2121 = vmatpush1.msra.mxu0 0.0
        %2122 = vmatprep.subr.mxu0 0.0
        %2123 = vmatpush1.msra.mxu0 0.0
        %2124 = vmatprep.subr.mxu0 0.0
        %2125 = vmatpush1.msra.mxu0 0.0
        %2126 = vmatprep.subr.mxu0 0.0
        %2127 = vmatpush1.msra.mxu0 0.0
        %2128 = vmatprep.subr.mxu0 0.0
        %2129 = vmatpush1.msra.mxu0 0.0
        %2130 = vmatprep.subr.mxu0 0.0
        %2131 = vmatpush1.msra.mxu0 0.0
        %2132 = vmatprep.subr.mxu0 0.0
        %2133 = vmatpush1.msra.mxu0 0.0
        %2134 = vmatprep.subr.mxu0 0.0
        %2135 = vmatpush1.msra.mxu0 0.0
        %2136 = vmatprep.subr.mxu0 0.0
        %2137 = vmatpush1.msra.mxu0 0.0
        %2138 = vmatprep.subr.mxu0 0.0
        %2139 = vmatpush1.msra.mxu0 0.0
        %2140 = vmatprep.subr.mxu0 0.0
        %2141 = vmatpush1.msra.mxu0 0.0
        %2142 = vmatprep.subr.mxu0 0.0
        %2143 = vmatpush1.msra.mxu0 0.0
        %2144 = vmatprep.subr.mxu0 0.0
        %2145 = vmatpush1.msra.mxu0 0.0
        %2146 = vmatprep.subr.mxu0 0.0
        %2147 = vmatpush1.msra.mxu0 0.0
        %2148 = vmatprep.subr.mxu0 0.0
        %2149 = vmatpush1.msra.mxu0 0.0
        %2150 = vmatprep.subr.mxu0 0.0
        %2151 = vmatpush1.msra.mxu0 0.0
        %2152 = vmatprep.subr.mxu0 0.0
        %2153 = vmatpush1.msra.mxu0 0.0
        %2154 = vmatprep.subr.mxu0 0.0
        %2155 = vmatpush1.msra.mxu0 0.0
        %2156 = vmatprep.subr.mxu0 0.0
        %2157 = vmatpush1.msra.mxu0 0.0
        %2158 = vmatprep.subr.mxu0 0.0
        %2159 = vmatpush1.msra.mxu0 0.0
        %2160 = vmatprep.subr.mxu0 0.0
        %2161 = vmatpush1.msra.mxu0 0.0
        %2162 = vmatprep.subr.mxu0 0.0
        %2163 = vmatpush1.msra.mxu0 0.0
        %2164 = vmatprep.subr.mxu0 0.0
        %2165 = vmatpush1.msra.mxu0 0.0
        %2166 = vmatprep.subr.mxu0 0.0
        %2167 = vmatpush1.msra.mxu0 0.0
        %2168 = vmatprep.subr.mxu0 0.0
        %2169 = vmatpush1.msra.mxu0 0.0
        %2170 = vmatprep.subr.mxu0 0.0
        %2171 = vmatpush1.msra.mxu0 0.0
        %2172 = vmatprep.subr.mxu0 0.0
        %2173 = vmatpush1.msra.mxu0 0.0
        %2174 = vmatprep.subr.mxu0 0.0
        %2175 = vmatpush1.msra.mxu0 0.0
        %2176 = vmatprep.subr.mxu0 0.0
        %2177 = vmatpush1.msra.mxu0 0.0
        %2178 = vmatprep.subr.mxu0 0.0
        %2179 = vmatpush1.msra.mxu0 0.0
        %2180 = vmatprep.mubr.f32.mxu0 0.0
        %2181 = vmatmul.mubr.f32.gmra.mrb[0].mxu0 %v2066
        %v2182 = vpop.f32.mrb[0].mxu0
        %v2183 = vadd.f32 0.0, %v2182
        %v2184 = vpop.f32.mrb[0].mxu0
        %2185 = vmatprep.mubr.f32.mxu0 0.0
        %2186 = vmatmul.mubr.f32.gmra.mrb[0].mxu0 %v2069
        %v2187 = vpop.f32.mrb[0].mxu0
        %v2188 = vadd.f32 0.0, %v2187
        %v2189 = vpop.f32.mrb[0].mxu0
        %2190 = vmatprep.mubr.f32.mxu0 0.0
        %2191 = vmatmul.mubr.f32.gmra.mrb[0].mxu0 %v2072
        %v2192 = vpop.f32.mrb[0].mxu0
        %v2193 = vadd.f32 0.0, %v2192
        %v2194 = vpop.f32.mrb[0].mxu0
        %2195 = vmatprep.mubr.f32.mxu0 0.0
        %2196 = vmatmul.mubr.f32.gmra.mrb[0].mxu0 %v2075
        %v2197 = vpop.f32.mrb[0].mxu0
        %v2198 = vadd.f32 0.0, %v2197
        %v2199 = vpop.f32.mrb[0].mxu0
        %2200 = vmatprep.mubr.f32.mxu0 0.0
        %2201 = vmatmul.mubr.f32.gmra.mrb[0].mxu0 %v2078
        %v2202 = vpop.f32.mrb[0].mxu0
        %v2203 = vadd.f32 0.0, %v2202
        %v2204 = vpop.f32.mrb[0].mxu0
        %2205 = vmatprep.mubr.f32.mxu0 0.0
        %2206 = vmatmul.mubr.f32.gmra.mrb[0].mxu0 %v2081
        %v2207 = vpop.f32.mrb[0].mxu0
        %v2208 = vadd.f32 0.0, %v2207
        %v2209 = vpop.f32.mrb[0].mxu0
        %2210 = vmatprep.mubr.f32.mxu0 0.0
        %2211 = vmatmul.mubr.f32.gmra.mrb[0].mxu0 %v2084
        %v2212 = vpop.f32.mrb[0].mxu0
        %v2213 = vadd.f32 0.0, %v2212
        %v2214 = vpop.f32.mrb[0].mxu0
        %2215 = vmatprep.mubr.f32.mxu0 0.0
        %2216 = vmatmul.mubr.f32.gmra.mrb[0].mxu0 %v2087
        %v2217 = vpop.f32.mrb[0].mxu0
        %v2218 = vadd.f32 0.0, %v2217
        %v2219 = vpop.f32.mrb[0].mxu0
        %2220 = vmatprep.mubr.f32.mxu0 0.0
        %2221 = vmatmul.mubr.f32.gmra.mrb[0].mxu0 %v2090
        %v2222 = vpop.f32.mrb[0].mxu0
        %v2223 = vadd.f32 0.0, %v2222
        %v2224 = vpop.f32.mrb[0].mxu0
        %2225 = vmatprep.mubr.f32.mxu0 0.0
        %2226 = vmatmul.mubr.f32.gmra.mrb[0].mxu0 %v2093
        %v2227 = vpop.f32.mrb[0].mxu0
        %v2228 = vadd.f32 0.0, %v2227
        %v2229 = vpop.f32.mrb[0].mxu0
        %2230 = vmatprep.mubr.f32.mxu0 0.0
        %2231 = vmatmul.mubr.f32.gmra.mrb[0].mxu0 %v2096
        %v2232 = vpop.f32.mrb[0].mxu0
        %v2233 = vadd.f32 0.0, %v2232
        %v2234 = vpop.f32.mrb[0].mxu0
        %2235 = vmatprep.mubr.f32.mxu0 0.0
        %2236 = vmatmul.mubr.f32.gmra.mrb[0].mxu0 %v2099
        %v2237 = vpop.f32.mrb[0].mxu0
        %v2238 = vadd.f32 0.0, %v2237
        %v2239 = vpop.f32.mrb[0].mxu0
        %2240 = vmatprep.mubr.f32.mxu0 0.0
        %2241 = vmatmul.mubr.f32.gmra.mrb[0].mxu0 %v2102
        %v2242 = vpop.f32.mrb[0].mxu0
        %v2243 = vadd.f32 0.0, %v2242
        %v2244 = vpop.f32.mrb[0].mxu0
        %2245 = vmatprep.mubr.f32.mxu0 0.0
        %2246 = vmatmul.mubr.f32.gmra.mrb[0].mxu0 %v2105
        %v2247 = vpop.f32.mrb[0].mxu0
        %v2248 = vadd.f32 0.0, %v2247
        %v2249 = vpop.f32.mrb[0].mxu0
        %2250 = vmatprep.mubr.f32.mxu0 0.0
        %2251 = vmatmul.mubr.f32.gmra.mrb[0].mxu0 %v2108
        %v2252 = vpop.f32.mrb[0].mxu0
        %v2253 = vadd.f32 0.0, %v2252
        %v2254 = vpop.f32.mrb[0].mxu0
        %2255 = vmatprep.mubr.f32.mxu0 0.0
        %2256 = vmatmul.mubr.f32.gmra.mrb[0].mxu0 %v2111
        %v2257 = vpop.f32.mrb[0].mxu0
        %v2258 = vadd.f32 0.0, %v2257
        %v2259 = vpop.f32.mrb[0].mxu0
        %2260 = vdwg.mxu0
        %v2261 = vsel %vm769, %v2183, 0.0
        %v2262 = vsel %vm770, %v2188, 0.0
        %v2263 = vsel %vm771, %v2193, 0.0
        %v2264 = vsel %vm772, %v2198, 0.0
        %v2265 = vsel %vm773, %v2203, 0.0
        %v2266 = vsel %vm774, %v2208, 0.0
        %v2267 = vsel %vm775, %v2213, 0.0
        %v2268 = vsel %vm776, %v2218, 0.0
        %v2269 = vsel %vm777, %v2223, 0.0
        %v2270 = vsel %vm778, %v2228, 0.0
        %v2271 = vsel %vm779, %v2233, 0.0
        %v2272 = vsel %vm780, %v2238, 0.0
        %v2273 = vsel %vm781, %v2243, 0.0
        %v2274 = vsel %vm782, %v2248, 0.0
        %v2275 = vsel %vm783, %v2253, 0.0
        %v2276 = vsel %vm784, %v2258, 0.0
        %v2277 = vadd.f32 %v2031, %v2261
        %v2278 = vadd.f32 %v2032, %v2262
        %v2279 = vadd.f32 %v2033, %v2263
        %v2280 = vadd.f32 %v2034, %v2264
        %v2281 = vadd.f32 %v2035, %v2265
        %v2282 = vadd.f32 %v2036, %v2266
        %v2283 = vadd.f32 %v2037, %v2267
        %v2284 = vadd.f32 %v2038, %v2268
        %v2285 = vadd.f32 %v2039, %v2269
        %v2286 = vadd.f32 %v2040, %v2270
        %v2287 = vadd.f32 %v2041, %v2271
        %v2288 = vadd.f32 %v2042, %v2272
        %v2289 = vadd.f32 %v2043, %v2273
        %v2290 = vadd.f32 %v2044, %v2274
        %v2291 = vadd.f32 %v2045, %v2275
        %v2292 = vadd.f32 %v2046, %v2276
        %v2293 = vld [vmem:[%s291 + $0x21] sm:$0xff]
        %v2294 = vld [vmem:[%s291 + $0x29] sm:$0xff]
        %v2295 = vld [vmem:[%s291 + $0x31] sm:$0xff]
        %v2296 = vld [vmem:[%s291 + $0x39] sm:$0xff]
        %v2297 = vld [vmem:[%s291 + $0x41] sm:$0xff]
        %v2298 = vld [vmem:[%s291 + $0x49] sm:$0xff]
        %v2299 = vld [vmem:[%s291 + $0x51] sm:$0xff]
        %v2300 = vld [vmem:[%s291 + $0x59] sm:$0xff]
        %v2301 = vld [vmem:[%s291 + $0x61] sm:$0xff]
        %v2302 = vld [vmem:[%s291 + $0x69] sm:$0xff]
        %v2303 = vld [vmem:[%s291 + $0x71] sm:$0xff]
        %v2304 = vld [vmem:[%s291 + $0x79] sm:$0xff]
        %v2305 = vld [vmem:[%s291 + $0x81] sm:$0xff]
        %v2306 = vld [vmem:[%s291 + $0x89] sm:$0xff]
        %v2307 = vld [vmem:[%s291 + $0x91] sm:$0xff]
        %v2308 = vld [vmem:[%s291 + $0x99] sm:$0xff]
        %s2309 = scalar_lea.vmem %s2, 28
        %v2310 = vld [vmem:[%s2309] sm:$0xf]
        %v2312 = vsel %vm555, %v2293, 0
        %v2315 = vsel %vm555, %v2294, 0
        %v2318 = vsel %vm555, %v2295, 0
        %v2321 = vsel %vm555, %v2296, 0
        %v2324 = vsel %vm555, %v2297, 0
        %v2327 = vsel %vm555, %v2298, 0
        %v2330 = vsel %vm555, %v2299, 0
        %v2333 = vsel %vm555, %v2300, 0
        %v2336 = vsel %vm555, %v2301, 0
        %v2339 = vsel %vm555, %v2302, 0
        %v2342 = vsel %vm555, %v2303, 0
        %v2345 = vsel %vm555, %v2304, 0
        %v2348 = vsel %vm555, %v2305, 0
        %v2351 = vsel %vm555, %v2306, 0
        %v2354 = vsel %vm555, %v2307, 0
        %v2357 = vsel %vm555, %v2308, 0
        %v2360 = vsel %vm604, %v2310, 0
        %2362 = vmatprep.subr.mxu0 0.0
        %2363 = vmatpush1.msra.mxu0 %v2360
        %2364 = vmatprep.subr.mxu0 0.0
        %2365 = vmatpush1.msra.mxu0 0.0
        %2366 = vmatprep.subr.mxu0 0.0
        %2367 = vmatpush1.msra.mxu0 0.0
        %2368 = vmatprep.subr.mxu0 0.0
        %2369 = vmatpush1.msra.mxu0 0.0
        %2370 = vmatprep.subr.mxu0 0.0
        %2371 = vmatpush1.msra.mxu0 0.0
        %2372 = vmatprep.subr.mxu0 0.0
        %2373 = vmatpush1.msra.mxu0 0.0
        %2374 = vmatprep.subr.mxu0 0.0
        %2375 = vmatpush1.msra.mxu0 0.0
        %2376 = vmatprep.subr.mxu0 0.0
        %2377 = vmatpush1.msra.mxu0 0.0
        %2378 = vmatprep.subr.mxu0 0.0
        %2379 = vmatpush1.msra.mxu0 0.0
        %2380 = vmatprep.subr.mxu0 0.0
        %2381 = vmatpush1.msra.mxu0 0.0
        %2382 = vmatprep.subr.mxu0 0.0
        %2383 = vmatpush1.msra.mxu0 0.0
        %2384 = vmatprep.subr.mxu0 0.0
        %2385 = vmatpush1.msra.mxu0 0.0
        %2386 = vmatprep.subr.mxu0 0.0
        %2387 = vmatpush1.msra.mxu0 0.0
        %2388 = vmatprep.subr.mxu0 0.0
        %2389 = vmatpush1.msra.mxu0 0.0
        %2390 = vmatprep.subr.mxu0 0.0
        %2391 = vmatpush1.msra.mxu0 0.0
        %2392 = vmatprep.subr.mxu0 0.0
        %2393 = vmatpush1.msra.mxu0 0.0
        %2394 = vmatprep.subr.mxu0 0.0
        %2395 = vmatpush1.msra.mxu0 0.0
        %2396 = vmatprep.subr.mxu0 0.0
        %2397 = vmatpush1.msra.mxu0 0.0
        %2398 = vmatprep.subr.mxu0 0.0
        %2399 = vmatpush1.msra.mxu0 0.0
        %2400 = vmatprep.subr.mxu0 0.0
        %2401 = vmatpush1.msra.mxu0 0.0
        %2402 = vmatprep.subr.mxu0 0.0
        %2403 = vmatpush1.msra.mxu0 0.0
        %2404 = vmatprep.subr.mxu0 0.0
        %2405 = vmatpush1.msra.mxu0 0.0
        %2406 = vmatprep.subr.mxu0 0.0
        %2407 = vmatpush1.msra.mxu0 0.0
        %2408 = vmatprep.subr.mxu0 0.0
        %2409 = vmatpush1.msra.mxu0 0.0
        %2410 = vmatprep.subr.mxu0 0.0
        %2411 = vmatpush1.msra.mxu0 0.0
        %2412 = vmatprep.subr.mxu0 0.0
        %2413 = vmatpush1.msra.mxu0 0.0
        %2414 = vmatprep.subr.mxu0 0.0
        %2415 = vmatpush1.msra.mxu0 0.0
        %2416 = vmatprep.subr.mxu0 0.0
        %2417 = vmatpush1.msra.mxu0 0.0
        %2418 = vmatprep.subr.mxu0 0.0
        %2419 = vmatpush1.msra.mxu0 0.0
        %2420 = vmatprep.subr.mxu0 0.0
        %2421 = vmatpush1.msra.mxu0 0.0
        %2422 = vmatprep.subr.mxu0 0.0
        %2423 = vmatpush1.msra.mxu0 0.0
        %2424 = vmatprep.subr.mxu0 0.0
        %2425 = vmatpush1.msra.mxu0 0.0
        %2426 = vmatprep.mubr.f32.mxu0 0.0
        %2427 = vmatmul.mubr.f32.gmra.mrb[0].mxu0 %v2312
        %v2428 = vpop.f32.mrb[0].mxu0
        %v2429 = vadd.f32 0.0, %v2428
        %v2430 = vpop.f32.mrb[0].mxu0
        %2431 = vmatprep.mubr.f32.mxu0 0.0
        %2432 = vmatmul.mubr.f32.gmra.mrb[0].mxu0 %v2315
        %v2433 = vpop.f32.mrb[0].mxu0
        %v2434 = vadd.f32 0.0, %v2433
        %v2435 = vpop.f32.mrb[0].mxu0
        %2436 = vmatprep.mubr.f32.mxu0 0.0
        %2437 = vmatmul.mubr.f32.gmra.mrb[0].mxu0 %v2318
        %v2438 = vpop.f32.mrb[0].mxu0
        %v2439 = vadd.f32 0.0, %v2438
        %v2440 = vpop.f32.mrb[0].mxu0
        %2441 = vmatprep.mubr.f32.mxu0 0.0
        %2442 = vmatmul.mubr.f32.gmra.mrb[0].mxu0 %v2321
        %v2443 = vpop.f32.mrb[0].mxu0
        %v2444 = vadd.f32 0.0, %v2443
        %v2445 = vpop.f32.mrb[0].mxu0
        %2446 = vmatprep.mubr.f32.mxu0 0.0
        %2447 = vmatmul.mubr.f32.gmra.mrb[0].mxu0 %v2324
        %v2448 = vpop.f32.mrb[0].mxu0
        %v2449 = vadd.f32 0.0, %v2448
        %v2450 = vpop.f32.mrb[0].mxu0
        %2451 = vmatprep.mubr.f32.mxu0 0.0
        %2452 = vmatmul.mubr.f32.gmra.mrb[0].mxu0 %v2327
        %v2453 = vpop.f32.mrb[0].mxu0
        %v2454 = vadd.f32 0.0, %v2453
        %v2455 = vpop.f32.mrb[0].mxu0
        %2456 = vmatprep.mubr.f32.mxu0 0.0
        %2457 = vmatmul.mubr.f32.gmra.mrb[0].mxu0 %v2330
        %v2458 = vpop.f32.mrb[0].mxu0
        %v2459 = vadd.f32 0.0, %v2458
        %v2460 = vpop.f32.mrb[0].mxu0
        %2461 = vmatprep.mubr.f32.mxu0 0.0
        %2462 = vmatmul.mubr.f32.gmra.mrb[0].mxu0 %v2333
        %v2463 = vpop.f32.mrb[0].mxu0
        %v2464 = vadd.f32 0.0, %v2463
        %v2465 = vpop.f32.mrb[0].mxu0
        %2466 = vmatprep.mubr.f32.mxu0 0.0
        %2467 = vmatmul.mubr.f32.gmra.mrb[0].mxu0 %v2336
        %v2468 = vpop.f32.mrb[0].mxu0
        %v2469 = vadd.f32 0.0, %v2468
        %v2470 = vpop.f32.mrb[0].mxu0
        %2471 = vmatprep.mubr.f32.mxu0 0.0
        %2472 = vmatmul.mubr.f32.gmra.mrb[0].mxu0 %v2339
        %v2473 = vpop.f32.mrb[0].mxu0
        %v2474 = vadd.f32 0.0, %v2473
        %v2475 = vpop.f32.mrb[0].mxu0
        %2476 = vmatprep.mubr.f32.mxu0 0.0
        %2477 = vmatmul.mubr.f32.gmra.mrb[0].mxu0 %v2342
        %v2478 = vpop.f32.mrb[0].mxu0
        %v2479 = vadd.f32 0.0, %v2478
        %v2480 = vpop.f32.mrb[0].mxu0
        %2481 = vmatprep.mubr.f32.mxu0 0.0
        %2482 = vmatmul.mubr.f32.gmra.mrb[0].mxu0 %v2345
        %v2483 = vpop.f32.mrb[0].mxu0
        %v2484 = vadd.f32 0.0, %v2483
        %v2485 = vpop.f32.mrb[0].mxu0
        %2486 = vmatprep.mubr.f32.mxu0 0.0
        %2487 = vmatmul.mubr.f32.gmra.mrb[0].mxu0 %v2348
        %v2488 = vpop.f32.mrb[0].mxu0
        %v2489 = vadd.f32 0.0, %v2488
        %v2490 = vpop.f32.mrb[0].mxu0
        %2491 = vmatprep.mubr.f32.mxu0 0.0
        %2492 = vmatmul.mubr.f32.gmra.mrb[0].mxu0 %v2351
        %v2493 = vpop.f32.mrb[0].mxu0
        %v2494 = vadd.f32 0.0, %v2493
        %v2495 = vpop.f32.mrb[0].mxu0
        %2496 = vmatprep.mubr.f32.mxu0 0.0
        %2497 = vmatmul.mubr.f32.gmra.mrb[0].mxu0 %v2354
        %v2498 = vpop.f32.mrb[0].mxu0
        %v2499 = vadd.f32 0.0, %v2498
        %v2500 = vpop.f32.mrb[0].mxu0
        %2501 = vmatprep.mubr.f32.mxu0 0.0
        %2502 = vmatmul.mubr.f32.gmra.mrb[0].mxu0 %v2357
        %v2503 = vpop.f32.mrb[0].mxu0
        %v2504 = vadd.f32 0.0, %v2503
        %v2505 = vpop.f32.mrb[0].mxu0
        %2506 = vdwg.mxu0
        %v2507 = vadd.f32 %v2277, %v2429
        %v2508 = vadd.f32 %v2278, %v2434
        %v2509 = vadd.f32 %v2279, %v2439
        %v2510 = vadd.f32 %v2280, %v2444
        %v2511 = vadd.f32 %v2281, %v2449
        %v2512 = vadd.f32 %v2282, %v2454
        %v2513 = vadd.f32 %v2283, %v2459
        %v2514 = vadd.f32 %v2284, %v2464
        %v2515 = vadd.f32 %v2285, %v2469
        %v2516 = vadd.f32 %v2286, %v2474
        %v2517 = vadd.f32 %v2287, %v2479
        %v2518 = vadd.f32 %v2288, %v2484
        %v2519 = vadd.f32 %v2289, %v2489
        %v2520 = vadd.f32 %v2290, %v2494
        %v2521 = vadd.f32 %v2291, %v2499
        %v2522 = vadd.f32 %v2292, %v2504
        %v2523 = vld [vmem:[%s291 + $0x22] sm:$0xff]
        %v2524 = vld [vmem:[%s291 + $0x2a] sm:$0xff]
        %v2525 = vld [vmem:[%s291 + $0x32] sm:$0xff]
        %v2526 = vld [vmem:[%s291 + $0x3a] sm:$0xff]
        %v2527 = vld [vmem:[%s291 + $0x42] sm:$0xff]
        %v2528 = vld [vmem:[%s291 + $0x4a] sm:$0xff]
        %v2529 = vld [vmem:[%s291 + $0x52] sm:$0xff]
        %v2530 = vld [vmem:[%s291 + $0x5a] sm:$0xff]
        %v2531 = vld [vmem:[%s291 + $0x62] sm:$0xff]
        %v2532 = vld [vmem:[%s291 + $0x6a] sm:$0xff]
        %v2533 = vld [vmem:[%s291 + $0x72] sm:$0xff]
        %v2534 = vld [vmem:[%s291 + $0x7a] sm:$0xff]
        %v2535 = vld [vmem:[%s291 + $0x82] sm:$0xff]
        %v2536 = vld [vmem:[%s291 + $0x8a] sm:$0xff]
        %v2537 = vld [vmem:[%s291 + $0x92] sm:$0xff]
        %v2538 = vld [vmem:[%s291 + $0x9a] sm:$0xff]
        %s2539 = scalar_lea.vmem %s2, 32
        %v2540 = vld [vmem:[%s2539] sm:$0xf]
        %v2542 = vsel %vm555, %v2523, 0
        %v2545 = vsel %vm555, %v2524, 0
        %v2548 = vsel %vm555, %v2525, 0
        %v2551 = vsel %vm555, %v2526, 0
        %v2554 = vsel %vm555, %v2527, 0
        %v2557 = vsel %vm555, %v2528, 0
        %v2560 = vsel %vm555, %v2529, 0
        %v2563 = vsel %vm555, %v2530, 0
        %v2566 = vsel %vm555, %v2531, 0
        %v2569 = vsel %vm555, %v2532, 0
        %v2572 = vsel %vm555, %v2533, 0
        %v2575 = vsel %vm555, %v2534, 0
        %v2578 = vsel %vm555, %v2535, 0
        %v2581 = vsel %vm555, %v2536, 0
        %v2584 = vsel %vm555, %v2537, 0
        %v2587 = vsel %vm555, %v2538, 0
        %v2590 = vsel %vm604, %v2540, 0
        %2592 = vmatprep.subr.mxu0 0.0
        %2593 = vmatpush1.msra.mxu0 %v2590
        %2594 = vmatprep.subr.mxu0 0.0
        %2595 = vmatpush1.msra.mxu0 0.0
        %2596 = vmatprep.subr.mxu0 0.0
        %2597 = vmatpush1.msra.mxu0 0.0
        %2598 = vmatprep.subr.mxu0 0.0
        %2599 = vmatpush1.msra.mxu0 0.0
        %2600 = vmatprep.subr.mxu0 0.0
        %2601 = vmatpush1.msra.mxu0 0.0
        %2602 = vmatprep.subr.mxu0 0.0
        %2603 = vmatpush1.msra.mxu0 0.0
        %2604 = vmatprep.subr.mxu0 0.0
        %2605 = vmatpush1.msra.mxu0 0.0
        %2606 = vmatprep.subr.mxu0 0.0
        %2607 = vmatpush1.msra.mxu0 0.0
        %2608 = vmatprep.subr.mxu0 0.0
        %2609 = vmatpush1.msra.mxu0 0.0
        %2610 = vmatprep.subr.mxu0 0.0
        %2611 = vmatpush1.msra.mxu0 0.0
        %2612 = vmatprep.subr.mxu0 0.0
        %2613 = vmatpush1.msra.mxu0 0.0
        %2614 = vmatprep.subr.mxu0 0.0
        %2615 = vmatpush1.msra.mxu0 0.0
        %2616 = vmatprep.subr.mxu0 0.0
        %2617 = vmatpush1.msra.mxu0 0.0
        %2618 = vmatprep.subr.mxu0 0.0
        %2619 = vmatpush1.msra.mxu0 0.0
        %2620 = vmatprep.subr.mxu0 0.0
        %2621 = vmatpush1.msra.mxu0 0.0
        %2622 = vmatprep.subr.mxu0 0.0
        %2623 = vmatpush1.msra.mxu0 0.0
        %2624 = vmatprep.subr.mxu0 0.0
        %2625 = vmatpush1.msra.mxu0 0.0
        %2626 = vmatprep.subr.mxu0 0.0
        %2627 = vmatpush1.msra.mxu0 0.0
        %2628 = vmatprep.subr.mxu0 0.0
        %2629 = vmatpush1.msra.mxu0 0.0
        %2630 = vmatprep.subr.mxu0 0.0
        %2631 = vmatpush1.msra.mxu0 0.0
        %2632 = vmatprep.subr.mxu0 0.0
        %2633 = vmatpush1.msra.mxu0 0.0
        %2634 = vmatprep.subr.mxu0 0.0
        %2635 = vmatpush1.msra.mxu0 0.0
        %2636 = vmatprep.subr.mxu0 0.0
        %2637 = vmatpush1.msra.mxu0 0.0
        %2638 = vmatprep.subr.mxu0 0.0
        %2639 = vmatpush1.msra.mxu0 0.0
        %2640 = vmatprep.subr.mxu0 0.0
        %2641 = vmatpush1.msra.mxu0 0.0
        %2642 = vmatprep.subr.mxu0 0.0
        %2643 = vmatpush1.msra.mxu0 0.0
        %2644 = vmatprep.subr.mxu0 0.0
        %2645 = vmatpush1.msra.mxu0 0.0
        %2646 = vmatprep.subr.mxu0 0.0
        %2647 = vmatpush1.msra.mxu0 0.0
        %2648 = vmatprep.subr.mxu0 0.0
        %2649 = vmatpush1.msra.mxu0 0.0
        %2650 = vmatprep.subr.mxu0 0.0
        %2651 = vmatpush1.msra.mxu0 0.0
        %2652 = vmatprep.subr.mxu0 0.0
        %2653 = vmatpush1.msra.mxu0 0.0
        %2654 = vmatprep.subr.mxu0 0.0
        %2655 = vmatpush1.msra.mxu0 0.0
        %2656 = vmatprep.mubr.f32.mxu0 0.0
        %2657 = vmatmul.mubr.f32.gmra.mrb[0].mxu0 %v2542
        %v2658 = vpop.f32.mrb[0].mxu0
        %v2659 = vadd.f32 0.0, %v2658
        %v2660 = vpop.f32.mrb[0].mxu0
        %2661 = vmatprep.mubr.f32.mxu0 0.0
        %2662 = vmatmul.mubr.f32.gmra.mrb[0].mxu0 %v2545
        %v2663 = vpop.f32.mrb[0].mxu0
        %v2664 = vadd.f32 0.0, %v2663
        %v2665 = vpop.f32.mrb[0].mxu0
        %2666 = vmatprep.mubr.f32.mxu0 0.0
        %2667 = vmatmul.mubr.f32.gmra.mrb[0].mxu0 %v2548
        %v2668 = vpop.f32.mrb[0].mxu0
        %v2669 = vadd.f32 0.0, %v2668
        %v2670 = vpop.f32.mrb[0].mxu0
        %2671 = vmatprep.mubr.f32.mxu0 0.0
        %2672 = vmatmul.mubr.f32.gmra.mrb[0].mxu0 %v2551
        %v2673 = vpop.f32.mrb[0].mxu0
        %v2674 = vadd.f32 0.0, %v2673
        %v2675 = vpop.f32.mrb[0].mxu0
        %2676 = vmatprep.mubr.f32.mxu0 0.0
        %2677 = vmatmul.mubr.f32.gmra.mrb[0].mxu0 %v2554
        %v2678 = vpop.f32.mrb[0].mxu0
        %v2679 = vadd.f32 0.0, %v2678
        %v2680 = vpop.f32.mrb[0].mxu0
        %2681 = vmatprep.mubr.f32.mxu0 0.0
        %2682 = vmatmul.mubr.f32.gmra.mrb[0].mxu0 %v2557
        %v2683 = vpop.f32.mrb[0].mxu0
        %v2684 = vadd.f32 0.0, %v2683
        %v2685 = vpop.f32.mrb[0].mxu0
        %2686 = vmatprep.mubr.f32.mxu0 0.0
        %2687 = vmatmul.mubr.f32.gmra.mrb[0].mxu0 %v2560
        %v2688 = vpop.f32.mrb[0].mxu0
        %v2689 = vadd.f32 0.0, %v2688
        %v2690 = vpop.f32.mrb[0].mxu0
        %2691 = vmatprep.mubr.f32.mxu0 0.0
        %2692 = vmatmul.mubr.f32.gmra.mrb[0].mxu0 %v2563
        %v2693 = vpop.f32.mrb[0].mxu0
        %v2694 = vadd.f32 0.0, %v2693
        %v2695 = vpop.f32.mrb[0].mxu0
        %2696 = vmatprep.mubr.f32.mxu0 0.0
        %2697 = vmatmul.mubr.f32.gmra.mrb[0].mxu0 %v2566
        %v2698 = vpop.f32.mrb[0].mxu0
        %v2699 = vadd.f32 0.0, %v2698
        %v2700 = vpop.f32.mrb[0].mxu0
        %2701 = vmatprep.mubr.f32.mxu0 0.0
        %2702 = vmatmul.mubr.f32.gmra.mrb[0].mxu0 %v2569
        %v2703 = vpop.f32.mrb[0].mxu0
        %v2704 = vadd.f32 0.0, %v2703
        %v2705 = vpop.f32.mrb[0].mxu0
        %2706 = vmatprep.mubr.f32.mxu0 0.0
        %2707 = vmatmul.mubr.f32.gmra.mrb[0].mxu0 %v2572
        %v2708 = vpop.f32.mrb[0].mxu0
        %v2709 = vadd.f32 0.0, %v2708
        %v2710 = vpop.f32.mrb[0].mxu0
        %2711 = vmatprep.mubr.f32.mxu0 0.0
        %2712 = vmatmul.mubr.f32.gmra.mrb[0].mxu0 %v2575
        %v2713 = vpop.f32.mrb[0].mxu0
        %v2714 = vadd.f32 0.0, %v2713
        %v2715 = vpop.f32.mrb[0].mxu0
        %2716 = vmatprep.mubr.f32.mxu0 0.0
        %2717 = vmatmul.mubr.f32.gmra.mrb[0].mxu0 %v2578
        %v2718 = vpop.f32.mrb[0].mxu0
        %v2719 = vadd.f32 0.0, %v2718
        %v2720 = vpop.f32.mrb[0].mxu0
        %2721 = vmatprep.mubr.f32.mxu0 0.0
        %2722 = vmatmul.mubr.f32.gmra.mrb[0].mxu0 %v2581
        %v2723 = vpop.f32.mrb[0].mxu0
        %v2724 = vadd.f32 0.0, %v2723
        %v2725 = vpop.f32.mrb[0].mxu0
        %2726 = vmatprep.mubr.f32.mxu0 0.0
        %2727 = vmatmul.mubr.f32.gmra.mrb[0].mxu0 %v2584
        %v2728 = vpop.f32.mrb[0].mxu0
        %v2729 = vadd.f32 0.0, %v2728
        %v2730 = vpop.f32.mrb[0].mxu0
        %2731 = vmatprep.mubr.f32.mxu0 0.0
        %2732 = vmatmul.mubr.f32.gmra.mrb[0].mxu0 %v2587
        %v2733 = vpop.f32.mrb[0].mxu0
        %v2734 = vadd.f32 0.0, %v2733
        %v2735 = vpop.f32.mrb[0].mxu0
        %2736 = vdwg.mxu0
        %v2737 = vsel %vm1277, %v2659, 0.0
        %v2738 = vsel %vm1278, %v2664, 0.0
        %v2739 = vsel %vm1279, %v2669, 0.0
        %v2740 = vsel %vm1280, %v2674, 0.0
        %v2741 = vsel %vm1281, %v2679, 0.0
        %v2742 = vsel %vm1282, %v2684, 0.0
        %v2743 = vsel %vm1283, %v2689, 0.0
        %v2744 = vsel %vm1284, %v2694, 0.0
        %v2745 = vsel %vm1285, %v2699, 0.0
        %v2746 = vsel %vm1286, %v2704, 0.0
        %v2747 = vsel %vm1287, %v2709, 0.0
        %v2748 = vsel %vm1288, %v2714, 0.0
        %v2749 = vsel %vm1289, %v2719, 0.0
        %v2750 = vsel %vm1290, %v2724, 0.0
        %v2751 = vsel %vm1291, %v2729, 0.0
        %v2752 = vsel %vm1292, %v2734, 0.0
        %v2753 = vadd.f32 %v2507, %v2737
        %v2754 = vadd.f32 %v2508, %v2738
        %v2755 = vadd.f32 %v2509, %v2739
        %v2756 = vadd.f32 %v2510, %v2740
        %v2757 = vadd.f32 %v2511, %v2741
        %v2758 = vadd.f32 %v2512, %v2742
        %v2759 = vadd.f32 %v2513, %v2743
        %v2760 = vadd.f32 %v2514, %v2744
        %v2761 = vadd.f32 %v2515, %v2745
        %v2762 = vadd.f32 %v2516, %v2746
        %v2763 = vadd.f32 %v2517, %v2747
        %v2764 = vadd.f32 %v2518, %v2748
        %v2765 = vadd.f32 %v2519, %v2749
        %v2766 = vadd.f32 %v2520, %v2750
        %v2767 = vadd.f32 %v2521, %v2751
        %v2768 = vadd.f32 %v2522, %v2752
        %v2769 = vld [vmem:[%s3] sm:$0x1]
        %v2771 = vlaneseq
        %v2772 = vshrl.u32 %v2771, 7
        %v2773 = vsub.s32 0, %v2772
        %v2774 = vrot.slane %v2769, %v2773
        %v2776 = vadd.f32 %v2753, %v2774
        %v2777 = vadd.f32 %v2754, %v2774
        %v2778 = vadd.f32 %v2755, %v2774
        %v2779 = vadd.f32 %v2756, %v2774
        %v2780 = vadd.f32 %v2757, %v2774
        %v2781 = vadd.f32 %v2758, %v2774
        %v2782 = vadd.f32 %v2759, %v2774
        %v2783 = vadd.f32 %v2760, %v2774
        %v2784 = vadd.f32 %v2761, %v2774
        %v2785 = vadd.f32 %v2762, %v2774
        %v2786 = vadd.f32 %v2763, %v2774
        %v2787 = vadd.f32 %v2764, %v2774
        %v2788 = vadd.f32 %v2765, %v2774
        %v2789 = vadd.f32 %v2766, %v2774
        %v2790 = vadd.f32 %v2767, %v2774
        %v2791 = vadd.f32 %v2768, %v2774
        %v2792 = vmul.f32 %v2776, 1.442695
        %v2793 = vpow.pop %v2792
        %v2794 = vmul.f32 %v2777, 1.442695
        %v2795 = vpow.pop %v2794
        %v2796 = vmul.f32 %v2778, 1.442695
        %v2797 = vpow.pop %v2796
        %v2798 = vmul.f32 %v2779, 1.442695
        %v2799 = vpow.pop %v2798
        %v2800 = vmul.f32 %v2780, 1.442695
        %v2801 = vpow.pop %v2800
        %v2802 = vmul.f32 %v2781, 1.442695
        %v2803 = vpow.pop %v2802
        %v2804 = vmul.f32 %v2782, 1.442695
        %v2805 = vpow.pop %v2804
        %v2806 = vmul.f32 %v2783, 1.442695
        %v2807 = vpow.pop %v2806
        %v2808 = vmul.f32 %v2784, 1.442695
        %v2809 = vpow.pop %v2808
        %v2810 = vmul.f32 %v2785, 1.442695
        %v2811 = vpow.pop %v2810
        %v2812 = vmul.f32 %v2786, 1.442695
        %v2813 = vpow.pop %v2812
        %v2814 = vmul.f32 %v2787, 1.442695
        %v2815 = vpow.pop %v2814
        %v2816 = vmul.f32 %v2788, 1.442695
        %v2817 = vpow.pop %v2816
        %v2818 = vmul.f32 %v2789, 1.442695
        %v2819 = vpow.pop %v2818
        %v2820 = vmul.f32 %v2790, 1.442695
        %v2821 = vpow.pop %v2820
        %v2822 = vmul.f32 %v2791, 1.442695
        %v2823 = vpow.pop %v2822
        %v2824 = vadd.f32 %v2793, 2.0
        %v2825 = vadd.f32 %v2795, 2.0
        %v2826 = vadd.f32 %v2797, 2.0
        %v2827 = vadd.f32 %v2799, 2.0
        %v2828 = vadd.f32 %v2801, 2.0
        %v2829 = vadd.f32 %v2803, 2.0
        %v2830 = vadd.f32 %v2805, 2.0
        %v2831 = vadd.f32 %v2807, 2.0
        %v2832 = vadd.f32 %v2809, 2.0
        %v2833 = vadd.f32 %v2811, 2.0
        %v2834 = vadd.f32 %v2813, 2.0
        %v2835 = vadd.f32 %v2815, 2.0
        %v2836 = vadd.f32 %v2817, 2.0
        %v2837 = vadd.f32 %v2819, 2.0
        %v2838 = vadd.f32 %v2821, 2.0
        %v2839 = vadd.f32 %v2823, 2.0
        %v2840 = vmul.f32 %v2793, %v2824
        %v2841 = vmul.f32 %v2795, %v2825
        %v2842 = vmul.f32 %v2797, %v2826
        %v2843 = vmul.f32 %v2799, %v2827
        %v2844 = vmul.f32 %v2801, %v2828
        %v2845 = vmul.f32 %v2803, %v2829
        %v2846 = vmul.f32 %v2805, %v2830
        %v2847 = vmul.f32 %v2807, %v2831
        %v2848 = vmul.f32 %v2809, %v2832
        %v2849 = vmul.f32 %v2811, %v2833
        %v2850 = vmul.f32 %v2813, %v2834
        %v2851 = vmul.f32 %v2815, %v2835
        %v2852 = vmul.f32 %v2817, %v2836
        %v2853 = vmul.f32 %v2819, %v2837
        %v2854 = vmul.f32 %v2821, %v2838
        %v2855 = vmul.f32 %v2823, %v2839
        %v2856 = vadd.f32 %v2840, 2.0
        %v2857 = vadd.f32 %v2841, 2.0
        %v2858 = vadd.f32 %v2842, 2.0
        %v2859 = vadd.f32 %v2843, 2.0
        %v2860 = vadd.f32 %v2844, 2.0
        %v2861 = vadd.f32 %v2845, 2.0
        %v2862 = vadd.f32 %v2846, 2.0
        %v2863 = vadd.f32 %v2847, 2.0
        %v2864 = vadd.f32 %v2848, 2.0
        %v2865 = vadd.f32 %v2849, 2.0
        %v2866 = vadd.f32 %v2850, 2.0
        %v2867 = vadd.f32 %v2851, 2.0
        %v2868 = vadd.f32 %v2852, 2.0
        %v2869 = vadd.f32 %v2853, 2.0
        %v2870 = vadd.f32 %v2854, 2.0
        %v2871 = vadd.f32 %v2855, 2.0
        %v2872 = vrcp.pop %v2856
        %v2873 = vrcp.pop %v2857
        %v2874 = vrcp.pop %v2858
        %v2875 = vrcp.pop %v2859
        %v2876 = vrcp.pop %v2860
        %v2877 = vrcp.pop %v2861
        %v2878 = vrcp.pop %v2862
        %v2879 = vrcp.pop %v2863
        %v2880 = vrcp.pop %v2864
        %v2881 = vrcp.pop %v2865
        %v2882 = vrcp.pop %v2866
        %v2883 = vrcp.pop %v2867
        %v2884 = vrcp.pop %v2868
        %v2885 = vrcp.pop %v2869
        %v2886 = vrcp.pop %v2870
        %v2887 = vrcp.pop %v2871
        %v2888 = vmul.f32 %v2840, %v2872
        %v2889 = vmul.f32 %v2841, %v2873
        %v2890 = vmul.f32 %v2842, %v2874
        %v2891 = vmul.f32 %v2843, %v2875
        %v2892 = vmul.f32 %v2844, %v2876
        %v2893 = vmul.f32 %v2845, %v2877
        %v2894 = vmul.f32 %v2846, %v2878
        %v2895 = vmul.f32 %v2847, %v2879
        %v2896 = vmul.f32 %v2848, %v2880
        %v2897 = vmul.f32 %v2849, %v2881
        %v2898 = vmul.f32 %v2850, %v2882
        %v2899 = vmul.f32 %v2851, %v2883
        %v2900 = vmul.f32 %v2852, %v2884
        %v2901 = vmul.f32 %v2853, %v2885
        %v2902 = vmul.f32 %v2854, %v2886
        %v2903 = vmul.f32 %v2855, %v2887
        %vm2904 = vcmp.gt.f32.partialorder %v2776, 20.0
        %vm2905 = vcmp.gt.f32.partialorder %v2777, 20.0
        %vm2906 = vcmp.gt.f32.partialorder %v2778, 20.0
        %vm2907 = vcmp.gt.f32.partialorder %v2779, 20.0
        %vm2908 = vcmp.gt.f32.partialorder %v2780, 20.0
        %vm2909 = vcmp.gt.f32.partialorder %v2781, 20.0
        %vm2910 = vcmp.gt.f32.partialorder %v2782, 20.0
        %vm2911 = vcmp.gt.f32.partialorder %v2783, 20.0
        %vm2912 = vcmp.gt.f32.partialorder %v2784, 20.0
        %vm2913 = vcmp.gt.f32.partialorder %v2785, 20.0
        %vm2914 = vcmp.gt.f32.partialorder %v2786, 20.0
        %vm2915 = vcmp.gt.f32.partialorder %v2787, 20.0
        %vm2916 = vcmp.gt.f32.partialorder %v2788, 20.0
        %vm2917 = vcmp.gt.f32.partialorder %v2789, 20.0
        %vm2918 = vcmp.gt.f32.partialorder %v2790, 20.0
        %vm2919 = vcmp.gt.f32.partialorder %v2791, 20.0
        %v2920 = vmul.f32 %v2776, %v2888
        %v2921 = vmul.f32 %v2777, %v2889
        %v2922 = vmul.f32 %v2778, %v2890
        %v2923 = vmul.f32 %v2779, %v2891
        %v2924 = vmul.f32 %v2780, %v2892
        %v2925 = vmul.f32 %v2781, %v2893
        %v2926 = vmul.f32 %v2782, %v2894
        %v2927 = vmul.f32 %v2783, %v2895
        %v2928 = vmul.f32 %v2784, %v2896
        %v2929 = vmul.f32 %v2785, %v2897
        %v2930 = vmul.f32 %v2786, %v2898
        %v2931 = vmul.f32 %v2787, %v2899
        %v2932 = vmul.f32 %v2788, %v2900
        %v2933 = vmul.f32 %v2789, %v2901
        %v2934 = vmul.f32 %v2790, %v2902
        %v2935 = vmul.f32 %v2791, %v2903
        %v2936 = vsel %vm2904, %v2776, %v2920
        %v2937 = vsel %vm2905, %v2777, %v2921
        %v2938 = vsel %vm2906, %v2778, %v2922
        %v2939 = vsel %vm2907, %v2779, %v2923
        %v2940 = vsel %vm2908, %v2780, %v2924
        %v2941 = vsel %vm2909, %v2781, %v2925
        %v2942 = vsel %vm2910, %v2782, %v2926
        %v2943 = vsel %vm2911, %v2783, %v2927
        %v2944 = vsel %vm2912, %v2784, %v2928
        %v2945 = vsel %vm2913, %v2785, %v2929
        %v2946 = vsel %vm2914, %v2786, %v2930
        %v2947 = vsel %vm2915, %v2787, %v2931
        %v2948 = vsel %vm2916, %v2788, %v2932
        %v2949 = vsel %vm2917, %v2789, %v2933
        %v2950 = vsel %vm2918, %v2790, %v2934
        %v2951 = vsel %vm2919, %v2791, %v2935
        %v2952 = vld [vmem:[%s4] sm:$0xf]
        %v2953 = vld [vmem:[%s5] sm:$0xf]
        %v2955 = vsel %vm604, %v2953, 0
        %2957 = vmatprep.subr.mxu0 0.0
        %2958 = vmatpush1.msra.mxu0 %v2955
        %2959 = vmatprep.subr.mxu0 0.0
        %2960 = vmatpush1.msra.mxu0 0.0
        %2961 = vmatprep.subr.mxu0 0.0
        %2962 = vmatpush1.msra.mxu0 0.0
        %2963 = vmatprep.subr.mxu0 0.0
        %2964 = vmatpush1.msra.mxu0 0.0
        %2965 = vmatprep.subr.mxu0 0.0
        %2966 = vmatpush1.msra.mxu0 0.0
        %2967 = vmatprep.subr.mxu0 0.0
        %2968 = vmatpush1.msra.mxu0 0.0
        %2969 = vmatprep.subr.mxu0 0.0
        %2970 = vmatpush1.msra.mxu0 0.0
        %2971 = vmatprep.subr.mxu0 0.0
        %2972 = vmatpush1.msra.mxu0 0.0
        %2973 = vmatprep.subr.mxu0 0.0
        %2974 = vmatpush1.msra.mxu0 0.0
        %2975 = vmatprep.subr.mxu0 0.0
        %2976 = vmatpush1.msra.mxu0 0.0
        %2977 = vmatprep.subr.mxu0 0.0
        %2978 = vmatpush1.msra.mxu0 0.0
        %2979 = vmatprep.subr.mxu0 0.0
        %2980 = vmatpush1.msra.mxu0 0.0
        %2981 = vmatprep.subr.mxu0 0.0
        %2982 = vmatpush1.msra.mxu0 0.0
        %2983 = vmatprep.subr.mxu0 0.0
        %2984 = vmatpush1.msra.mxu0 0.0
        %2985 = vmatprep.subr.mxu0 0.0
        %2986 = vmatpush1.msra.mxu0 0.0
        %2987 = vmatprep.subr.mxu0 0.0
        %2988 = vmatpush1.msra.mxu0 0.0
        %2989 = vmatprep.subr.mxu0 0.0
        %2990 = vmatpush1.msra.mxu0 0.0
        %2991 = vmatprep.subr.mxu0 0.0
        %2992 = vmatpush1.msra.mxu0 0.0
        %2993 = vmatprep.subr.mxu0 0.0
        %2994 = vmatpush1.msra.mxu0 0.0
        %2995 = vmatprep.subr.mxu0 0.0
        %2996 = vmatpush1.msra.mxu0 0.0
        %2997 = vmatprep.subr.mxu0 0.0
        %2998 = vmatpush1.msra.mxu0 0.0
        %2999 = vmatprep.subr.mxu0 0.0
        %3000 = vmatpush1.msra.mxu0 0.0
        %3001 = vmatprep.subr.mxu0 0.0
        %3002 = vmatpush1.msra.mxu0 0.0
        %3003 = vmatprep.subr.mxu0 0.0
        %3004 = vmatpush1.msra.mxu0 0.0
        %3005 = vmatprep.subr.mxu0 0.0
        %3006 = vmatpush1.msra.mxu0 0.0
        %3007 = vmatprep.subr.mxu0 0.0
        %3008 = vmatpush1.msra.mxu0 0.0
        %3009 = vmatprep.subr.mxu0 0.0
        %3010 = vmatpush1.msra.mxu0 0.0
        %3011 = vmatprep.subr.mxu0 0.0
        %3012 = vmatpush1.msra.mxu0 0.0
        %3013 = vmatprep.subr.mxu0 0.0
        %3014 = vmatpush1.msra.mxu0 0.0
        %3015 = vmatprep.subr.mxu0 0.0
        %3016 = vmatpush1.msra.mxu0 0.0
        %3017 = vmatprep.subr.mxu0 0.0
        %3018 = vmatpush1.msra.mxu0 0.0
        %3019 = vmatprep.subr.mxu0 0.0
        %3020 = vmatpush1.msra.mxu0 0.0
        %3021 = vmatprep.mubr.f32.mxu0 0.0
        %3022 = vmatmul.mubr.f32.gmra.mrb[0].mxu0 %v1590
        %v3023 = vpop.f32.mrb[0].mxu0
        %v3024 = vadd.f32 0.0, %v3023
        %v3025 = vpop.f32.mrb[0].mxu0
        %3026 = vmatprep.mubr.f32.mxu0 0.0
        %3027 = vmatmul.mubr.f32.gmra.mrb[0].mxu0 %v1593
        %v3028 = vpop.f32.mrb[0].mxu0
        %v3029 = vadd.f32 0.0, %v3028
        %v3030 = vpop.f32.mrb[0].mxu0
        %3031 = vmatprep.mubr.f32.mxu0 0.0
        %3032 = vmatmul.mubr.f32.gmra.mrb[0].mxu0 %v1596
        %v3033 = vpop.f32.mrb[0].mxu0
        %v3034 = vadd.f32 0.0, %v3033
        %v3035 = vpop.f32.mrb[0].mxu0
        %3036 = vmatprep.mubr.f32.mxu0 0.0
        %3037 = vmatmul.mubr.f32.gmra.mrb[0].mxu0 %v1599
        %v3038 = vpop.f32.mrb[0].mxu0
        %v3039 = vadd.f32 0.0, %v3038
        %v3040 = vpop.f32.mrb[0].mxu0
        %3041 = vmatprep.mubr.f32.mxu0 0.0
        %3042 = vmatmul.mubr.f32.gmra.mrb[0].mxu0 %v1602
        %v3043 = vpop.f32.mrb[0].mxu0
        %v3044 = vadd.f32 0.0, %v3043
        %v3045 = vpop.f32.mrb[0].mxu0
        %3046 = vmatprep.mubr.f32.mxu0 0.0
        %3047 = vmatmul.mubr.f32.gmra.mrb[0].mxu0 %v1605
        %v3048 = vpop.f32.mrb[0].mxu0
        %v3049 = vadd.f32 0.0, %v3048
        %v3050 = vpop.f32.mrb[0].mxu0
        %3051 = vmatprep.mubr.f32.mxu0 0.0
        %3052 = vmatmul.mubr.f32.gmra.mrb[0].mxu0 %v1608
        %v3053 = vpop.f32.mrb[0].mxu0
        %v3054 = vadd.f32 0.0, %v3053
        %v3055 = vpop.f32.mrb[0].mxu0
        %3056 = vmatprep.mubr.f32.mxu0 0.0
        %3057 = vmatmul.mubr.f32.gmra.mrb[0].mxu0 %v1611
        %v3058 = vpop.f32.mrb[0].mxu0
        %v3059 = vadd.f32 0.0, %v3058
        %v3060 = vpop.f32.mrb[0].mxu0
        %3061 = vmatprep.mubr.f32.mxu0 0.0
        %3062 = vmatmul.mubr.f32.gmra.mrb[0].mxu0 %v1614
        %v3063 = vpop.f32.mrb[0].mxu0
        %v3064 = vadd.f32 0.0, %v3063
        %v3065 = vpop.f32.mrb[0].mxu0
        %3066 = vmatprep.mubr.f32.mxu0 0.0
        %3067 = vmatmul.mubr.f32.gmra.mrb[0].mxu0 %v1617
        %v3068 = vpop.f32.mrb[0].mxu0
        %v3069 = vadd.f32 0.0, %v3068
        %v3070 = vpop.f32.mrb[0].mxu0
        %3071 = vmatprep.mubr.f32.mxu0 0.0
        %3072 = vmatmul.mubr.f32.gmra.mrb[0].mxu0 %v1620
        %v3073 = vpop.f32.mrb[0].mxu0
        %v3074 = vadd.f32 0.0, %v3073
        %v3075 = vpop.f32.mrb[0].mxu0
        %3076 = vmatprep.mubr.f32.mxu0 0.0
        %3077 = vmatmul.mubr.f32.gmra.mrb[0].mxu0 %v1623
        %v3078 = vpop.f32.mrb[0].mxu0
        %v3079 = vadd.f32 0.0, %v3078
        %v3080 = vpop.f32.mrb[0].mxu0
        %3081 = vmatprep.mubr.f32.mxu0 0.0
        %3082 = vmatmul.mubr.f32.gmra.mrb[0].mxu0 %v1626
        %v3083 = vpop.f32.mrb[0].mxu0
        %v3084 = vadd.f32 0.0, %v3083
        %v3085 = vpop.f32.mrb[0].mxu0
        %3086 = vmatprep.mubr.f32.mxu0 0.0
        %3087 = vmatmul.mubr.f32.gmra.mrb[0].mxu0 %v1629
        %v3088 = vpop.f32.mrb[0].mxu0
        %v3089 = vadd.f32 0.0, %v3088
        %v3090 = vpop.f32.mrb[0].mxu0
        %3091 = vmatprep.mubr.f32.mxu0 0.0
        %3092 = vmatmul.mubr.f32.gmra.mrb[0].mxu0 %v1632
        %v3093 = vpop.f32.mrb[0].mxu0
        %v3094 = vadd.f32 0.0, %v3093
        %v3095 = vpop.f32.mrb[0].mxu0
        %3096 = vmatprep.mubr.f32.mxu0 0.0
        %3097 = vmatmul.mubr.f32.gmra.mrb[0].mxu0 %v1635
        %v3098 = vpop.f32.mrb[0].mxu0
        %v3099 = vadd.f32 0.0, %v3098
        %v3100 = vpop.f32.mrb[0].mxu0
        %3101 = vdwg.mxu0
        %v3103 = vsel %vm555, %v2936, 0
        %v3106 = vsel %vm555, %v2937, 0
        %v3109 = vsel %vm555, %v2938, 0
        %v3112 = vsel %vm555, %v2939, 0
        %v3115 = vsel %vm555, %v2940, 0
        %v3118 = vsel %vm555, %v2941, 0
        %v3121 = vsel %vm555, %v2942, 0
        %v3124 = vsel %vm555, %v2943, 0
        %v3127 = vsel %vm555, %v2944, 0
        %v3130 = vsel %vm555, %v2945, 0
        %v3133 = vsel %vm555, %v2946, 0
        %v3136 = vsel %vm555, %v2947, 0
        %v3139 = vsel %vm555, %v2948, 0
        %v3142 = vsel %vm555, %v2949, 0
        %v3145 = vsel %vm555, %v2950, 0
        %v3148 = vsel %vm555, %v2951, 0
        %v3151 = vsel %vm604, %v2952, 0
        %3153 = vmatprep.subr.mxu0 0.0
        %3154 = vmatpush1.msra.mxu0 %v3151
        %3155 = vmatprep.subr.mxu0 0.0
        %3156 = vmatpush1.msra.mxu0 0.0
        %3157 = vmatprep.subr.mxu0 0.0
        %3158 = vmatpush1.msra.mxu0 0.0
        %3159 = vmatprep.subr.mxu0 0.0
        %3160 = vmatpush1.msra.mxu0 0.0
        %3161 = vmatprep.subr.mxu0 0.0
        %3162 = vmatpush1.msra.mxu0 0.0
        %3163 = vmatprep.subr.mxu0 0.0
        %3164 = vmatpush1.msra.mxu0 0.0
        %3165 = vmatprep.subr.mxu0 0.0
        %3166 = vmatpush1.msra.mxu0 0.0
        %3167 = vmatprep.subr.mxu0 0.0
        %3168 = vmatpush1.msra.mxu0 0.0
        %3169 = vmatprep.subr.mxu0 0.0
        %3170 = vmatpush1.msra.mxu0 0.0
        %3171 = vmatprep.subr.mxu0 0.0
        %3172 = vmatpush1.msra.mxu0 0.0
        %3173 = vmatprep.subr.mxu0 0.0
        %3174 = vmatpush1.msra.mxu0 0.0
        %3175 = vmatprep.subr.mxu0 0.0
        %3176 = vmatpush1.msra.mxu0 0.0
        %3177 = vmatprep.subr.mxu0 0.0
        %3178 = vmatpush1.msra.mxu0 0.0
        %3179 = vmatprep.subr.mxu0 0.0
        %3180 = vmatpush1.msra.mxu0 0.0
        %3181 = vmatprep.subr.mxu0 0.0
        %3182 = vmatpush1.msra.mxu0 0.0
        %3183 = vmatprep.subr.mxu0 0.0
        %3184 = vmatpush1.msra.mxu0 0.0
        %3185 = vmatprep.subr.mxu0 0.0
        %3186 = vmatpush1.msra.mxu0 0.0
        %3187 = vmatprep.subr.mxu0 0.0
        %3188 = vmatpush1.msra.mxu0 0.0
        %3189 = vmatprep.subr.mxu0 0.0
        %3190 = vmatpush1.msra.mxu0 0.0
        %3191 = vmatprep.subr.mxu0 0.0
        %3192 = vmatpush1.msra.mxu0 0.0
        %3193 = vmatprep.subr.mxu0 0.0
        %3194 = vmatpush1.msra.mxu0 0.0
        %3195 = vmatprep.subr.mxu0 0.0
        %3196 = vmatpush1.msra.mxu0 0.0
        %3197 = vmatprep.subr.mxu0 0.0
        %3198 = vmatpush1.msra.mxu0 0.0
        %3199 = vmatprep.subr.mxu0 0.0
        %3200 = vmatpush1.msra.mxu0 0.0
        %3201 = vmatprep.subr.mxu0 0.0
        %3202 = vmatpush1.msra.mxu0 0.0
        %3203 = vmatprep.subr.mxu0 0.0
        %3204 = vmatpush1.msra.mxu0 0.0
        %3205 = vmatprep.subr.mxu0 0.0
        %3206 = vmatpush1.msra.mxu0 0.0
        %3207 = vmatprep.subr.mxu0 0.0
        %3208 = vmatpush1.msra.mxu0 0.0
        %3209 = vmatprep.subr.mxu0 0.0
        %3210 = vmatpush1.msra.mxu0 0.0
        %3211 = vmatprep.subr.mxu0 0.0
        %3212 = vmatpush1.msra.mxu0 0.0
        %3213 = vmatprep.subr.mxu0 0.0
        %3214 = vmatpush1.msra.mxu0 0.0
        %3215 = vmatprep.subr.mxu0 0.0
        %3216 = vmatpush1.msra.mxu0 0.0
        %3217 = vmatprep.mubr.f32.mxu0 0.0
        %3218 = vmatmul.mubr.f32.gmra.mrb[0].mxu0 %v3103
        %v3219 = vpop.f32.mrb[0].mxu0
        %v3220 = vadd.f32 %v3024, %v3219
        %v3221 = vpop.f32.mrb[0].mxu0
        %3222 = vmatprep.mubr.f32.mxu0 0.0
        %3223 = vmatmul.mubr.f32.gmra.mrb[0].mxu0 %v3106
        %v3224 = vpop.f32.mrb[0].mxu0
        %v3225 = vadd.f32 %v3029, %v3224
        %v3226 = vpop.f32.mrb[0].mxu0
        %3227 = vmatprep.mubr.f32.mxu0 0.0
        %3228 = vmatmul.mubr.f32.gmra.mrb[0].mxu0 %v3109
        %v3229 = vpop.f32.mrb[0].mxu0
        %v3230 = vadd.f32 %v3034, %v3229
        %v3231 = vpop.f32.mrb[0].mxu0
        %3232 = vmatprep.mubr.f32.mxu0 0.0
        %3233 = vmatmul.mubr.f32.gmra.mrb[0].mxu0 %v3112
        %v3234 = vpop.f32.mrb[0].mxu0
        %v3235 = vadd.f32 %v3039, %v3234
        %v3236 = vpop.f32.mrb[0].mxu0
        %3237 = vmatprep.mubr.f32.mxu0 0.0
        %3238 = vmatmul.mubr.f32.gmra.mrb[0].mxu0 %v3115
        %v3239 = vpop.f32.mrb[0].mxu0
        %v3240 = vadd.f32 %v3044, %v3239
        %v3241 = vpop.f32.mrb[0].mxu0
        %3242 = vmatprep.mubr.f32.mxu0 0.0
        %3243 = vmatmul.mubr.f32.gmra.mrb[0].mxu0 %v3118
        %v3244 = vpop.f32.mrb[0].mxu0
        %v3245 = vadd.f32 %v3049, %v3244
        %v3246 = vpop.f32.mrb[0].mxu0
        %3247 = vmatprep.mubr.f32.mxu0 0.0
        %3248 = vmatmul.mubr.f32.gmra.mrb[0].mxu0 %v3121
        %v3249 = vpop.f32.mrb[0].mxu0
        %v3250 = vadd.f32 %v3054, %v3249
        %v3251 = vpop.f32.mrb[0].mxu0
        %3252 = vmatprep.mubr.f32.mxu0 0.0
        %3253 = vmatmul.mubr.f32.gmra.mrb[0].mxu0 %v3124
        %v3254 = vpop.f32.mrb[0].mxu0
        %v3255 = vadd.f32 %v3059, %v3254
        %v3256 = vpop.f32.mrb[0].mxu0
        %3257 = vmatprep.mubr.f32.mxu0 0.0
        %3258 = vmatmul.mubr.f32.gmra.mrb[0].mxu0 %v3127
        %v3259 = vpop.f32.mrb[0].mxu0
        %v3260 = vadd.f32 %v3064, %v3259
        %v3261 = vpop.f32.mrb[0].mxu0
        %3262 = vmatprep.mubr.f32.mxu0 0.0
        %3263 = vmatmul.mubr.f32.gmra.mrb[0].mxu0 %v3130
        %v3264 = vpop.f32.mrb[0].mxu0
        %v3265 = vadd.f32 %v3069, %v3264
        %v3266 = vpop.f32.mrb[0].mxu0
        %3267 = vmatprep.mubr.f32.mxu0 0.0
        %3268 = vmatmul.mubr.f32.gmra.mrb[0].mxu0 %v3133
        %v3269 = vpop.f32.mrb[0].mxu0
        %v3270 = vadd.f32 %v3074, %v3269
        %v3271 = vpop.f32.mrb[0].mxu0
        %3272 = vmatprep.mubr.f32.mxu0 0.0
        %3273 = vmatmul.mubr.f32.gmra.mrb[0].mxu0 %v3136
        %v3274 = vpop.f32.mrb[0].mxu0
        %v3275 = vadd.f32 %v3079, %v3274
        %v3276 = vpop.f32.mrb[0].mxu0
        %3277 = vmatprep.mubr.f32.mxu0 0.0
        %3278 = vmatmul.mubr.f32.gmra.mrb[0].mxu0 %v3139
        %v3279 = vpop.f32.mrb[0].mxu0
        %v3280 = vadd.f32 %v3084, %v3279
        %v3281 = vpop.f32.mrb[0].mxu0
        %3282 = vmatprep.mubr.f32.mxu0 0.0
        %3283 = vmatmul.mubr.f32.gmra.mrb[0].mxu0 %v3142
        %v3284 = vpop.f32.mrb[0].mxu0
        %v3285 = vadd.f32 %v3089, %v3284
        %v3286 = vpop.f32.mrb[0].mxu0
        %3287 = vmatprep.mubr.f32.mxu0 0.0
        %3288 = vmatmul.mubr.f32.gmra.mrb[0].mxu0 %v3145
        %v3289 = vpop.f32.mrb[0].mxu0
        %v3290 = vadd.f32 %v3094, %v3289
        %v3291 = vpop.f32.mrb[0].mxu0
        %3292 = vmatprep.mubr.f32.mxu0 0.0
        %3293 = vmatmul.mubr.f32.gmra.mrb[0].mxu0 %v3148
        %v3294 = vpop.f32.mrb[0].mxu0
        %v3295 = vadd.f32 %v3099, %v3294
        %v3296 = vpop.f32.mrb[0].mxu0
        %3297 = vdwg.mxu0
        %v3298 = vld [vmem:[%s6] sm:$0x1]
        %v3300 = vlaneseq
        %v3301 = vshrl.u32 %v3300, 7
        %v3302 = vsub.s32 0, %v3301
        %v3303 = vrot.slane %v3298, %v3302
        %v3305 = vadd.f32 %v3220, %v3303
        %v3306 = vadd.f32 %v3225, %v3303
        %v3307 = vadd.f32 %v3230, %v3303
        %v3308 = vadd.f32 %v3235, %v3303
        %v3309 = vadd.f32 %v3240, %v3303
        %v3310 = vadd.f32 %v3245, %v3303
        %v3311 = vadd.f32 %v3250, %v3303
        %v3312 = vadd.f32 %v3255, %v3303
        %v3313 = vadd.f32 %v3260, %v3303
        %v3314 = vadd.f32 %v3265, %v3303
        %v3315 = vadd.f32 %v3270, %v3303
        %v3316 = vadd.f32 %v3275, %v3303
        %v3317 = vadd.f32 %v3280, %v3303
        %v3318 = vadd.f32 %v3285, %v3303
        %v3319 = vadd.f32 %v3290, %v3303
        %v3320 = vadd.f32 %v3295, %v3303
        %v3321 = vmul.f32 %v3305, 1.442695
        %v3322 = vpow.pop %v3321
        %v3323 = vmul.f32 %v3306, 1.442695
        %v3324 = vpow.pop %v3323
        %v3325 = vmul.f32 %v3307, 1.442695
        %v3326 = vpow.pop %v3325
        %v3327 = vmul.f32 %v3308, 1.442695
        %v3328 = vpow.pop %v3327
        %v3329 = vmul.f32 %v3309, 1.442695
        %v3330 = vpow.pop %v3329
        %v3331 = vmul.f32 %v3310, 1.442695
        %v3332 = vpow.pop %v3331
        %v3333 = vmul.f32 %v3311, 1.442695
        %v3334 = vpow.pop %v3333
        %v3335 = vmul.f32 %v3312, 1.442695
        %v3336 = vpow.pop %v3335
        %v3337 = vmul.f32 %v3313, 1.442695
        %v3338 = vpow.pop %v3337
        %v3339 = vmul.f32 %v3314, 1.442695
        %v3340 = vpow.pop %v3339
        %v3341 = vmul.f32 %v3315, 1.442695
        %v3342 = vpow.pop %v3341
        %v3343 = vmul.f32 %v3316, 1.442695
        %v3344 = vpow.pop %v3343
        %v3345 = vmul.f32 %v3317, 1.442695
        %v3346 = vpow.pop %v3345
        %v3347 = vmul.f32 %v3318, 1.442695
        %v3348 = vpow.pop %v3347
        %v3349 = vmul.f32 %v3319, 1.442695
        %v3350 = vpow.pop %v3349
        %v3351 = vmul.f32 %v3320, 1.442695
        %v3352 = vpow.pop %v3351
        %v3353 = vadd.f32 %v3322, 2.0
        %v3354 = vadd.f32 %v3324, 2.0
        %v3355 = vadd.f32 %v3326, 2.0
        %v3356 = vadd.f32 %v3328, 2.0
        %v3357 = vadd.f32 %v3330, 2.0
        %v3358 = vadd.f32 %v3332, 2.0
        %v3359 = vadd.f32 %v3334, 2.0
        %v3360 = vadd.f32 %v3336, 2.0
        %v3361 = vadd.f32 %v3338, 2.0
        %v3362 = vadd.f32 %v3340, 2.0
        %v3363 = vadd.f32 %v3342, 2.0
        %v3364 = vadd.f32 %v3344, 2.0
        %v3365 = vadd.f32 %v3346, 2.0
        %v3366 = vadd.f32 %v3348, 2.0
        %v3367 = vadd.f32 %v3350, 2.0
        %v3368 = vadd.f32 %v3352, 2.0
        %v3369 = vmul.f32 %v3322, %v3353
        %v3370 = vmul.f32 %v3324, %v3354
        %v3371 = vmul.f32 %v3326, %v3355
        %v3372 = vmul.f32 %v3328, %v3356
        %v3373 = vmul.f32 %v3330, %v3357
        %v3374 = vmul.f32 %v3332, %v3358
        %v3375 = vmul.f32 %v3334, %v3359
        %v3376 = vmul.f32 %v3336, %v3360
        %v3377 = vmul.f32 %v3338, %v3361
        %v3378 = vmul.f32 %v3340, %v3362
        %v3379 = vmul.f32 %v3342, %v3363
        %v3380 = vmul.f32 %v3344, %v3364
        %v3381 = vmul.f32 %v3346, %v3365
        %v3382 = vmul.f32 %v3348, %v3366
        %v3383 = vmul.f32 %v3350, %v3367
        %v3384 = vmul.f32 %v3352, %v3368
        %v3385 = vadd.f32 %v3369, 2.0
        %v3386 = vadd.f32 %v3370, 2.0
        %v3387 = vadd.f32 %v3371, 2.0
        %v3388 = vadd.f32 %v3372, 2.0
        %v3389 = vadd.f32 %v3373, 2.0
        %v3390 = vadd.f32 %v3374, 2.0
        %v3391 = vadd.f32 %v3375, 2.0
        %v3392 = vadd.f32 %v3376, 2.0
        %v3393 = vadd.f32 %v3377, 2.0
        %v3394 = vadd.f32 %v3378, 2.0
        %v3395 = vadd.f32 %v3379, 2.0
        %v3396 = vadd.f32 %v3380, 2.0
        %v3397 = vadd.f32 %v3381, 2.0
        %v3398 = vadd.f32 %v3382, 2.0
        %v3399 = vadd.f32 %v3383, 2.0
        %v3400 = vadd.f32 %v3384, 2.0
        %v3401 = vrcp.pop %v3385
        %v3402 = vrcp.pop %v3386
        %v3403 = vrcp.pop %v3387
        %v3404 = vrcp.pop %v3388
        %v3405 = vrcp.pop %v3389
        %v3406 = vrcp.pop %v3390
        %v3407 = vrcp.pop %v3391
        %v3408 = vrcp.pop %v3392
        %v3409 = vrcp.pop %v3393
        %v3410 = vrcp.pop %v3394
        %v3411 = vrcp.pop %v3395
        %v3412 = vrcp.pop %v3396
        %v3413 = vrcp.pop %v3397
        %v3414 = vrcp.pop %v3398
        %v3415 = vrcp.pop %v3399
        %v3416 = vrcp.pop %v3400
        %v3417 = vmul.f32 %v3369, %v3401
        %v3418 = vmul.f32 %v3370, %v3402
        %v3419 = vmul.f32 %v3371, %v3403
        %v3420 = vmul.f32 %v3372, %v3404
        %v3421 = vmul.f32 %v3373, %v3405
        %v3422 = vmul.f32 %v3374, %v3406
        %v3423 = vmul.f32 %v3375, %v3407
        %v3424 = vmul.f32 %v3376, %v3408
        %v3425 = vmul.f32 %v3377, %v3409
        %v3426 = vmul.f32 %v3378, %v3410
        %v3427 = vmul.f32 %v3379, %v3411
        %v3428 = vmul.f32 %v3380, %v3412
        %v3429 = vmul.f32 %v3381, %v3413
        %v3430 = vmul.f32 %v3382, %v3414
        %v3431 = vmul.f32 %v3383, %v3415
        %v3432 = vmul.f32 %v3384, %v3416
        %vm3433 = vcmp.gt.f32.partialorder %v3305, 20.0
        %vm3434 = vcmp.gt.f32.partialorder %v3306, 20.0
        %vm3435 = vcmp.gt.f32.partialorder %v3307, 20.0
        %vm3436 = vcmp.gt.f32.partialorder %v3308, 20.0
        %vm3437 = vcmp.gt.f32.partialorder %v3309, 20.0
        %vm3438 = vcmp.gt.f32.partialorder %v3310, 20.0
        %vm3439 = vcmp.gt.f32.partialorder %v3311, 20.0
        %vm3440 = vcmp.gt.f32.partialorder %v3312, 20.0
        %vm3441 = vcmp.gt.f32.partialorder %v3313, 20.0
        %vm3442 = vcmp.gt.f32.partialorder %v3314, 20.0
        %vm3443 = vcmp.gt.f32.partialorder %v3315, 20.0
        %vm3444 = vcmp.gt.f32.partialorder %v3316, 20.0
        %vm3445 = vcmp.gt.f32.partialorder %v3317, 20.0
        %vm3446 = vcmp.gt.f32.partialorder %v3318, 20.0
        %vm3447 = vcmp.gt.f32.partialorder %v3319, 20.0
        %vm3448 = vcmp.gt.f32.partialorder %v3320, 20.0
        %v3449 = vmul.f32 %v3305, %v3417
        %v3450 = vmul.f32 %v3306, %v3418
        %v3451 = vmul.f32 %v3307, %v3419
        %v3452 = vmul.f32 %v3308, %v3420
        %v3453 = vmul.f32 %v3309, %v3421
        %v3454 = vmul.f32 %v3310, %v3422
        %v3455 = vmul.f32 %v3311, %v3423
        %v3456 = vmul.f32 %v3312, %v3424
        %v3457 = vmul.f32 %v3313, %v3425
        %v3458 = vmul.f32 %v3314, %v3426
        %v3459 = vmul.f32 %v3315, %v3427
        %v3460 = vmul.f32 %v3316, %v3428
        %v3461 = vmul.f32 %v3317, %v3429
        %v3462 = vmul.f32 %v3318, %v3430
        %v3463 = vmul.f32 %v3319, %v3431
        %v3464 = vmul.f32 %v3320, %v3432
        %v3465 = vsel %vm3433, %v3305, %v3449
        %v3466 = vsel %vm3434, %v3306, %v3450
        %v3467 = vsel %vm3435, %v3307, %v3451
        %v3468 = vsel %vm3436, %v3308, %v3452
        %v3469 = vsel %vm3437, %v3309, %v3453
        %v3470 = vsel %vm3438, %v3310, %v3454
        %v3471 = vsel %vm3439, %v3311, %v3455
        %v3472 = vsel %vm3440, %v3312, %v3456
        %v3473 = vsel %vm3441, %v3313, %v3457
        %v3474 = vsel %vm3442, %v3314, %v3458
        %v3475 = vsel %vm3443, %v3315, %v3459
        %v3476 = vsel %vm3444, %v3316, %v3460
        %v3477 = vsel %vm3445, %v3317, %v3461
        %v3478 = vsel %vm3446, %v3318, %v3462
        %v3479 = vsel %vm3447, %v3319, %v3463
        %v3480 = vsel %vm3448, %v3320, %v3464
        %v3481 = vld [vmem:[%s296] sm:$0xff]
        %v3482 = vld [vmem:[%s296 + $0x8] sm:$0xff]
        %v3483 = vld [vmem:[%s296 + $0x10] sm:$0xff]
        %v3484 = vld [vmem:[%s296 + $0x18] sm:$0xff]
        %v3485 = vld [vmem:[%s296 + $0x20] sm:$0xff]
        %v3486 = vld [vmem:[%s296 + $0x28] sm:$0xff]
        %v3487 = vld [vmem:[%s296 + $0x30] sm:$0xff]
        %v3488 = vld [vmem:[%s296 + $0x38] sm:$0xff]
        %v3489 = vld [vmem:[%s296 + $0x40] sm:$0xff]
        %v3490 = vld [vmem:[%s296 + $0x48] sm:$0xff]
        %v3491 = vld [vmem:[%s296 + $0x50] sm:$0xff]
        %v3492 = vld [vmem:[%s296 + $0x58] sm:$0xff]
        %v3493 = vld [vmem:[%s296 + $0x60] sm:$0xff]
        %v3494 = vld [vmem:[%s296 + $0x68] sm:$0xff]
        %v3495 = vld [vmem:[%s296 + $0x70] sm:$0xff]
        %v3496 = vld [vmem:[%s296 + $0x78] sm:$0xff]
        %3513 = vrot.lane.b32.xlu0 %v3465, 8
        %v3514 = vpop.permute.xlu0 %3513
        %3515 = vrot.lane.b32.xlu0 %v3466, 8
        %v3516 = vpop.permute.xlu0 %3515
        %3517 = vrot.lane.b32.xlu0 %v3467, 8
        %v3518 = vpop.permute.xlu0 %3517
        %3519 = vrot.lane.b32.xlu0 %v3468, 8
        %v3520 = vpop.permute.xlu0 %3519
        %3521 = vrot.lane.b32.xlu0 %v3469, 8
        %v3522 = vpop.permute.xlu0 %3521
        %3523 = vrot.lane.b32.xlu0 %v3470, 8
        %v3524 = vpop.permute.xlu0 %3523
        %3525 = vrot.lane.b32.xlu0 %v3471, 8
        %v3526 = vpop.permute.xlu0 %3525
        %3527 = vrot.lane.b32.xlu0 %v3472, 8
        %v3528 = vpop.permute.xlu0 %3527
        %3529 = vrot.lane.b32.xlu0 %v3473, 8
        %v3530 = vpop.permute.xlu0 %3529
        %3531 = vrot.lane.b32.xlu0 %v3474, 8
        %v3532 = vpop.permute.xlu0 %3531
        %3533 = vrot.lane.b32.xlu0 %v3475, 8
        %v3534 = vpop.permute.xlu0 %3533
        %3535 = vrot.lane.b32.xlu0 %v3476, 8
        %v3536 = vpop.permute.xlu0 %3535
        %3537 = vrot.lane.b32.xlu0 %v3477, 8
        %v3538 = vpop.permute.xlu0 %3537
        %3539 = vrot.lane.b32.xlu0 %v3478, 8
        %v3540 = vpop.permute.xlu0 %3539
        %3541 = vrot.lane.b32.xlu0 %v3479, 8
        %v3542 = vpop.permute.xlu0 %3541
        %3543 = vrot.lane.b32.xlu0 %v3480, 8
        %v3544 = vpop.permute.xlu0 %3543
        %vm3561 = vcmask 64512
        %v3562 = vsel %vm3561, %v3481, %v3514
        %v3563 = vsel %vm3561, %v3482, %v3516
        %v3564 = vsel %vm3561, %v3483, %v3518
        %v3565 = vsel %vm3561, %v3484, %v3520
        %v3566 = vsel %vm3561, %v3485, %v3522
        %v3567 = vsel %vm3561, %v3486, %v3524
        %v3568 = vsel %vm3561, %v3487, %v3526
        %v3569 = vsel %vm3561, %v3488, %v3528
        %v3570 = vsel %vm3561, %v3489, %v3530
        %v3571 = vsel %vm3561, %v3490, %v3532
        %v3572 = vsel %vm3561, %v3491, %v3534
        %v3573 = vsel %vm3561, %v3492, %v3536
        %v3574 = vsel %vm3561, %v3493, %v3538
        %v3575 = vsel %vm3561, %v3494, %v3540
        %v3576 = vsel %vm3561, %v3495, %v3542
        %v3577 = vsel %vm3561, %v3496, %v3544
        %vm3578 = vcmask 130048
        %3579 = vst.msk [vmem:[%s286] sm:$0xff] %vm3578, %v3562
        %3580 = vst.msk [vmem:[%s286 + $0x8] sm:$0xff] %vm3578, %v3563
        %3581 = vst.msk [vmem:[%s286 + $0x10] sm:$0xff] %vm3578, %v3564
        %3582 = vst.msk [vmem:[%s286 + $0x18] sm:$0xff] %vm3578, %v3565
        %3583 = vst.msk [vmem:[%s286 + $0x20] sm:$0xff] %vm3578, %v3566
        %3584 = vst.msk [vmem:[%s286 + $0x28] sm:$0xff] %vm3578, %v3567
        %3585 = vst.msk [vmem:[%s286 + $0x30] sm:$0xff] %vm3578, %v3568
        %3586 = vst.msk [vmem:[%s286 + $0x38] sm:$0xff] %vm3578, %v3569
        %3587 = vst.msk [vmem:[%s286 + $0x40] sm:$0xff] %vm3578, %v3570
        %3588 = vst.msk [vmem:[%s286 + $0x48] sm:$0xff] %vm3578, %v3571
        %3589 = vst.msk [vmem:[%s286 + $0x50] sm:$0xff] %vm3578, %v3572
        %3590 = vst.msk [vmem:[%s286 + $0x58] sm:$0xff] %vm3578, %v3573
        %3591 = vst.msk [vmem:[%s286 + $0x60] sm:$0xff] %vm3578, %v3574
        %3592 = vst.msk [vmem:[%s286 + $0x68] sm:$0xff] %vm3578, %v3575
        %3593 = vst.msk [vmem:[%s286 + $0x70] sm:$0xff] %vm3578, %v3576
        %3594 = vst.msk [vmem:[%s286 + $0x78] sm:$0xff] %vm3578, %v3577
        %s3595 = sand.u32 %s186, 1
        %s3596 = scalar_lea.sflag [#allocation3], %s3595
        %s3597 = sand.u32 %s186, 1
        %s3598 = smul.addr %s3597, 128
        %s3599 = scalar_lea.vmem [#allocation2], %s3598
        // Predicated region
        $region49: #{resblock_body.5} parent=47 // pred_check
          %p3600 = pneg %p196
        $region50: #{resblock_body.5} parent=47 // pred_check_branch
          %3602 = sbr.rel (%p3600) target = $region52
        $region51: #{resblock_body.5} parent=47 // pred_region
          %s3604 = ssub.s32 2048, 2048
          %3605 = vsyncadd %s3596, %s3604
          %s3606 = smul.addr %s21, 16
          %s3607 = smul.addr %s3606, 128
          %s3608 = scalar_lea.hbm %s7, %s3607
          %s3609 = sshll.u32 %s3599, 4
          %s3610 = int_to_ptr.vmem [resolvable:$true] %s3609
          %3615 = dma.vmem_to_hbm [thread:$0]  %s3610, 2048, %s3608, %s3596, 128, 128, 8
        $region52: #{resblock_body.5} parent=47 // pred_fallthru
          _
      $region48: #{resblock_body.5} parent=5 // pred_fallthru
        _
      %p3616 = scmp.le.s32.totalorder 2, %s16
      // Predicated region
      $region53: #{resblock_body.5} parent=5 // pred_check
        %p3617 = pneg %p3616
      $region54: #{resblock_body.5} parent=5 // pred_check_branch
        %3619 = sbr.rel (%p3617) target = $region56
      $region55: #{resblock_body.5} parent=5 // pred_region
        %s3620 = ssub.s32 %s16, 2
        // Predicated region
        $region57: #{resblock_body.5} parent=55 // pred_check
          %p3621 = pneg %p202
        $region58: #{resblock_body.5} parent=55 // pred_check_branch
          %3623 = sbr.rel (%p3621) target = $region60
        $region59: #{resblock_body.5} parent=55 // pred_region
          %s3624 = sand.u32 %s187, 1
          %s3625 = scalar_lea.sflag [#allocation3], %s3624
          %s3626 = sand.u32 %s187, 1
          %s3627 = smul.addr %s3626, 128
          %s3628 = scalar_lea.vmem [#allocation2], %s3627
          %3629 = dma.done %s3625, 2048
        $region60: #{resblock_body.5} parent=55 // pred_fallthru
          _
      $region56: #{resblock_body.5} parent=5 // pred_fallthru
        _
    $region6: #{resblock_body.5} parent=1 // loop_footer
      %s20 = sadd.s32 1, %s16
    $region7: #{resblock_body.5} parent=1 // loop_footer_branch
      %15 = sbr.rel target = $region3
    $region8: #{resblock_body.5} parent=1 // loop_exit
      _
    %3630 = vsyncpa [#allocation3], 1
    %s3631 = scalar_lea.sflag [#allocation3], 1
    %3632 = vsyncpa %s3631, 1

</llo_original>
